<compile_context>
chip_gen: v7x
topology: tpu7x:2x2x1
jax: 0.10.0
libtpu: 0.0.40
codegen_flags: <defaults>
</compile_context>

<pallas_src>
import functools

import jax
import jax.numpy as jnp
from jax.experimental import pallas as pl
from jax.experimental.pallas import tpu as pltpu

NEG_SLOPE = 0.01   # nn.LeakyReLU() default
BN_EPS = 1e-5      # nn.BatchNorm2d default
_VMEM_LIMIT = 48 * 1024 * 1024   # safe on v5e/v6e (128 MiB) and v7x (64 MiB)


def _conv_stats_kernel(x_ref, w_ref, y_ref, sum_ref, ssq_ref, *,
                       kh, kw, oh, ow, stride, h_sub):
    """Pass 1: conv for one image (tap-wise MXU matmuls over the space-to-batch
    layout, no strided slices) + per-channel sum / sum-of-squares accumulated
    across the batch grid."""
    b = pl.program_id(0)
    cin = x_ref.shape[-1]
    c_pad = w_ref.shape[-1]
    ohw = oh * ow

    acc = jnp.zeros((ohw, c_pad), jnp.float32)
    for t in range(kh * kw):
        i, j = t // kw, t % kw
        di, ri = divmod(i, stride)
        dj, rj = divmod(j, stride)
        # Sub-grid (ri, rj): rows are flattened as (ri*stride + rj)*h_sub + y'.
        row0 = (ri * stride + rj) * h_sub + di
        xt = x_ref[0, pl.ds(row0, oh), pl.ds(dj, ow), :]           # [OH, OW, Cin]
        acc = acc + jnp.dot(xt.reshape(ohw, cin), w_ref[t],
                            preferred_element_type=jnp.float32)

    y_ref[...] = acc.reshape(1, ohw, c_pad)   # raw conv output (f32), re-read by pass 2

    @pl.when(b == 0)
    def _():
        sum_ref[...] = jnp.zeros_like(sum_ref)
        ssq_ref[...] = jnp.zeros_like(ssq_ref)

    sum_ref[...] += jnp.sum(acc, axis=0, keepdims=True)
    ssq_ref[...] += jnp.sum(acc * acc, axis=0, keepdims=True)


def _bn_lrelu_kernel(y_ref, scale_ref, shift_ref, o_ref):
    """Pass 2: folded BatchNorm (y*scale + shift) + LeakyReLU, lane-dense stores."""
    z = y_ref[...] * scale_ref[...] + shift_ref[...]
    o_ref[...] = jnp.where(z >= 0, z, NEG_SLOPE * z)


@functools.partial(jax.jit, static_argnames=("kernel_size", "stride", "compute_dtype"))
def discriminator_block(x, weight, bias, gamma, beta, *, kernel_size, stride,
                        compute_dtype=jnp.bfloat16):
    """x: [N, Cin, H, W]; weight: [Cout, Cin, KH, KW]; bias/gamma/beta: [Cout].
    Returns [N, Cout, OH, OW] float32, matching the PyTorch module in train mode."""
    del bias  # exactly cancelled by train-mode BatchNorm's batch-mean subtraction
    n, cin, h, w = x.shape
    cout = weight.shape[0]
    kh = kw = kernel_size
    s = stride
    oh = (h - kh) // s + 1
    ow = (w - kw) // s + 1
    ohw = oh * ow
    m = n * ohw
    c_pad = ((cout + 127) // 128) * 128          # lane-dense channel axis
    cbytes = jnp.dtype(compute_dtype).itemsize

    # ---- Wrapper-side layout glue (single XLA pass each, no data blowup). ----
    # NHWC + space-to-batch: x_sb[n, (ry*s+rx)*H_sub + y', x', c] = x[n, c, s*y'+ry, s*x'+rx]
    x_nhwc = jnp.transpose(x, (0, 2, 3, 1)).astype(compute_dtype)          # [N,H,W,Cin]
    h_sub = -(-h // s)
    w_sub = -(-w // s)
    x_pad = jnp.pad(x_nhwc, ((0, 0), (0, h_sub * s - h), (0, w_sub * s - w), (0, 0)))
    x_sb = x_pad.reshape(n, h_sub, s, w_sub, s, cin)
    x_sb = jnp.transpose(x_sb, (0, 2, 4, 1, 3, 5))                         # [N,s,s,Hs,Ws,Cin]
    x_sb = x_sb.reshape(n, s * s * h_sub, w_sub, cin)

    w_taps = jnp.transpose(weight, (2, 3, 1, 0)).reshape(kh * kw, cin, cout)
    w_taps = jnp.pad(w_taps, ((0, 0), (0, 0), (0, c_pad - cout))).astype(compute_dtype)

    conv_kernel = functools.partial(_conv_stats_kernel, kh=kh, kw=kw, oh=oh, ow=ow,
                                    stride=s, h_sub=h_sub)
    y, ch_sum, ch_ssq = pl.pallas_call(
        conv_kernel,
        grid=(n,),
        in_specs=[pl.BlockSpec((1, s * s * h_sub, w_sub, cin), lambda b: (b, 0, 0, 0)),
                  pl.BlockSpec((kh * kw, cin, c_pad), lambda b: (0, 0, 0))],
        out_specs=[pl.BlockSpec((1, ohw, c_pad), lambda b: (b, 0, 0)),
                   pl.BlockSpec((1, c_pad), lambda b: (0, 0)),
                   pl.BlockSpec((1, c_pad), lambda b: (0, 0))],
        out_shape=(jax.ShapeDtypeStruct((n, ohw, c_pad), jnp.float32),
                   jax.ShapeDtypeStruct((1, c_pad), jnp.float32),
                   jax.ShapeDtypeStruct((1, c_pad), jnp.float32)),
        compiler_params=pltpu.CompilerParams(
            dimension_semantics=("arbitrary",),          # stats accumulate across grid
            vmem_limit_bytes=_VMEM_LIMIT),
        cost_estimate=pl.CostEstimate(
            flops=2 * m * cin * kh * kw * c_pad,
            transcendentals=0,
            bytes_accessed=(n * s * s * h_sub * w_sub * cin * cbytes
                            + kh * kw * cin * c_pad * cbytes
                            + m * c_pad * 4 + 2 * c_pad * 4)),
    )(x_sb, w_taps)

    # Finalize batch statistics -> a single per-channel scale/shift (tiny arrays).
    mean = ch_sum / m                                          # [1, C_pad]
    var = jnp.maximum(ch_ssq / m - mean * mean, 0.0)
    inv_std = jax.lax.rsqrt(var + BN_EPS)
    gamma_p = jnp.pad(gamma.astype(jnp.float32), (0, c_pad - cout)).reshape(1, c_pad)
    beta_p = jnp.pad(beta.astype(jnp.float32), (0, c_pad - cout)).reshape(1, c_pad)
    scale = gamma_p * inv_std
    shift = beta_p - mean * scale

    out_p = pl.pallas_call(
        _bn_lrelu_kernel,
        grid=(n,),
        in_specs=[pl.BlockSpec((1, ohw, c_pad), lambda b: (b, 0, 0)),
                  pl.BlockSpec((1, c_pad), lambda b: (0, 0)),
                  pl.BlockSpec((1, c_pad), lambda b: (0, 0))],
        out_specs=pl.BlockSpec((1, ohw, c_pad), lambda b: (b, 0, 0)),
        out_shape=jax.ShapeDtypeStruct((n, ohw, c_pad), jnp.float32),
        compiler_params=pltpu.CompilerParams(
            dimension_semantics=("parallel",),           # megacore-shardable
            vmem_limit_bytes=_VMEM_LIMIT),
        cost_estimate=pl.CostEstimate(
            flops=3 * m * c_pad, transcendentals=0,
            bytes_accessed=2 * m * c_pad * 4),
    )(y, scale, shift)

    # [N, OH*OW, C_pad] -> NCHW (wrapper glue; slice drops the lane padding).
    out = out_p[:, :, :cout].reshape(n, oh, ow, cout)
    return jnp.transpose(out, (0, 3, 1, 2))


def _reference(x, weight, bias, gamma, beta, *, stride):
    """Plain-JAX reference of the PyTorch forward (train-mode BN, f32)."""
    y = jax.lax.conv_general_dilated(
        x, weight, window_strides=(stride, stride), padding="VALID",
        dimension_numbers=("NCHW", "OIHW", "NCHW"),
    ) + bias[None, :, None, None]
    mean = jnp.mean(y, axis=(0, 2, 3), keepdims=True)
    var = jnp.mean((y - mean) ** 2, axis=(0, 2, 3), keepdims=True)
    y = (y - mean) * jax.lax.rsqrt(var + BN_EPS)
    y = y * gamma[None, :, None, None] + beta[None, :, None, None]
    return jnp.where(y >= 0, y, NEG_SLOPE * y)


if __name__ == "__main__":
    # Small, deterministic configuration.
    N, CIN, H, W = 2, 4, 16, 16
    COUT, KSIZE, STRIDE = 8, 3, 2

    key = jax.random.PRNGKey(0)
    kx, kw_, kb = jax.random.split(key, 3)
    x = jax.random.normal(kx, (N, CIN, H, W), dtype=jnp.float32)

    # Deterministic synthetic parameters (shapes match nn.Conv2d / nn.BatchNorm2d).
    fan_in = CIN * KSIZE * KSIZE
    bound = 1.0 / (fan_in ** 0.5)
    weight = jax.random.uniform(kw_, (COUT, CIN, KSIZE, KSIZE),
                                minval=-bound, maxval=bound, dtype=jnp.float32)
    bias = jax.random.uniform(kb, (COUT,), minval=-bound, maxval=bound,
                              dtype=jnp.float32)
    gamma = jnp.ones((COUT,), jnp.float32)   # BatchNorm2d weight init
    beta = jnp.zeros((COUT,), jnp.float32)   # BatchNorm2d bias init

    ref = _reference(x, weight, bias, gamma, beta, stride=STRIDE)
    expected_shape = (N, COUT, (H - KSIZE) // STRIDE + 1, (W - KSIZE) // STRIDE + 1)

    # f32 path: tight check of the kernel structure (incl. exact bias/BN cancellation).
    out_f32 = jax.block_until_ready(
        discriminator_block(x, weight, bias, gamma, beta,
                            kernel_size=KSIZE, stride=STRIDE,
                            compute_dtype=jnp.float32))
    assert out_f32.shape == ref.shape == expected_shape
    err32 = float(jnp.max(jnp.abs(out_f32 - ref)))
    assert err32 < 2e-4, f"f32 mismatch vs reference: {err32}"

    # bf16 MXU path (default): looser tolerance for bf16 input rounding.
    out_bf16 = jax.block_until_ready(
        discriminator_block(x, weight, bias, gamma, beta,
                            kernel_size=KSIZE, stride=STRIDE,
                            compute_dtype=jnp.bfloat16))
    assert out_bf16.shape == expected_shape
    err16 = float(jnp.max(jnp.abs(out_bf16 - ref)))
    assert err16 < 5e-2, f"bf16 mismatch vs reference: {err16}"

    print("KERNEL_OK")
</pallas_src>

<mosaic_0001>
module attributes {stable_mosaic.version = 11 : i64} {
  func.func @_conv_stats_kernel(%arg0: i32, %arg1: memref<1x32x8x4xf32, #tpu.memory_space<vmem>>, %arg2: memref<9x4x128xf32, #tpu.memory_space<vmem>>, %arg3: memref<1x49x128xf32, #tpu.memory_space<vmem>>, %arg4: memref<1x128xf32, #tpu.memory_space<vmem>>, %arg5: memref<1x128xf32, #tpu.memory_space<vmem>>) attributes {dimension_semantics = [#tpu.dimension_semantics<arbitrary>], iteration_bounds = array<i64: 2>, scalar_prefetch = 0 : i64, scratch_operands = 0 : i64, tpu.core_type = #tpu.core_type<tc>, window_params = [{transform_indices = @transform_0, window_bounds = array<i64: 1, 32, 8, 4>}, {pipeline_mode = #tpu.pipeline_mode<synchronous>, transform_indices = @transform_1, window_bounds = array<i64: 9, 4, 128>}, {transform_indices = @transform_2, window_bounds = array<i64: 1, 49, 128>}, {pipeline_mode = #tpu.pipeline_mode<synchronous>, transform_indices = @transform_3, window_bounds = array<i64: 1, 128>}, {pipeline_mode = #tpu.pipeline_mode<synchronous>, transform_indices = @transform_4, window_bounds = array<i64: 1, 128>}]} {
    %cst = arith.constant 0.000000e+00 : f32
    %0 = vector.broadcast %cst : f32 to vector<49x128xf32>
    %c0 = arith.constant 0 : index
    %c0_0 = arith.constant 0 : index
    %c0_1 = arith.constant 0 : index
    %c0_2 = arith.constant 0 : index
    %1 = vector.load %arg1[%c0, %c0_0, %c0_1, %c0_2] : memref<1x32x8x4xf32, #tpu.memory_space<vmem>>, vector<1x7x7x4xf32>
    %2 = vector.shape_cast %1 : vector<1x7x7x4xf32> to vector<7x7x4xf32>
    %3 = vector.shape_cast %2 : vector<7x7x4xf32> to vector<49x4xf32>
    %c0_3 = arith.constant 0 : index
    %c0_4 = arith.constant 0 : index
    %c0_5 = arith.constant 0 : index
    %4 = vector.load %arg2[%c0_3, %c0_4, %c0_5] : memref<9x4x128xf32, #tpu.memory_space<vmem>>, vector<1x4x128xf32>
    %5 = vector.shape_cast %4 : vector<1x4x128xf32> to vector<4x128xf32>
    %cst_6 = arith.constant dense<0.000000e+00> : vector<49x128xf32>
    %6 = tpu.matmul %3, %5, %cst_6 {dimension_numbers = #tpu.dot_dimension_numbers<[1], [0], [0], [1], [0, 0, 1, 1], [], []>} : vector<49x4xf32>, vector<4x128xf32>, vector<49x128xf32> -> vector<49x128xf32>
    %7 = arith.addf %0, %6 : vector<49x128xf32>
    %c0_7 = arith.constant 0 : index
    %c8 = arith.constant 8 : index
    %c0_8 = arith.constant 0 : index
    %c0_9 = arith.constant 0 : index
    %8 = vector.load %arg1[%c0_7, %c8, %c0_8, %c0_9] : memref<1x32x8x4xf32, #tpu.memory_space<vmem>>, vector<1x7x7x4xf32>
    %9 = vector.shape_cast %8 : vector<1x7x7x4xf32> to vector<7x7x4xf32>
    %10 = vector.shape_cast %9 : vector<7x7x4xf32> to vector<49x4xf32>
    %c1 = arith.constant 1 : index
    %c0_10 = arith.constant 0 : index
    %c0_11 = arith.constant 0 : index
    %11 = vector.load %arg2[%c1, %c0_10, %c0_11] : memref<9x4x128xf32, #tpu.memory_space<vmem>>, vector<1x4x128xf32>
    %12 = vector.shape_cast %11 : vector<1x4x128xf32> to vector<4x128xf32>
    %cst_12 = arith.constant dense<0.000000e+00> : vector<49x128xf32>
    %13 = tpu.matmul %10, %12, %cst_12 {dimension_numbers = #tpu.dot_dimension_numbers<[1], [0], [0], [1], [0, 0, 1, 1], [], []>} : vector<49x4xf32>, vector<4x128xf32>, vector<49x128xf32> -> vector<49x128xf32>
    %14 = arith.addf %7, %13 : vector<49x128xf32>
    %c0_13 = arith.constant 0 : index
    %c0_14 = arith.constant 0 : index
    %c1_15 = arith.constant 1 : index
    %c0_16 = arith.constant 0 : index
    %15 = vector.load %arg1[%c0_13, %c0_14, %c1_15, %c0_16] : memref<1x32x8x4xf32, #tpu.memory_space<vmem>>, vector<1x7x7x4xf32>
    %16 = vector.shape_cast %15 : vector<1x7x7x4xf32> to vector<7x7x4xf32>
    %17 = vector.shape_cast %16 : vector<7x7x4xf32> to vector<49x4xf32>
    %c2 = arith.constant 2 : index
    %c0_17 = arith.constant 0 : index
    %c0_18 = arith.constant 0 : index
    %18 = vector.load %arg2[%c2, %c0_17, %c0_18] : memref<9x4x128xf32, #tpu.memory_space<vmem>>, vector<1x4x128xf32>
    %19 = vector.shape_cast %18 : vector<1x4x128xf32> to vector<4x128xf32>
    %cst_19 = arith.constant dense<0.000000e+00> : vector<49x128xf32>
    %20 = tpu.matmul %17, %19, %cst_19 {dimension_numbers = #tpu.dot_dimension_numbers<[1], [0], [0], [1], [0, 0, 1, 1], [], []>} : vector<49x4xf32>, vector<4x128xf32>, vector<49x128xf32> -> vector<49x128xf32>
    %21 = arith.addf %14, %20 : vector<49x128xf32>
    %c0_20 = arith.constant 0 : index
    %c16 = arith.constant 16 : index
    %c0_21 = arith.constant 0 : index
    %c0_22 = arith.constant 0 : index
    %22 = vector.load %arg1[%c0_20, %c16, %c0_21, %c0_22] : memref<1x32x8x4xf32, #tpu.memory_space<vmem>>, vector<1x7x7x4xf32>
    %23 = vector.shape_cast %22 : vector<1x7x7x4xf32> to vector<7x7x4xf32>
    %24 = vector.shape_cast %23 : vector<7x7x4xf32> to vector<49x4xf32>
    %c3 = arith.constant 3 : index
    %c0_23 = arith.constant 0 : index
    %c0_24 = arith.constant 0 : index
    %25 = vector.load %arg2[%c3, %c0_23, %c0_24] : memref<9x4x128xf32, #tpu.memory_space<vmem>>, vector<1x4x128xf32>
    %26 = vector.shape_cast %25 : vector<1x4x128xf32> to vector<4x128xf32>
    %cst_25 = arith.constant dense<0.000000e+00> : vector<49x128xf32>
    %27 = tpu.matmul %24, %26, %cst_25 {dimension_numbers = #tpu.dot_dimension_numbers<[1], [0], [0], [1], [0, 0, 1, 1], [], []>} : vector<49x4xf32>, vector<4x128xf32>, vector<49x128xf32> -> vector<49x128xf32>
    %28 = arith.addf %21, %27 : vector<49x128xf32>
    %c0_26 = arith.constant 0 : index
    %c24 = arith.constant 24 : index
    %c0_27 = arith.constant 0 : index
    %c0_28 = arith.constant 0 : index
    %29 = vector.load %arg1[%c0_26, %c24, %c0_27, %c0_28] : memref<1x32x8x4xf32, #tpu.memory_space<vmem>>, vector<1x7x7x4xf32>
    %30 = vector.shape_cast %29 : vector<1x7x7x4xf32> to vector<7x7x4xf32>
    %31 = vector.shape_cast %30 : vector<7x7x4xf32> to vector<49x4xf32>
    %c4 = arith.constant 4 : index
    %c0_29 = arith.constant 0 : index
    %c0_30 = arith.constant 0 : index
    %32 = vector.load %arg2[%c4, %c0_29, %c0_30] : memref<9x4x128xf32, #tpu.memory_space<vmem>>, vector<1x4x128xf32>
    %33 = vector.shape_cast %32 : vector<1x4x128xf32> to vector<4x128xf32>
    %cst_31 = arith.constant dense<0.000000e+00> : vector<49x128xf32>
    %34 = tpu.matmul %31, %33, %cst_31 {dimension_numbers = #tpu.dot_dimension_numbers<[1], [0], [0], [1], [0, 0, 1, 1], [], []>} : vector<49x4xf32>, vector<4x128xf32>, vector<49x128xf32> -> vector<49x128xf32>
    %35 = arith.addf %28, %34 : vector<49x128xf32>
    %c0_32 = arith.constant 0 : index
    %c16_33 = arith.constant 16 : index
    %c1_34 = arith.constant 1 : index
    %c0_35 = arith.constant 0 : index
    %36 = vector.load %arg1[%c0_32, %c16_33, %c1_34, %c0_35] : memref<1x32x8x4xf32, #tpu.memory_space<vmem>>, vector<1x7x7x4xf32>
    %37 = vector.shape_cast %36 : vector<1x7x7x4xf32> to vector<7x7x4xf32>
    %38 = vector.shape_cast %37 : vector<7x7x4xf32> to vector<49x4xf32>
    %c5 = arith.constant 5 : index
    %c0_36 = arith.constant 0 : index
    %c0_37 = arith.constant 0 : index
    %39 = vector.load %arg2[%c5, %c0_36, %c0_37] : memref<9x4x128xf32, #tpu.memory_space<vmem>>, vector<1x4x128xf32>
    %40 = vector.shape_cast %39 : vector<1x4x128xf32> to vector<4x128xf32>
    %cst_38 = arith.constant dense<0.000000e+00> : vector<49x128xf32>
    %41 = tpu.matmul %38, %40, %cst_38 {dimension_numbers = #tpu.dot_dimension_numbers<[1], [0], [0], [1], [0, 0, 1, 1], [], []>} : vector<49x4xf32>, vector<4x128xf32>, vector<49x128xf32> -> vector<49x128xf32>
    %42 = arith.addf %35, %41 : vector<49x128xf32>
    %c0_39 = arith.constant 0 : index
    %c1_40 = arith.constant 1 : index
    %c0_41 = arith.constant 0 : index
    %c0_42 = arith.constant 0 : index
    %43 = vector.load %arg1[%c0_39, %c1_40, %c0_41, %c0_42] : memref<1x32x8x4xf32, #tpu.memory_space<vmem>>, vector<1x7x7x4xf32>
    %44 = vector.shape_cast %43 : vector<1x7x7x4xf32> to vector<7x7x4xf32>
    %45 = vector.shape_cast %44 : vector<7x7x4xf32> to vector<49x4xf32>
    %c6 = arith.constant 6 : index
    %c0_43 = arith.constant 0 : index
    %c0_44 = arith.constant 0 : index
    %46 = vector.load %arg2[%c6, %c0_43, %c0_44] : memref<9x4x128xf32, #tpu.memory_space<vmem>>, vector<1x4x128xf32>
    %47 = vector.shape_cast %46 : vector<1x4x128xf32> to vector<4x128xf32>
    %cst_45 = arith.constant dense<0.000000e+00> : vector<49x128xf32>
    %48 = tpu.matmul %45, %47, %cst_45 {dimension_numbers = #tpu.dot_dimension_numbers<[1], [0], [0], [1], [0, 0, 1, 1], [], []>} : vector<49x4xf32>, vector<4x128xf32>, vector<49x128xf32> -> vector<49x128xf32>
    %49 = arith.addf %42, %48 : vector<49x128xf32>
    %c0_46 = arith.constant 0 : index
    %c9 = arith.constant 9 : index
    %c0_47 = arith.constant 0 : index
    %c0_48 = arith.constant 0 : index
    %50 = vector.load %arg1[%c0_46, %c9, %c0_47, %c0_48] : memref<1x32x8x4xf32, #tpu.memory_space<vmem>>, vector<1x7x7x4xf32>
    %51 = vector.shape_cast %50 : vector<1x7x7x4xf32> to vector<7x7x4xf32>
    %52 = vector.shape_cast %51 : vector<7x7x4xf32> to vector<49x4xf32>
    %c7 = arith.constant 7 : index
    %c0_49 = arith.constant 0 : index
    %c0_50 = arith.constant 0 : index
    %53 = vector.load %arg2[%c7, %c0_49, %c0_50] : memref<9x4x128xf32, #tpu.memory_space<vmem>>, vector<1x4x128xf32>
    %54 = vector.shape_cast %53 : vector<1x4x128xf32> to vector<4x128xf32>
    %cst_51 = arith.constant dense<0.000000e+00> : vector<49x128xf32>
    %55 = tpu.matmul %52, %54, %cst_51 {dimension_numbers = #tpu.dot_dimension_numbers<[1], [0], [0], [1], [0, 0, 1, 1], [], []>} : vector<49x4xf32>, vector<4x128xf32>, vector<49x128xf32> -> vector<49x128xf32>
    %56 = arith.addf %49, %55 : vector<49x128xf32>
    %c0_52 = arith.constant 0 : index
    %c1_53 = arith.constant 1 : index
    %c1_54 = arith.constant 1 : index
    %c0_55 = arith.constant 0 : index
    %57 = vector.load %arg1[%c0_52, %c1_53, %c1_54, %c0_55] : memref<1x32x8x4xf32, #tpu.memory_space<vmem>>, vector<1x7x7x4xf32>
    %58 = vector.shape_cast %57 : vector<1x7x7x4xf32> to vector<7x7x4xf32>
    %59 = vector.shape_cast %58 : vector<7x7x4xf32> to vector<49x4xf32>
    %c8_56 = arith.constant 8 : index
    %c0_57 = arith.constant 0 : index
    %c0_58 = arith.constant 0 : index
    %60 = vector.load %arg2[%c8_56, %c0_57, %c0_58] : memref<9x4x128xf32, #tpu.memory_space<vmem>>, vector<1x4x128xf32>
    %61 = vector.shape_cast %60 : vector<1x4x128xf32> to vector<4x128xf32>
    %cst_59 = arith.constant dense<0.000000e+00> : vector<49x128xf32>
    %62 = tpu.matmul %59, %61, %cst_59 {dimension_numbers = #tpu.dot_dimension_numbers<[1], [0], [0], [1], [0, 0, 1, 1], [], []>} : vector<49x4xf32>, vector<4x128xf32>, vector<49x128xf32> -> vector<49x128xf32>
    %63 = arith.addf %56, %62 : vector<49x128xf32>
    %64 = vector.shape_cast %63 : vector<49x128xf32> to vector<1x49x128xf32>
    %c0_60 = arith.constant 0 : index
    %c0_61 = arith.constant 0 : index
    %c0_62 = arith.constant 0 : index
    %65 = vector.load %arg3[%c0_60, %c0_61, %c0_62] : memref<1x49x128xf32, #tpu.memory_space<vmem>>, vector<1x49x128xf32>
    tpu.vector_store %arg3[%c0_60, %c0_61, %c0_62], %64 {strides = array<i32>} : memref<1x49x128xf32, #tpu.memory_space<vmem>>, vector<1x49x128xf32>,
    %c0_i32 = arith.constant 0 : i32
    %66 = arith.cmpi eq, %arg0, %c0_i32 : i32
    %67 = arith.extui %66 : i1 to i32
    %c0_i32_63 = arith.constant 0 : i32
    %68 = arith.cmpi ne, %67, %c0_i32_63 : i32
    scf.if %68 {
      %cst_74 = arith.constant 0.000000e+00 : f32
      %80 = vector.broadcast %cst_74 : f32 to vector<1x128xf32>
      %c0_75 = arith.constant 0 : index
      %c0_76 = arith.constant 0 : index
      %81 = vector.load %arg4[%c0_75, %c0_76] : memref<1x128xf32, #tpu.memory_space<vmem>>, vector<1x128xf32>
      tpu.vector_store %arg4[%c0_75, %c0_76], %80 {strides = array<i32>} : memref<1x128xf32, #tpu.memory_space<vmem>>, vector<1x128xf32>,
      %cst_77 = arith.constant 0.000000e+00 : f32
      %82 = vector.broadcast %cst_77 : f32 to vector<1x128xf32>
      %c0_78 = arith.constant 0 : index
      %c0_79 = arith.constant 0 : index
      %83 = vector.load %arg5[%c0_78, %c0_79] : memref<1x128xf32, #tpu.memory_space<vmem>>, vector<1x128xf32>
      tpu.vector_store %arg5[%c0_78, %c0_79], %82 {strides = array<i32>} : memref<1x128xf32, #tpu.memory_space<vmem>>, vector<1x128xf32>,
    } else {
    }
    %c0_64 = arith.constant 0 : index
    %c0_65 = arith.constant 0 : index
    %69 = vector.load %arg4[%c0_64, %c0_65] : memref<1x128xf32, #tpu.memory_space<vmem>>, vector<1x128xf32>
    %cst_66 = arith.constant dense<0.000000e+00> : vector<128xf32>
    %70 = vector.multi_reduction <add>, %63, %cst_66 [0] : vector<49x128xf32> to vector<128xf32>
    %71 = vector.shape_cast %70 : vector<128xf32> to vector<1x128xf32>
    %72 = arith.addf %69, %71 : vector<1x128xf32>
    %c0_67 = arith.constant 0 : index
    %c0_68 = arith.constant 0 : index
    %73 = vector.load %arg4[%c0_67, %c0_68] : memref<1x128xf32, #tpu.memory_space<vmem>>, vector<1x128xf32>
    tpu.vector_store %arg4[%c0_67, %c0_68], %72 {strides = array<i32>} : memref<1x128xf32, #tpu.memory_space<vmem>>, vector<1x128xf32>,
    %c0_69 = arith.constant 0 : index
    %c0_70 = arith.constant 0 : index
    %74 = vector.load %arg5[%c0_69, %c0_70] : memref<1x128xf32, #tpu.memory_space<vmem>>, vector<1x128xf32>
    %75 = arith.mulf %63, %63 : vector<49x128xf32>
    %cst_71 = arith.constant dense<0.000000e+00> : vector<128xf32>
    %76 = vector.multi_reduction <add>, %75, %cst_71 [0] : vector<49x128xf32> to vector<128xf32>
    %77 = vector.shape_cast %76 : vector<128xf32> to vector<1x128xf32>
    %78 = arith.addf %74, %77 : vector<1x128xf32>
    %c0_72 = arith.constant 0 : index
    %c0_73 = arith.constant 0 : index
    %79 = vector.load %arg5[%c0_72, %c0_73] : memref<1x128xf32, #tpu.memory_space<vmem>>, vector<1x128xf32>
    tpu.vector_store %arg5[%c0_72, %c0_73], %78 {strides = array<i32>} : memref<1x128xf32, #tpu.memory_space<vmem>>, vector<1x128xf32>,
    return
  }
  func.func @transform_0(%arg0: i32) -> (i32, i32, i32, i32) {
    %c0_i32 = arith.constant 0 : i32
    %c0_i32_0 = arith.constant 0 : i32
    %c0_i32_1 = arith.constant 0 : i32
    %c0_i32_2 = arith.constant 0 : i32
    return %arg0, %c0_i32, %c0_i32_0, %c0_i32_1 : i32, i32, i32, i32
  }
  func.func @transform_1(%arg0: i32) -> (i32, i32, i32) {
    %c0_i32 = arith.constant 0 : i32
    %c0_i32_0 = arith.constant 0 : i32
    %c0_i32_1 = arith.constant 0 : i32
    %c0_i32_2 = arith.constant 0 : i32
    return %c0_i32, %c0_i32_0, %c0_i32_1 : i32, i32, i32
  }
  func.func @transform_2(%arg0: i32) -> (i32, i32, i32) {
    %c0_i32 = arith.constant 0 : i32
    %c0_i32_0 = arith.constant 0 : i32
    %c0_i32_1 = arith.constant 0 : i32
    return %arg0, %c0_i32, %c0_i32_0 : i32, i32, i32
  }
  func.func @transform_3(%arg0: i32) -> (i32, i32) {
    %c0_i32 = arith.constant 0 : i32
    %c0_i32_0 = arith.constant 0 : i32
    %c0_i32_1 = arith.constant 0 : i32
    return %c0_i32, %c0_i32_0 : i32, i32
  }
  func.func @transform_4(%arg0: i32) -> (i32, i32) {
    %c0_i32 = arith.constant 0 : i32
    %c0_i32_0 = arith.constant 0 : i32
    %c0_i32_1 = arith.constant 0 : i32
    return %c0_i32, %c0_i32_0 : i32, i32
  }
}

module attributes {stable_mosaic.version = 11 : i64} {
  func.func @_bn_lrelu_kernel(%arg0: i32, %arg1: memref<1x49x128xf32, #tpu.memory_space<vmem>>, %arg2: memref<1x128xf32, #tpu.memory_space<vmem>>, %arg3: memref<1x128xf32, #tpu.memory_space<vmem>>, %arg4: memref<1x49x128xf32, #tpu.memory_space<vmem>>) attributes {dimension_semantics = [#tpu.dimension_semantics<parallel>], iteration_bounds = array<i64: 2>, scalar_prefetch = 0 : i64, scratch_operands = 0 : i64, tpu.core_type = #tpu.core_type<tc>, window_params = [{transform_indices = @transform_0, window_bounds = array<i64: 1, 49, 128>}, {pipeline_mode = #tpu.pipeline_mode<synchronous>, transform_indices = @transform_1, window_bounds = array<i64: 1, 128>}, {pipeline_mode = #tpu.pipeline_mode<synchronous>, transform_indices = @transform_2, window_bounds = array<i64: 1, 128>}, {transform_indices = @transform_3, window_bounds = array<i64: 1, 49, 128>}]} {
    %c0 = arith.constant 0 : index
    %c0_0 = arith.constant 0 : index
    %c0_1 = arith.constant 0 : index
    %0 = vector.load %arg1[%c0, %c0_0, %c0_1] : memref<1x49x128xf32, #tpu.memory_space<vmem>>, vector<1x49x128xf32>
    %c0_2 = arith.constant 0 : index
    %c0_3 = arith.constant 0 : index
    %1 = vector.load %arg2[%c0_2, %c0_3] : memref<1x128xf32, #tpu.memory_space<vmem>>, vector<1x128xf32>
    %2 = vector.shape_cast %1 : vector<1x128xf32> to vector<1x1x128xf32>
    %3 = vector.broadcast %2 : vector<1x1x128xf32> to vector<1x49x128xf32>
    %4 = arith.mulf %0, %3 : vector<1x49x128xf32>
    %c0_4 = arith.constant 0 : index
    %c0_5 = arith.constant 0 : index
    %5 = vector.load %arg3[%c0_4, %c0_5] : memref<1x128xf32, #tpu.memory_space<vmem>>, vector<1x128xf32>
    %6 = vector.shape_cast %5 : vector<1x128xf32> to vector<1x1x128xf32>
    %7 = vector.broadcast %6 : vector<1x1x128xf32> to vector<1x49x128xf32>
    %8 = arith.addf %4, %7 : vector<1x49x128xf32>
    %cst = arith.constant 0.000000e+00 : f32
    %9 = vector.broadcast %cst : f32 to vector<1x49x128xf32>
    %10 = arith.cmpf oge, %8, %9 : vector<1x49x128xf32>
    %cst_6 = arith.constant 0.00999999977 : f32
    %11 = vector.broadcast %cst_6 : f32 to vector<1x49x128xf32>
    %12 = arith.mulf %11, %8 : vector<1x49x128xf32>
    %13 = arith.select %10, %8, %12 : vector<1x49x128xi1>, vector<1x49x128xf32>
    %c0_7 = arith.constant 0 : index
    %c0_8 = arith.constant 0 : index
    %c0_9 = arith.constant 0 : index
    %14 = vector.load %arg4[%c0_7, %c0_8, %c0_9] : memref<1x49x128xf32, #tpu.memory_space<vmem>>, vector<1x49x128xf32>
    tpu.vector_store %arg4[%c0_7, %c0_8, %c0_9], %13 {strides = array<i32>} : memref<1x49x128xf32, #tpu.memory_space<vmem>>, vector<1x49x128xf32>,
    return
  }
  func.func @transform_0(%arg0: i32) -> (i32, i32, i32) {
    %c0_i32 = arith.constant 0 : i32
    %c0_i32_0 = arith.constant 0 : i32
    %c0_i32_1 = arith.constant 0 : i32
    return %arg0, %c0_i32, %c0_i32_0 : i32, i32, i32
  }
  func.func @transform_1(%arg0: i32) -> (i32, i32) {
    %c0_i32 = arith.constant 0 : i32
    %c0_i32_0 = arith.constant 0 : i32
    %c0_i32_1 = arith.constant 0 : i32
    return %c0_i32, %c0_i32_0 : i32, i32
  }
  func.func @transform_2(%arg0: i32) -> (i32, i32) {
    %c0_i32 = arith.constant 0 : i32
    %c0_i32_0 = arith.constant 0 : i32
    %c0_i32_1 = arith.constant 0 : i32
    return %c0_i32, %c0_i32_0 : i32, i32
  }
  func.func @transform_3(%arg0: i32) -> (i32, i32, i32) {
    %c0_i32 = arith.constant 0 : i32
    %c0_i32_0 = arith.constant 0 : i32
    %c0_i32_1 = arith.constant 0 : i32
    return %arg0, %c0_i32, %c0_i32_0 : i32, i32, i32
  }
}

</mosaic_0001>

<llo_original>
// kernel: discriminator_block.3
$region0: #{discriminator_block.3}
  #allocation0 [shape = 'u32[]', space=smem, size = 0x4, offset = 0x4, fixed_abs, tag = 'smem constant byte address 0x4 - core index']
  #allocation1 [shape = 'u32[144,128]{1,0:T(1,128)}', space=vmem, size = 0x12000, scoped, tag = 'internal scratch']
  %s0 = inlined_call_operand.vmem [shape: f32[2,49,128], index: 0, kind: input, shape index: {}]
  %s1 = inlined_call_operand.vmem [shape: f32[1,128], index: 1, kind: input, shape index: {}]
  %s2 = inlined_call_operand.vmem [shape: f32[1,128], index: 2, kind: input, shape index: {}]
  %s3 = inlined_call_operand.vmem [shape: f32[2,49,128], index: 3, kind: output, shape index: {}]
  %s4 = sld [smem:[#allocation0]]
  $region45: #{discriminator_block.3} parent=0
    _
  %s6 = ssub.s32 1, %s4
  %s7 = scalar_select 0, %s6, %s4
  loop: start=0, step=1, limit=4
  $region2: #{discriminator_block.3} parent=0 // loop_pre_header
    _
  $region3: #{discriminator_block.3} parent=0 // loop_header
    %s9 = sphi 0, %s13
    %p10 = scmp.ge.s32.totalorder %s9, 4
    %s19 = sphi 0, %s21
    %s22 = sphi 0, %s19
    %s23 = sphi 0, %s22
    %s39 = sphi 0, %s23
    %s43 = sphi 0, %s43
    %s45 = sphi 0, %s43
    %s46 = sphi 0, %s45
    %s60 = sphi 0, %s46
    %s64 = sphi 0, %s64
    %s66 = sphi 0, %s64
    %s67 = sphi 0, %s66
    %s81 = sphi 0, %s67
    %s87 = sphi 0, %s89
    %s90 = sphi 0, %s87
    %s91 = sphi 0, %s90
    %s107 = sphi 0, %s91
  $region4: #{discriminator_block.3} parent=0 // loop_header_branch
    %12 = sbr.rel (%p10) target = $region8
  $region5: #{discriminator_block.3} parent=0 // loop_body
    %s14 = ssub.s32 %s9, 1
    %s15 = ssub.s32 %s9, 2
    %s16 = sadd.s32 %s9, 1
    %s17 = ssub.s32 %s9, %s16
    %p18 = scmp.eq.s32.totalorder %s17, 0
    %s20 = sadd.s32 %s19, 1
    %s21 = scalar_select %p18, %s19, %s20
    %p24 = pneg %p18
    %p25 = scmp.eq.s32.totalorder %s9, 1
    %p26 = por %p24, %p25
    %p27 = scmp.ne.s32.totalorder %s19, %s22
    %p28 = scmp.eq.s32.totalorder %s9, 0
    %p29 = por %p27, %p28
    %p30 = scmp.ne.s32.totalorder %s19, %s22
    %p31 = scmp.eq.s32.totalorder %s14, 1
    %p32 = por %p30, %p31
    %p33 = scmp.ne.s32.totalorder %s22, %s23
    %p34 = scmp.eq.s32.totalorder %s14, 0
    %p35 = por %p33, %p34
    %p36 = scmp.ne.s32.totalorder %s22, %s23
    %p37 = scmp.eq.s32.totalorder %s15, 1
    %p38 = por %p36, %p37
    %p40 = scmp.ne.s32.totalorder %s23, %s39
    %p41 = scmp.eq.s32.totalorder %s15, 0
    %p42 = por %p40, %p41
    %s44 = sadd.s32 %s43, 1
    %p47 = scmp.eq.s32.totalorder %s9, 1
    %p48 = scmp.ne.s32.totalorder %s43, %s45
    %p49 = scmp.eq.s32.totalorder %s9, 0
    %p50 = por %p48, %p49
    %p51 = scmp.ne.s32.totalorder %s43, %s45
    %p52 = scmp.eq.s32.totalorder %s14, 1
    %p53 = por %p51, %p52
    %p54 = scmp.ne.s32.totalorder %s45, %s46
    %p55 = scmp.eq.s32.totalorder %s14, 0
    %p56 = por %p54, %p55
    %p57 = scmp.ne.s32.totalorder %s45, %s46
    %p58 = scmp.eq.s32.totalorder %s15, 1
    %p59 = por %p57, %p58
    %p61 = scmp.ne.s32.totalorder %s46, %s60
    %p62 = scmp.eq.s32.totalorder %s15, 0
    %p63 = por %p61, %p62
    %s65 = sadd.s32 %s64, 1
    %p68 = scmp.eq.s32.totalorder %s9, 1
    %p69 = scmp.ne.s32.totalorder %s64, %s66
    %p70 = scmp.eq.s32.totalorder %s9, 0
    %p71 = por %p69, %p70
    %p72 = scmp.ne.s32.totalorder %s64, %s66
    %p73 = scmp.eq.s32.totalorder %s14, 1
    %p74 = por %p72, %p73
    %p75 = scmp.ne.s32.totalorder %s66, %s67
    %p76 = scmp.eq.s32.totalorder %s14, 0
    %p77 = por %p75, %p76
    %p78 = scmp.ne.s32.totalorder %s66, %s67
    %p79 = scmp.eq.s32.totalorder %s15, 1
    %p80 = por %p78, %p79
    %p82 = scmp.ne.s32.totalorder %s67, %s81
    %p83 = scmp.eq.s32.totalorder %s15, 0
    %p84 = por %p82, %p83
    %s85 = ssub.s32 %s9, %s16
    %p86 = scmp.eq.s32.totalorder %s85, 0
    %s88 = sadd.s32 %s87, 1
    %s89 = scalar_select %p86, %s87, %s88
    %p92 = pneg %p86
    %p93 = scmp.eq.s32.totalorder %s9, 1
    %p94 = por %p92, %p93
    %p95 = scmp.ne.s32.totalorder %s87, %s90
    %p96 = scmp.eq.s32.totalorder %s9, 0
    %p97 = por %p95, %p96
    %p98 = scmp.ne.s32.totalorder %s87, %s90
    %p99 = scmp.eq.s32.totalorder %s14, 1
    %p100 = por %p98, %p99
    %p101 = scmp.ne.s32.totalorder %s90, %s91
    %p102 = scmp.eq.s32.totalorder %s14, 0
    %p103 = por %p101, %p102
    %p104 = scmp.ne.s32.totalorder %s90, %s91
    %p105 = scmp.eq.s32.totalorder %s15, 1
    %p106 = por %p104, %p105
    %p108 = scmp.ne.s32.totalorder %s91, %s107
    %p109 = scmp.eq.s32.totalorder %s15, 0
    %p110 = por %p108, %p109
    %p111 = scmp.le.s32.totalorder 1, %s9
    %p112 = scmp.lt.s32.totalorder %s9, 3
    %p113 = pnand %p111, %p112
    %p114 = pneg %p113
    // Predicated region
    $region9: #{discriminator_block.3} parent=5 // pred_check
      _
    $region10: #{discriminator_block.3} parent=5 // pred_check_branch
      %116 = sbr.rel (%p113) target = $region12
    $region11: #{discriminator_block.3} parent=5 // pred_region
      %s117 = ssub.s32 %s9, 1
      // Predicated region
      $region13: #{discriminator_block.3} parent=11 // pred_check
        %p118 = pneg %p56
      $region14: #{discriminator_block.3} parent=11 // pred_check_branch
        %120 = sbr.rel (%p118) target = $region16
      $region15: #{discriminator_block.3} parent=11 // pred_region
        _
      $region16: #{discriminator_block.3} parent=11 // pred_fallthru
        _
      // Predicated region
      $region17: #{discriminator_block.3} parent=11 // pred_check
        %p121 = pneg %p77
      $region18: #{discriminator_block.3} parent=11 // pred_check_branch
        %123 = sbr.rel (%p121) target = $region20
      $region19: #{discriminator_block.3} parent=11 // pred_region
        _
      $region20: #{discriminator_block.3} parent=11 // pred_fallthru
        _
    $region12: #{discriminator_block.3} parent=5 // pred_fallthru
      _
    %p124 = scmp.lt.s32.totalorder %s9, 2
    // Predicated region
    $region21: #{discriminator_block.3} parent=5 // pred_check
      %p125 = pneg %p124
    $region22: #{discriminator_block.3} parent=5 // pred_check_branch
      %127 = sbr.rel (%p125) target = $region24
    $region23: #{discriminator_block.3} parent=5 // pred_region
      // Predicated region
      $region25: #{discriminator_block.3} parent=23 // pred_check
        %p128 = pneg %p29
      $region26: #{discriminator_block.3} parent=23 // pred_check_branch
        %130 = sbr.rel (%p128) target = $region28
      $region27: #{discriminator_block.3} parent=23 // pred_region
        %p131 = scmp.lt.s32.totalorder %s9, 1
        %s132 = scalar_select %p131, %s9, 1
        %s133 = smul.addr %s132, 7
        %s134 = smul.addr %s133, 8
        %s135 = scalar_lea.vmem %s0, %s134
      $region28: #{discriminator_block.3} parent=23 // pred_fallthru
        _
    $region24: #{discriminator_block.3} parent=5 // pred_fallthru
      _
    %p136 = scmp.le.s32.totalorder 1, %s9
    %p137 = scmp.lt.s32.totalorder %s9, 3
    %p138 = pnand %p136, %p137
    %p139 = pneg %p138
    // Predicated region
    $region29: #{discriminator_block.3} parent=5 // pred_check
      _
    $region30: #{discriminator_block.3} parent=5 // pred_check_branch
      %141 = sbr.rel (%p138) target = $region32
    $region31: #{discriminator_block.3} parent=5 // pred_region
      %s142 = ssub.s32 %s9, 1
      %p143 = scmp.lt.s32.totalorder %s14, 1
      %s144 = scalar_select %p143, %s14, 1
      %s145 = smul.addr %s144, 7
      %s146 = smul.addr %s145, 8
      %s147 = scalar_lea.vmem %s0, %s146
      %p148 = pneg %p35
      %p149 = pneg %p32
      %p150 = pneg %p56
      %p151 = pneg %p53
      %p152 = pneg %p77
      %p153 = pneg %p74
      %p154 = pneg %p103
      %p155 = pneg %p100
      %p156 = scmp.lt.s32.totalorder %s14, 1
      %s157 = scalar_select %p156, %s14, 1
      %s158 = smul.addr %s157, 7
      %s159 = smul.addr %s158, 8
      %s160 = scalar_lea.vmem %s3, %s159
      %p161 = scmp.lt.s32.totalorder %s14, 1
      %s162 = scalar_select %p161, %s14, 1
      %s163 = smul.addr %s162, 7
      %s164 = smul.addr %s163, 8
      %s165 = scalar_lea.vmem %s0, %s164
      %p166 = scmp.lt.s32.totalorder %s14, 1
      %s167 = scalar_select %p166, %s14, 1
      %s168 = smul.addr %s167, 7
      %s169 = smul.addr %s168, 8
      %s170 = scalar_lea.vmem %s3, %s169
      %v171 = vld [vmem:[%s165] sm:$0xff]
      %v172 = vld [vmem:[%s165 + $0x8] sm:$0xff]
      %v173 = vld [vmem:[%s165 + $0x10] sm:$0xff]
      %v174 = vld [vmem:[%s165 + $0x18] sm:$0xff]
      %v175 = vld [vmem:[%s165 + $0x20] sm:$0xff]
      %v176 = vld [vmem:[%s165 + $0x28] sm:$0xff]
      %v177 = vld [vmem:[%s165 + $0x30] sm:$0x1]
      %v178 = vld [vmem:[%s1] sm:$0x1]
      %v180 = vlaneseq
      %v181 = vshrl.u32 %v180, 7
      %v182 = vsub.s32 0, %v181
      %v183 = vrot.slane %v178, %v182
      %v185 = vmul.f32 %v171, %v183
      %v186 = vmul.f32 %v172, %v183
      %v187 = vmul.f32 %v173, %v183
      %v188 = vmul.f32 %v174, %v183
      %v189 = vmul.f32 %v175, %v183
      %v190 = vmul.f32 %v176, %v183
      %v191 = vmul.f32 %v177, %v183
      %v192 = vld [vmem:[%s2] sm:$0x1]
      %v194 = vlaneseq
      %v195 = vshrl.u32 %v194, 7
      %v196 = vsub.s32 0, %v195
      %v197 = vrot.slane %v192, %v196
      %v199 = vadd.f32 %v185, %v197
      %v200 = vadd.f32 %v186, %v197
      %v201 = vadd.f32 %v187, %v197
      %v202 = vadd.f32 %v188, %v197
      %v203 = vadd.f32 %v189, %v197
      %v204 = vadd.f32 %v190, %v197
      %v205 = vadd.f32 %v191, %v197
      %vm206 = vcmp.ge.f32.partialorder %v199, 0.0
      %vm207 = vcmp.ge.f32.partialorder %v200, 0.0
      %vm208 = vcmp.ge.f32.partialorder %v201, 0.0
      %vm209 = vcmp.ge.f32.partialorder %v202, 0.0
      %vm210 = vcmp.ge.f32.partialorder %v203, 0.0
      %vm211 = vcmp.ge.f32.partialorder %v204, 0.0
      %vm212 = vcmp.ge.f32.partialorder %v205, 0.0
      %v213 = vmul.f32 %v199, 0.01
      %v214 = vmul.f32 %v200, 0.01
      %v215 = vmul.f32 %v201, 0.01
      %v216 = vmul.f32 %v202, 0.01
      %v217 = vmul.f32 %v203, 0.01
      %v218 = vmul.f32 %v204, 0.01
      %v219 = vmul.f32 %v205, 0.01
      %v220 = vsel %vm206, %v199, %v213
      %v221 = vsel %vm207, %v200, %v214
      %v222 = vsel %vm208, %v201, %v215
      %v223 = vsel %vm209, %v202, %v216
      %v224 = vsel %vm210, %v203, %v217
      %v225 = vsel %vm211, %v204, %v218
      %v226 = vsel %vm212, %v205, %v219
      %227 = vst [vmem:[%s170] sm:$0xff] %v220
      %228 = vst [vmem:[%s170 + $0x8] sm:$0xff] %v221
      %229 = vst [vmem:[%s170 + $0x10] sm:$0xff] %v222
      %230 = vst [vmem:[%s170 + $0x18] sm:$0xff] %v223
      %231 = vst [vmem:[%s170 + $0x20] sm:$0xff] %v224
      %232 = vst [vmem:[%s170 + $0x28] sm:$0xff] %v225
      %233 = vst [vmem:[%s170 + $0x30] sm:$0x1] %v226
      %p234 = scmp.lt.s32.totalorder %s14, 1
      %s235 = scalar_select %p234, %s14, 1
      %s236 = smul.addr %s235, 7
      %s237 = smul.addr %s236, 8
      %s238 = scalar_lea.vmem %s3, %s237
      // Predicated region
      $region33: #{discriminator_block.3} parent=31 // pred_check
        %p239 = pneg %p100
      $region34: #{discriminator_block.3} parent=31 // pred_check_branch
        %241 = sbr.rel (%p239) target = $region36
      $region35: #{discriminator_block.3} parent=31 // pred_region
        _
      $region36: #{discriminator_block.3} parent=31 // pred_fallthru
        _
    $region32: #{discriminator_block.3} parent=5 // pred_fallthru
      _
    %p242 = scmp.le.s32.totalorder 2, %s9
    // Predicated region
    $region37: #{discriminator_block.3} parent=5 // pred_check
      %p243 = pneg %p242
    $region38: #{discriminator_block.3} parent=5 // pred_check_branch
      %245 = sbr.rel (%p243) target = $region40
    $region39: #{discriminator_block.3} parent=5 // pred_region
      %s246 = ssub.s32 %s9, 2
      // Predicated region
      $region41: #{discriminator_block.3} parent=39 // pred_check
        %p247 = pneg %p106
      $region42: #{discriminator_block.3} parent=39 // pred_check_branch
        %249 = sbr.rel (%p247) target = $region44
      $region43: #{discriminator_block.3} parent=39 // pred_region
        %p250 = scmp.lt.s32.totalorder %s15, 1
        %s251 = scalar_select %p250, %s15, 1
        %s252 = smul.addr %s251, 7
        %s253 = smul.addr %s252, 8
        %s254 = scalar_lea.vmem %s3, %s253
      $region44: #{discriminator_block.3} parent=39 // pred_fallthru
        _
    $region40: #{discriminator_block.3} parent=5 // pred_fallthru
      _
  $region6: #{discriminator_block.3} parent=0 // loop_footer
    %s13 = sadd.s32 1, %s9
  $region7: #{discriminator_block.3} parent=0 // loop_footer_branch
    %8 = sbr.rel target = $region3
  $region8: #{discriminator_block.3} parent=0 // loop_exit
    _

// kernel: discriminator_block.2
$region0: #{discriminator_block.2}
  #allocation0 [shape = 'u32[]', space=smem, size = 0x4, offset = 0x4, fixed_abs, tag = 'smem constant byte address 0x4 - core index']
  #allocation1 [shape = 'u32[144,128]{1,0:T(1,128)}', space=vmem, size = 0x12000, scoped, tag = 'internal scratch']
  %s0 = inlined_call_operand.vmem [shape: f32[2,32,8,4], index: 0, kind: input, shape index: {}]
  %s1 = inlined_call_operand.vmem [shape: f32[9,4,128], index: 1, kind: input, shape index: {}]
  %s2 = inlined_call_operand.vmem [shape: f32[2,49,128], index: 2, kind: output, shape index: {0}]
  %s3 = inlined_call_operand.vmem [shape: f32[1,128], index: 3, kind: output, shape index: {1}]
  %s4 = inlined_call_operand.vmem [shape: f32[1,128], index: 4, kind: output, shape index: {2}]
  %5 = xla_tuple %s2, %s3, %s4
  %s6 = sld [smem:[#allocation0]]
  $region61: #{discriminator_block.2} parent=0
    _
  %s8 = ssub.s32 1, %s6
  %s9 = scalar_select 0, %s8, %s6
  loop: start=0, step=1, limit=4
  $region2: #{discriminator_block.2} parent=0 // loop_pre_header
    _
  $region3: #{discriminator_block.2} parent=0 // loop_header
    %s11 = sphi 0, %s15
    %p12 = scmp.ge.s32.totalorder %s11, 4
    %s21 = sphi 0, %s23
    %s24 = sphi 0, %s21
    %s25 = sphi 0, %s24
    %s41 = sphi 0, %s25
    %s45 = sphi 0, %s45
    %s47 = sphi 0, %s45
    %s48 = sphi 0, %s47
    %s62 = sphi 0, %s48
    %s68 = sphi 0, %s70
    %s71 = sphi 0, %s68
    %s72 = sphi 0, %s71
    %s88 = sphi 0, %s72
    %s92 = sphi 0, %s92
    %s94 = sphi 0, %s92
    %s95 = sphi 0, %s94
    %s109 = sphi 0, %s95
    %s113 = sphi 0, %s113
    %s115 = sphi 0, %s113
    %s116 = sphi 0, %s115
    %s130 = sphi 0, %s116
  $region4: #{discriminator_block.2} parent=0 // loop_header_branch
    %14 = sbr.rel (%p12) target = $region8
  $region5: #{discriminator_block.2} parent=0 // loop_body
    %s16 = ssub.s32 %s11, 1
    %s17 = ssub.s32 %s11, 2
    %s18 = sadd.s32 %s11, 1
    %s19 = ssub.s32 %s11, %s18
    %p20 = scmp.eq.s32.totalorder %s19, 0
    %s22 = sadd.s32 %s21, 1
    %s23 = scalar_select %p20, %s21, %s22
    %p26 = pneg %p20
    %p27 = scmp.eq.s32.totalorder %s11, 1
    %p28 = por %p26, %p27
    %p29 = scmp.ne.s32.totalorder %s21, %s24
    %p30 = scmp.eq.s32.totalorder %s11, 0
    %p31 = por %p29, %p30
    %p32 = scmp.ne.s32.totalorder %s21, %s24
    %p33 = scmp.eq.s32.totalorder %s16, 1
    %p34 = por %p32, %p33
    %p35 = scmp.ne.s32.totalorder %s24, %s25
    %p36 = scmp.eq.s32.totalorder %s16, 0
    %p37 = por %p35, %p36
    %p38 = scmp.ne.s32.totalorder %s24, %s25
    %p39 = scmp.eq.s32.totalorder %s17, 1
    %p40 = por %p38, %p39
    %p42 = scmp.ne.s32.totalorder %s25, %s41
    %p43 = scmp.eq.s32.totalorder %s17, 0
    %p44 = por %p42, %p43
    %s46 = sadd.s32 %s45, 1
    %p49 = scmp.eq.s32.totalorder %s11, 1
    %p50 = scmp.ne.s32.totalorder %s45, %s47
    %p51 = scmp.eq.s32.totalorder %s11, 0
    %p52 = por %p50, %p51
    %p53 = scmp.ne.s32.totalorder %s45, %s47
    %p54 = scmp.eq.s32.totalorder %s16, 1
    %p55 = por %p53, %p54
    %p56 = scmp.ne.s32.totalorder %s47, %s48
    %p57 = scmp.eq.s32.totalorder %s16, 0
    %p58 = por %p56, %p57
    %p59 = scmp.ne.s32.totalorder %s47, %s48
    %p60 = scmp.eq.s32.totalorder %s17, 1
    %p61 = por %p59, %p60
    %p63 = scmp.ne.s32.totalorder %s48, %s62
    %p64 = scmp.eq.s32.totalorder %s17, 0
    %p65 = por %p63, %p64
    %s66 = ssub.s32 %s11, %s18
    %p67 = scmp.eq.s32.totalorder %s66, 0
    %s69 = sadd.s32 %s68, 1
    %s70 = scalar_select %p67, %s68, %s69
    %p73 = pneg %p67
    %p74 = scmp.eq.s32.totalorder %s11, 1
    %p75 = por %p73, %p74
    %p76 = scmp.ne.s32.totalorder %s68, %s71
    %p77 = scmp.eq.s32.totalorder %s11, 0
    %p78 = por %p76, %p77
    %p79 = scmp.ne.s32.totalorder %s68, %s71
    %p80 = scmp.eq.s32.totalorder %s16, 1
    %p81 = por %p79, %p80
    %p82 = scmp.ne.s32.totalorder %s71, %s72
    %p83 = scmp.eq.s32.totalorder %s16, 0
    %p84 = por %p82, %p83
    %p85 = scmp.ne.s32.totalorder %s71, %s72
    %p86 = scmp.eq.s32.totalorder %s17, 1
    %p87 = por %p85, %p86
    %p89 = scmp.ne.s32.totalorder %s72, %s88
    %p90 = scmp.eq.s32.totalorder %s17, 0
    %p91 = por %p89, %p90
    %s93 = sadd.s32 %s92, 1
    %p96 = scmp.eq.s32.totalorder %s11, 1
    %p97 = scmp.ne.s32.totalorder %s92, %s94
    %p98 = scmp.eq.s32.totalorder %s11, 0
    %p99 = por %p97, %p98
    %p100 = scmp.ne.s32.totalorder %s92, %s94
    %p101 = scmp.eq.s32.totalorder %s16, 1
    %p102 = por %p100, %p101
    %p103 = scmp.ne.s32.totalorder %s94, %s95
    %p104 = scmp.eq.s32.totalorder %s16, 0
    %p105 = por %p103, %p104
    %p106 = scmp.ne.s32.totalorder %s94, %s95
    %p107 = scmp.eq.s32.totalorder %s17, 1
    %p108 = por %p106, %p107
    %p110 = scmp.ne.s32.totalorder %s95, %s109
    %p111 = scmp.eq.s32.totalorder %s17, 0
    %p112 = por %p110, %p111
    %s114 = sadd.s32 %s113, 1
    %p117 = scmp.eq.s32.totalorder %s11, 1
    %p118 = scmp.ne.s32.totalorder %s113, %s115
    %p119 = scmp.eq.s32.totalorder %s11, 0
    %p120 = por %p118, %p119
    %p121 = scmp.ne.s32.totalorder %s113, %s115
    %p122 = scmp.eq.s32.totalorder %s16, 1
    %p123 = por %p121, %p122
    %p124 = scmp.ne.s32.totalorder %s115, %s116
    %p125 = scmp.eq.s32.totalorder %s16, 0
    %p126 = por %p124, %p125
    %p127 = scmp.ne.s32.totalorder %s115, %s116
    %p128 = scmp.eq.s32.totalorder %s17, 1
    %p129 = por %p127, %p128
    %p131 = scmp.ne.s32.totalorder %s116, %s130
    %p132 = scmp.eq.s32.totalorder %s17, 0
    %p133 = por %p131, %p132
    %p134 = scmp.le.s32.totalorder 1, %s11
    %p135 = scmp.lt.s32.totalorder %s11, 3
    %p136 = pnand %p134, %p135
    %p137 = pneg %p136
    // Predicated region
    $region9: #{discriminator_block.2} parent=5 // pred_check
      _
    $region10: #{discriminator_block.2} parent=5 // pred_check_branch
      %139 = sbr.rel (%p136) target = $region12
    $region11: #{discriminator_block.2} parent=5 // pred_region
      %s140 = ssub.s32 %s11, 1
      // Predicated region
      $region13: #{discriminator_block.2} parent=11 // pred_check
        %p141 = pneg %p58
      $region14: #{discriminator_block.2} parent=11 // pred_check_branch
        %143 = sbr.rel (%p141) target = $region16
      $region15: #{discriminator_block.2} parent=11 // pred_region
        _
      $region16: #{discriminator_block.2} parent=11 // pred_fallthru
        _
    $region12: #{discriminator_block.2} parent=5 // pred_fallthru
      _
    %p144 = scmp.lt.s32.totalorder %s11, 2
    // Predicated region
    $region17: #{discriminator_block.2} parent=5 // pred_check
      %p145 = pneg %p144
    $region18: #{discriminator_block.2} parent=5 // pred_check_branch
      %147 = sbr.rel (%p145) target = $region20
    $region19: #{discriminator_block.2} parent=5 // pred_region
      // Predicated region
      $region21: #{discriminator_block.2} parent=19 // pred_check
        %p148 = pneg %p31
      $region22: #{discriminator_block.2} parent=19 // pred_check_branch
        %150 = sbr.rel (%p148) target = $region24
      $region23: #{discriminator_block.2} parent=19 // pred_region
        %p151 = scmp.lt.s32.totalorder %s11, 1
        %s152 = scalar_select %p151, %s11, 1
        %s153 = smul.addr %s152, 32
        %s154 = smul.addr %s153, 8
        %s155 = scalar_lea.vmem %s0, %s154
      $region24: #{discriminator_block.2} parent=19 // pred_fallthru
        _
    $region20: #{discriminator_block.2} parent=5 // pred_fallthru
      _
    %p156 = scmp.le.s32.totalorder 1, %s11
    %p157 = scmp.lt.s32.totalorder %s11, 3
    %p158 = pnand %p156, %p157
    %p159 = pneg %p158
    // Predicated region
    $region25: #{discriminator_block.2} parent=5 // pred_check
      _
    $region26: #{discriminator_block.2} parent=5 // pred_check_branch
      %161 = sbr.rel (%p158) target = $region28
    $region27: #{discriminator_block.2} parent=5 // pred_region
      %s162 = ssub.s32 %s11, 1
      %p163 = scmp.lt.s32.totalorder %s16, 1
      %s164 = scalar_select %p163, %s16, 1
      %s165 = smul.addr %s164, 32
      %s166 = smul.addr %s165, 8
      %s167 = scalar_lea.vmem %s0, %s166
      %p168 = pneg %p37
      %p169 = pneg %p34
      %p170 = pneg %p58
      %p171 = pneg %p55
      %p172 = pneg %p84
      %p173 = pneg %p81
      %p174 = scmp.lt.s32.totalorder %s16, 1
      %s175 = scalar_select %p174, %s16, 1
      %s176 = smul.addr %s175, 7
      %s177 = smul.addr %s176, 8
      %s178 = scalar_lea.vmem %s2, %s177
      %p179 = pneg %p105
      %p180 = pneg %p102
      %p181 = pneg %p126
      %p182 = pneg %p123
      %p183 = scmp.lt.s32.totalorder %s16, 1
      %s184 = scalar_select %p183, %s16, 1
      %s185 = smul.addr %s184, 32
      %s186 = smul.addr %s185, 8
      %s187 = scalar_lea.vmem %s0, %s186
      %p188 = scmp.lt.s32.totalorder %s16, 1
      %s189 = scalar_select %p188, %s16, 1
      %s190 = smul.addr %s189, 7
      %s191 = smul.addr %s190, 8
      %s192 = scalar_lea.vmem %s2, %s191
      %v193 = vld [vmem:[%s187] sm:$0x7f]
      %v194 = vld [vmem:[%s187 + $0x8] sm:$0x7f]
      %v195 = vld [vmem:[%s187 + $0x10] sm:$0x7f]
      %v196 = vld [vmem:[%s187 + $0x18] sm:$0x7f]
      %v197 = vld [vmem:[%s187 + $0x20] sm:$0x7f]
      %v198 = vld [vmem:[%s187 + $0x28] sm:$0x7f]
      %v199 = vld [vmem:[%s187 + $0x30] sm:$0x7f]
      %v207 = vcombine.high %v193, %v193
      %v209 = vunpack.c.l.s4 1966171168
      %v210 = vunpack.c.0.s8 %v209
      %v211 = vlaneseq
      %v212 = vshrl.u32 %v211, 7
      %v213 = vsub.s32 %v210, %v212
      %v214 = vrot.slane %v193, %v213
      %v216 = vunpack.c.l.s4 1966171168
      %v217 = vunpack.c.0.s8 %v216
      %v218 = vlaneseq
      %v219 = vshrl.u32 %v218, 7
      %v220 = vsub.s32 %v217, %v219
      %v221 = vrot.slane %v207, %v220
      %v222 = vcombine.high %v214, %v214
      %v223 = vcombine.high %v221, %v221
      %v225 = vunpack.c.l.s4 1966171168
      %v226 = vunpack.c.0.s8 %v225
      %v227 = vlaneseq
      %v228 = vshrl.u32 %v227, 7
      %v229 = vsub.s32 %v226, %v228
      %v230 = vrot.slane %v214, %v229
      %v232 = vunpack.c.l.s4 1966171168
      %v233 = vunpack.c.0.s8 %v232
      %v234 = vlaneseq
      %v235 = vshrl.u32 %v234, 7
      %v236 = vsub.s32 %v233, %v235
      %v237 = vrot.slane %v221, %v236
      %v239 = vunpack.c.l.s4 1966171168
      %v240 = vunpack.c.0.s8 %v239
      %v241 = vlaneseq
      %v242 = vshrl.u32 %v241, 7
      %v243 = vsub.s32 %v240, %v242
      %v244 = vrot.slane %v222, %v243
      %v246 = vunpack.c.l.s4 1966171168
      %v247 = vunpack.c.0.s8 %v246
      %v248 = vlaneseq
      %v249 = vshrl.u32 %v248, 7
      %v250 = vsub.s32 %v247, %v249
      %v251 = vrot.slane %v223, %v250
      %v252 = vcombine.high %v230, %v230
      %v253 = vcombine.high %v237, %v237
      %v254 = vcombine.high %v244, %v244
      %v255 = vcombine.high %v194, %v194
      %v257 = vunpack.c.l.s4 1966171168
      %v258 = vunpack.c.0.s8 %v257
      %v259 = vlaneseq
      %v260 = vshrl.u32 %v259, 7
      %v261 = vsub.s32 %v258, %v260
      %v262 = vrot.slane %v194, %v261
      %v264 = vunpack.c.l.s4 1966171168
      %v265 = vunpack.c.0.s8 %v264
      %v266 = vlaneseq
      %v267 = vshrl.u32 %v266, 7
      %v268 = vsub.s32 %v265, %v267
      %v269 = vrot.slane %v255, %v268
      %v270 = vcombine.high %v262, %v262
      %v271 = vcombine.high %v269, %v269
      %v273 = vunpack.c.l.s4 1966171168
      %v274 = vunpack.c.0.s8 %v273
      %v275 = vlaneseq
      %v276 = vshrl.u32 %v275, 7
      %v277 = vsub.s32 %v274, %v276
      %v278 = vrot.slane %v262, %v277
      %v280 = vunpack.c.l.s4 1966171168
      %v281 = vunpack.c.0.s8 %v280
      %v282 = vlaneseq
      %v283 = vshrl.u32 %v282, 7
      %v284 = vsub.s32 %v281, %v283
      %v285 = vrot.slane %v269, %v284
      %v287 = vunpack.c.l.s4 1966171168
      %v288 = vunpack.c.0.s8 %v287
      %v289 = vlaneseq
      %v290 = vshrl.u32 %v289, 7
      %v291 = vsub.s32 %v288, %v290
      %v292 = vrot.slane %v270, %v291
      %v294 = vunpack.c.l.s4 1966171168
      %v295 = vunpack.c.0.s8 %v294
      %v296 = vlaneseq
      %v297 = vshrl.u32 %v296, 7
      %v298 = vsub.s32 %v295, %v297
      %v299 = vrot.slane %v271, %v298
      %v300 = vcombine.high %v278, %v278
      %v301 = vcombine.high %v285, %v285
      %v302 = vcombine.high %v292, %v292
      %v303 = vcombine.high %v195, %v195
      %v305 = vunpack.c.l.s4 1966171168
      %v306 = vunpack.c.0.s8 %v305
      %v307 = vlaneseq
      %v308 = vshrl.u32 %v307, 7
      %v309 = vsub.s32 %v306, %v308
      %v310 = vrot.slane %v195, %v309
      %v312 = vunpack.c.l.s4 1966171168
      %v313 = vunpack.c.0.s8 %v312
      %v314 = vlaneseq
      %v315 = vshrl.u32 %v314, 7
      %v316 = vsub.s32 %v313, %v315
      %v317 = vrot.slane %v303, %v316
      %v318 = vcombine.high %v310, %v310
      %v319 = vcombine.high %v317, %v317
      %v321 = vunpack.c.l.s4 1966171168
      %v322 = vunpack.c.0.s8 %v321
      %v323 = vlaneseq
      %v324 = vshrl.u32 %v323, 7
      %v325 = vsub.s32 %v322, %v324
      %v326 = vrot.slane %v310, %v325
      %v328 = vunpack.c.l.s4 1966171168
      %v329 = vunpack.c.0.s8 %v328
      %v330 = vlaneseq
      %v331 = vshrl.u32 %v330, 7
      %v332 = vsub.s32 %v329, %v331
      %v333 = vrot.slane %v317, %v332
      %v335 = vunpack.c.l.s4 1966171168
      %v336 = vunpack.c.0.s8 %v335
      %v337 = vlaneseq
      %v338 = vshrl.u32 %v337, 7
      %v339 = vsub.s32 %v336, %v338
      %v340 = vrot.slane %v318, %v339
      %v342 = vunpack.c.l.s4 1966171168
      %v343 = vunpack.c.0.s8 %v342
      %v344 = vlaneseq
      %v345 = vshrl.u32 %v344, 7
      %v346 = vsub.s32 %v343, %v345
      %v347 = vrot.slane %v319, %v346
      %v348 = vcombine.high %v326, %v326
      %v349 = vcombine.high %v333, %v333
      %v350 = vcombine.high %v340, %v340
      %v351 = vcombine.high %v196, %v196
      %v353 = vunpack.c.l.s4 1966171168
      %v354 = vunpack.c.0.s8 %v353
      %v355 = vlaneseq
      %v356 = vshrl.u32 %v355, 7
      %v357 = vsub.s32 %v354, %v356
      %v358 = vrot.slane %v196, %v357
      %v360 = vunpack.c.l.s4 1966171168
      %v361 = vunpack.c.0.s8 %v360
      %v362 = vlaneseq
      %v363 = vshrl.u32 %v362, 7
      %v364 = vsub.s32 %v361, %v363
      %v365 = vrot.slane %v351, %v364
      %v366 = vcombine.high %v358, %v358
      %v367 = vcombine.high %v365, %v365
      %v369 = vunpack.c.l.s4 1966171168
      %v370 = vunpack.c.0.s8 %v369
      %v371 = vlaneseq
      %v372 = vshrl.u32 %v371, 7
      %v373 = vsub.s32 %v370, %v372
      %v374 = vrot.slane %v358, %v373
      %v376 = vunpack.c.l.s4 1966171168
      %v377 = vunpack.c.0.s8 %v376
      %v378 = vlaneseq
      %v379 = vshrl.u32 %v378, 7
      %v380 = vsub.s32 %v377, %v379
      %v381 = vrot.slane %v365, %v380
      %v383 = vunpack.c.l.s4 1966171168
      %v384 = vunpack.c.0.s8 %v383
      %v385 = vlaneseq
      %v386 = vshrl.u32 %v385, 7
      %v387 = vsub.s32 %v384, %v386
      %v388 = vrot.slane %v366, %v387
      %v390 = vunpack.c.l.s4 1966171168
      %v391 = vunpack.c.0.s8 %v390
      %v392 = vlaneseq
      %v393 = vshrl.u32 %v392, 7
      %v394 = vsub.s32 %v391, %v393
      %v395 = vrot.slane %v367, %v394
      %v396 = vcombine.high %v374, %v374
      %v397 = vcombine.high %v381, %v381
      %v398 = vcombine.high %v388, %v388
      %v399 = vcombine.high %v197, %v197
      %v401 = vunpack.c.l.s4 1966171168
      %v402 = vunpack.c.0.s8 %v401
      %v403 = vlaneseq
      %v404 = vshrl.u32 %v403, 7
      %v405 = vsub.s32 %v402, %v404
      %v406 = vrot.slane %v197, %v405
      %v408 = vunpack.c.l.s4 1966171168
      %v409 = vunpack.c.0.s8 %v408
      %v410 = vlaneseq
      %v411 = vshrl.u32 %v410, 7
      %v412 = vsub.s32 %v409, %v411
      %v413 = vrot.slane %v399, %v412
      %v414 = vcombine.high %v406, %v406
      %v415 = vcombine.high %v413, %v413
      %v417 = vunpack.c.l.s4 1966171168
      %v418 = vunpack.c.0.s8 %v417
      %v419 = vlaneseq
      %v420 = vshrl.u32 %v419, 7
      %v421 = vsub.s32 %v418, %v420
      %v422 = vrot.slane %v406, %v421
      %v424 = vunpack.c.l.s4 1966171168
      %v425 = vunpack.c.0.s8 %v424
      %v426 = vlaneseq
      %v427 = vshrl.u32 %v426, 7
      %v428 = vsub.s32 %v425, %v427
      %v429 = vrot.slane %v413, %v428
      %v431 = vunpack.c.l.s4 1966171168
      %v432 = vunpack.c.0.s8 %v431
      %v433 = vlaneseq
      %v434 = vshrl.u32 %v433, 7
      %v435 = vsub.s32 %v432, %v434
      %v436 = vrot.slane %v414, %v435
      %v438 = vunpack.c.l.s4 1966171168
      %v439 = vunpack.c.0.s8 %v438
      %v440 = vlaneseq
      %v441 = vshrl.u32 %v440, 7
      %v442 = vsub.s32 %v439, %v441
      %v443 = vrot.slane %v415, %v442
      %v444 = vcombine.high %v422, %v422
      %v445 = vcombine.high %v429, %v429
      %v446 = vcombine.high %v436, %v436
      %v447 = vcombine.high %v198, %v198
      %v449 = vunpack.c.l.s4 1966171168
      %v450 = vunpack.c.0.s8 %v449
      %v451 = vlaneseq
      %v452 = vshrl.u32 %v451, 7
      %v453 = vsub.s32 %v450, %v452
      %v454 = vrot.slane %v198, %v453
      %v456 = vunpack.c.l.s4 1966171168
      %v457 = vunpack.c.0.s8 %v456
      %v458 = vlaneseq
      %v459 = vshrl.u32 %v458, 7
      %v460 = vsub.s32 %v457, %v459
      %v461 = vrot.slane %v447, %v460
      %v462 = vcombine.high %v454, %v454
      %v463 = vcombine.high %v461, %v461
      %v465 = vunpack.c.l.s4 1966171168
      %v466 = vunpack.c.0.s8 %v465
      %v467 = vlaneseq
      %v468 = vshrl.u32 %v467, 7
      %v469 = vsub.s32 %v466, %v468
      %v470 = vrot.slane %v454, %v469
      %v472 = vunpack.c.l.s4 1966171168
      %v473 = vunpack.c.0.s8 %v472
      %v474 = vlaneseq
      %v475 = vshrl.u32 %v474, 7
      %v476 = vsub.s32 %v473, %v475
      %v477 = vrot.slane %v461, %v476
      %v479 = vunpack.c.l.s4 1966171168
      %v480 = vunpack.c.0.s8 %v479
      %v481 = vlaneseq
      %v482 = vshrl.u32 %v481, 7
      %v483 = vsub.s32 %v480, %v482
      %v484 = vrot.slane %v462, %v483
      %v486 = vunpack.c.l.s4 1966171168
      %v487 = vunpack.c.0.s8 %v486
      %v488 = vlaneseq
      %v489 = vshrl.u32 %v488, 7
      %v490 = vsub.s32 %v487, %v489
      %v491 = vrot.slane %v463, %v490
      %v492 = vcombine.high %v470, %v470
      %v493 = vcombine.high %v477, %v477
      %v494 = vcombine.high %v484, %v484
      %v495 = vcombine.high %v199, %v199
      %v497 = vunpack.c.l.s4 1966171168
      %v498 = vunpack.c.0.s8 %v497
      %v499 = vlaneseq
      %v500 = vshrl.u32 %v499, 7
      %v501 = vsub.s32 %v498, %v500
      %v502 = vrot.slane %v199, %v501
      %v504 = vunpack.c.l.s4 1966171168
      %v505 = vunpack.c.0.s8 %v504
      %v506 = vlaneseq
      %v507 = vshrl.u32 %v506, 7
      %v508 = vsub.s32 %v505, %v507
      %v509 = vrot.slane %v495, %v508
      %v510 = vcombine.high %v502, %v502
      %v511 = vcombine.high %v509, %v509
      %v513 = vunpack.c.l.s4 1966171168
      %v514 = vunpack.c.0.s8 %v513
      %v515 = vlaneseq
      %v516 = vshrl.u32 %v515, 7
      %v517 = vsub.s32 %v514, %v516
      %v518 = vrot.slane %v502, %v517
      %v520 = vunpack.c.l.s4 1966171168
      %v521 = vunpack.c.0.s8 %v520
      %v522 = vlaneseq
      %v523 = vshrl.u32 %v522, 7
      %v524 = vsub.s32 %v521, %v523
      %v525 = vrot.slane %v509, %v524
      %v527 = vunpack.c.l.s4 1966171168
      %v528 = vunpack.c.0.s8 %v527
      %v529 = vlaneseq
      %v530 = vshrl.u32 %v529, 7
      %v531 = vsub.s32 %v528, %v530
      %v532 = vrot.slane %v510, %v531
      %v534 = vunpack.c.l.s4 1966171168
      %v535 = vunpack.c.0.s8 %v534
      %v536 = vlaneseq
      %v537 = vshrl.u32 %v536, 7
      %v538 = vsub.s32 %v535, %v537
      %v539 = vrot.slane %v511, %v538
      %v540 = vcombine.high %v518, %v518
      %v541 = vcombine.high %v525, %v525
      %v542 = vcombine.high %v532, %v532
      %v543 = vld [vmem:[%s1] sm:$0xf]
      %s544 = scalar_lea.vmem %s187, 64
      %v545 = vld [vmem:[%s544] sm:$0x7f]
      %v546 = vld [vmem:[%s544 + $0x8] sm:$0x7f]
      %v547 = vld [vmem:[%s544 + $0x10] sm:$0x7f]
      %v548 = vld [vmem:[%s544 + $0x18] sm:$0x7f]
      %v549 = vld [vmem:[%s544 + $0x20] sm:$0x7f]
      %v550 = vld [vmem:[%s544 + $0x28] sm:$0x7f]
      %v551 = vld [vmem:[%s544 + $0x30] sm:$0x7f]
      %v559 = vcombine.high %v545, %v545
      %v561 = vunpack.c.l.s4 1966171168
      %v562 = vunpack.c.0.s8 %v561
      %v563 = vlaneseq
      %v564 = vshrl.u32 %v563, 7
      %v565 = vsub.s32 %v562, %v564
      %v566 = vrot.slane %v545, %v565
      %v568 = vunpack.c.l.s4 1966171168
      %v569 = vunpack.c.0.s8 %v568
      %v570 = vlaneseq
      %v571 = vshrl.u32 %v570, 7
      %v572 = vsub.s32 %v569, %v571
      %v573 = vrot.slane %v559, %v572
      %v574 = vcombine.high %v566, %v566
      %v575 = vcombine.high %v573, %v573
      %v577 = vunpack.c.l.s4 1966171168
      %v578 = vunpack.c.0.s8 %v577
      %v579 = vlaneseq
      %v580 = vshrl.u32 %v579, 7
      %v581 = vsub.s32 %v578, %v580
      %v582 = vrot.slane %v566, %v581
      %v584 = vunpack.c.l.s4 1966171168
      %v585 = vunpack.c.0.s8 %v584
      %v586 = vlaneseq
      %v587 = vshrl.u32 %v586, 7
      %v588 = vsub.s32 %v585, %v587
      %v589 = vrot.slane %v573, %v588
      %v591 = vunpack.c.l.s4 1966171168
      %v592 = vunpack.c.0.s8 %v591
      %v593 = vlaneseq
      %v594 = vshrl.u32 %v593, 7
      %v595 = vsub.s32 %v592, %v594
      %v596 = vrot.slane %v574, %v595
      %v598 = vunpack.c.l.s4 1966171168
      %v599 = vunpack.c.0.s8 %v598
      %v600 = vlaneseq
      %v601 = vshrl.u32 %v600, 7
      %v602 = vsub.s32 %v599, %v601
      %v603 = vrot.slane %v575, %v602
      %v604 = vcombine.high %v582, %v582
      %v605 = vcombine.high %v589, %v589
      %v606 = vcombine.high %v596, %v596
      %v607 = vcombine.high %v546, %v546
      %v609 = vunpack.c.l.s4 1966171168
      %v610 = vunpack.c.0.s8 %v609
      %v611 = vlaneseq
      %v612 = vshrl.u32 %v611, 7
      %v613 = vsub.s32 %v610, %v612
      %v614 = vrot.slane %v546, %v613
      %v616 = vunpack.c.l.s4 1966171168
      %v617 = vunpack.c.0.s8 %v616
      %v618 = vlaneseq
      %v619 = vshrl.u32 %v618, 7
      %v620 = vsub.s32 %v617, %v619
      %v621 = vrot.slane %v607, %v620
      %v622 = vcombine.high %v614, %v614
      %v623 = vcombine.high %v621, %v621
      %v625 = vunpack.c.l.s4 1966171168
      %v626 = vunpack.c.0.s8 %v625
      %v627 = vlaneseq
      %v628 = vshrl.u32 %v627, 7
      %v629 = vsub.s32 %v626, %v628
      %v630 = vrot.slane %v614, %v629
      %v632 = vunpack.c.l.s4 1966171168
      %v633 = vunpack.c.0.s8 %v632
      %v634 = vlaneseq
      %v635 = vshrl.u32 %v634, 7
      %v636 = vsub.s32 %v633, %v635
      %v637 = vrot.slane %v621, %v636
      %v639 = vunpack.c.l.s4 1966171168
      %v640 = vunpack.c.0.s8 %v639
      %v641 = vlaneseq
      %v642 = vshrl.u32 %v641, 7
      %v643 = vsub.s32 %v640, %v642
      %v644 = vrot.slane %v622, %v643
      %v646 = vunpack.c.l.s4 1966171168
      %v647 = vunpack.c.0.s8 %v646
      %v648 = vlaneseq
      %v649 = vshrl.u32 %v648, 7
      %v650 = vsub.s32 %v647, %v649
      %v651 = vrot.slane %v623, %v650
      %v652 = vcombine.high %v630, %v630
      %v653 = vcombine.high %v637, %v637
      %v654 = vcombine.high %v644, %v644
      %v655 = vcombine.high %v547, %v547
      %v657 = vunpack.c.l.s4 1966171168
      %v658 = vunpack.c.0.s8 %v657
      %v659 = vlaneseq
      %v660 = vshrl.u32 %v659, 7
      %v661 = vsub.s32 %v658, %v660
      %v662 = vrot.slane %v547, %v661
      %v664 = vunpack.c.l.s4 1966171168
      %v665 = vunpack.c.0.s8 %v664
      %v666 = vlaneseq
      %v667 = vshrl.u32 %v666, 7
      %v668 = vsub.s32 %v665, %v667
      %v669 = vrot.slane %v655, %v668
      %v670 = vcombine.high %v662, %v662
      %v671 = vcombine.high %v669, %v669
      %v673 = vunpack.c.l.s4 1966171168
      %v674 = vunpack.c.0.s8 %v673
      %v675 = vlaneseq
      %v676 = vshrl.u32 %v675, 7
      %v677 = vsub.s32 %v674, %v676
      %v678 = vrot.slane %v662, %v677
      %v680 = vunpack.c.l.s4 1966171168
      %v681 = vunpack.c.0.s8 %v680
      %v682 = vlaneseq
      %v683 = vshrl.u32 %v682, 7
      %v684 = vsub.s32 %v681, %v683
      %v685 = vrot.slane %v669, %v684
      %v687 = vunpack.c.l.s4 1966171168
      %v688 = vunpack.c.0.s8 %v687
      %v689 = vlaneseq
      %v690 = vshrl.u32 %v689, 7
      %v691 = vsub.s32 %v688, %v690
      %v692 = vrot.slane %v670, %v691
      %v694 = vunpack.c.l.s4 1966171168
      %v695 = vunpack.c.0.s8 %v694
      %v696 = vlaneseq
      %v697 = vshrl.u32 %v696, 7
      %v698 = vsub.s32 %v695, %v697
      %v699 = vrot.slane %v671, %v698
      %v700 = vcombine.high %v678, %v678
      %v701 = vcombine.high %v685, %v685
      %v702 = vcombine.high %v692, %v692
      %v703 = vcombine.high %v548, %v548
      %v705 = vunpack.c.l.s4 1966171168
      %v706 = vunpack.c.0.s8 %v705
      %v707 = vlaneseq
      %v708 = vshrl.u32 %v707, 7
      %v709 = vsub.s32 %v706, %v708
      %v710 = vrot.slane %v548, %v709
      %v712 = vunpack.c.l.s4 1966171168
      %v713 = vunpack.c.0.s8 %v712
      %v714 = vlaneseq
      %v715 = vshrl.u32 %v714, 7
      %v716 = vsub.s32 %v713, %v715
      %v717 = vrot.slane %v703, %v716
      %v718 = vcombine.high %v710, %v710
      %v719 = vcombine.high %v717, %v717
      %v721 = vunpack.c.l.s4 1966171168
      %v722 = vunpack.c.0.s8 %v721
      %v723 = vlaneseq
      %v724 = vshrl.u32 %v723, 7
      %v725 = vsub.s32 %v722, %v724
      %v726 = vrot.slane %v710, %v725
      %v728 = vunpack.c.l.s4 1966171168
      %v729 = vunpack.c.0.s8 %v728
      %v730 = vlaneseq
      %v731 = vshrl.u32 %v730, 7
      %v732 = vsub.s32 %v729, %v731
      %v733 = vrot.slane %v717, %v732
      %v735 = vunpack.c.l.s4 1966171168
      %v736 = vunpack.c.0.s8 %v735
      %v737 = vlaneseq
      %v738 = vshrl.u32 %v737, 7
      %v739 = vsub.s32 %v736, %v738
      %v740 = vrot.slane %v718, %v739
      %v742 = vunpack.c.l.s4 1966171168
      %v743 = vunpack.c.0.s8 %v742
      %v744 = vlaneseq
      %v745 = vshrl.u32 %v744, 7
      %v746 = vsub.s32 %v743, %v745
      %v747 = vrot.slane %v719, %v746
      %v748 = vcombine.high %v726, %v726
      %v749 = vcombine.high %v733, %v733
      %v750 = vcombine.high %v740, %v740
      %v751 = vcombine.high %v549, %v549
      %v753 = vunpack.c.l.s4 1966171168
      %v754 = vunpack.c.0.s8 %v753
      %v755 = vlaneseq
      %v756 = vshrl.u32 %v755, 7
      %v757 = vsub.s32 %v754, %v756
      %v758 = vrot.slane %v549, %v757
      %v760 = vunpack.c.l.s4 1966171168
      %v761 = vunpack.c.0.s8 %v760
      %v762 = vlaneseq
      %v763 = vshrl.u32 %v762, 7
      %v764 = vsub.s32 %v761, %v763
      %v765 = vrot.slane %v751, %v764
      %v766 = vcombine.high %v758, %v758
      %v767 = vcombine.high %v765, %v765
      %v769 = vunpack.c.l.s4 1966171168
      %v770 = vunpack.c.0.s8 %v769
      %v771 = vlaneseq
      %v772 = vshrl.u32 %v771, 7
      %v773 = vsub.s32 %v770, %v772
      %v774 = vrot.slane %v758, %v773
      %v776 = vunpack.c.l.s4 1966171168
      %v777 = vunpack.c.0.s8 %v776
      %v778 = vlaneseq
      %v779 = vshrl.u32 %v778, 7
      %v780 = vsub.s32 %v777, %v779
      %v781 = vrot.slane %v765, %v780
      %v783 = vunpack.c.l.s4 1966171168
      %v784 = vunpack.c.0.s8 %v783
      %v785 = vlaneseq
      %v786 = vshrl.u32 %v785, 7
      %v787 = vsub.s32 %v784, %v786
      %v788 = vrot.slane %v766, %v787
      %v790 = vunpack.c.l.s4 1966171168
      %v791 = vunpack.c.0.s8 %v790
      %v792 = vlaneseq
      %v793 = vshrl.u32 %v792, 7
      %v794 = vsub.s32 %v791, %v793
      %v795 = vrot.slane %v767, %v794
      %v796 = vcombine.high %v774, %v774
      %v797 = vcombine.high %v781, %v781
      %v798 = vcombine.high %v788, %v788
      %v799 = vcombine.high %v550, %v550
      %v801 = vunpack.c.l.s4 1966171168
      %v802 = vunpack.c.0.s8 %v801
      %v803 = vlaneseq
      %v804 = vshrl.u32 %v803, 7
      %v805 = vsub.s32 %v802, %v804
      %v806 = vrot.slane %v550, %v805
      %v808 = vunpack.c.l.s4 1966171168
      %v809 = vunpack.c.0.s8 %v808
      %v810 = vlaneseq
      %v811 = vshrl.u32 %v810, 7
      %v812 = vsub.s32 %v809, %v811
      %v813 = vrot.slane %v799, %v812
      %v814 = vcombine.high %v806, %v806
      %v815 = vcombine.high %v813, %v813
      %v817 = vunpack.c.l.s4 1966171168
      %v818 = vunpack.c.0.s8 %v817
      %v819 = vlaneseq
      %v820 = vshrl.u32 %v819, 7
      %v821 = vsub.s32 %v818, %v820
      %v822 = vrot.slane %v806, %v821
      %v824 = vunpack.c.l.s4 1966171168
      %v825 = vunpack.c.0.s8 %v824
      %v826 = vlaneseq
      %v827 = vshrl.u32 %v826, 7
      %v828 = vsub.s32 %v825, %v827
      %v829 = vrot.slane %v813, %v828
      %v831 = vunpack.c.l.s4 1966171168
      %v832 = vunpack.c.0.s8 %v831
      %v833 = vlaneseq
      %v834 = vshrl.u32 %v833, 7
      %v835 = vsub.s32 %v832, %v834
      %v836 = vrot.slane %v814, %v835
      %v838 = vunpack.c.l.s4 1966171168
      %v839 = vunpack.c.0.s8 %v838
      %v840 = vlaneseq
      %v841 = vshrl.u32 %v840, 7
      %v842 = vsub.s32 %v839, %v841
      %v843 = vrot.slane %v815, %v842
      %v844 = vcombine.high %v822, %v822
      %v845 = vcombine.high %v829, %v829
      %v846 = vcombine.high %v836, %v836
      %v847 = vcombine.high %v551, %v551
      %v849 = vunpack.c.l.s4 1966171168
      %v850 = vunpack.c.0.s8 %v849
      %v851 = vlaneseq
      %v852 = vshrl.u32 %v851, 7
      %v853 = vsub.s32 %v850, %v852
      %v854 = vrot.slane %v551, %v853
      %v856 = vunpack.c.l.s4 1966171168
      %v857 = vunpack.c.0.s8 %v856
      %v858 = vlaneseq
      %v859 = vshrl.u32 %v858, 7
      %v860 = vsub.s32 %v857, %v859
      %v861 = vrot.slane %v847, %v860
      %v862 = vcombine.high %v854, %v854
      %v863 = vcombine.high %v861, %v861
      %v865 = vunpack.c.l.s4 1966171168
      %v866 = vunpack.c.0.s8 %v865
      %v867 = vlaneseq
      %v868 = vshrl.u32 %v867, 7
      %v869 = vsub.s32 %v866, %v868
      %v870 = vrot.slane %v854, %v869
      %v872 = vunpack.c.l.s4 1966171168
      %v873 = vunpack.c.0.s8 %v872
      %v874 = vlaneseq
      %v875 = vshrl.u32 %v874, 7
      %v876 = vsub.s32 %v873, %v875
      %v877 = vrot.slane %v861, %v876
      %v879 = vunpack.c.l.s4 1966171168
      %v880 = vunpack.c.0.s8 %v879
      %v881 = vlaneseq
      %v882 = vshrl.u32 %v881, 7
      %v883 = vsub.s32 %v880, %v882
      %v884 = vrot.slane %v862, %v883
      %v886 = vunpack.c.l.s4 1966171168
      %v887 = vunpack.c.0.s8 %v886
      %v888 = vlaneseq
      %v889 = vshrl.u32 %v888, 7
      %v890 = vsub.s32 %v887, %v889
      %v891 = vrot.slane %v863, %v890
      %v892 = vcombine.high %v870, %v870
      %v893 = vcombine.high %v877, %v877
      %v894 = vcombine.high %v884, %v884
      %s895 = scalar_lea.vmem %s1, 4
      %v896 = vld [vmem:[%s895] sm:$0xf]
      %v897 = vcombine.low %v582, %v596
      %v898 = vcombine.low %v604, %v606
      %v899 = vcombine.low %v589, %v603
      %v900 = vcombine.low %v605, %v630
      %v902 = vunpack.c.l.s4 1966171168
      %v903 = vunpack.c.0.s8 %v902
      %v904 = vlaneseq
      %v905 = vshrl.u32 %v904, 7
      %v906 = vsub.s32 %v903, %v905
      %v907 = vrot.slane %v897, %v906
      %v909 = vunpack.c.l.s4 1966171168
      %v910 = vunpack.c.0.s8 %v909
      %v911 = vlaneseq
      %v912 = vshrl.u32 %v911, 7
      %v913 = vsub.s32 %v910, %v912
      %v914 = vrot.slane %v898, %v913
      %v916 = vunpack.c.l.s4 1966171168
      %v917 = vunpack.c.0.s8 %v916
      %v918 = vlaneseq
      %v919 = vshrl.u32 %v918, 7
      %v920 = vsub.s32 %v917, %v919
      %v921 = vrot.slane %v899, %v920
      %v923 = vunpack.c.l.s4 1966171168
      %v924 = vunpack.c.0.s8 %v923
      %v925 = vlaneseq
      %v926 = vshrl.u32 %v925, 7
      %v927 = vsub.s32 %v924, %v926
      %v928 = vrot.slane %v900, %v927
      %v929 = vcombine.low %v907, %v914
      %v930 = vcombine.low %v921, %v928
      %v932 = vunpack.c.l.s4 1966171168
      %v933 = vunpack.c.0.s8 %v932
      %v934 = vlaneseq
      %v935 = vshrl.u32 %v934, 7
      %v936 = vsub.s32 %v933, %v935
      %v937 = vrot.slane %v929, %v936
      %v939 = vunpack.c.l.s4 1966171168
      %v940 = vunpack.c.0.s8 %v939
      %v941 = vlaneseq
      %v942 = vshrl.u32 %v941, 7
      %v943 = vsub.s32 %v940, %v942
      %v944 = vrot.slane %v930, %v943
      %v945 = vcombine.low %v937, %v944
      %v946 = vcombine.low %v644, %v652
      %v947 = vcombine.low %v654, %v637
      %v948 = vcombine.low %v651, %v653
      %v949 = vcombine.low %v678, %v692
      %v951 = vunpack.c.l.s4 1966171168
      %v952 = vunpack.c.0.s8 %v951
      %v953 = vlaneseq
      %v954 = vshrl.u32 %v953, 7
      %v955 = vsub.s32 %v952, %v954
      %v956 = vrot.slane %v946, %v955
      %v958 = vunpack.c.l.s4 1966171168
      %v959 = vunpack.c.0.s8 %v958
      %v960 = vlaneseq
      %v961 = vshrl.u32 %v960, 7
      %v962 = vsub.s32 %v959, %v961
      %v963 = vrot.slane %v947, %v962
      %v965 = vunpack.c.l.s4 1966171168
      %v966 = vunpack.c.0.s8 %v965
      %v967 = vlaneseq
      %v968 = vshrl.u32 %v967, 7
      %v969 = vsub.s32 %v966, %v968
      %v970 = vrot.slane %v948, %v969
      %v972 = vunpack.c.l.s4 1966171168
      %v973 = vunpack.c.0.s8 %v972
      %v974 = vlaneseq
      %v975 = vshrl.u32 %v974, 7
      %v976 = vsub.s32 %v973, %v975
      %v977 = vrot.slane %v949, %v976
      %v978 = vcombine.low %v956, %v963
      %v979 = vcombine.low %v970, %v977
      %v981 = vunpack.c.l.s4 1966171168
      %v982 = vunpack.c.0.s8 %v981
      %v983 = vlaneseq
      %v984 = vshrl.u32 %v983, 7
      %v985 = vsub.s32 %v982, %v984
      %v986 = vrot.slane %v978, %v985
      %v988 = vunpack.c.l.s4 1966171168
      %v989 = vunpack.c.0.s8 %v988
      %v990 = vlaneseq
      %v991 = vshrl.u32 %v990, 7
      %v992 = vsub.s32 %v989, %v991
      %v993 = vrot.slane %v979, %v992
      %v994 = vcombine.low %v986, %v993
      %v995 = vcombine.low %v700, %v702
      %v996 = vcombine.low %v685, %v699
      %v997 = vcombine.low %v701, %v726
      %v998 = vcombine.low %v740, %v748
      %v1000 = vunpack.c.l.s4 1966171168
      %v1001 = vunpack.c.0.s8 %v1000
      %v1002 = vlaneseq
      %v1003 = vshrl.u32 %v1002, 7
      %v1004 = vsub.s32 %v1001, %v1003
      %v1005 = vrot.slane %v995, %v1004
      %v1007 = vunpack.c.l.s4 1966171168
      %v1008 = vunpack.c.0.s8 %v1007
      %v1009 = vlaneseq
      %v1010 = vshrl.u32 %v1009, 7
      %v1011 = vsub.s32 %v1008, %v1010
      %v1012 = vrot.slane %v996, %v1011
      %v1014 = vunpack.c.l.s4 1966171168
      %v1015 = vunpack.c.0.s8 %v1014
      %v1016 = vlaneseq
      %v1017 = vshrl.u32 %v1016, 7
      %v1018 = vsub.s32 %v1015, %v1017
      %v1019 = vrot.slane %v997, %v1018
      %v1021 = vunpack.c.l.s4 1966171168
      %v1022 = vunpack.c.0.s8 %v1021
      %v1023 = vlaneseq
      %v1024 = vshrl.u32 %v1023, 7
      %v1025 = vsub.s32 %v1022, %v1024
      %v1026 = vrot.slane %v998, %v1025
      %v1027 = vcombine.low %v1005, %v1012
      %v1028 = vcombine.low %v1019, %v1026
      %v1030 = vunpack.c.l.s4 1966171168
      %v1031 = vunpack.c.0.s8 %v1030
      %v1032 = vlaneseq
      %v1033 = vshrl.u32 %v1032, 7
      %v1034 = vsub.s32 %v1031, %v1033
      %v1035 = vrot.slane %v1027, %v1034
      %v1037 = vunpack.c.l.s4 1966171168
      %v1038 = vunpack.c.0.s8 %v1037
      %v1039 = vlaneseq
      %v1040 = vshrl.u32 %v1039, 7
      %v1041 = vsub.s32 %v1038, %v1040
      %v1042 = vrot.slane %v1028, %v1041
      %v1043 = vcombine.low %v1035, %v1042
      %v1044 = vcombine.low %v750, %v733
      %v1045 = vcombine.low %v747, %v749
      %v1046 = vcombine.low %v774, %v788
      %v1047 = vcombine.low %v796, %v798
      %v1049 = vunpack.c.l.s4 1966171168
      %v1050 = vunpack.c.0.s8 %v1049
      %v1051 = vlaneseq
      %v1052 = vshrl.u32 %v1051, 7
      %v1053 = vsub.s32 %v1050, %v1052
      %v1054 = vrot.slane %v1044, %v1053
      %v1056 = vunpack.c.l.s4 1966171168
      %v1057 = vunpack.c.0.s8 %v1056
      %v1058 = vlaneseq
      %v1059 = vshrl.u32 %v1058, 7
      %v1060 = vsub.s32 %v1057, %v1059
      %v1061 = vrot.slane %v1045, %v1060
      %v1063 = vunpack.c.l.s4 1966171168
      %v1064 = vunpack.c.0.s8 %v1063
      %v1065 = vlaneseq
      %v1066 = vshrl.u32 %v1065, 7
      %v1067 = vsub.s32 %v1064, %v1066
      %v1068 = vrot.slane %v1046, %v1067
      %v1070 = vunpack.c.l.s4 1966171168
      %v1071 = vunpack.c.0.s8 %v1070
      %v1072 = vlaneseq
      %v1073 = vshrl.u32 %v1072, 7
      %v1074 = vsub.s32 %v1071, %v1073
      %v1075 = vrot.slane %v1047, %v1074
      %v1076 = vcombine.low %v1054, %v1061
      %v1077 = vcombine.low %v1068, %v1075
      %v1079 = vunpack.c.l.s4 1966171168
      %v1080 = vunpack.c.0.s8 %v1079
      %v1081 = vlaneseq
      %v1082 = vshrl.u32 %v1081, 7
      %v1083 = vsub.s32 %v1080, %v1082
      %v1084 = vrot.slane %v1076, %v1083
      %v1086 = vunpack.c.l.s4 1966171168
      %v1087 = vunpack.c.0.s8 %v1086
      %v1088 = vlaneseq
      %v1089 = vshrl.u32 %v1088, 7
      %v1090 = vsub.s32 %v1087, %v1089
      %v1091 = vrot.slane %v1077, %v1090
      %v1092 = vcombine.low %v1084, %v1091
      %v1093 = vcombine.low %v781, %v795
      %v1094 = vcombine.low %v797, %v822
      %v1095 = vcombine.low %v836, %v844
      %v1096 = vcombine.low %v846, %v829
      %v1098 = vunpack.c.l.s4 1966171168
      %v1099 = vunpack.c.0.s8 %v1098
      %v1100 = vlaneseq
      %v1101 = vshrl.u32 %v1100, 7
      %v1102 = vsub.s32 %v1099, %v1101
      %v1103 = vrot.slane %v1093, %v1102
      %v1105 = vunpack.c.l.s4 1966171168
      %v1106 = vunpack.c.0.s8 %v1105
      %v1107 = vlaneseq
      %v1108 = vshrl.u32 %v1107, 7
      %v1109 = vsub.s32 %v1106, %v1108
      %v1110 = vrot.slane %v1094, %v1109
      %v1112 = vunpack.c.l.s4 1966171168
      %v1113 = vunpack.c.0.s8 %v1112
      %v1114 = vlaneseq
      %v1115 = vshrl.u32 %v1114, 7
      %v1116 = vsub.s32 %v1113, %v1115
      %v1117 = vrot.slane %v1095, %v1116
      %v1119 = vunpack.c.l.s4 1966171168
      %v1120 = vunpack.c.0.s8 %v1119
      %v1121 = vlaneseq
      %v1122 = vshrl.u32 %v1121, 7
      %v1123 = vsub.s32 %v1120, %v1122
      %v1124 = vrot.slane %v1096, %v1123
      %v1125 = vcombine.low %v1103, %v1110
      %v1126 = vcombine.low %v1117, %v1124
      %v1128 = vunpack.c.l.s4 1966171168
      %v1129 = vunpack.c.0.s8 %v1128
      %v1130 = vlaneseq
      %v1131 = vshrl.u32 %v1130, 7
      %v1132 = vsub.s32 %v1129, %v1131
      %v1133 = vrot.slane %v1125, %v1132
      %v1135 = vunpack.c.l.s4 1966171168
      %v1136 = vunpack.c.0.s8 %v1135
      %v1137 = vlaneseq
      %v1138 = vshrl.u32 %v1137, 7
      %v1139 = vsub.s32 %v1136, %v1138
      %v1140 = vrot.slane %v1126, %v1139
      %v1141 = vcombine.low %v1133, %v1140
      %v1142 = vcombine.low %v843, %v845
      %v1143 = vcombine.low %v870, %v884
      %v1144 = vcombine.low %v892, %v894
      %v1145 = vcombine.low %v877, %v891
      %v1147 = vunpack.c.l.s4 1966171168
      %v1148 = vunpack.c.0.s8 %v1147
      %v1149 = vlaneseq
      %v1150 = vshrl.u32 %v1149, 7
      %v1151 = vsub.s32 %v1148, %v1150
      %v1152 = vrot.slane %v1142, %v1151
      %v1154 = vunpack.c.l.s4 1966171168
      %v1155 = vunpack.c.0.s8 %v1154
      %v1156 = vlaneseq
      %v1157 = vshrl.u32 %v1156, 7
      %v1158 = vsub.s32 %v1155, %v1157
      %v1159 = vrot.slane %v1143, %v1158
      %v1161 = vunpack.c.l.s4 1966171168
      %v1162 = vunpack.c.0.s8 %v1161
      %v1163 = vlaneseq
      %v1164 = vshrl.u32 %v1163, 7
      %v1165 = vsub.s32 %v1162, %v1164
      %v1166 = vrot.slane %v1144, %v1165
      %v1168 = vunpack.c.l.s4 1966171168
      %v1169 = vunpack.c.0.s8 %v1168
      %v1170 = vlaneseq
      %v1171 = vshrl.u32 %v1170, 7
      %v1172 = vsub.s32 %v1169, %v1171
      %v1173 = vrot.slane %v1145, %v1172
      %v1174 = vcombine.low %v1152, %v1159
      %v1175 = vcombine.low %v1166, %v1173
      %v1177 = vunpack.c.l.s4 1966171168
      %v1178 = vunpack.c.0.s8 %v1177
      %v1179 = vlaneseq
      %v1180 = vshrl.u32 %v1179, 7
      %v1181 = vsub.s32 %v1178, %v1180
      %v1182 = vrot.slane %v1174, %v1181
      %v1184 = vunpack.c.l.s4 1966171168
      %v1185 = vunpack.c.0.s8 %v1184
      %v1186 = vlaneseq
      %v1187 = vshrl.u32 %v1186, 7
      %v1188 = vsub.s32 %v1185, %v1187
      %v1189 = vrot.slane %v1175, %v1188
      %v1190 = vcombine.low %v1182, %v1189
      %v1192 = vunpack.c.l.s4 1966171168
      %v1193 = vunpack.c.0.s8 %v1192
      %v1194 = vlaneseq
      %v1195 = vshrl.u32 %v1194, 7
      %v1196 = vsub.s32 %v1193, %v1195
      %v1197 = vrot.slane %v893, %v1196
      %v1199 = vunpack.c.l.s4 1966171168
      %v1200 = vunpack.c.0.s8 %v1199
      %v1201 = vlaneseq
      %v1202 = vshrl.u32 %v1201, 7
      %v1203 = vsub.s32 %v1200, %v1202
      %v1204 = vrot.slane %v1197, %v1203
      %vm1205 = vcmask 31744
      %v1206 = vsel %vm1205, %v945, 0
      %v1208 = vsel %vm1205, %v994, 0
      %v1210 = vsel %vm1205, %v1043, 0
      %v1212 = vsel %vm1205, %v1092, 0
      %v1214 = vsel %vm1205, %v1141, 0
      %v1216 = vsel %vm1205, %v1190, 0
      %v1218 = vsel %vm1205, %v1204, 0
      %vm1220 = vcmask 1043456
      %v1222 = vsel %vm1220, %v896, 0
      %1224 = vmatprep.subr.mxu0 0.0
      %1225 = vmatpush1.msra.mxu0 %v1222
      %1226 = vmatprep.subr.mxu0 0.0
      %1227 = vmatpush1.msra.mxu0 0.0
      %1228 = vmatprep.subr.mxu0 0.0
      %1229 = vmatpush1.msra.mxu0 0.0
      %1230 = vmatprep.subr.mxu0 0.0
      %1231 = vmatpush1.msra.mxu0 0.0
      %1232 = vmatprep.subr.mxu0 0.0
      %1233 = vmatpush1.msra.mxu0 0.0
      %1234 = vmatprep.subr.mxu0 0.0
      %1235 = vmatpush1.msra.mxu0 0.0
      %1236 = vmatprep.subr.mxu0 0.0
      %1237 = vmatpush1.msra.mxu0 0.0
      %1238 = vmatprep.subr.mxu0 0.0
      %1239 = vmatpush1.msra.mxu0 0.0
      %1240 = vmatprep.subr.mxu0 0.0
      %1241 = vmatpush1.msra.mxu0 0.0
      %1242 = vmatprep.subr.mxu0 0.0
      %1243 = vmatpush1.msra.mxu0 0.0
      %1244 = vmatprep.subr.mxu0 0.0
      %1245 = vmatpush1.msra.mxu0 0.0
      %1246 = vmatprep.subr.mxu0 0.0
      %1247 = vmatpush1.msra.mxu0 0.0
      %1248 = vmatprep.subr.mxu0 0.0
      %1249 = vmatpush1.msra.mxu0 0.0
      %1250 = vmatprep.subr.mxu0 0.0
      %1251 = vmatpush1.msra.mxu0 0.0
      %1252 = vmatprep.subr.mxu0 0.0
      %1253 = vmatpush1.msra.mxu0 0.0
      %1254 = vmatprep.subr.mxu0 0.0
      %1255 = vmatpush1.msra.mxu0 0.0
      %1256 = vmatprep.subr.mxu0 0.0
      %1257 = vmatpush1.msra.mxu0 0.0
      %1258 = vmatprep.subr.mxu0 0.0
      %1259 = vmatpush1.msra.mxu0 0.0
      %1260 = vmatprep.subr.mxu0 0.0
      %1261 = vmatpush1.msra.mxu0 0.0
      %1262 = vmatprep.subr.mxu0 0.0
      %1263 = vmatpush1.msra.mxu0 0.0
      %1264 = vmatprep.subr.mxu0 0.0
      %1265 = vmatpush1.msra.mxu0 0.0
      %1266 = vmatprep.subr.mxu0 0.0
      %1267 = vmatpush1.msra.mxu0 0.0
      %1268 = vmatprep.subr.mxu0 0.0
      %1269 = vmatpush1.msra.mxu0 0.0
      %1270 = vmatprep.subr.mxu0 0.0
      %1271 = vmatpush1.msra.mxu0 0.0
      %1272 = vmatprep.subr.mxu0 0.0
      %1273 = vmatpush1.msra.mxu0 0.0
      %1274 = vmatprep.subr.mxu0 0.0
      %1275 = vmatpush1.msra.mxu0 0.0
      %1276 = vmatprep.subr.mxu0 0.0
      %1277 = vmatpush1.msra.mxu0 0.0
      %1278 = vmatprep.subr.mxu0 0.0
      %1279 = vmatpush1.msra.mxu0 0.0
      %1280 = vmatprep.subr.mxu0 0.0
      %1281 = vmatpush1.msra.mxu0 0.0
      %1282 = vmatprep.subr.mxu0 0.0
      %1283 = vmatpush1.msra.mxu0 0.0
      %1284 = vmatprep.subr.mxu0 0.0
      %1285 = vmatpush1.msra.mxu0 0.0
      %1286 = vmatprep.subr.mxu0 0.0
      %1287 = vmatpush1.msra.mxu0 0.0
      %1288 = vmatprep.mubr.f32.mxu0 0.0
      %1289 = vmatmul.mubr.f32.gmra.mrb[0].mxu0 %v1206
      %v1290 = vpop.f32.mrb[0].mxu0
      %v1291 = vadd.f32 0.0, %v1290
      %v1292 = vpop.f32.mrb[0].mxu0
      %1293 = vmatprep.mubr.f32.mxu0 0.0
      %1294 = vmatmul.mubr.f32.gmra.mrb[0].mxu0 %v1208
      %v1295 = vpop.f32.mrb[0].mxu0
      %v1296 = vadd.f32 0.0, %v1295
      %v1297 = vpop.f32.mrb[0].mxu0
      %1298 = vmatprep.mubr.f32.mxu0 0.0
      %1299 = vmatmul.mubr.f32.gmra.mrb[0].mxu0 %v1210
      %v1300 = vpop.f32.mrb[0].mxu0
      %v1301 = vadd.f32 0.0, %v1300
      %v1302 = vpop.f32.mrb[0].mxu0
      %1303 = vmatprep.mubr.f32.mxu0 0.0
      %1304 = vmatmul.mubr.f32.gmra.mrb[0].mxu0 %v1212
      %v1305 = vpop.f32.mrb[0].mxu0
      %v1306 = vadd.f32 0.0, %v1305
      %v1307 = vpop.f32.mrb[0].mxu0
      %1308 = vmatprep.mubr.f32.mxu0 0.0
      %1309 = vmatmul.mubr.f32.gmra.mrb[0].mxu0 %v1214
      %v1310 = vpop.f32.mrb[0].mxu0
      %v1311 = vadd.f32 0.0, %v1310
      %v1312 = vpop.f32.mrb[0].mxu0
      %1313 = vmatprep.mubr.f32.mxu0 0.0
      %1314 = vmatmul.mubr.f32.gmra.mrb[0].mxu0 %v1216
      %v1315 = vpop.f32.mrb[0].mxu0
      %v1316 = vadd.f32 0.0, %v1315
      %v1317 = vpop.f32.mrb[0].mxu0
      %1318 = vmatprep.mubr.f32.mxu0 0.0
      %1319 = vmatmul.mubr.f32.gmra.mrb[0].mxu0 %v1218
      %v1320 = vpop.f32.mrb[0].mxu0
      %v1321 = vadd.f32 0.0, %v1320
      %v1322 = vpop.f32.mrb[0].mxu0
      %1323 = vdwg.mxu0
      %v1324 = vcombine.low %v230, %v244
      %v1325 = vcombine.low %v252, %v254
      %v1326 = vcombine.low %v237, %v251
      %v1327 = vcombine.low %v253, %v278
      %v1329 = vunpack.c.l.s4 1966171168
      %v1330 = vunpack.c.0.s8 %v1329
      %v1331 = vlaneseq
      %v1332 = vshrl.u32 %v1331, 7
      %v1333 = vsub.s32 %v1330, %v1332
      %v1334 = vrot.slane %v1324, %v1333
      %v1336 = vunpack.c.l.s4 1966171168
      %v1337 = vunpack.c.0.s8 %v1336
      %v1338 = vlaneseq
      %v1339 = vshrl.u32 %v1338, 7
      %v1340 = vsub.s32 %v1337, %v1339
      %v1341 = vrot.slane %v1325, %v1340
      %v1343 = vunpack.c.l.s4 1966171168
      %v1344 = vunpack.c.0.s8 %v1343
      %v1345 = vlaneseq
      %v1346 = vshrl.u32 %v1345, 7
      %v1347 = vsub.s32 %v1344, %v1346
      %v1348 = vrot.slane %v1326, %v1347
      %v1350 = vunpack.c.l.s4 1966171168
      %v1351 = vunpack.c.0.s8 %v1350
      %v1352 = vlaneseq
      %v1353 = vshrl.u32 %v1352, 7
      %v1354 = vsub.s32 %v1351, %v1353
      %v1355 = vrot.slane %v1327, %v1354
      %v1356 = vcombine.low %v1334, %v1341
      %v1357 = vcombine.low %v1348, %v1355
      %v1359 = vunpack.c.l.s4 1966171168
      %v1360 = vunpack.c.0.s8 %v1359
      %v1361 = vlaneseq
      %v1362 = vshrl.u32 %v1361, 7
      %v1363 = vsub.s32 %v1360, %v1362
      %v1364 = vrot.slane %v1356, %v1363
      %v1366 = vunpack.c.l.s4 1966171168
      %v1367 = vunpack.c.0.s8 %v1366
      %v1368 = vlaneseq
      %v1369 = vshrl.u32 %v1368, 7
      %v1370 = vsub.s32 %v1367, %v1369
      %v1371 = vrot.slane %v1357, %v1370
      %v1372 = vcombine.low %v1364, %v1371
      %v1373 = vcombine.low %v292, %v300
      %v1374 = vcombine.low %v302, %v285
      %v1375 = vcombine.low %v299, %v301
      %v1376 = vcombine.low %v326, %v340
      %v1378 = vunpack.c.l.s4 1966171168
      %v1379 = vunpack.c.0.s8 %v1378
      %v1380 = vlaneseq
      %v1381 = vshrl.u32 %v1380, 7
      %v1382 = vsub.s32 %v1379, %v1381
      %v1383 = vrot.slane %v1373, %v1382
      %v1385 = vunpack.c.l.s4 1966171168
      %v1386 = vunpack.c.0.s8 %v1385
      %v1387 = vlaneseq
      %v1388 = vshrl.u32 %v1387, 7
      %v1389 = vsub.s32 %v1386, %v1388
      %v1390 = vrot.slane %v1374, %v1389
      %v1392 = vunpack.c.l.s4 1966171168
      %v1393 = vunpack.c.0.s8 %v1392
      %v1394 = vlaneseq
      %v1395 = vshrl.u32 %v1394, 7
      %v1396 = vsub.s32 %v1393, %v1395
      %v1397 = vrot.slane %v1375, %v1396
      %v1399 = vunpack.c.l.s4 1966171168
      %v1400 = vunpack.c.0.s8 %v1399
      %v1401 = vlaneseq
      %v1402 = vshrl.u32 %v1401, 7
      %v1403 = vsub.s32 %v1400, %v1402
      %v1404 = vrot.slane %v1376, %v1403
      %v1405 = vcombine.low %v1383, %v1390
      %v1406 = vcombine.low %v1397, %v1404
      %v1408 = vunpack.c.l.s4 1966171168
      %v1409 = vunpack.c.0.s8 %v1408
      %v1410 = vlaneseq
      %v1411 = vshrl.u32 %v1410, 7
      %v1412 = vsub.s32 %v1409, %v1411
      %v1413 = vrot.slane %v1405, %v1412
      %v1415 = vunpack.c.l.s4 1966171168
      %v1416 = vunpack.c.0.s8 %v1415
      %v1417 = vlaneseq
      %v1418 = vshrl.u32 %v1417, 7
      %v1419 = vsub.s32 %v1416, %v1418
      %v1420 = vrot.slane %v1406, %v1419
      %v1421 = vcombine.low %v1413, %v1420
      %v1422 = vcombine.low %v348, %v350
      %v1423 = vcombine.low %v333, %v347
      %v1424 = vcombine.low %v349, %v374
      %v1425 = vcombine.low %v388, %v396
      %v1427 = vunpack.c.l.s4 1966171168
      %v1428 = vunpack.c.0.s8 %v1427
      %v1429 = vlaneseq
      %v1430 = vshrl.u32 %v1429, 7
      %v1431 = vsub.s32 %v1428, %v1430
      %v1432 = vrot.slane %v1422, %v1431
      %v1434 = vunpack.c.l.s4 1966171168
      %v1435 = vunpack.c.0.s8 %v1434
      %v1436 = vlaneseq
      %v1437 = vshrl.u32 %v1436, 7
      %v1438 = vsub.s32 %v1435, %v1437
      %v1439 = vrot.slane %v1423, %v1438
      %v1441 = vunpack.c.l.s4 1966171168
      %v1442 = vunpack.c.0.s8 %v1441
      %v1443 = vlaneseq
      %v1444 = vshrl.u32 %v1443, 7
      %v1445 = vsub.s32 %v1442, %v1444
      %v1446 = vrot.slane %v1424, %v1445
      %v1448 = vunpack.c.l.s4 1966171168
      %v1449 = vunpack.c.0.s8 %v1448
      %v1450 = vlaneseq
      %v1451 = vshrl.u32 %v1450, 7
      %v1452 = vsub.s32 %v1449, %v1451
      %v1453 = vrot.slane %v1425, %v1452
      %v1454 = vcombine.low %v1432, %v1439
      %v1455 = vcombine.low %v1446, %v1453
      %v1457 = vunpack.c.l.s4 1966171168
      %v1458 = vunpack.c.0.s8 %v1457
      %v1459 = vlaneseq
      %v1460 = vshrl.u32 %v1459, 7
      %v1461 = vsub.s32 %v1458, %v1460
      %v1462 = vrot.slane %v1454, %v1461
      %v1464 = vunpack.c.l.s4 1966171168
      %v1465 = vunpack.c.0.s8 %v1464
      %v1466 = vlaneseq
      %v1467 = vshrl.u32 %v1466, 7
      %v1468 = vsub.s32 %v1465, %v1467
      %v1469 = vrot.slane %v1455, %v1468
      %v1470 = vcombine.low %v1462, %v1469
      %v1471 = vcombine.low %v398, %v381
      %v1472 = vcombine.low %v395, %v397
      %v1473 = vcombine.low %v422, %v436
      %v1474 = vcombine.low %v444, %v446
      %v1476 = vunpack.c.l.s4 1966171168
      %v1477 = vunpack.c.0.s8 %v1476
      %v1478 = vlaneseq
      %v1479 = vshrl.u32 %v1478, 7
      %v1480 = vsub.s32 %v1477, %v1479
      %v1481 = vrot.slane %v1471, %v1480
      %v1483 = vunpack.c.l.s4 1966171168
      %v1484 = vunpack.c.0.s8 %v1483
      %v1485 = vlaneseq
      %v1486 = vshrl.u32 %v1485, 7
      %v1487 = vsub.s32 %v1484, %v1486
      %v1488 = vrot.slane %v1472, %v1487
      %v1490 = vunpack.c.l.s4 1966171168
      %v1491 = vunpack.c.0.s8 %v1490
      %v1492 = vlaneseq
      %v1493 = vshrl.u32 %v1492, 7
      %v1494 = vsub.s32 %v1491, %v1493
      %v1495 = vrot.slane %v1473, %v1494
      %v1497 = vunpack.c.l.s4 1966171168
      %v1498 = vunpack.c.0.s8 %v1497
      %v1499 = vlaneseq
      %v1500 = vshrl.u32 %v1499, 7
      %v1501 = vsub.s32 %v1498, %v1500
      %v1502 = vrot.slane %v1474, %v1501
      %v1503 = vcombine.low %v1481, %v1488
      %v1504 = vcombine.low %v1495, %v1502
      %v1506 = vunpack.c.l.s4 1966171168
      %v1507 = vunpack.c.0.s8 %v1506
      %v1508 = vlaneseq
      %v1509 = vshrl.u32 %v1508, 7
      %v1510 = vsub.s32 %v1507, %v1509
      %v1511 = vrot.slane %v1503, %v1510
      %v1513 = vunpack.c.l.s4 1966171168
      %v1514 = vunpack.c.0.s8 %v1513
      %v1515 = vlaneseq
      %v1516 = vshrl.u32 %v1515, 7
      %v1517 = vsub.s32 %v1514, %v1516
      %v1518 = vrot.slane %v1504, %v1517
      %v1519 = vcombine.low %v1511, %v1518
      %v1520 = vcombine.low %v429, %v443
      %v1521 = vcombine.low %v445, %v470
      %v1522 = vcombine.low %v484, %v492
      %v1523 = vcombine.low %v494, %v477
      %v1525 = vunpack.c.l.s4 1966171168
      %v1526 = vunpack.c.0.s8 %v1525
      %v1527 = vlaneseq
      %v1528 = vshrl.u32 %v1527, 7
      %v1529 = vsub.s32 %v1526, %v1528
      %v1530 = vrot.slane %v1520, %v1529
      %v1532 = vunpack.c.l.s4 1966171168
      %v1533 = vunpack.c.0.s8 %v1532
      %v1534 = vlaneseq
      %v1535 = vshrl.u32 %v1534, 7
      %v1536 = vsub.s32 %v1533, %v1535
      %v1537 = vrot.slane %v1521, %v1536
      %v1539 = vunpack.c.l.s4 1966171168
      %v1540 = vunpack.c.0.s8 %v1539
      %v1541 = vlaneseq
      %v1542 = vshrl.u32 %v1541, 7
      %v1543 = vsub.s32 %v1540, %v1542
      %v1544 = vrot.slane %v1522, %v1543
      %v1546 = vunpack.c.l.s4 1966171168
      %v1547 = vunpack.c.0.s8 %v1546
      %v1548 = vlaneseq
      %v1549 = vshrl.u32 %v1548, 7
      %v1550 = vsub.s32 %v1547, %v1549
      %v1551 = vrot.slane %v1523, %v1550
      %v1552 = vcombine.low %v1530, %v1537
      %v1553 = vcombine.low %v1544, %v1551
      %v1555 = vunpack.c.l.s4 1966171168
      %v1556 = vunpack.c.0.s8 %v1555
      %v1557 = vlaneseq
      %v1558 = vshrl.u32 %v1557, 7
      %v1559 = vsub.s32 %v1556, %v1558
      %v1560 = vrot.slane %v1552, %v1559
      %v1562 = vunpack.c.l.s4 1966171168
      %v1563 = vunpack.c.0.s8 %v1562
      %v1564 = vlaneseq
      %v1565 = vshrl.u32 %v1564, 7
      %v1566 = vsub.s32 %v1563, %v1565
      %v1567 = vrot.slane %v1553, %v1566
      %v1568 = vcombine.low %v1560, %v1567
      %v1569 = vcombine.low %v491, %v493
      %v1570 = vcombine.low %v518, %v532
      %v1571 = vcombine.low %v540, %v542
      %v1572 = vcombine.low %v525, %v539
      %v1574 = vunpack.c.l.s4 1966171168
      %v1575 = vunpack.c.0.s8 %v1574
      %v1576 = vlaneseq
      %v1577 = vshrl.u32 %v1576, 7
      %v1578 = vsub.s32 %v1575, %v1577
      %v1579 = vrot.slane %v1569, %v1578
      %v1581 = vunpack.c.l.s4 1966171168
      %v1582 = vunpack.c.0.s8 %v1581
      %v1583 = vlaneseq
      %v1584 = vshrl.u32 %v1583, 7
      %v1585 = vsub.s32 %v1582, %v1584
      %v1586 = vrot.slane %v1570, %v1585
      %v1588 = vunpack.c.l.s4 1966171168
      %v1589 = vunpack.c.0.s8 %v1588
      %v1590 = vlaneseq
      %v1591 = vshrl.u32 %v1590, 7
      %v1592 = vsub.s32 %v1589, %v1591
      %v1593 = vrot.slane %v1571, %v1592
      %v1595 = vunpack.c.l.s4 1966171168
      %v1596 = vunpack.c.0.s8 %v1595
      %v1597 = vlaneseq
      %v1598 = vshrl.u32 %v1597, 7
      %v1599 = vsub.s32 %v1596, %v1598
      %v1600 = vrot.slane %v1572, %v1599
      %v1601 = vcombine.low %v1579, %v1586
      %v1602 = vcombine.low %v1593, %v1600
      %v1604 = vunpack.c.l.s4 1966171168
      %v1605 = vunpack.c.0.s8 %v1604
      %v1606 = vlaneseq
      %v1607 = vshrl.u32 %v1606, 7
      %v1608 = vsub.s32 %v1605, %v1607
      %v1609 = vrot.slane %v1601, %v1608
      %v1611 = vunpack.c.l.s4 1966171168
      %v1612 = vunpack.c.0.s8 %v1611
      %v1613 = vlaneseq
      %v1614 = vshrl.u32 %v1613, 7
      %v1615 = vsub.s32 %v1612, %v1614
      %v1616 = vrot.slane %v1602, %v1615
      %v1617 = vcombine.low %v1609, %v1616
      %v1619 = vunpack.c.l.s4 1966171168
      %v1620 = vunpack.c.0.s8 %v1619
      %v1621 = vlaneseq
      %v1622 = vshrl.u32 %v1621, 7
      %v1623 = vsub.s32 %v1620, %v1622
      %v1624 = vrot.slane %v541, %v1623
      %v1626 = vunpack.c.l.s4 1966171168
      %v1627 = vunpack.c.0.s8 %v1626
      %v1628 = vlaneseq
      %v1629 = vshrl.u32 %v1628, 7
      %v1630 = vsub.s32 %v1627, %v1629
      %v1631 = vrot.slane %v1624, %v1630
      %v1632 = vsel %vm1205, %v1372, 0
      %v1634 = vsel %vm1205, %v1421, 0
      %v1636 = vsel %vm1205, %v1470, 0
      %v1638 = vsel %vm1205, %v1519, 0
      %v1640 = vsel %vm1205, %v1568, 0
      %v1642 = vsel %vm1205, %v1617, 0
      %v1644 = vsel %vm1205, %v1631, 0
      %v1647 = vsel %vm1220, %v543, 0
      %1649 = vmatprep.subr.mxu0 0.0
      %1650 = vmatpush1.msra.mxu0 %v1647
      %1651 = vmatprep.subr.mxu0 0.0
      %1652 = vmatpush1.msra.mxu0 0.0
      %1653 = vmatprep.subr.mxu0 0.0
      %1654 = vmatpush1.msra.mxu0 0.0
      %1655 = vmatprep.subr.mxu0 0.0
      %1656 = vmatpush1.msra.mxu0 0.0
      %1657 = vmatprep.subr.mxu0 0.0
      %1658 = vmatpush1.msra.mxu0 0.0
      %1659 = vmatprep.subr.mxu0 0.0
      %1660 = vmatpush1.msra.mxu0 0.0
      %1661 = vmatprep.subr.mxu0 0.0
      %1662 = vmatpush1.msra.mxu0 0.0
      %1663 = vmatprep.subr.mxu0 0.0
      %1664 = vmatpush1.msra.mxu0 0.0
      %1665 = vmatprep.subr.mxu0 0.0
      %1666 = vmatpush1.msra.mxu0 0.0
      %1667 = vmatprep.subr.mxu0 0.0
      %1668 = vmatpush1.msra.mxu0 0.0
      %1669 = vmatprep.subr.mxu0 0.0
      %1670 = vmatpush1.msra.mxu0 0.0
      %1671 = vmatprep.subr.mxu0 0.0
      %1672 = vmatpush1.msra.mxu0 0.0
      %1673 = vmatprep.subr.mxu0 0.0
      %1674 = vmatpush1.msra.mxu0 0.0
      %1675 = vmatprep.subr.mxu0 0.0
      %1676 = vmatpush1.msra.mxu0 0.0
      %1677 = vmatprep.subr.mxu0 0.0
      %1678 = vmatpush1.msra.mxu0 0.0
      %1679 = vmatprep.subr.mxu0 0.0
      %1680 = vmatpush1.msra.mxu0 0.0
      %1681 = vmatprep.subr.mxu0 0.0
      %1682 = vmatpush1.msra.mxu0 0.0
      %1683 = vmatprep.subr.mxu0 0.0
      %1684 = vmatpush1.msra.mxu0 0.0
      %1685 = vmatprep.subr.mxu0 0.0
      %1686 = vmatpush1.msra.mxu0 0.0
      %1687 = vmatprep.subr.mxu0 0.0
      %1688 = vmatpush1.msra.mxu0 0.0
      %1689 = vmatprep.subr.mxu0 0.0
      %1690 = vmatpush1.msra.mxu0 0.0
      %1691 = vmatprep.subr.mxu0 0.0
      %1692 = vmatpush1.msra.mxu0 0.0
      %1693 = vmatprep.subr.mxu0 0.0
      %1694 = vmatpush1.msra.mxu0 0.0
      %1695 = vmatprep.subr.mxu0 0.0
      %1696 = vmatpush1.msra.mxu0 0.0
      %1697 = vmatprep.subr.mxu0 0.0
      %1698 = vmatpush1.msra.mxu0 0.0
      %1699 = vmatprep.subr.mxu0 0.0
      %1700 = vmatpush1.msra.mxu0 0.0
      %1701 = vmatprep.subr.mxu0 0.0
      %1702 = vmatpush1.msra.mxu0 0.0
      %1703 = vmatprep.subr.mxu0 0.0
      %1704 = vmatpush1.msra.mxu0 0.0
      %1705 = vmatprep.subr.mxu0 0.0
      %1706 = vmatpush1.msra.mxu0 0.0
      %1707 = vmatprep.subr.mxu0 0.0
      %1708 = vmatpush1.msra.mxu0 0.0
      %1709 = vmatprep.subr.mxu0 0.0
      %1710 = vmatpush1.msra.mxu0 0.0
      %1711 = vmatprep.subr.mxu0 0.0
      %1712 = vmatpush1.msra.mxu0 0.0
      %1713 = vmatprep.mubr.f32.mxu0 0.0
      %1714 = vmatmul.mubr.f32.gmra.mrb[0].mxu0 %v1632
      %v1715 = vpop.f32.mrb[0].mxu0
      %v1716 = vadd.f32 %v1291, %v1715
      %v1717 = vpop.f32.mrb[0].mxu0
      %1718 = vmatprep.mubr.f32.mxu0 0.0
      %1719 = vmatmul.mubr.f32.gmra.mrb[0].mxu0 %v1634
      %v1720 = vpop.f32.mrb[0].mxu0
      %v1721 = vadd.f32 %v1296, %v1720
      %v1722 = vpop.f32.mrb[0].mxu0
      %1723 = vmatprep.mubr.f32.mxu0 0.0
      %1724 = vmatmul.mubr.f32.gmra.mrb[0].mxu0 %v1636
      %v1725 = vpop.f32.mrb[0].mxu0
      %v1726 = vadd.f32 %v1301, %v1725
      %v1727 = vpop.f32.mrb[0].mxu0
      %1728 = vmatprep.mubr.f32.mxu0 0.0
      %1729 = vmatmul.mubr.f32.gmra.mrb[0].mxu0 %v1638
      %v1730 = vpop.f32.mrb[0].mxu0
      %v1731 = vadd.f32 %v1306, %v1730
      %v1732 = vpop.f32.mrb[0].mxu0
      %1733 = vmatprep.mubr.f32.mxu0 0.0
      %1734 = vmatmul.mubr.f32.gmra.mrb[0].mxu0 %v1640
      %v1735 = vpop.f32.mrb[0].mxu0
      %v1736 = vadd.f32 %v1311, %v1735
      %v1737 = vpop.f32.mrb[0].mxu0
      %1738 = vmatprep.mubr.f32.mxu0 0.0
      %1739 = vmatmul.mubr.f32.gmra.mrb[0].mxu0 %v1642
      %v1740 = vpop.f32.mrb[0].mxu0
      %v1741 = vadd.f32 %v1316, %v1740
      %v1742 = vpop.f32.mrb[0].mxu0
      %1743 = vmatprep.mubr.f32.mxu0 0.0
      %1744 = vmatmul.mubr.f32.gmra.mrb[0].mxu0 %v1644
      %v1745 = vpop.f32.mrb[0].mxu0
      %v1746 = vadd.f32 %v1321, %v1745
      %v1747 = vpop.f32.mrb[0].mxu0
      %1748 = vdwg.mxu0
      %v1749 = vld [vmem:[%s187 + $0x1] sm:$0x7f]
      %v1750 = vld [vmem:[%s187 + $0x9] sm:$0x7f]
      %v1751 = vld [vmem:[%s187 + $0x11] sm:$0x7f]
      %v1752 = vld [vmem:[%s187 + $0x19] sm:$0x7f]
      %v1753 = vld [vmem:[%s187 + $0x21] sm:$0x7f]
      %v1754 = vld [vmem:[%s187 + $0x29] sm:$0x7f]
      %v1755 = vld [vmem:[%s187 + $0x31] sm:$0x7f]
      %v1763 = vcombine.high %v1749, %v1749
      %v1765 = vunpack.c.l.s4 1966171168
      %v1766 = vunpack.c.0.s8 %v1765
      %v1767 = vlaneseq
      %v1768 = vshrl.u32 %v1767, 7
      %v1769 = vsub.s32 %v1766, %v1768
      %v1770 = vrot.slane %v1749, %v1769
      %v1772 = vunpack.c.l.s4 1966171168
      %v1773 = vunpack.c.0.s8 %v1772
      %v1774 = vlaneseq
      %v1775 = vshrl.u32 %v1774, 7
      %v1776 = vsub.s32 %v1773, %v1775
      %v1777 = vrot.slane %v1763, %v1776
      %v1778 = vcombine.high %v1770, %v1770
      %v1779 = vcombine.high %v1777, %v1777
      %v1781 = vunpack.c.l.s4 1966171168
      %v1782 = vunpack.c.0.s8 %v1781
      %v1783 = vlaneseq
      %v1784 = vshrl.u32 %v1783, 7
      %v1785 = vsub.s32 %v1782, %v1784
      %v1786 = vrot.slane %v1770, %v1785
      %v1788 = vunpack.c.l.s4 1966171168
      %v1789 = vunpack.c.0.s8 %v1788
      %v1790 = vlaneseq
      %v1791 = vshrl.u32 %v1790, 7
      %v1792 = vsub.s32 %v1789, %v1791
      %v1793 = vrot.slane %v1777, %v1792
      %v1795 = vunpack.c.l.s4 1966171168
      %v1796 = vunpack.c.0.s8 %v1795
      %v1797 = vlaneseq
      %v1798 = vshrl.u32 %v1797, 7
      %v1799 = vsub.s32 %v1796, %v1798
      %v1800 = vrot.slane %v1778, %v1799
      %v1802 = vunpack.c.l.s4 1966171168
      %v1803 = vunpack.c.0.s8 %v1802
      %v1804 = vlaneseq
      %v1805 = vshrl.u32 %v1804, 7
      %v1806 = vsub.s32 %v1803, %v1805
      %v1807 = vrot.slane %v1779, %v1806
      %v1808 = vcombine.high %v1786, %v1786
      %v1809 = vcombine.high %v1793, %v1793
      %v1810 = vcombine.high %v1800, %v1800
      %v1811 = vcombine.high %v1750, %v1750
      %v1813 = vunpack.c.l.s4 1966171168
      %v1814 = vunpack.c.0.s8 %v1813
      %v1815 = vlaneseq
      %v1816 = vshrl.u32 %v1815, 7
      %v1817 = vsub.s32 %v1814, %v1816
      %v1818 = vrot.slane %v1750, %v1817
      %v1820 = vunpack.c.l.s4 1966171168
      %v1821 = vunpack.c.0.s8 %v1820
      %v1822 = vlaneseq
      %v1823 = vshrl.u32 %v1822, 7
      %v1824 = vsub.s32 %v1821, %v1823
      %v1825 = vrot.slane %v1811, %v1824
      %v1826 = vcombine.high %v1818, %v1818
      %v1827 = vcombine.high %v1825, %v1825
      %v1829 = vunpack.c.l.s4 1966171168
      %v1830 = vunpack.c.0.s8 %v1829
      %v1831 = vlaneseq
      %v1832 = vshrl.u32 %v1831, 7
      %v1833 = vsub.s32 %v1830, %v1832
      %v1834 = vrot.slane %v1818, %v1833
      %v1836 = vunpack.c.l.s4 1966171168
      %v1837 = vunpack.c.0.s8 %v1836
      %v1838 = vlaneseq
      %v1839 = vshrl.u32 %v1838, 7
      %v1840 = vsub.s32 %v1837, %v1839
      %v1841 = vrot.slane %v1825, %v1840
      %v1843 = vunpack.c.l.s4 1966171168
      %v1844 = vunpack.c.0.s8 %v1843
      %v1845 = vlaneseq
      %v1846 = vshrl.u32 %v1845, 7
      %v1847 = vsub.s32 %v1844, %v1846
      %v1848 = vrot.slane %v1826, %v1847
      %v1850 = vunpack.c.l.s4 1966171168
      %v1851 = vunpack.c.0.s8 %v1850
      %v1852 = vlaneseq
      %v1853 = vshrl.u32 %v1852, 7
      %v1854 = vsub.s32 %v1851, %v1853
      %v1855 = vrot.slane %v1827, %v1854
      %v1856 = vcombine.high %v1834, %v1834
      %v1857 = vcombine.high %v1841, %v1841
      %v1858 = vcombine.high %v1848, %v1848
      %v1859 = vcombine.high %v1751, %v1751
      %v1861 = vunpack.c.l.s4 1966171168
      %v1862 = vunpack.c.0.s8 %v1861
      %v1863 = vlaneseq
      %v1864 = vshrl.u32 %v1863, 7
      %v1865 = vsub.s32 %v1862, %v1864
      %v1866 = vrot.slane %v1751, %v1865
      %v1868 = vunpack.c.l.s4 1966171168
      %v1869 = vunpack.c.0.s8 %v1868
      %v1870 = vlaneseq
      %v1871 = vshrl.u32 %v1870, 7
      %v1872 = vsub.s32 %v1869, %v1871
      %v1873 = vrot.slane %v1859, %v1872
      %v1874 = vcombine.high %v1866, %v1866
      %v1875 = vcombine.high %v1873, %v1873
      %v1877 = vunpack.c.l.s4 1966171168
      %v1878 = vunpack.c.0.s8 %v1877
      %v1879 = vlaneseq
      %v1880 = vshrl.u32 %v1879, 7
      %v1881 = vsub.s32 %v1878, %v1880
      %v1882 = vrot.slane %v1866, %v1881
      %v1884 = vunpack.c.l.s4 1966171168
      %v1885 = vunpack.c.0.s8 %v1884
      %v1886 = vlaneseq
      %v1887 = vshrl.u32 %v1886, 7
      %v1888 = vsub.s32 %v1885, %v1887
      %v1889 = vrot.slane %v1873, %v1888
      %v1891 = vunpack.c.l.s4 1966171168
      %v1892 = vunpack.c.0.s8 %v1891
      %v1893 = vlaneseq
      %v1894 = vshrl.u32 %v1893, 7
      %v1895 = vsub.s32 %v1892, %v1894
      %v1896 = vrot.slane %v1874, %v1895
      %v1898 = vunpack.c.l.s4 1966171168
      %v1899 = vunpack.c.0.s8 %v1898
      %v1900 = vlaneseq
      %v1901 = vshrl.u32 %v1900, 7
      %v1902 = vsub.s32 %v1899, %v1901
      %v1903 = vrot.slane %v1875, %v1902
      %v1904 = vcombine.high %v1882, %v1882
      %v1905 = vcombine.high %v1889, %v1889
      %v1906 = vcombine.high %v1896, %v1896
      %v1907 = vcombine.high %v1752, %v1752
      %v1909 = vunpack.c.l.s4 1966171168
      %v1910 = vunpack.c.0.s8 %v1909
      %v1911 = vlaneseq
      %v1912 = vshrl.u32 %v1911, 7
      %v1913 = vsub.s32 %v1910, %v1912
      %v1914 = vrot.slane %v1752, %v1913
      %v1916 = vunpack.c.l.s4 1966171168
      %v1917 = vunpack.c.0.s8 %v1916
      %v1918 = vlaneseq
      %v1919 = vshrl.u32 %v1918, 7
      %v1920 = vsub.s32 %v1917, %v1919
      %v1921 = vrot.slane %v1907, %v1920
      %v1922 = vcombine.high %v1914, %v1914
      %v1923 = vcombine.high %v1921, %v1921
      %v1925 = vunpack.c.l.s4 1966171168
      %v1926 = vunpack.c.0.s8 %v1925
      %v1927 = vlaneseq
      %v1928 = vshrl.u32 %v1927, 7
      %v1929 = vsub.s32 %v1926, %v1928
      %v1930 = vrot.slane %v1914, %v1929
      %v1932 = vunpack.c.l.s4 1966171168
      %v1933 = vunpack.c.0.s8 %v1932
      %v1934 = vlaneseq
      %v1935 = vshrl.u32 %v1934, 7
      %v1936 = vsub.s32 %v1933, %v1935
      %v1937 = vrot.slane %v1921, %v1936
      %v1939 = vunpack.c.l.s4 1966171168
      %v1940 = vunpack.c.0.s8 %v1939
      %v1941 = vlaneseq
      %v1942 = vshrl.u32 %v1941, 7
      %v1943 = vsub.s32 %v1940, %v1942
      %v1944 = vrot.slane %v1922, %v1943
      %v1946 = vunpack.c.l.s4 1966171168
      %v1947 = vunpack.c.0.s8 %v1946
      %v1948 = vlaneseq
      %v1949 = vshrl.u32 %v1948, 7
      %v1950 = vsub.s32 %v1947, %v1949
      %v1951 = vrot.slane %v1923, %v1950
      %v1952 = vcombine.high %v1930, %v1930
      %v1953 = vcombine.high %v1937, %v1937
      %v1954 = vcombine.high %v1944, %v1944
      %v1955 = vcombine.high %v1753, %v1753
      %v1957 = vunpack.c.l.s4 1966171168
      %v1958 = vunpack.c.0.s8 %v1957
      %v1959 = vlaneseq
      %v1960 = vshrl.u32 %v1959, 7
      %v1961 = vsub.s32 %v1958, %v1960
      %v1962 = vrot.slane %v1753, %v1961
      %v1964 = vunpack.c.l.s4 1966171168
      %v1965 = vunpack.c.0.s8 %v1964
      %v1966 = vlaneseq
      %v1967 = vshrl.u32 %v1966, 7
      %v1968 = vsub.s32 %v1965, %v1967
      %v1969 = vrot.slane %v1955, %v1968
      %v1970 = vcombine.high %v1962, %v1962
      %v1971 = vcombine.high %v1969, %v1969
      %v1973 = vunpack.c.l.s4 1966171168
      %v1974 = vunpack.c.0.s8 %v1973
      %v1975 = vlaneseq
      %v1976 = vshrl.u32 %v1975, 7
      %v1977 = vsub.s32 %v1974, %v1976
      %v1978 = vrot.slane %v1962, %v1977
      %v1980 = vunpack.c.l.s4 1966171168
      %v1981 = vunpack.c.0.s8 %v1980
      %v1982 = vlaneseq
      %v1983 = vshrl.u32 %v1982, 7
      %v1984 = vsub.s32 %v1981, %v1983
      %v1985 = vrot.slane %v1969, %v1984
      %v1987 = vunpack.c.l.s4 1966171168
      %v1988 = vunpack.c.0.s8 %v1987
      %v1989 = vlaneseq
      %v1990 = vshrl.u32 %v1989, 7
      %v1991 = vsub.s32 %v1988, %v1990
      %v1992 = vrot.slane %v1970, %v1991
      %v1994 = vunpack.c.l.s4 1966171168
      %v1995 = vunpack.c.0.s8 %v1994
      %v1996 = vlaneseq
      %v1997 = vshrl.u32 %v1996, 7
      %v1998 = vsub.s32 %v1995, %v1997
      %v1999 = vrot.slane %v1971, %v1998
      %v2000 = vcombine.high %v1978, %v1978
      %v2001 = vcombine.high %v1985, %v1985
      %v2002 = vcombine.high %v1992, %v1992
      %v2003 = vcombine.high %v1754, %v1754
      %v2005 = vunpack.c.l.s4 1966171168
      %v2006 = vunpack.c.0.s8 %v2005
      %v2007 = vlaneseq
      %v2008 = vshrl.u32 %v2007, 7
      %v2009 = vsub.s32 %v2006, %v2008
      %v2010 = vrot.slane %v1754, %v2009
      %v2012 = vunpack.c.l.s4 1966171168
      %v2013 = vunpack.c.0.s8 %v2012
      %v2014 = vlaneseq
      %v2015 = vshrl.u32 %v2014, 7
      %v2016 = vsub.s32 %v2013, %v2015
      %v2017 = vrot.slane %v2003, %v2016
      %v2018 = vcombine.high %v2010, %v2010
      %v2019 = vcombine.high %v2017, %v2017
      %v2021 = vunpack.c.l.s4 1966171168
      %v2022 = vunpack.c.0.s8 %v2021
      %v2023 = vlaneseq
      %v2024 = vshrl.u32 %v2023, 7
      %v2025 = vsub.s32 %v2022, %v2024
      %v2026 = vrot.slane %v2010, %v2025
      %v2028 = vunpack.c.l.s4 1966171168
      %v2029 = vunpack.c.0.s8 %v2028
      %v2030 = vlaneseq
      %v2031 = vshrl.u32 %v2030, 7
      %v2032 = vsub.s32 %v2029, %v2031
      %v2033 = vrot.slane %v2017, %v2032
      %v2035 = vunpack.c.l.s4 1966171168
      %v2036 = vunpack.c.0.s8 %v2035
      %v2037 = vlaneseq
      %v2038 = vshrl.u32 %v2037, 7
      %v2039 = vsub.s32 %v2036, %v2038
      %v2040 = vrot.slane %v2018, %v2039
      %v2042 = vunpack.c.l.s4 1966171168
      %v2043 = vunpack.c.0.s8 %v2042
      %v2044 = vlaneseq
      %v2045 = vshrl.u32 %v2044, 7
      %v2046 = vsub.s32 %v2043, %v2045
      %v2047 = vrot.slane %v2019, %v2046
      %v2048 = vcombine.high %v2026, %v2026
      %v2049 = vcombine.high %v2033, %v2033
      %v2050 = vcombine.high %v2040, %v2040
      %v2051 = vcombine.high %v1755, %v1755
      %v2053 = vunpack.c.l.s4 1966171168
      %v2054 = vunpack.c.0.s8 %v2053
      %v2055 = vlaneseq
      %v2056 = vshrl.u32 %v2055, 7
      %v2057 = vsub.s32 %v2054, %v2056
      %v2058 = vrot.slane %v1755, %v2057
      %v2060 = vunpack.c.l.s4 1966171168
      %v2061 = vunpack.c.0.s8 %v2060
      %v2062 = vlaneseq
      %v2063 = vshrl.u32 %v2062, 7
      %v2064 = vsub.s32 %v2061, %v2063
      %v2065 = vrot.slane %v2051, %v2064
      %v2066 = vcombine.high %v2058, %v2058
      %v2067 = vcombine.high %v2065, %v2065
      %v2069 = vunpack.c.l.s4 1966171168
      %v2070 = vunpack.c.0.s8 %v2069
      %v2071 = vlaneseq
      %v2072 = vshrl.u32 %v2071, 7
      %v2073 = vsub.s32 %v2070, %v2072
      %v2074 = vrot.slane %v2058, %v2073
      %v2076 = vunpack.c.l.s4 1966171168
      %v2077 = vunpack.c.0.s8 %v2076
      %v2078 = vlaneseq
      %v2079 = vshrl.u32 %v2078, 7
      %v2080 = vsub.s32 %v2077, %v2079
      %v2081 = vrot.slane %v2065, %v2080
      %v2083 = vunpack.c.l.s4 1966171168
      %v2084 = vunpack.c.0.s8 %v2083
      %v2085 = vlaneseq
      %v2086 = vshrl.u32 %v2085, 7
      %v2087 = vsub.s32 %v2084, %v2086
      %v2088 = vrot.slane %v2066, %v2087
      %v2090 = vunpack.c.l.s4 1966171168
      %v2091 = vunpack.c.0.s8 %v2090
      %v2092 = vlaneseq
      %v2093 = vshrl.u32 %v2092, 7
      %v2094 = vsub.s32 %v2091, %v2093
      %v2095 = vrot.slane %v2067, %v2094
      %v2096 = vcombine.high %v2074, %v2074
      %v2097 = vcombine.high %v2081, %v2081
      %v2098 = vcombine.high %v2088, %v2088
      %s2099 = scalar_lea.vmem %s1, 8
      %v2100 = vld [vmem:[%s2099] sm:$0xf]
      %v2101 = vcombine.low %v1786, %v1800
      %v2102 = vcombine.low %v1808, %v1810
      %v2103 = vcombine.low %v1793, %v1807
      %v2104 = vcombine.low %v1809, %v1834
      %v2106 = vunpack.c.l.s4 1966171168
      %v2107 = vunpack.c.0.s8 %v2106
      %v2108 = vlaneseq
      %v2109 = vshrl.u32 %v2108, 7
      %v2110 = vsub.s32 %v2107, %v2109
      %v2111 = vrot.slane %v2101, %v2110
      %v2113 = vunpack.c.l.s4 1966171168
      %v2114 = vunpack.c.0.s8 %v2113
      %v2115 = vlaneseq
      %v2116 = vshrl.u32 %v2115, 7
      %v2117 = vsub.s32 %v2114, %v2116
      %v2118 = vrot.slane %v2102, %v2117
      %v2120 = vunpack.c.l.s4 1966171168
      %v2121 = vunpack.c.0.s8 %v2120
      %v2122 = vlaneseq
      %v2123 = vshrl.u32 %v2122, 7
      %v2124 = vsub.s32 %v2121, %v2123
      %v2125 = vrot.slane %v2103, %v2124
      %v2127 = vunpack.c.l.s4 1966171168
      %v2128 = vunpack.c.0.s8 %v2127
      %v2129 = vlaneseq
      %v2130 = vshrl.u32 %v2129, 7
      %v2131 = vsub.s32 %v2128, %v2130
      %v2132 = vrot.slane %v2104, %v2131
      %v2133 = vcombine.low %v2111, %v2118
      %v2134 = vcombine.low %v2125, %v2132
      %v2136 = vunpack.c.l.s4 1966171168
      %v2137 = vunpack.c.0.s8 %v2136
      %v2138 = vlaneseq
      %v2139 = vshrl.u32 %v2138, 7
      %v2140 = vsub.s32 %v2137, %v2139
      %v2141 = vrot.slane %v2133, %v2140
      %v2143 = vunpack.c.l.s4 1966171168
      %v2144 = vunpack.c.0.s8 %v2143
      %v2145 = vlaneseq
      %v2146 = vshrl.u32 %v2145, 7
      %v2147 = vsub.s32 %v2144, %v2146
      %v2148 = vrot.slane %v2134, %v2147
      %v2149 = vcombine.low %v2141, %v2148
      %v2150 = vcombine.low %v1848, %v1856
      %v2151 = vcombine.low %v1858, %v1841
      %v2152 = vcombine.low %v1855, %v1857
      %v2153 = vcombine.low %v1882, %v1896
      %v2155 = vunpack.c.l.s4 1966171168
      %v2156 = vunpack.c.0.s8 %v2155
      %v2157 = vlaneseq
      %v2158 = vshrl.u32 %v2157, 7
      %v2159 = vsub.s32 %v2156, %v2158
      %v2160 = vrot.slane %v2150, %v2159
      %v2162 = vunpack.c.l.s4 1966171168
      %v2163 = vunpack.c.0.s8 %v2162
      %v2164 = vlaneseq
      %v2165 = vshrl.u32 %v2164, 7
      %v2166 = vsub.s32 %v2163, %v2165
      %v2167 = vrot.slane %v2151, %v2166
      %v2169 = vunpack.c.l.s4 1966171168
      %v2170 = vunpack.c.0.s8 %v2169
      %v2171 = vlaneseq
      %v2172 = vshrl.u32 %v2171, 7
      %v2173 = vsub.s32 %v2170, %v2172
      %v2174 = vrot.slane %v2152, %v2173
      %v2176 = vunpack.c.l.s4 1966171168
      %v2177 = vunpack.c.0.s8 %v2176
      %v2178 = vlaneseq
      %v2179 = vshrl.u32 %v2178, 7
      %v2180 = vsub.s32 %v2177, %v2179
      %v2181 = vrot.slane %v2153, %v2180
      %v2182 = vcombine.low %v2160, %v2167
      %v2183 = vcombine.low %v2174, %v2181
      %v2185 = vunpack.c.l.s4 1966171168
      %v2186 = vunpack.c.0.s8 %v2185
      %v2187 = vlaneseq
      %v2188 = vshrl.u32 %v2187, 7
      %v2189 = vsub.s32 %v2186, %v2188
      %v2190 = vrot.slane %v2182, %v2189
      %v2192 = vunpack.c.l.s4 1966171168
      %v2193 = vunpack.c.0.s8 %v2192
      %v2194 = vlaneseq
      %v2195 = vshrl.u32 %v2194, 7
      %v2196 = vsub.s32 %v2193, %v2195
      %v2197 = vrot.slane %v2183, %v2196
      %v2198 = vcombine.low %v2190, %v2197
      %v2199 = vcombine.low %v1904, %v1906
      %v2200 = vcombine.low %v1889, %v1903
      %v2201 = vcombine.low %v1905, %v1930
      %v2202 = vcombine.low %v1944, %v1952
      %v2204 = vunpack.c.l.s4 1966171168
      %v2205 = vunpack.c.0.s8 %v2204
      %v2206 = vlaneseq
      %v2207 = vshrl.u32 %v2206, 7
      %v2208 = vsub.s32 %v2205, %v2207
      %v2209 = vrot.slane %v2199, %v2208
      %v2211 = vunpack.c.l.s4 1966171168
      %v2212 = vunpack.c.0.s8 %v2211
      %v2213 = vlaneseq
      %v2214 = vshrl.u32 %v2213, 7
      %v2215 = vsub.s32 %v2212, %v2214
      %v2216 = vrot.slane %v2200, %v2215
      %v2218 = vunpack.c.l.s4 1966171168
      %v2219 = vunpack.c.0.s8 %v2218
      %v2220 = vlaneseq
      %v2221 = vshrl.u32 %v2220, 7
      %v2222 = vsub.s32 %v2219, %v2221
      %v2223 = vrot.slane %v2201, %v2222
      %v2225 = vunpack.c.l.s4 1966171168
      %v2226 = vunpack.c.0.s8 %v2225
      %v2227 = vlaneseq
      %v2228 = vshrl.u32 %v2227, 7
      %v2229 = vsub.s32 %v2226, %v2228
      %v2230 = vrot.slane %v2202, %v2229
      %v2231 = vcombine.low %v2209, %v2216
      %v2232 = vcombine.low %v2223, %v2230
      %v2234 = vunpack.c.l.s4 1966171168
      %v2235 = vunpack.c.0.s8 %v2234
      %v2236 = vlaneseq
      %v2237 = vshrl.u32 %v2236, 7
      %v2238 = vsub.s32 %v2235, %v2237
      %v2239 = vrot.slane %v2231, %v2238
      %v2241 = vunpack.c.l.s4 1966171168
      %v2242 = vunpack.c.0.s8 %v2241
      %v2243 = vlaneseq
      %v2244 = vshrl.u32 %v2243, 7
      %v2245 = vsub.s32 %v2242, %v2244
      %v2246 = vrot.slane %v2232, %v2245
      %v2247 = vcombine.low %v2239, %v2246
      %v2248 = vcombine.low %v1954, %v1937
      %v2249 = vcombine.low %v1951, %v1953
      %v2250 = vcombine.low %v1978, %v1992
      %v2251 = vcombine.low %v2000, %v2002
      %v2253 = vunpack.c.l.s4 1966171168
      %v2254 = vunpack.c.0.s8 %v2253
      %v2255 = vlaneseq
      %v2256 = vshrl.u32 %v2255, 7
      %v2257 = vsub.s32 %v2254, %v2256
      %v2258 = vrot.slane %v2248, %v2257
      %v2260 = vunpack.c.l.s4 1966171168
      %v2261 = vunpack.c.0.s8 %v2260
      %v2262 = vlaneseq
      %v2263 = vshrl.u32 %v2262, 7
      %v2264 = vsub.s32 %v2261, %v2263
      %v2265 = vrot.slane %v2249, %v2264
      %v2267 = vunpack.c.l.s4 1966171168
      %v2268 = vunpack.c.0.s8 %v2267
      %v2269 = vlaneseq
      %v2270 = vshrl.u32 %v2269, 7
      %v2271 = vsub.s32 %v2268, %v2270
      %v2272 = vrot.slane %v2250, %v2271
      %v2274 = vunpack.c.l.s4 1966171168
      %v2275 = vunpack.c.0.s8 %v2274
      %v2276 = vlaneseq
      %v2277 = vshrl.u32 %v2276, 7
      %v2278 = vsub.s32 %v2275, %v2277
      %v2279 = vrot.slane %v2251, %v2278
      %v2280 = vcombine.low %v2258, %v2265
      %v2281 = vcombine.low %v2272, %v2279
      %v2283 = vunpack.c.l.s4 1966171168
      %v2284 = vunpack.c.0.s8 %v2283
      %v2285 = vlaneseq
      %v2286 = vshrl.u32 %v2285, 7
      %v2287 = vsub.s32 %v2284, %v2286
      %v2288 = vrot.slane %v2280, %v2287
      %v2290 = vunpack.c.l.s4 1966171168
      %v2291 = vunpack.c.0.s8 %v2290
      %v2292 = vlaneseq
      %v2293 = vshrl.u32 %v2292, 7
      %v2294 = vsub.s32 %v2291, %v2293
      %v2295 = vrot.slane %v2281, %v2294
      %v2296 = vcombine.low %v2288, %v2295
      %v2297 = vcombine.low %v1985, %v1999
      %v2298 = vcombine.low %v2001, %v2026
      %v2299 = vcombine.low %v2040, %v2048
      %v2300 = vcombine.low %v2050, %v2033
      %v2302 = vunpack.c.l.s4 1966171168
      %v2303 = vunpack.c.0.s8 %v2302
      %v2304 = vlaneseq
      %v2305 = vshrl.u32 %v2304, 7
      %v2306 = vsub.s32 %v2303, %v2305
      %v2307 = vrot.slane %v2297, %v2306
      %v2309 = vunpack.c.l.s4 1966171168
      %v2310 = vunpack.c.0.s8 %v2309
      %v2311 = vlaneseq
      %v2312 = vshrl.u32 %v2311, 7
      %v2313 = vsub.s32 %v2310, %v2312
      %v2314 = vrot.slane %v2298, %v2313
      %v2316 = vunpack.c.l.s4 1966171168
      %v2317 = vunpack.c.0.s8 %v2316
      %v2318 = vlaneseq
      %v2319 = vshrl.u32 %v2318, 7
      %v2320 = vsub.s32 %v2317, %v2319
      %v2321 = vrot.slane %v2299, %v2320
      %v2323 = vunpack.c.l.s4 1966171168
      %v2324 = vunpack.c.0.s8 %v2323
      %v2325 = vlaneseq
      %v2326 = vshrl.u32 %v2325, 7
      %v2327 = vsub.s32 %v2324, %v2326
      %v2328 = vrot.slane %v2300, %v2327
      %v2329 = vcombine.low %v2307, %v2314
      %v2330 = vcombine.low %v2321, %v2328
      %v2332 = vunpack.c.l.s4 1966171168
      %v2333 = vunpack.c.0.s8 %v2332
      %v2334 = vlaneseq
      %v2335 = vshrl.u32 %v2334, 7
      %v2336 = vsub.s32 %v2333, %v2335
      %v2337 = vrot.slane %v2329, %v2336
      %v2339 = vunpack.c.l.s4 1966171168
      %v2340 = vunpack.c.0.s8 %v2339
      %v2341 = vlaneseq
      %v2342 = vshrl.u32 %v2341, 7
      %v2343 = vsub.s32 %v2340, %v2342
      %v2344 = vrot.slane %v2330, %v2343
      %v2345 = vcombine.low %v2337, %v2344
      %v2346 = vcombine.low %v2047, %v2049
      %v2347 = vcombine.low %v2074, %v2088
      %v2348 = vcombine.low %v2096, %v2098
      %v2349 = vcombine.low %v2081, %v2095
      %v2351 = vunpack.c.l.s4 1966171168
      %v2352 = vunpack.c.0.s8 %v2351
      %v2353 = vlaneseq
      %v2354 = vshrl.u32 %v2353, 7
      %v2355 = vsub.s32 %v2352, %v2354
      %v2356 = vrot.slane %v2346, %v2355
      %v2358 = vunpack.c.l.s4 1966171168
      %v2359 = vunpack.c.0.s8 %v2358
      %v2360 = vlaneseq
      %v2361 = vshrl.u32 %v2360, 7
      %v2362 = vsub.s32 %v2359, %v2361
      %v2363 = vrot.slane %v2347, %v2362
      %v2365 = vunpack.c.l.s4 1966171168
      %v2366 = vunpack.c.0.s8 %v2365
      %v2367 = vlaneseq
      %v2368 = vshrl.u32 %v2367, 7
      %v2369 = vsub.s32 %v2366, %v2368
      %v2370 = vrot.slane %v2348, %v2369
      %v2372 = vunpack.c.l.s4 1966171168
      %v2373 = vunpack.c.0.s8 %v2372
      %v2374 = vlaneseq
      %v2375 = vshrl.u32 %v2374, 7
      %v2376 = vsub.s32 %v2373, %v2375
      %v2377 = vrot.slane %v2349, %v2376
      %v2378 = vcombine.low %v2356, %v2363
      %v2379 = vcombine.low %v2370, %v2377
      %v2381 = vunpack.c.l.s4 1966171168
      %v2382 = vunpack.c.0.s8 %v2381
      %v2383 = vlaneseq
      %v2384 = vshrl.u32 %v2383, 7
      %v2385 = vsub.s32 %v2382, %v2384
      %v2386 = vrot.slane %v2378, %v2385
      %v2388 = vunpack.c.l.s4 1966171168
      %v2389 = vunpack.c.0.s8 %v2388
      %v2390 = vlaneseq
      %v2391 = vshrl.u32 %v2390, 7
      %v2392 = vsub.s32 %v2389, %v2391
      %v2393 = vrot.slane %v2379, %v2392
      %v2394 = vcombine.low %v2386, %v2393
      %v2396 = vunpack.c.l.s4 1966171168
      %v2397 = vunpack.c.0.s8 %v2396
      %v2398 = vlaneseq
      %v2399 = vshrl.u32 %v2398, 7
      %v2400 = vsub.s32 %v2397, %v2399
      %v2401 = vrot.slane %v2097, %v2400
      %v2403 = vunpack.c.l.s4 1966171168
      %v2404 = vunpack.c.0.s8 %v2403
      %v2405 = vlaneseq
      %v2406 = vshrl.u32 %v2405, 7
      %v2407 = vsub.s32 %v2404, %v2406
      %v2408 = vrot.slane %v2401, %v2407
      %v2409 = vsel %vm1205, %v2149, 0
      %v2411 = vsel %vm1205, %v2198, 0
      %v2413 = vsel %vm1205, %v2247, 0
      %v2415 = vsel %vm1205, %v2296, 0
      %v2417 = vsel %vm1205, %v2345, 0
      %v2419 = vsel %vm1205, %v2394, 0
      %v2421 = vsel %vm1205, %v2408, 0
      %v2424 = vsel %vm1220, %v2100, 0
      %2426 = vmatprep.subr.mxu0 0.0
      %2427 = vmatpush1.msra.mxu0 %v2424
      %2428 = vmatprep.subr.mxu0 0.0
      %2429 = vmatpush1.msra.mxu0 0.0
      %2430 = vmatprep.subr.mxu0 0.0
      %2431 = vmatpush1.msra.mxu0 0.0
      %2432 = vmatprep.subr.mxu0 0.0
      %2433 = vmatpush1.msra.mxu0 0.0
      %2434 = vmatprep.subr.mxu0 0.0
      %2435 = vmatpush1.msra.mxu0 0.0
      %2436 = vmatprep.subr.mxu0 0.0
      %2437 = vmatpush1.msra.mxu0 0.0
      %2438 = vmatprep.subr.mxu0 0.0
      %2439 = vmatpush1.msra.mxu0 0.0
      %2440 = vmatprep.subr.mxu0 0.0
      %2441 = vmatpush1.msra.mxu0 0.0
      %2442 = vmatprep.subr.mxu0 0.0
      %2443 = vmatpush1.msra.mxu0 0.0
      %2444 = vmatprep.subr.mxu0 0.0
      %2445 = vmatpush1.msra.mxu0 0.0
      %2446 = vmatprep.subr.mxu0 0.0
      %2447 = vmatpush1.msra.mxu0 0.0
      %2448 = vmatprep.subr.mxu0 0.0
      %2449 = vmatpush1.msra.mxu0 0.0
      %2450 = vmatprep.subr.mxu0 0.0
      %2451 = vmatpush1.msra.mxu0 0.0
      %2452 = vmatprep.subr.mxu0 0.0
      %2453 = vmatpush1.msra.mxu0 0.0
      %2454 = vmatprep.subr.mxu0 0.0
      %2455 = vmatpush1.msra.mxu0 0.0
      %2456 = vmatprep.subr.mxu0 0.0
      %2457 = vmatpush1.msra.mxu0 0.0
      %2458 = vmatprep.subr.mxu0 0.0
      %2459 = vmatpush1.msra.mxu0 0.0
      %2460 = vmatprep.subr.mxu0 0.0
      %2461 = vmatpush1.msra.mxu0 0.0
      %2462 = vmatprep.subr.mxu0 0.0
      %2463 = vmatpush1.msra.mxu0 0.0
      %2464 = vmatprep.subr.mxu0 0.0
      %2465 = vmatpush1.msra.mxu0 0.0
      %2466 = vmatprep.subr.mxu0 0.0
      %2467 = vmatpush1.msra.mxu0 0.0
      %2468 = vmatprep.subr.mxu0 0.0
      %2469 = vmatpush1.msra.mxu0 0.0
      %2470 = vmatprep.subr.mxu0 0.0
      %2471 = vmatpush1.msra.mxu0 0.0
      %2472 = vmatprep.subr.mxu0 0.0
      %2473 = vmatpush1.msra.mxu0 0.0
      %2474 = vmatprep.subr.mxu0 0.0
      %2475 = vmatpush1.msra.mxu0 0.0
      %2476 = vmatprep.subr.mxu0 0.0
      %2477 = vmatpush1.msra.mxu0 0.0
      %2478 = vmatprep.subr.mxu0 0.0
      %2479 = vmatpush1.msra.mxu0 0.0
      %2480 = vmatprep.subr.mxu0 0.0
      %2481 = vmatpush1.msra.mxu0 0.0
      %2482 = vmatprep.subr.mxu0 0.0
      %2483 = vmatpush1.msra.mxu0 0.0
      %2484 = vmatprep.subr.mxu0 0.0
      %2485 = vmatpush1.msra.mxu0 0.0
      %2486 = vmatprep.subr.mxu0 0.0
      %2487 = vmatpush1.msra.mxu0 0.0
      %2488 = vmatprep.subr.mxu0 0.0
      %2489 = vmatpush1.msra.mxu0 0.0
      %2490 = vmatprep.mubr.f32.mxu0 0.0
      %2491 = vmatmul.mubr.f32.gmra.mrb[0].mxu0 %v2409
      %v2492 = vpop.f32.mrb[0].mxu0
      %v2493 = vadd.f32 0.0, %v2492
      %v2494 = vpop.f32.mrb[0].mxu0
      %2495 = vmatprep.mubr.f32.mxu0 0.0
      %2496 = vmatmul.mubr.f32.gmra.mrb[0].mxu0 %v2411
      %v2497 = vpop.f32.mrb[0].mxu0
      %v2498 = vadd.f32 0.0, %v2497
      %v2499 = vpop.f32.mrb[0].mxu0
      %2500 = vmatprep.mubr.f32.mxu0 0.0
      %2501 = vmatmul.mubr.f32.gmra.mrb[0].mxu0 %v2413
      %v2502 = vpop.f32.mrb[0].mxu0
      %v2503 = vadd.f32 0.0, %v2502
      %v2504 = vpop.f32.mrb[0].mxu0
      %2505 = vmatprep.mubr.f32.mxu0 0.0
      %2506 = vmatmul.mubr.f32.gmra.mrb[0].mxu0 %v2415
      %v2507 = vpop.f32.mrb[0].mxu0
      %v2508 = vadd.f32 0.0, %v2507
      %v2509 = vpop.f32.mrb[0].mxu0
      %2510 = vmatprep.mubr.f32.mxu0 0.0
      %2511 = vmatmul.mubr.f32.gmra.mrb[0].mxu0 %v2417
      %v2512 = vpop.f32.mrb[0].mxu0
      %v2513 = vadd.f32 0.0, %v2512
      %v2514 = vpop.f32.mrb[0].mxu0
      %2515 = vmatprep.mubr.f32.mxu0 0.0
      %2516 = vmatmul.mubr.f32.gmra.mrb[0].mxu0 %v2419
      %v2517 = vpop.f32.mrb[0].mxu0
      %v2518 = vadd.f32 0.0, %v2517
      %v2519 = vpop.f32.mrb[0].mxu0
      %2520 = vmatprep.mubr.f32.mxu0 0.0
      %2521 = vmatmul.mubr.f32.gmra.mrb[0].mxu0 %v2421
      %v2522 = vpop.f32.mrb[0].mxu0
      %v2523 = vadd.f32 0.0, %v2522
      %v2524 = vpop.f32.mrb[0].mxu0
      %2525 = vdwg.mxu0
      %v2526 = vadd.f32 %v1716, %v2493
      %v2527 = vadd.f32 %v1721, %v2498
      %v2528 = vadd.f32 %v1726, %v2503
      %v2529 = vadd.f32 %v1731, %v2508
      %v2530 = vadd.f32 %v1736, %v2513
      %v2531 = vadd.f32 %v1741, %v2518
      %v2532 = vadd.f32 %v1746, %v2523
      %s2533 = scalar_lea.vmem %s187, 128
      %v2534 = vld [vmem:[%s2533] sm:$0x7f]
      %v2535 = vld [vmem:[%s2533 + $0x8] sm:$0x7f]
      %v2536 = vld [vmem:[%s2533 + $0x10] sm:$0x7f]
      %v2537 = vld [vmem:[%s2533 + $0x18] sm:$0x7f]
      %v2538 = vld [vmem:[%s2533 + $0x20] sm:$0x7f]
      %v2539 = vld [vmem:[%s2533 + $0x28] sm:$0x7f]
      %v2540 = vld [vmem:[%s2533 + $0x30] sm:$0x7f]
      %v2548 = vcombine.high %v2534, %v2534
      %v2550 = vunpack.c.l.s4 1966171168
      %v2551 = vunpack.c.0.s8 %v2550
      %v2552 = vlaneseq
      %v2553 = vshrl.u32 %v2552, 7
      %v2554 = vsub.s32 %v2551, %v2553
      %v2555 = vrot.slane %v2534, %v2554
      %v2557 = vunpack.c.l.s4 1966171168
      %v2558 = vunpack.c.0.s8 %v2557
      %v2559 = vlaneseq
      %v2560 = vshrl.u32 %v2559, 7
      %v2561 = vsub.s32 %v2558, %v2560
      %v2562 = vrot.slane %v2548, %v2561
      %v2563 = vcombine.high %v2555, %v2555
      %v2564 = vcombine.high %v2562, %v2562
      %v2566 = vunpack.c.l.s4 1966171168
      %v2567 = vunpack.c.0.s8 %v2566
      %v2568 = vlaneseq
      %v2569 = vshrl.u32 %v2568, 7
      %v2570 = vsub.s32 %v2567, %v2569
      %v2571 = vrot.slane %v2555, %v2570
      %v2573 = vunpack.c.l.s4 1966171168
      %v2574 = vunpack.c.0.s8 %v2573
      %v2575 = vlaneseq
      %v2576 = vshrl.u32 %v2575, 7
      %v2577 = vsub.s32 %v2574, %v2576
      %v2578 = vrot.slane %v2562, %v2577
      %v2580 = vunpack.c.l.s4 1966171168
      %v2581 = vunpack.c.0.s8 %v2580
      %v2582 = vlaneseq
      %v2583 = vshrl.u32 %v2582, 7
      %v2584 = vsub.s32 %v2581, %v2583
      %v2585 = vrot.slane %v2563, %v2584
      %v2587 = vunpack.c.l.s4 1966171168
      %v2588 = vunpack.c.0.s8 %v2587
      %v2589 = vlaneseq
      %v2590 = vshrl.u32 %v2589, 7
      %v2591 = vsub.s32 %v2588, %v2590
      %v2592 = vrot.slane %v2564, %v2591
      %v2593 = vcombine.high %v2571, %v2571
      %v2594 = vcombine.high %v2578, %v2578
      %v2595 = vcombine.high %v2585, %v2585
      %v2596 = vcombine.high %v2535, %v2535
      %v2598 = vunpack.c.l.s4 1966171168
      %v2599 = vunpack.c.0.s8 %v2598
      %v2600 = vlaneseq
      %v2601 = vshrl.u32 %v2600, 7
      %v2602 = vsub.s32 %v2599, %v2601
      %v2603 = vrot.slane %v2535, %v2602
      %v2605 = vunpack.c.l.s4 1966171168
      %v2606 = vunpack.c.0.s8 %v2605
      %v2607 = vlaneseq
      %v2608 = vshrl.u32 %v2607, 7
      %v2609 = vsub.s32 %v2606, %v2608
      %v2610 = vrot.slane %v2596, %v2609
      %v2611 = vcombine.high %v2603, %v2603
      %v2612 = vcombine.high %v2610, %v2610
      %v2614 = vunpack.c.l.s4 1966171168
      %v2615 = vunpack.c.0.s8 %v2614
      %v2616 = vlaneseq
      %v2617 = vshrl.u32 %v2616, 7
      %v2618 = vsub.s32 %v2615, %v2617
      %v2619 = vrot.slane %v2603, %v2618
      %v2621 = vunpack.c.l.s4 1966171168
      %v2622 = vunpack.c.0.s8 %v2621
      %v2623 = vlaneseq
      %v2624 = vshrl.u32 %v2623, 7
      %v2625 = vsub.s32 %v2622, %v2624
      %v2626 = vrot.slane %v2610, %v2625
      %v2628 = vunpack.c.l.s4 1966171168
      %v2629 = vunpack.c.0.s8 %v2628
      %v2630 = vlaneseq
      %v2631 = vshrl.u32 %v2630, 7
      %v2632 = vsub.s32 %v2629, %v2631
      %v2633 = vrot.slane %v2611, %v2632
      %v2635 = vunpack.c.l.s4 1966171168
      %v2636 = vunpack.c.0.s8 %v2635
      %v2637 = vlaneseq
      %v2638 = vshrl.u32 %v2637, 7
      %v2639 = vsub.s32 %v2636, %v2638
      %v2640 = vrot.slane %v2612, %v2639
      %v2641 = vcombine.high %v2619, %v2619
      %v2642 = vcombine.high %v2626, %v2626
      %v2643 = vcombine.high %v2633, %v2633
      %v2644 = vcombine.high %v2536, %v2536
      %v2646 = vunpack.c.l.s4 1966171168
      %v2647 = vunpack.c.0.s8 %v2646
      %v2648 = vlaneseq
      %v2649 = vshrl.u32 %v2648, 7
      %v2650 = vsub.s32 %v2647, %v2649
      %v2651 = vrot.slane %v2536, %v2650
      %v2653 = vunpack.c.l.s4 1966171168
      %v2654 = vunpack.c.0.s8 %v2653
      %v2655 = vlaneseq
      %v2656 = vshrl.u32 %v2655, 7
      %v2657 = vsub.s32 %v2654, %v2656
      %v2658 = vrot.slane %v2644, %v2657
      %v2659 = vcombine.high %v2651, %v2651
      %v2660 = vcombine.high %v2658, %v2658
      %v2662 = vunpack.c.l.s4 1966171168
      %v2663 = vunpack.c.0.s8 %v2662
      %v2664 = vlaneseq
      %v2665 = vshrl.u32 %v2664, 7
      %v2666 = vsub.s32 %v2663, %v2665
      %v2667 = vrot.slane %v2651, %v2666
      %v2669 = vunpack.c.l.s4 1966171168
      %v2670 = vunpack.c.0.s8 %v2669
      %v2671 = vlaneseq
      %v2672 = vshrl.u32 %v2671, 7
      %v2673 = vsub.s32 %v2670, %v2672
      %v2674 = vrot.slane %v2658, %v2673
      %v2676 = vunpack.c.l.s4 1966171168
      %v2677 = vunpack.c.0.s8 %v2676
      %v2678 = vlaneseq
      %v2679 = vshrl.u32 %v2678, 7
      %v2680 = vsub.s32 %v2677, %v2679
      %v2681 = vrot.slane %v2659, %v2680
      %v2683 = vunpack.c.l.s4 1966171168
      %v2684 = vunpack.c.0.s8 %v2683
      %v2685 = vlaneseq
      %v2686 = vshrl.u32 %v2685, 7
      %v2687 = vsub.s32 %v2684, %v2686
      %v2688 = vrot.slane %v2660, %v2687
      %v2689 = vcombine.high %v2667, %v2667
      %v2690 = vcombine.high %v2674, %v2674
      %v2691 = vcombine.high %v2681, %v2681
      %v2692 = vcombine.high %v2537, %v2537
      %v2694 = vunpack.c.l.s4 1966171168
      %v2695 = vunpack.c.0.s8 %v2694
      %v2696 = vlaneseq
      %v2697 = vshrl.u32 %v2696, 7
      %v2698 = vsub.s32 %v2695, %v2697
      %v2699 = vrot.slane %v2537, %v2698
      %v2701 = vunpack.c.l.s4 1966171168
      %v2702 = vunpack.c.0.s8 %v2701
      %v2703 = vlaneseq
      %v2704 = vshrl.u32 %v2703, 7
      %v2705 = vsub.s32 %v2702, %v2704
      %v2706 = vrot.slane %v2692, %v2705
      %v2707 = vcombine.high %v2699, %v2699
      %v2708 = vcombine.high %v2706, %v2706
      %v2710 = vunpack.c.l.s4 1966171168
      %v2711 = vunpack.c.0.s8 %v2710
      %v2712 = vlaneseq
      %v2713 = vshrl.u32 %v2712, 7
      %v2714 = vsub.s32 %v2711, %v2713
      %v2715 = vrot.slane %v2699, %v2714
      %v2717 = vunpack.c.l.s4 1966171168
      %v2718 = vunpack.c.0.s8 %v2717
      %v2719 = vlaneseq
      %v2720 = vshrl.u32 %v2719, 7
      %v2721 = vsub.s32 %v2718, %v2720
      %v2722 = vrot.slane %v2706, %v2721
      %v2724 = vunpack.c.l.s4 1966171168
      %v2725 = vunpack.c.0.s8 %v2724
      %v2726 = vlaneseq
      %v2727 = vshrl.u32 %v2726, 7
      %v2728 = vsub.s32 %v2725, %v2727
      %v2729 = vrot.slane %v2707, %v2728
      %v2731 = vunpack.c.l.s4 1966171168
      %v2732 = vunpack.c.0.s8 %v2731
      %v2733 = vlaneseq
      %v2734 = vshrl.u32 %v2733, 7
      %v2735 = vsub.s32 %v2732, %v2734
      %v2736 = vrot.slane %v2708, %v2735
      %v2737 = vcombine.high %v2715, %v2715
      %v2738 = vcombine.high %v2722, %v2722
      %v2739 = vcombine.high %v2729, %v2729
      %v2740 = vcombine.high %v2538, %v2538
      %v2742 = vunpack.c.l.s4 1966171168
      %v2743 = vunpack.c.0.s8 %v2742
      %v2744 = vlaneseq
      %v2745 = vshrl.u32 %v2744, 7
      %v2746 = vsub.s32 %v2743, %v2745
      %v2747 = vrot.slane %v2538, %v2746
      %v2749 = vunpack.c.l.s4 1966171168
      %v2750 = vunpack.c.0.s8 %v2749
      %v2751 = vlaneseq
      %v2752 = vshrl.u32 %v2751, 7
      %v2753 = vsub.s32 %v2750, %v2752
      %v2754 = vrot.slane %v2740, %v2753
      %v2755 = vcombine.high %v2747, %v2747
      %v2756 = vcombine.high %v2754, %v2754
      %v2758 = vunpack.c.l.s4 1966171168
      %v2759 = vunpack.c.0.s8 %v2758
      %v2760 = vlaneseq
      %v2761 = vshrl.u32 %v2760, 7
      %v2762 = vsub.s32 %v2759, %v2761
      %v2763 = vrot.slane %v2747, %v2762
      %v2765 = vunpack.c.l.s4 1966171168
      %v2766 = vunpack.c.0.s8 %v2765
      %v2767 = vlaneseq
      %v2768 = vshrl.u32 %v2767, 7
      %v2769 = vsub.s32 %v2766, %v2768
      %v2770 = vrot.slane %v2754, %v2769
      %v2772 = vunpack.c.l.s4 1966171168
      %v2773 = vunpack.c.0.s8 %v2772
      %v2774 = vlaneseq
      %v2775 = vshrl.u32 %v2774, 7
      %v2776 = vsub.s32 %v2773, %v2775
      %v2777 = vrot.slane %v2755, %v2776
      %v2779 = vunpack.c.l.s4 1966171168
      %v2780 = vunpack.c.0.s8 %v2779
      %v2781 = vlaneseq
      %v2782 = vshrl.u32 %v2781, 7
      %v2783 = vsub.s32 %v2780, %v2782
      %v2784 = vrot.slane %v2756, %v2783
      %v2785 = vcombine.high %v2763, %v2763
      %v2786 = vcombine.high %v2770, %v2770
      %v2787 = vcombine.high %v2777, %v2777
      %v2788 = vcombine.high %v2539, %v2539
      %v2790 = vunpack.c.l.s4 1966171168
      %v2791 = vunpack.c.0.s8 %v2790
      %v2792 = vlaneseq
      %v2793 = vshrl.u32 %v2792, 7
      %v2794 = vsub.s32 %v2791, %v2793
      %v2795 = vrot.slane %v2539, %v2794
      %v2797 = vunpack.c.l.s4 1966171168
      %v2798 = vunpack.c.0.s8 %v2797
      %v2799 = vlaneseq
      %v2800 = vshrl.u32 %v2799, 7
      %v2801 = vsub.s32 %v2798, %v2800
      %v2802 = vrot.slane %v2788, %v2801
      %v2803 = vcombine.high %v2795, %v2795
      %v2804 = vcombine.high %v2802, %v2802
      %v2806 = vunpack.c.l.s4 1966171168
      %v2807 = vunpack.c.0.s8 %v2806
      %v2808 = vlaneseq
      %v2809 = vshrl.u32 %v2808, 7
      %v2810 = vsub.s32 %v2807, %v2809
      %v2811 = vrot.slane %v2795, %v2810
      %v2813 = vunpack.c.l.s4 1966171168
      %v2814 = vunpack.c.0.s8 %v2813
      %v2815 = vlaneseq
      %v2816 = vshrl.u32 %v2815, 7
      %v2817 = vsub.s32 %v2814, %v2816
      %v2818 = vrot.slane %v2802, %v2817
      %v2820 = vunpack.c.l.s4 1966171168
      %v2821 = vunpack.c.0.s8 %v2820
      %v2822 = vlaneseq
      %v2823 = vshrl.u32 %v2822, 7
      %v2824 = vsub.s32 %v2821, %v2823
      %v2825 = vrot.slane %v2803, %v2824
      %v2827 = vunpack.c.l.s4 1966171168
      %v2828 = vunpack.c.0.s8 %v2827
      %v2829 = vlaneseq
      %v2830 = vshrl.u32 %v2829, 7
      %v2831 = vsub.s32 %v2828, %v2830
      %v2832 = vrot.slane %v2804, %v2831
      %v2833 = vcombine.high %v2811, %v2811
      %v2834 = vcombine.high %v2818, %v2818
      %v2835 = vcombine.high %v2825, %v2825
      %v2836 = vcombine.high %v2540, %v2540
      %v2838 = vunpack.c.l.s4 1966171168
      %v2839 = vunpack.c.0.s8 %v2838
      %v2840 = vlaneseq
      %v2841 = vshrl.u32 %v2840, 7
      %v2842 = vsub.s32 %v2839, %v2841
      %v2843 = vrot.slane %v2540, %v2842
      %v2845 = vunpack.c.l.s4 1966171168
      %v2846 = vunpack.c.0.s8 %v2845
      %v2847 = vlaneseq
      %v2848 = vshrl.u32 %v2847, 7
      %v2849 = vsub.s32 %v2846, %v2848
      %v2850 = vrot.slane %v2836, %v2849
      %v2851 = vcombine.high %v2843, %v2843
      %v2852 = vcombine.high %v2850, %v2850
      %v2854 = vunpack.c.l.s4 1966171168
      %v2855 = vunpack.c.0.s8 %v2854
      %v2856 = vlaneseq
      %v2857 = vshrl.u32 %v2856, 7
      %v2858 = vsub.s32 %v2855, %v2857
      %v2859 = vrot.slane %v2843, %v2858
      %v2861 = vunpack.c.l.s4 1966171168
      %v2862 = vunpack.c.0.s8 %v2861
      %v2863 = vlaneseq
      %v2864 = vshrl.u32 %v2863, 7
      %v2865 = vsub.s32 %v2862, %v2864
      %v2866 = vrot.slane %v2850, %v2865
      %v2868 = vunpack.c.l.s4 1966171168
      %v2869 = vunpack.c.0.s8 %v2868
      %v2870 = vlaneseq
      %v2871 = vshrl.u32 %v2870, 7
      %v2872 = vsub.s32 %v2869, %v2871
      %v2873 = vrot.slane %v2851, %v2872
      %v2875 = vunpack.c.l.s4 1966171168
      %v2876 = vunpack.c.0.s8 %v2875
      %v2877 = vlaneseq
      %v2878 = vshrl.u32 %v2877, 7
      %v2879 = vsub.s32 %v2876, %v2878
      %v2880 = vrot.slane %v2852, %v2879
      %v2881 = vcombine.high %v2859, %v2859
      %v2882 = vcombine.high %v2866, %v2866
      %v2883 = vcombine.high %v2873, %v2873
      %s2884 = scalar_lea.vmem %s1, 12
      %v2885 = vld [vmem:[%s2884] sm:$0xf]
      %v2886 = vcombine.low %v2571, %v2585
      %v2887 = vcombine.low %v2593, %v2595
      %v2888 = vcombine.low %v2578, %v2592
      %v2889 = vcombine.low %v2594, %v2619
      %v2891 = vunpack.c.l.s4 1966171168
      %v2892 = vunpack.c.0.s8 %v2891
      %v2893 = vlaneseq
      %v2894 = vshrl.u32 %v2893, 7
      %v2895 = vsub.s32 %v2892, %v2894
      %v2896 = vrot.slane %v2886, %v2895
      %v2898 = vunpack.c.l.s4 1966171168
      %v2899 = vunpack.c.0.s8 %v2898
      %v2900 = vlaneseq
      %v2901 = vshrl.u32 %v2900, 7
      %v2902 = vsub.s32 %v2899, %v2901
      %v2903 = vrot.slane %v2887, %v2902
      %v2905 = vunpack.c.l.s4 1966171168
      %v2906 = vunpack.c.0.s8 %v2905
      %v2907 = vlaneseq
      %v2908 = vshrl.u32 %v2907, 7
      %v2909 = vsub.s32 %v2906, %v2908
      %v2910 = vrot.slane %v2888, %v2909
      %v2912 = vunpack.c.l.s4 1966171168
      %v2913 = vunpack.c.0.s8 %v2912
      %v2914 = vlaneseq
      %v2915 = vshrl.u32 %v2914, 7
      %v2916 = vsub.s32 %v2913, %v2915
      %v2917 = vrot.slane %v2889, %v2916
      %v2918 = vcombine.low %v2896, %v2903
      %v2919 = vcombine.low %v2910, %v2917
      %v2921 = vunpack.c.l.s4 1966171168
      %v2922 = vunpack.c.0.s8 %v2921
      %v2923 = vlaneseq
      %v2924 = vshrl.u32 %v2923, 7
      %v2925 = vsub.s32 %v2922, %v2924
      %v2926 = vrot.slane %v2918, %v2925
      %v2928 = vunpack.c.l.s4 1966171168
      %v2929 = vunpack.c.0.s8 %v2928
      %v2930 = vlaneseq
      %v2931 = vshrl.u32 %v2930, 7
      %v2932 = vsub.s32 %v2929, %v2931
      %v2933 = vrot.slane %v2919, %v2932
      %v2934 = vcombine.low %v2926, %v2933
      %v2935 = vcombine.low %v2633, %v2641
      %v2936 = vcombine.low %v2643, %v2626
      %v2937 = vcombine.low %v2640, %v2642
      %v2938 = vcombine.low %v2667, %v2681
      %v2940 = vunpack.c.l.s4 1966171168
      %v2941 = vunpack.c.0.s8 %v2940
      %v2942 = vlaneseq
      %v2943 = vshrl.u32 %v2942, 7
      %v2944 = vsub.s32 %v2941, %v2943
      %v2945 = vrot.slane %v2935, %v2944
      %v2947 = vunpack.c.l.s4 1966171168
      %v2948 = vunpack.c.0.s8 %v2947
      %v2949 = vlaneseq
      %v2950 = vshrl.u32 %v2949, 7
      %v2951 = vsub.s32 %v2948, %v2950
      %v2952 = vrot.slane %v2936, %v2951
      %v2954 = vunpack.c.l.s4 1966171168
      %v2955 = vunpack.c.0.s8 %v2954
      %v2956 = vlaneseq
      %v2957 = vshrl.u32 %v2956, 7
      %v2958 = vsub.s32 %v2955, %v2957
      %v2959 = vrot.slane %v2937, %v2958
      %v2961 = vunpack.c.l.s4 1966171168
      %v2962 = vunpack.c.0.s8 %v2961
      %v2963 = vlaneseq
      %v2964 = vshrl.u32 %v2963, 7
      %v2965 = vsub.s32 %v2962, %v2964
      %v2966 = vrot.slane %v2938, %v2965
      %v2967 = vcombine.low %v2945, %v2952
      %v2968 = vcombine.low %v2959, %v2966
      %v2970 = vunpack.c.l.s4 1966171168
      %v2971 = vunpack.c.0.s8 %v2970
      %v2972 = vlaneseq
      %v2973 = vshrl.u32 %v2972, 7
      %v2974 = vsub.s32 %v2971, %v2973
      %v2975 = vrot.slane %v2967, %v2974
      %v2977 = vunpack.c.l.s4 1966171168
      %v2978 = vunpack.c.0.s8 %v2977
      %v2979 = vlaneseq
      %v2980 = vshrl.u32 %v2979, 7
      %v2981 = vsub.s32 %v2978, %v2980
      %v2982 = vrot.slane %v2968, %v2981
      %v2983 = vcombine.low %v2975, %v2982
      %v2984 = vcombine.low %v2689, %v2691
      %v2985 = vcombine.low %v2674, %v2688
      %v2986 = vcombine.low %v2690, %v2715
      %v2987 = vcombine.low %v2729, %v2737
      %v2989 = vunpack.c.l.s4 1966171168
      %v2990 = vunpack.c.0.s8 %v2989
      %v2991 = vlaneseq
      %v2992 = vshrl.u32 %v2991, 7
      %v2993 = vsub.s32 %v2990, %v2992
      %v2994 = vrot.slane %v2984, %v2993
      %v2996 = vunpack.c.l.s4 1966171168
      %v2997 = vunpack.c.0.s8 %v2996
      %v2998 = vlaneseq
      %v2999 = vshrl.u32 %v2998, 7
      %v3000 = vsub.s32 %v2997, %v2999
      %v3001 = vrot.slane %v2985, %v3000
      %v3003 = vunpack.c.l.s4 1966171168
      %v3004 = vunpack.c.0.s8 %v3003
      %v3005 = vlaneseq
      %v3006 = vshrl.u32 %v3005, 7
      %v3007 = vsub.s32 %v3004, %v3006
      %v3008 = vrot.slane %v2986, %v3007
      %v3010 = vunpack.c.l.s4 1966171168
      %v3011 = vunpack.c.0.s8 %v3010
      %v3012 = vlaneseq
      %v3013 = vshrl.u32 %v3012, 7
      %v3014 = vsub.s32 %v3011, %v3013
      %v3015 = vrot.slane %v2987, %v3014
      %v3016 = vcombine.low %v2994, %v3001
      %v3017 = vcombine.low %v3008, %v3015
      %v3019 = vunpack.c.l.s4 1966171168
      %v3020 = vunpack.c.0.s8 %v3019
      %v3021 = vlaneseq
      %v3022 = vshrl.u32 %v3021, 7
      %v3023 = vsub.s32 %v3020, %v3022
      %v3024 = vrot.slane %v3016, %v3023
      %v3026 = vunpack.c.l.s4 1966171168
      %v3027 = vunpack.c.0.s8 %v3026
      %v3028 = vlaneseq
      %v3029 = vshrl.u32 %v3028, 7
      %v3030 = vsub.s32 %v3027, %v3029
      %v3031 = vrot.slane %v3017, %v3030
      %v3032 = vcombine.low %v3024, %v3031
      %v3033 = vcombine.low %v2739, %v2722
      %v3034 = vcombine.low %v2736, %v2738
      %v3035 = vcombine.low %v2763, %v2777
      %v3036 = vcombine.low %v2785, %v2787
      %v3038 = vunpack.c.l.s4 1966171168
      %v3039 = vunpack.c.0.s8 %v3038
      %v3040 = vlaneseq
      %v3041 = vshrl.u32 %v3040, 7
      %v3042 = vsub.s32 %v3039, %v3041
      %v3043 = vrot.slane %v3033, %v3042
      %v3045 = vunpack.c.l.s4 1966171168
      %v3046 = vunpack.c.0.s8 %v3045
      %v3047 = vlaneseq
      %v3048 = vshrl.u32 %v3047, 7
      %v3049 = vsub.s32 %v3046, %v3048
      %v3050 = vrot.slane %v3034, %v3049
      %v3052 = vunpack.c.l.s4 1966171168
      %v3053 = vunpack.c.0.s8 %v3052
      %v3054 = vlaneseq
      %v3055 = vshrl.u32 %v3054, 7
      %v3056 = vsub.s32 %v3053, %v3055
      %v3057 = vrot.slane %v3035, %v3056
      %v3059 = vunpack.c.l.s4 1966171168
      %v3060 = vunpack.c.0.s8 %v3059
      %v3061 = vlaneseq
      %v3062 = vshrl.u32 %v3061, 7
      %v3063 = vsub.s32 %v3060, %v3062
      %v3064 = vrot.slane %v3036, %v3063
      %v3065 = vcombine.low %v3043, %v3050
      %v3066 = vcombine.low %v3057, %v3064
      %v3068 = vunpack.c.l.s4 1966171168
      %v3069 = vunpack.c.0.s8 %v3068
      %v3070 = vlaneseq
      %v3071 = vshrl.u32 %v3070, 7
      %v3072 = vsub.s32 %v3069, %v3071
      %v3073 = vrot.slane %v3065, %v3072
      %v3075 = vunpack.c.l.s4 1966171168
      %v3076 = vunpack.c.0.s8 %v3075
      %v3077 = vlaneseq
      %v3078 = vshrl.u32 %v3077, 7
      %v3079 = vsub.s32 %v3076, %v3078
      %v3080 = vrot.slane %v3066, %v3079
      %v3081 = vcombine.low %v3073, %v3080
      %v3082 = vcombine.low %v2770, %v2784
      %v3083 = vcombine.low %v2786, %v2811
      %v3084 = vcombine.low %v2825, %v2833
      %v3085 = vcombine.low %v2835, %v2818
      %v3087 = vunpack.c.l.s4 1966171168
      %v3088 = vunpack.c.0.s8 %v3087
      %v3089 = vlaneseq
      %v3090 = vshrl.u32 %v3089, 7
      %v3091 = vsub.s32 %v3088, %v3090
      %v3092 = vrot.slane %v3082, %v3091
      %v3094 = vunpack.c.l.s4 1966171168
      %v3095 = vunpack.c.0.s8 %v3094
      %v3096 = vlaneseq
      %v3097 = vshrl.u32 %v3096, 7
      %v3098 = vsub.s32 %v3095, %v3097
      %v3099 = vrot.slane %v3083, %v3098
      %v3101 = vunpack.c.l.s4 1966171168
      %v3102 = vunpack.c.0.s8 %v3101
      %v3103 = vlaneseq
      %v3104 = vshrl.u32 %v3103, 7
      %v3105 = vsub.s32 %v3102, %v3104
      %v3106 = vrot.slane %v3084, %v3105
      %v3108 = vunpack.c.l.s4 1966171168
      %v3109 = vunpack.c.0.s8 %v3108
      %v3110 = vlaneseq
      %v3111 = vshrl.u32 %v3110, 7
      %v3112 = vsub.s32 %v3109, %v3111
      %v3113 = vrot.slane %v3085, %v3112
      %v3114 = vcombine.low %v3092, %v3099
      %v3115 = vcombine.low %v3106, %v3113
      %v3117 = vunpack.c.l.s4 1966171168
      %v3118 = vunpack.c.0.s8 %v3117
      %v3119 = vlaneseq
      %v3120 = vshrl.u32 %v3119, 7
      %v3121 = vsub.s32 %v3118, %v3120
      %v3122 = vrot.slane %v3114, %v3121
      %v3124 = vunpack.c.l.s4 1966171168
      %v3125 = vunpack.c.0.s8 %v3124
      %v3126 = vlaneseq
      %v3127 = vshrl.u32 %v3126, 7
      %v3128 = vsub.s32 %v3125, %v3127
      %v3129 = vrot.slane %v3115, %v3128
      %v3130 = vcombine.low %v3122, %v3129
      %v3131 = vcombine.low %v2832, %v2834
      %v3132 = vcombine.low %v2859, %v2873
      %v3133 = vcombine.low %v2881, %v2883
      %v3134 = vcombine.low %v2866, %v2880
      %v3136 = vunpack.c.l.s4 1966171168
      %v3137 = vunpack.c.0.s8 %v3136
      %v3138 = vlaneseq
      %v3139 = vshrl.u32 %v3138, 7
      %v3140 = vsub.s32 %v3137, %v3139
      %v3141 = vrot.slane %v3131, %v3140
      %v3143 = vunpack.c.l.s4 1966171168
      %v3144 = vunpack.c.0.s8 %v3143
      %v3145 = vlaneseq
      %v3146 = vshrl.u32 %v3145, 7
      %v3147 = vsub.s32 %v3144, %v3146
      %v3148 = vrot.slane %v3132, %v3147
      %v3150 = vunpack.c.l.s4 1966171168
      %v3151 = vunpack.c.0.s8 %v3150
      %v3152 = vlaneseq
      %v3153 = vshrl.u32 %v3152, 7
      %v3154 = vsub.s32 %v3151, %v3153
      %v3155 = vrot.slane %v3133, %v3154
      %v3157 = vunpack.c.l.s4 1966171168
      %v3158 = vunpack.c.0.s8 %v3157
      %v3159 = vlaneseq
      %v3160 = vshrl.u32 %v3159, 7
      %v3161 = vsub.s32 %v3158, %v3160
      %v3162 = vrot.slane %v3134, %v3161
      %v3163 = vcombine.low %v3141, %v3148
      %v3164 = vcombine.low %v3155, %v3162
      %v3166 = vunpack.c.l.s4 1966171168
      %v3167 = vunpack.c.0.s8 %v3166
      %v3168 = vlaneseq
      %v3169 = vshrl.u32 %v3168, 7
      %v3170 = vsub.s32 %v3167, %v3169
      %v3171 = vrot.slane %v3163, %v3170
      %v3173 = vunpack.c.l.s4 1966171168
      %v3174 = vunpack.c.0.s8 %v3173
      %v3175 = vlaneseq
      %v3176 = vshrl.u32 %v3175, 7
      %v3177 = vsub.s32 %v3174, %v3176
      %v3178 = vrot.slane %v3164, %v3177
      %v3179 = vcombine.low %v3171, %v3178
      %v3181 = vunpack.c.l.s4 1966171168
      %v3182 = vunpack.c.0.s8 %v3181
      %v3183 = vlaneseq
      %v3184 = vshrl.u32 %v3183, 7
      %v3185 = vsub.s32 %v3182, %v3184
      %v3186 = vrot.slane %v2882, %v3185
      %v3188 = vunpack.c.l.s4 1966171168
      %v3189 = vunpack.c.0.s8 %v3188
      %v3190 = vlaneseq
      %v3191 = vshrl.u32 %v3190, 7
      %v3192 = vsub.s32 %v3189, %v3191
      %v3193 = vrot.slane %v3186, %v3192
      %v3194 = vsel %vm1205, %v2934, 0
      %v3196 = vsel %vm1205, %v2983, 0
      %v3198 = vsel %vm1205, %v3032, 0
      %v3200 = vsel %vm1205, %v3081, 0
      %v3202 = vsel %vm1205, %v3130, 0
      %v3204 = vsel %vm1205, %v3179, 0
      %v3206 = vsel %vm1205, %v3193, 0
      %v3209 = vsel %vm1220, %v2885, 0
      %3211 = vmatprep.subr.mxu0 0.0
      %3212 = vmatpush1.msra.mxu0 %v3209
      %3213 = vmatprep.subr.mxu0 0.0
      %3214 = vmatpush1.msra.mxu0 0.0
      %3215 = vmatprep.subr.mxu0 0.0
      %3216 = vmatpush1.msra.mxu0 0.0
      %3217 = vmatprep.subr.mxu0 0.0
      %3218 = vmatpush1.msra.mxu0 0.0
      %3219 = vmatprep.subr.mxu0 0.0
      %3220 = vmatpush1.msra.mxu0 0.0
      %3221 = vmatprep.subr.mxu0 0.0
      %3222 = vmatpush1.msra.mxu0 0.0
      %3223 = vmatprep.subr.mxu0 0.0
      %3224 = vmatpush1.msra.mxu0 0.0
      %3225 = vmatprep.subr.mxu0 0.0
      %3226 = vmatpush1.msra.mxu0 0.0
      %3227 = vmatprep.subr.mxu0 0.0
      %3228 = vmatpush1.msra.mxu0 0.0
      %3229 = vmatprep.subr.mxu0 0.0
      %3230 = vmatpush1.msra.mxu0 0.0
      %3231 = vmatprep.subr.mxu0 0.0
      %3232 = vmatpush1.msra.mxu0 0.0
      %3233 = vmatprep.subr.mxu0 0.0
      %3234 = vmatpush1.msra.mxu0 0.0
      %3235 = vmatprep.subr.mxu0 0.0
      %3236 = vmatpush1.msra.mxu0 0.0
      %3237 = vmatprep.subr.mxu0 0.0
      %3238 = vmatpush1.msra.mxu0 0.0
      %3239 = vmatprep.subr.mxu0 0.0
      %3240 = vmatpush1.msra.mxu0 0.0
      %3241 = vmatprep.subr.mxu0 0.0
      %3242 = vmatpush1.msra.mxu0 0.0
      %3243 = vmatprep.subr.mxu0 0.0
      %3244 = vmatpush1.msra.mxu0 0.0
      %3245 = vmatprep.subr.mxu0 0.0
      %3246 = vmatpush1.msra.mxu0 0.0
      %3247 = vmatprep.subr.mxu0 0.0
      %3248 = vmatpush1.msra.mxu0 0.0
      %3249 = vmatprep.subr.mxu0 0.0
      %3250 = vmatpush1.msra.mxu0 0.0
      %3251 = vmatprep.subr.mxu0 0.0
      %3252 = vmatpush1.msra.mxu0 0.0
      %3253 = vmatprep.subr.mxu0 0.0
      %3254 = vmatpush1.msra.mxu0 0.0
      %3255 = vmatprep.subr.mxu0 0.0
      %3256 = vmatpush1.msra.mxu0 0.0
      %3257 = vmatprep.subr.mxu0 0.0
      %3258 = vmatpush1.msra.mxu0 0.0
      %3259 = vmatprep.subr.mxu0 0.0
      %3260 = vmatpush1.msra.mxu0 0.0
      %3261 = vmatprep.subr.mxu0 0.0
      %3262 = vmatpush1.msra.mxu0 0.0
      %3263 = vmatprep.subr.mxu0 0.0
      %3264 = vmatpush1.msra.mxu0 0.0
      %3265 = vmatprep.subr.mxu0 0.0
      %3266 = vmatpush1.msra.mxu0 0.0
      %3267 = vmatprep.subr.mxu0 0.0
      %3268 = vmatpush1.msra.mxu0 0.0
      %3269 = vmatprep.subr.mxu0 0.0
      %3270 = vmatpush1.msra.mxu0 0.0
      %3271 = vmatprep.subr.mxu0 0.0
      %3272 = vmatpush1.msra.mxu0 0.0
      %3273 = vmatprep.subr.mxu0 0.0
      %3274 = vmatpush1.msra.mxu0 0.0
      %3275 = vmatprep.mubr.f32.mxu0 0.0
      %3276 = vmatmul.mubr.f32.gmra.mrb[0].mxu0 %v3194
      %v3277 = vpop.f32.mrb[0].mxu0
      %v3278 = vadd.f32 0.0, %v3277
      %v3279 = vpop.f32.mrb[0].mxu0
      %3280 = vmatprep.mubr.f32.mxu0 0.0
      %3281 = vmatmul.mubr.f32.gmra.mrb[0].mxu0 %v3196
      %v3282 = vpop.f32.mrb[0].mxu0
      %v3283 = vadd.f32 0.0, %v3282
      %v3284 = vpop.f32.mrb[0].mxu0
      %3285 = vmatprep.mubr.f32.mxu0 0.0
      %3286 = vmatmul.mubr.f32.gmra.mrb[0].mxu0 %v3198
      %v3287 = vpop.f32.mrb[0].mxu0
      %v3288 = vadd.f32 0.0, %v3287
      %v3289 = vpop.f32.mrb[0].mxu0
      %3290 = vmatprep.mubr.f32.mxu0 0.0
      %3291 = vmatmul.mubr.f32.gmra.mrb[0].mxu0 %v3200
      %v3292 = vpop.f32.mrb[0].mxu0
      %v3293 = vadd.f32 0.0, %v3292
      %v3294 = vpop.f32.mrb[0].mxu0
      %3295 = vmatprep.mubr.f32.mxu0 0.0
      %3296 = vmatmul.mubr.f32.gmra.mrb[0].mxu0 %v3202
      %v3297 = vpop.f32.mrb[0].mxu0
      %v3298 = vadd.f32 0.0, %v3297
      %v3299 = vpop.f32.mrb[0].mxu0
      %3300 = vmatprep.mubr.f32.mxu0 0.0
      %3301 = vmatmul.mubr.f32.gmra.mrb[0].mxu0 %v3204
      %v3302 = vpop.f32.mrb[0].mxu0
      %v3303 = vadd.f32 0.0, %v3302
      %v3304 = vpop.f32.mrb[0].mxu0
      %3305 = vmatprep.mubr.f32.mxu0 0.0
      %3306 = vmatmul.mubr.f32.gmra.mrb[0].mxu0 %v3206
      %v3307 = vpop.f32.mrb[0].mxu0
      %v3308 = vadd.f32 0.0, %v3307
      %v3309 = vpop.f32.mrb[0].mxu0
      %3310 = vdwg.mxu0
      %v3311 = vadd.f32 %v2526, %v3278
      %v3312 = vadd.f32 %v2527, %v3283
      %v3313 = vadd.f32 %v2528, %v3288
      %v3314 = vadd.f32 %v2529, %v3293
      %v3315 = vadd.f32 %v2530, %v3298
      %v3316 = vadd.f32 %v2531, %v3303
      %v3317 = vadd.f32 %v2532, %v3308
      %s3318 = scalar_lea.vmem %s187, 192
      %v3319 = vld [vmem:[%s3318] sm:$0x7f]
      %v3320 = vld [vmem:[%s3318 + $0x8] sm:$0x7f]
      %v3321 = vld [vmem:[%s3318 + $0x10] sm:$0x7f]
      %v3322 = vld [vmem:[%s3318 + $0x18] sm:$0x7f]
      %v3323 = vld [vmem:[%s3318 + $0x20] sm:$0x7f]
      %v3324 = vld [vmem:[%s3318 + $0x28] sm:$0x7f]
      %v3325 = vld [vmem:[%s3318 + $0x30] sm:$0x7f]
      %v3333 = vcombine.high %v3319, %v3319
      %v3335 = vunpack.c.l.s4 1966171168
      %v3336 = vunpack.c.0.s8 %v3335
      %v3337 = vlaneseq
      %v3338 = vshrl.u32 %v3337, 7
      %v3339 = vsub.s32 %v3336, %v3338
      %v3340 = vrot.slane %v3319, %v3339
      %v3342 = vunpack.c.l.s4 1966171168
      %v3343 = vunpack.c.0.s8 %v3342
      %v3344 = vlaneseq
      %v3345 = vshrl.u32 %v3344, 7
      %v3346 = vsub.s32 %v3343, %v3345
      %v3347 = vrot.slane %v3333, %v3346
      %v3348 = vcombine.high %v3340, %v3340
      %v3349 = vcombine.high %v3347, %v3347
      %v3351 = vunpack.c.l.s4 1966171168
      %v3352 = vunpack.c.0.s8 %v3351
      %v3353 = vlaneseq
      %v3354 = vshrl.u32 %v3353, 7
      %v3355 = vsub.s32 %v3352, %v3354
      %v3356 = vrot.slane %v3340, %v3355
      %v3358 = vunpack.c.l.s4 1966171168
      %v3359 = vunpack.c.0.s8 %v3358
      %v3360 = vlaneseq
      %v3361 = vshrl.u32 %v3360, 7
      %v3362 = vsub.s32 %v3359, %v3361
      %v3363 = vrot.slane %v3347, %v3362
      %v3365 = vunpack.c.l.s4 1966171168
      %v3366 = vunpack.c.0.s8 %v3365
      %v3367 = vlaneseq
      %v3368 = vshrl.u32 %v3367, 7
      %v3369 = vsub.s32 %v3366, %v3368
      %v3370 = vrot.slane %v3348, %v3369
      %v3372 = vunpack.c.l.s4 1966171168
      %v3373 = vunpack.c.0.s8 %v3372
      %v3374 = vlaneseq
      %v3375 = vshrl.u32 %v3374, 7
      %v3376 = vsub.s32 %v3373, %v3375
      %v3377 = vrot.slane %v3349, %v3376
      %v3378 = vcombine.high %v3356, %v3356
      %v3379 = vcombine.high %v3363, %v3363
      %v3380 = vcombine.high %v3370, %v3370
      %v3381 = vcombine.high %v3320, %v3320
      %v3383 = vunpack.c.l.s4 1966171168
      %v3384 = vunpack.c.0.s8 %v3383
      %v3385 = vlaneseq
      %v3386 = vshrl.u32 %v3385, 7
      %v3387 = vsub.s32 %v3384, %v3386
      %v3388 = vrot.slane %v3320, %v3387
      %v3390 = vunpack.c.l.s4 1966171168
      %v3391 = vunpack.c.0.s8 %v3390
      %v3392 = vlaneseq
      %v3393 = vshrl.u32 %v3392, 7
      %v3394 = vsub.s32 %v3391, %v3393
      %v3395 = vrot.slane %v3381, %v3394
      %v3396 = vcombine.high %v3388, %v3388
      %v3397 = vcombine.high %v3395, %v3395
      %v3399 = vunpack.c.l.s4 1966171168
      %v3400 = vunpack.c.0.s8 %v3399
      %v3401 = vlaneseq
      %v3402 = vshrl.u32 %v3401, 7
      %v3403 = vsub.s32 %v3400, %v3402
      %v3404 = vrot.slane %v3388, %v3403
      %v3406 = vunpack.c.l.s4 1966171168
      %v3407 = vunpack.c.0.s8 %v3406
      %v3408 = vlaneseq
      %v3409 = vshrl.u32 %v3408, 7
      %v3410 = vsub.s32 %v3407, %v3409
      %v3411 = vrot.slane %v3395, %v3410
      %v3413 = vunpack.c.l.s4 1966171168
      %v3414 = vunpack.c.0.s8 %v3413
      %v3415 = vlaneseq
      %v3416 = vshrl.u32 %v3415, 7
      %v3417 = vsub.s32 %v3414, %v3416
      %v3418 = vrot.slane %v3396, %v3417
      %v3420 = vunpack.c.l.s4 1966171168
      %v3421 = vunpack.c.0.s8 %v3420
      %v3422 = vlaneseq
      %v3423 = vshrl.u32 %v3422, 7
      %v3424 = vsub.s32 %v3421, %v3423
      %v3425 = vrot.slane %v3397, %v3424
      %v3426 = vcombine.high %v3404, %v3404
      %v3427 = vcombine.high %v3411, %v3411
      %v3428 = vcombine.high %v3418, %v3418
      %v3429 = vcombine.high %v3321, %v3321
      %v3431 = vunpack.c.l.s4 1966171168
      %v3432 = vunpack.c.0.s8 %v3431
      %v3433 = vlaneseq
      %v3434 = vshrl.u32 %v3433, 7
      %v3435 = vsub.s32 %v3432, %v3434
      %v3436 = vrot.slane %v3321, %v3435
      %v3438 = vunpack.c.l.s4 1966171168
      %v3439 = vunpack.c.0.s8 %v3438
      %v3440 = vlaneseq
      %v3441 = vshrl.u32 %v3440, 7
      %v3442 = vsub.s32 %v3439, %v3441
      %v3443 = vrot.slane %v3429, %v3442
      %v3444 = vcombine.high %v3436, %v3436
      %v3445 = vcombine.high %v3443, %v3443
      %v3447 = vunpack.c.l.s4 1966171168
      %v3448 = vunpack.c.0.s8 %v3447
      %v3449 = vlaneseq
      %v3450 = vshrl.u32 %v3449, 7
      %v3451 = vsub.s32 %v3448, %v3450
      %v3452 = vrot.slane %v3436, %v3451
      %v3454 = vunpack.c.l.s4 1966171168
      %v3455 = vunpack.c.0.s8 %v3454
      %v3456 = vlaneseq
      %v3457 = vshrl.u32 %v3456, 7
      %v3458 = vsub.s32 %v3455, %v3457
      %v3459 = vrot.slane %v3443, %v3458
      %v3461 = vunpack.c.l.s4 1966171168
      %v3462 = vunpack.c.0.s8 %v3461
      %v3463 = vlaneseq
      %v3464 = vshrl.u32 %v3463, 7
      %v3465 = vsub.s32 %v3462, %v3464
      %v3466 = vrot.slane %v3444, %v3465
      %v3468 = vunpack.c.l.s4 1966171168
      %v3469 = vunpack.c.0.s8 %v3468
      %v3470 = vlaneseq
      %v3471 = vshrl.u32 %v3470, 7
      %v3472 = vsub.s32 %v3469, %v3471
      %v3473 = vrot.slane %v3445, %v3472
      %v3474 = vcombine.high %v3452, %v3452
      %v3475 = vcombine.high %v3459, %v3459
      %v3476 = vcombine.high %v3466, %v3466
      %v3477 = vcombine.high %v3322, %v3322
      %v3479 = vunpack.c.l.s4 1966171168
      %v3480 = vunpack.c.0.s8 %v3479
      %v3481 = vlaneseq
      %v3482 = vshrl.u32 %v3481, 7
      %v3483 = vsub.s32 %v3480, %v3482
      %v3484 = vrot.slane %v3322, %v3483
      %v3486 = vunpack.c.l.s4 1966171168
      %v3487 = vunpack.c.0.s8 %v3486
      %v3488 = vlaneseq
      %v3489 = vshrl.u32 %v3488, 7
      %v3490 = vsub.s32 %v3487, %v3489
      %v3491 = vrot.slane %v3477, %v3490
      %v3492 = vcombine.high %v3484, %v3484
      %v3493 = vcombine.high %v3491, %v3491
      %v3495 = vunpack.c.l.s4 1966171168
      %v3496 = vunpack.c.0.s8 %v3495
      %v3497 = vlaneseq
      %v3498 = vshrl.u32 %v3497, 7
      %v3499 = vsub.s32 %v3496, %v3498
      %v3500 = vrot.slane %v3484, %v3499
      %v3502 = vunpack.c.l.s4 1966171168
      %v3503 = vunpack.c.0.s8 %v3502
      %v3504 = vlaneseq
      %v3505 = vshrl.u32 %v3504, 7
      %v3506 = vsub.s32 %v3503, %v3505
      %v3507 = vrot.slane %v3491, %v3506
      %v3509 = vunpack.c.l.s4 1966171168
      %v3510 = vunpack.c.0.s8 %v3509
      %v3511 = vlaneseq
      %v3512 = vshrl.u32 %v3511, 7
      %v3513 = vsub.s32 %v3510, %v3512
      %v3514 = vrot.slane %v3492, %v3513
      %v3516 = vunpack.c.l.s4 1966171168
      %v3517 = vunpack.c.0.s8 %v3516
      %v3518 = vlaneseq
      %v3519 = vshrl.u32 %v3518, 7
      %v3520 = vsub.s32 %v3517, %v3519
      %v3521 = vrot.slane %v3493, %v3520
      %v3522 = vcombine.high %v3500, %v3500
      %v3523 = vcombine.high %v3507, %v3507
      %v3524 = vcombine.high %v3514, %v3514
      %v3525 = vcombine.high %v3323, %v3323
      %v3527 = vunpack.c.l.s4 1966171168
      %v3528 = vunpack.c.0.s8 %v3527
      %v3529 = vlaneseq
      %v3530 = vshrl.u32 %v3529, 7
      %v3531 = vsub.s32 %v3528, %v3530
      %v3532 = vrot.slane %v3323, %v3531
      %v3534 = vunpack.c.l.s4 1966171168
      %v3535 = vunpack.c.0.s8 %v3534
      %v3536 = vlaneseq
      %v3537 = vshrl.u32 %v3536, 7
      %v3538 = vsub.s32 %v3535, %v3537
      %v3539 = vrot.slane %v3525, %v3538
      %v3540 = vcombine.high %v3532, %v3532
      %v3541 = vcombine.high %v3539, %v3539
      %v3543 = vunpack.c.l.s4 1966171168
      %v3544 = vunpack.c.0.s8 %v3543
      %v3545 = vlaneseq
      %v3546 = vshrl.u32 %v3545, 7
      %v3547 = vsub.s32 %v3544, %v3546
      %v3548 = vrot.slane %v3532, %v3547
      %v3550 = vunpack.c.l.s4 1966171168
      %v3551 = vunpack.c.0.s8 %v3550
      %v3552 = vlaneseq
      %v3553 = vshrl.u32 %v3552, 7
      %v3554 = vsub.s32 %v3551, %v3553
      %v3555 = vrot.slane %v3539, %v3554
      %v3557 = vunpack.c.l.s4 1966171168
      %v3558 = vunpack.c.0.s8 %v3557
      %v3559 = vlaneseq
      %v3560 = vshrl.u32 %v3559, 7
      %v3561 = vsub.s32 %v3558, %v3560
      %v3562 = vrot.slane %v3540, %v3561
      %v3564 = vunpack.c.l.s4 1966171168
      %v3565 = vunpack.c.0.s8 %v3564
      %v3566 = vlaneseq
      %v3567 = vshrl.u32 %v3566, 7
      %v3568 = vsub.s32 %v3565, %v3567
      %v3569 = vrot.slane %v3541, %v3568
      %v3570 = vcombine.high %v3548, %v3548
      %v3571 = vcombine.high %v3555, %v3555
      %v3572 = vcombine.high %v3562, %v3562
      %v3573 = vcombine.high %v3324, %v3324
      %v3575 = vunpack.c.l.s4 1966171168
      %v3576 = vunpack.c.0.s8 %v3575
      %v3577 = vlaneseq
      %v3578 = vshrl.u32 %v3577, 7
      %v3579 = vsub.s32 %v3576, %v3578
      %v3580 = vrot.slane %v3324, %v3579
      %v3582 = vunpack.c.l.s4 1966171168
      %v3583 = vunpack.c.0.s8 %v3582
      %v3584 = vlaneseq
      %v3585 = vshrl.u32 %v3584, 7
      %v3586 = vsub.s32 %v3583, %v3585
      %v3587 = vrot.slane %v3573, %v3586
      %v3588 = vcombine.high %v3580, %v3580
      %v3589 = vcombine.high %v3587, %v3587
      %v3591 = vunpack.c.l.s4 1966171168
      %v3592 = vunpack.c.0.s8 %v3591
      %v3593 = vlaneseq
      %v3594 = vshrl.u32 %v3593, 7
      %v3595 = vsub.s32 %v3592, %v3594
      %v3596 = vrot.slane %v3580, %v3595
      %v3598 = vunpack.c.l.s4 1966171168
      %v3599 = vunpack.c.0.s8 %v3598
      %v3600 = vlaneseq
      %v3601 = vshrl.u32 %v3600, 7
      %v3602 = vsub.s32 %v3599, %v3601
      %v3603 = vrot.slane %v3587, %v3602
      %v3605 = vunpack.c.l.s4 1966171168
      %v3606 = vunpack.c.0.s8 %v3605
      %v3607 = vlaneseq
      %v3608 = vshrl.u32 %v3607, 7
      %v3609 = vsub.s32 %v3606, %v3608
      %v3610 = vrot.slane %v3588, %v3609
      %v3612 = vunpack.c.l.s4 1966171168
      %v3613 = vunpack.c.0.s8 %v3612
      %v3614 = vlaneseq
      %v3615 = vshrl.u32 %v3614, 7
      %v3616 = vsub.s32 %v3613, %v3615
      %v3617 = vrot.slane %v3589, %v3616
      %v3618 = vcombine.high %v3596, %v3596
      %v3619 = vcombine.high %v3603, %v3603
      %v3620 = vcombine.high %v3610, %v3610
      %v3621 = vcombine.high %v3325, %v3325
      %v3623 = vunpack.c.l.s4 1966171168
      %v3624 = vunpack.c.0.s8 %v3623
      %v3625 = vlaneseq
      %v3626 = vshrl.u32 %v3625, 7
      %v3627 = vsub.s32 %v3624, %v3626
      %v3628 = vrot.slane %v3325, %v3627
      %v3630 = vunpack.c.l.s4 1966171168
      %v3631 = vunpack.c.0.s8 %v3630
      %v3632 = vlaneseq
      %v3633 = vshrl.u32 %v3632, 7
      %v3634 = vsub.s32 %v3631, %v3633
      %v3635 = vrot.slane %v3621, %v3634
      %v3636 = vcombine.high %v3628, %v3628
      %v3637 = vcombine.high %v3635, %v3635
      %v3639 = vunpack.c.l.s4 1966171168
      %v3640 = vunpack.c.0.s8 %v3639
      %v3641 = vlaneseq
      %v3642 = vshrl.u32 %v3641, 7
      %v3643 = vsub.s32 %v3640, %v3642
      %v3644 = vrot.slane %v3628, %v3643
      %v3646 = vunpack.c.l.s4 1966171168
      %v3647 = vunpack.c.0.s8 %v3646
      %v3648 = vlaneseq
      %v3649 = vshrl.u32 %v3648, 7
      %v3650 = vsub.s32 %v3647, %v3649
      %v3651 = vrot.slane %v3635, %v3650
      %v3653 = vunpack.c.l.s4 1966171168
      %v3654 = vunpack.c.0.s8 %v3653
      %v3655 = vlaneseq
      %v3656 = vshrl.u32 %v3655, 7
      %v3657 = vsub.s32 %v3654, %v3656
      %v3658 = vrot.slane %v3636, %v3657
      %v3660 = vunpack.c.l.s4 1966171168
      %v3661 = vunpack.c.0.s8 %v3660
      %v3662 = vlaneseq
      %v3663 = vshrl.u32 %v3662, 7
      %v3664 = vsub.s32 %v3661, %v3663
      %v3665 = vrot.slane %v3637, %v3664
      %v3666 = vcombine.high %v3644, %v3644
      %v3667 = vcombine.high %v3651, %v3651
      %v3668 = vcombine.high %v3658, %v3658
      %s3669 = scalar_lea.vmem %s1, 16
      %v3670 = vld [vmem:[%s3669] sm:$0xf]
      %v3671 = vcombine.low %v3356, %v3370
      %v3672 = vcombine.low %v3378, %v3380
      %v3673 = vcombine.low %v3363, %v3377
      %v3674 = vcombine.low %v3379, %v3404
      %v3676 = vunpack.c.l.s4 1966171168
      %v3677 = vunpack.c.0.s8 %v3676
      %v3678 = vlaneseq
      %v3679 = vshrl.u32 %v3678, 7
      %v3680 = vsub.s32 %v3677, %v3679
      %v3681 = vrot.slane %v3671, %v3680
      %v3683 = vunpack.c.l.s4 1966171168
      %v3684 = vunpack.c.0.s8 %v3683
      %v3685 = vlaneseq
      %v3686 = vshrl.u32 %v3685, 7
      %v3687 = vsub.s32 %v3684, %v3686
      %v3688 = vrot.slane %v3672, %v3687
      %v3690 = vunpack.c.l.s4 1966171168
      %v3691 = vunpack.c.0.s8 %v3690
      %v3692 = vlaneseq
      %v3693 = vshrl.u32 %v3692, 7
      %v3694 = vsub.s32 %v3691, %v3693
      %v3695 = vrot.slane %v3673, %v3694
      %v3697 = vunpack.c.l.s4 1966171168
      %v3698 = vunpack.c.0.s8 %v3697
      %v3699 = vlaneseq
      %v3700 = vshrl.u32 %v3699, 7
      %v3701 = vsub.s32 %v3698, %v3700
      %v3702 = vrot.slane %v3674, %v3701
      %v3703 = vcombine.low %v3681, %v3688
      %v3704 = vcombine.low %v3695, %v3702
      %v3706 = vunpack.c.l.s4 1966171168
      %v3707 = vunpack.c.0.s8 %v3706
      %v3708 = vlaneseq
      %v3709 = vshrl.u32 %v3708, 7
      %v3710 = vsub.s32 %v3707, %v3709
      %v3711 = vrot.slane %v3703, %v3710
      %v3713 = vunpack.c.l.s4 1966171168
      %v3714 = vunpack.c.0.s8 %v3713
      %v3715 = vlaneseq
      %v3716 = vshrl.u32 %v3715, 7
      %v3717 = vsub.s32 %v3714, %v3716
      %v3718 = vrot.slane %v3704, %v3717
      %v3719 = vcombine.low %v3711, %v3718
      %v3720 = vcombine.low %v3418, %v3426
      %v3721 = vcombine.low %v3428, %v3411
      %v3722 = vcombine.low %v3425, %v3427
      %v3723 = vcombine.low %v3452, %v3466
      %v3725 = vunpack.c.l.s4 1966171168
      %v3726 = vunpack.c.0.s8 %v3725
      %v3727 = vlaneseq
      %v3728 = vshrl.u32 %v3727, 7
      %v3729 = vsub.s32 %v3726, %v3728
      %v3730 = vrot.slane %v3720, %v3729
      %v3732 = vunpack.c.l.s4 1966171168
      %v3733 = vunpack.c.0.s8 %v3732
      %v3734 = vlaneseq
      %v3735 = vshrl.u32 %v3734, 7
      %v3736 = vsub.s32 %v3733, %v3735
      %v3737 = vrot.slane %v3721, %v3736
      %v3739 = vunpack.c.l.s4 1966171168
      %v3740 = vunpack.c.0.s8 %v3739
      %v3741 = vlaneseq
      %v3742 = vshrl.u32 %v3741, 7
      %v3743 = vsub.s32 %v3740, %v3742
      %v3744 = vrot.slane %v3722, %v3743
      %v3746 = vunpack.c.l.s4 1966171168
      %v3747 = vunpack.c.0.s8 %v3746
      %v3748 = vlaneseq
      %v3749 = vshrl.u32 %v3748, 7
      %v3750 = vsub.s32 %v3747, %v3749
      %v3751 = vrot.slane %v3723, %v3750
      %v3752 = vcombine.low %v3730, %v3737
      %v3753 = vcombine.low %v3744, %v3751
      %v3755 = vunpack.c.l.s4 1966171168
      %v3756 = vunpack.c.0.s8 %v3755
      %v3757 = vlaneseq
      %v3758 = vshrl.u32 %v3757, 7
      %v3759 = vsub.s32 %v3756, %v3758
      %v3760 = vrot.slane %v3752, %v3759
      %v3762 = vunpack.c.l.s4 1966171168
      %v3763 = vunpack.c.0.s8 %v3762
      %v3764 = vlaneseq
      %v3765 = vshrl.u32 %v3764, 7
      %v3766 = vsub.s32 %v3763, %v3765
      %v3767 = vrot.slane %v3753, %v3766
      %v3768 = vcombine.low %v3760, %v3767
      %v3769 = vcombine.low %v3474, %v3476
      %v3770 = vcombine.low %v3459, %v3473
      %v3771 = vcombine.low %v3475, %v3500
      %v3772 = vcombine.low %v3514, %v3522
      %v3774 = vunpack.c.l.s4 1966171168
      %v3775 = vunpack.c.0.s8 %v3774
      %v3776 = vlaneseq
      %v3777 = vshrl.u32 %v3776, 7
      %v3778 = vsub.s32 %v3775, %v3777
      %v3779 = vrot.slane %v3769, %v3778
      %v3781 = vunpack.c.l.s4 1966171168
      %v3782 = vunpack.c.0.s8 %v3781
      %v3783 = vlaneseq
      %v3784 = vshrl.u32 %v3783, 7
      %v3785 = vsub.s32 %v3782, %v3784
      %v3786 = vrot.slane %v3770, %v3785
      %v3788 = vunpack.c.l.s4 1966171168
      %v3789 = vunpack.c.0.s8 %v3788
      %v3790 = vlaneseq
      %v3791 = vshrl.u32 %v3790, 7
      %v3792 = vsub.s32 %v3789, %v3791
      %v3793 = vrot.slane %v3771, %v3792
      %v3795 = vunpack.c.l.s4 1966171168
      %v3796 = vunpack.c.0.s8 %v3795
      %v3797 = vlaneseq
      %v3798 = vshrl.u32 %v3797, 7
      %v3799 = vsub.s32 %v3796, %v3798
      %v3800 = vrot.slane %v3772, %v3799
      %v3801 = vcombine.low %v3779, %v3786
      %v3802 = vcombine.low %v3793, %v3800
      %v3804 = vunpack.c.l.s4 1966171168
      %v3805 = vunpack.c.0.s8 %v3804
      %v3806 = vlaneseq
      %v3807 = vshrl.u32 %v3806, 7
      %v3808 = vsub.s32 %v3805, %v3807
      %v3809 = vrot.slane %v3801, %v3808
      %v3811 = vunpack.c.l.s4 1966171168
      %v3812 = vunpack.c.0.s8 %v3811
      %v3813 = vlaneseq
      %v3814 = vshrl.u32 %v3813, 7
      %v3815 = vsub.s32 %v3812, %v3814
      %v3816 = vrot.slane %v3802, %v3815
      %v3817 = vcombine.low %v3809, %v3816
      %v3818 = vcombine.low %v3524, %v3507
      %v3819 = vcombine.low %v3521, %v3523
      %v3820 = vcombine.low %v3548, %v3562
      %v3821 = vcombine.low %v3570, %v3572
      %v3823 = vunpack.c.l.s4 1966171168
      %v3824 = vunpack.c.0.s8 %v3823
      %v3825 = vlaneseq
      %v3826 = vshrl.u32 %v3825, 7
      %v3827 = vsub.s32 %v3824, %v3826
      %v3828 = vrot.slane %v3818, %v3827
      %v3830 = vunpack.c.l.s4 1966171168
      %v3831 = vunpack.c.0.s8 %v3830
      %v3832 = vlaneseq
      %v3833 = vshrl.u32 %v3832, 7
      %v3834 = vsub.s32 %v3831, %v3833
      %v3835 = vrot.slane %v3819, %v3834
      %v3837 = vunpack.c.l.s4 1966171168
      %v3838 = vunpack.c.0.s8 %v3837
      %v3839 = vlaneseq
      %v3840 = vshrl.u32 %v3839, 7
      %v3841 = vsub.s32 %v3838, %v3840
      %v3842 = vrot.slane %v3820, %v3841
      %v3844 = vunpack.c.l.s4 1966171168
      %v3845 = vunpack.c.0.s8 %v3844
      %v3846 = vlaneseq
      %v3847 = vshrl.u32 %v3846, 7
      %v3848 = vsub.s32 %v3845, %v3847
      %v3849 = vrot.slane %v3821, %v3848
      %v3850 = vcombine.low %v3828, %v3835
      %v3851 = vcombine.low %v3842, %v3849
      %v3853 = vunpack.c.l.s4 1966171168
      %v3854 = vunpack.c.0.s8 %v3853
      %v3855 = vlaneseq
      %v3856 = vshrl.u32 %v3855, 7
      %v3857 = vsub.s32 %v3854, %v3856
      %v3858 = vrot.slane %v3850, %v3857
      %v3860 = vunpack.c.l.s4 1966171168
      %v3861 = vunpack.c.0.s8 %v3860
      %v3862 = vlaneseq
      %v3863 = vshrl.u32 %v3862, 7
      %v3864 = vsub.s32 %v3861, %v3863
      %v3865 = vrot.slane %v3851, %v3864
      %v3866 = vcombine.low %v3858, %v3865
      %v3867 = vcombine.low %v3555, %v3569
      %v3868 = vcombine.low %v3571, %v3596
      %v3869 = vcombine.low %v3610, %v3618
      %v3870 = vcombine.low %v3620, %v3603
      %v3872 = vunpack.c.l.s4 1966171168
      %v3873 = vunpack.c.0.s8 %v3872
      %v3874 = vlaneseq
      %v3875 = vshrl.u32 %v3874, 7
      %v3876 = vsub.s32 %v3873, %v3875
      %v3877 = vrot.slane %v3867, %v3876
      %v3879 = vunpack.c.l.s4 1966171168
      %v3880 = vunpack.c.0.s8 %v3879
      %v3881 = vlaneseq
      %v3882 = vshrl.u32 %v3881, 7
      %v3883 = vsub.s32 %v3880, %v3882
      %v3884 = vrot.slane %v3868, %v3883
      %v3886 = vunpack.c.l.s4 1966171168
      %v3887 = vunpack.c.0.s8 %v3886
      %v3888 = vlaneseq
      %v3889 = vshrl.u32 %v3888, 7
      %v3890 = vsub.s32 %v3887, %v3889
      %v3891 = vrot.slane %v3869, %v3890
      %v3893 = vunpack.c.l.s4 1966171168
      %v3894 = vunpack.c.0.s8 %v3893
      %v3895 = vlaneseq
      %v3896 = vshrl.u32 %v3895, 7
      %v3897 = vsub.s32 %v3894, %v3896
      %v3898 = vrot.slane %v3870, %v3897
      %v3899 = vcombine.low %v3877, %v3884
      %v3900 = vcombine.low %v3891, %v3898
      %v3902 = vunpack.c.l.s4 1966171168
      %v3903 = vunpack.c.0.s8 %v3902
      %v3904 = vlaneseq
      %v3905 = vshrl.u32 %v3904, 7
      %v3906 = vsub.s32 %v3903, %v3905
      %v3907 = vrot.slane %v3899, %v3906
      %v3909 = vunpack.c.l.s4 1966171168
      %v3910 = vunpack.c.0.s8 %v3909
      %v3911 = vlaneseq
      %v3912 = vshrl.u32 %v3911, 7
      %v3913 = vsub.s32 %v3910, %v3912
      %v3914 = vrot.slane %v3900, %v3913
      %v3915 = vcombine.low %v3907, %v3914
      %v3916 = vcombine.low %v3617, %v3619
      %v3917 = vcombine.low %v3644, %v3658
      %v3918 = vcombine.low %v3666, %v3668
      %v3919 = vcombine.low %v3651, %v3665
      %v3921 = vunpack.c.l.s4 1966171168
      %v3922 = vunpack.c.0.s8 %v3921
      %v3923 = vlaneseq
      %v3924 = vshrl.u32 %v3923, 7
      %v3925 = vsub.s32 %v3922, %v3924
      %v3926 = vrot.slane %v3916, %v3925
      %v3928 = vunpack.c.l.s4 1966171168
      %v3929 = vunpack.c.0.s8 %v3928
      %v3930 = vlaneseq
      %v3931 = vshrl.u32 %v3930, 7
      %v3932 = vsub.s32 %v3929, %v3931
      %v3933 = vrot.slane %v3917, %v3932
      %v3935 = vunpack.c.l.s4 1966171168
      %v3936 = vunpack.c.0.s8 %v3935
      %v3937 = vlaneseq
      %v3938 = vshrl.u32 %v3937, 7
      %v3939 = vsub.s32 %v3936, %v3938
      %v3940 = vrot.slane %v3918, %v3939
      %v3942 = vunpack.c.l.s4 1966171168
      %v3943 = vunpack.c.0.s8 %v3942
      %v3944 = vlaneseq
      %v3945 = vshrl.u32 %v3944, 7
      %v3946 = vsub.s32 %v3943, %v3945
      %v3947 = vrot.slane %v3919, %v3946
      %v3948 = vcombine.low %v3926, %v3933
      %v3949 = vcombine.low %v3940, %v3947
      %v3951 = vunpack.c.l.s4 1966171168
      %v3952 = vunpack.c.0.s8 %v3951
      %v3953 = vlaneseq
      %v3954 = vshrl.u32 %v3953, 7
      %v3955 = vsub.s32 %v3952, %v3954
      %v3956 = vrot.slane %v3948, %v3955
      %v3958 = vunpack.c.l.s4 1966171168
      %v3959 = vunpack.c.0.s8 %v3958
      %v3960 = vlaneseq
      %v3961 = vshrl.u32 %v3960, 7
      %v3962 = vsub.s32 %v3959, %v3961
      %v3963 = vrot.slane %v3949, %v3962
      %v3964 = vcombine.low %v3956, %v3963
      %v3966 = vunpack.c.l.s4 1966171168
      %v3967 = vunpack.c.0.s8 %v3966
      %v3968 = vlaneseq
      %v3969 = vshrl.u32 %v3968, 7
      %v3970 = vsub.s32 %v3967, %v3969
      %v3971 = vrot.slane %v3667, %v3970
      %v3973 = vunpack.c.l.s4 1966171168
      %v3974 = vunpack.c.0.s8 %v3973
      %v3975 = vlaneseq
      %v3976 = vshrl.u32 %v3975, 7
      %v3977 = vsub.s32 %v3974, %v3976
      %v3978 = vrot.slane %v3971, %v3977
      %v3979 = vsel %vm1205, %v3719, 0
      %v3981 = vsel %vm1205, %v3768, 0
      %v3983 = vsel %vm1205, %v3817, 0
      %v3985 = vsel %vm1205, %v3866, 0
      %v3987 = vsel %vm1205, %v3915, 0
      %v3989 = vsel %vm1205, %v3964, 0
      %v3991 = vsel %vm1205, %v3978, 0
      %v3994 = vsel %vm1220, %v3670, 0
      %3996 = vmatprep.subr.mxu0 0.0
      %3997 = vmatpush1.msra.mxu0 %v3994
      %3998 = vmatprep.subr.mxu0 0.0
      %3999 = vmatpush1.msra.mxu0 0.0
      %4000 = vmatprep.subr.mxu0 0.0
      %4001 = vmatpush1.msra.mxu0 0.0
      %4002 = vmatprep.subr.mxu0 0.0
      %4003 = vmatpush1.msra.mxu0 0.0
      %4004 = vmatprep.subr.mxu0 0.0
      %4005 = vmatpush1.msra.mxu0 0.0
      %4006 = vmatprep.subr.mxu0 0.0
      %4007 = vmatpush1.msra.mxu0 0.0
      %4008 = vmatprep.subr.mxu0 0.0
      %4009 = vmatpush1.msra.mxu0 0.0
      %4010 = vmatprep.subr.mxu0 0.0
      %4011 = vmatpush1.msra.mxu0 0.0
      %4012 = vmatprep.subr.mxu0 0.0
      %4013 = vmatpush1.msra.mxu0 0.0
      %4014 = vmatprep.subr.mxu0 0.0
      %4015 = vmatpush1.msra.mxu0 0.0
      %4016 = vmatprep.subr.mxu0 0.0
      %4017 = vmatpush1.msra.mxu0 0.0
      %4018 = vmatprep.subr.mxu0 0.0
      %4019 = vmatpush1.msra.mxu0 0.0
      %4020 = vmatprep.subr.mxu0 0.0
      %4021 = vmatpush1.msra.mxu0 0.0
      %4022 = vmatprep.subr.mxu0 0.0
      %4023 = vmatpush1.msra.mxu0 0.0
      %4024 = vmatprep.subr.mxu0 0.0
      %4025 = vmatpush1.msra.mxu0 0.0
      %4026 = vmatprep.subr.mxu0 0.0
      %4027 = vmatpush1.msra.mxu0 0.0
      %4028 = vmatprep.subr.mxu0 0.0
      %4029 = vmatpush1.msra.mxu0 0.0
      %4030 = vmatprep.subr.mxu0 0.0
      %4031 = vmatpush1.msra.mxu0 0.0
      %4032 = vmatprep.subr.mxu0 0.0
      %4033 = vmatpush1.msra.mxu0 0.0
      %4034 = vmatprep.subr.mxu0 0.0
      %4035 = vmatpush1.msra.mxu0 0.0
      %4036 = vmatprep.subr.mxu0 0.0
      %4037 = vmatpush1.msra.mxu0 0.0
      %4038 = vmatprep.subr.mxu0 0.0
      %4039 = vmatpush1.msra.mxu0 0.0
      %4040 = vmatprep.subr.mxu0 0.0
      %4041 = vmatpush1.msra.mxu0 0.0
      %4042 = vmatprep.subr.mxu0 0.0
      %4043 = vmatpush1.msra.mxu0 0.0
      %4044 = vmatprep.subr.mxu0 0.0
      %4045 = vmatpush1.msra.mxu0 0.0
      %4046 = vmatprep.subr.mxu0 0.0
      %4047 = vmatpush1.msra.mxu0 0.0
      %4048 = vmatprep.subr.mxu0 0.0
      %4049 = vmatpush1.msra.mxu0 0.0
      %4050 = vmatprep.subr.mxu0 0.0
      %4051 = vmatpush1.msra.mxu0 0.0
      %4052 = vmatprep.subr.mxu0 0.0
      %4053 = vmatpush1.msra.mxu0 0.0
      %4054 = vmatprep.subr.mxu0 0.0
      %4055 = vmatpush1.msra.mxu0 0.0
      %4056 = vmatprep.subr.mxu0 0.0
      %4057 = vmatpush1.msra.mxu0 0.0
      %4058 = vmatprep.subr.mxu0 0.0
      %4059 = vmatpush1.msra.mxu0 0.0
      %4060 = vmatprep.mubr.f32.mxu0 0.0
      %4061 = vmatmul.mubr.f32.gmra.mrb[0].mxu0 %v3979
      %v4062 = vpop.f32.mrb[0].mxu0
      %v4063 = vadd.f32 0.0, %v4062
      %v4064 = vpop.f32.mrb[0].mxu0
      %4065 = vmatprep.mubr.f32.mxu0 0.0
      %4066 = vmatmul.mubr.f32.gmra.mrb[0].mxu0 %v3981
      %v4067 = vpop.f32.mrb[0].mxu0
      %v4068 = vadd.f32 0.0, %v4067
      %v4069 = vpop.f32.mrb[0].mxu0
      %4070 = vmatprep.mubr.f32.mxu0 0.0
      %4071 = vmatmul.mubr.f32.gmra.mrb[0].mxu0 %v3983
      %v4072 = vpop.f32.mrb[0].mxu0
      %v4073 = vadd.f32 0.0, %v4072
      %v4074 = vpop.f32.mrb[0].mxu0
      %4075 = vmatprep.mubr.f32.mxu0 0.0
      %4076 = vmatmul.mubr.f32.gmra.mrb[0].mxu0 %v3985
      %v4077 = vpop.f32.mrb[0].mxu0
      %v4078 = vadd.f32 0.0, %v4077
      %v4079 = vpop.f32.mrb[0].mxu0
      %4080 = vmatprep.mubr.f32.mxu0 0.0
      %4081 = vmatmul.mubr.f32.gmra.mrb[0].mxu0 %v3987
      %v4082 = vpop.f32.mrb[0].mxu0
      %v4083 = vadd.f32 0.0, %v4082
      %v4084 = vpop.f32.mrb[0].mxu0
      %4085 = vmatprep.mubr.f32.mxu0 0.0
      %4086 = vmatmul.mubr.f32.gmra.mrb[0].mxu0 %v3989
      %v4087 = vpop.f32.mrb[0].mxu0
      %v4088 = vadd.f32 0.0, %v4087
      %v4089 = vpop.f32.mrb[0].mxu0
      %4090 = vmatprep.mubr.f32.mxu0 0.0
      %4091 = vmatmul.mubr.f32.gmra.mrb[0].mxu0 %v3991
      %v4092 = vpop.f32.mrb[0].mxu0
      %v4093 = vadd.f32 0.0, %v4092
      %v4094 = vpop.f32.mrb[0].mxu0
      %4095 = vdwg.mxu0
      %v4096 = vadd.f32 %v3311, %v4063
      %v4097 = vadd.f32 %v3312, %v4068
      %v4098 = vadd.f32 %v3313, %v4073
      %v4099 = vadd.f32 %v3314, %v4078
      %v4100 = vadd.f32 %v3315, %v4083
      %v4101 = vadd.f32 %v3316, %v4088
      %v4102 = vadd.f32 %v3317, %v4093
      %v4103 = vld [vmem:[%s2533 + $0x1] sm:$0x7f]
      %v4104 = vld [vmem:[%s2533 + $0x9] sm:$0x7f]
      %v4105 = vld [vmem:[%s2533 + $0x11] sm:$0x7f]
      %v4106 = vld [vmem:[%s2533 + $0x19] sm:$0x7f]
      %v4107 = vld [vmem:[%s2533 + $0x21] sm:$0x7f]
      %v4108 = vld [vmem:[%s2533 + $0x29] sm:$0x7f]
      %v4109 = vld [vmem:[%s2533 + $0x31] sm:$0x7f]
      %v4117 = vcombine.high %v4103, %v4103
      %v4119 = vunpack.c.l.s4 1966171168
      %v4120 = vunpack.c.0.s8 %v4119
      %v4121 = vlaneseq
      %v4122 = vshrl.u32 %v4121, 7
      %v4123 = vsub.s32 %v4120, %v4122
      %v4124 = vrot.slane %v4103, %v4123
      %v4126 = vunpack.c.l.s4 1966171168
      %v4127 = vunpack.c.0.s8 %v4126
      %v4128 = vlaneseq
      %v4129 = vshrl.u32 %v4128, 7
      %v4130 = vsub.s32 %v4127, %v4129
      %v4131 = vrot.slane %v4117, %v4130
      %v4132 = vcombine.high %v4124, %v4124
      %v4133 = vcombine.high %v4131, %v4131
      %v4135 = vunpack.c.l.s4 1966171168
      %v4136 = vunpack.c.0.s8 %v4135
      %v4137 = vlaneseq
      %v4138 = vshrl.u32 %v4137, 7
      %v4139 = vsub.s32 %v4136, %v4138
      %v4140 = vrot.slane %v4124, %v4139
      %v4142 = vunpack.c.l.s4 1966171168
      %v4143 = vunpack.c.0.s8 %v4142
      %v4144 = vlaneseq
      %v4145 = vshrl.u32 %v4144, 7
      %v4146 = vsub.s32 %v4143, %v4145
      %v4147 = vrot.slane %v4131, %v4146
      %v4149 = vunpack.c.l.s4 1966171168
      %v4150 = vunpack.c.0.s8 %v4149
      %v4151 = vlaneseq
      %v4152 = vshrl.u32 %v4151, 7
      %v4153 = vsub.s32 %v4150, %v4152
      %v4154 = vrot.slane %v4132, %v4153
      %v4156 = vunpack.c.l.s4 1966171168
      %v4157 = vunpack.c.0.s8 %v4156
      %v4158 = vlaneseq
      %v4159 = vshrl.u32 %v4158, 7
      %v4160 = vsub.s32 %v4157, %v4159
      %v4161 = vrot.slane %v4133, %v4160
      %v4162 = vcombine.high %v4140, %v4140
      %v4163 = vcombine.high %v4147, %v4147
      %v4164 = vcombine.high %v4154, %v4154
      %v4165 = vcombine.high %v4104, %v4104
      %v4167 = vunpack.c.l.s4 1966171168
      %v4168 = vunpack.c.0.s8 %v4167
      %v4169 = vlaneseq
      %v4170 = vshrl.u32 %v4169, 7
      %v4171 = vsub.s32 %v4168, %v4170
      %v4172 = vrot.slane %v4104, %v4171
      %v4174 = vunpack.c.l.s4 1966171168
      %v4175 = vunpack.c.0.s8 %v4174
      %v4176 = vlaneseq
      %v4177 = vshrl.u32 %v4176, 7
      %v4178 = vsub.s32 %v4175, %v4177
      %v4179 = vrot.slane %v4165, %v4178
      %v4180 = vcombine.high %v4172, %v4172
      %v4181 = vcombine.high %v4179, %v4179
      %v4183 = vunpack.c.l.s4 1966171168
      %v4184 = vunpack.c.0.s8 %v4183
      %v4185 = vlaneseq
      %v4186 = vshrl.u32 %v4185, 7
      %v4187 = vsub.s32 %v4184, %v4186
      %v4188 = vrot.slane %v4172, %v4187
      %v4190 = vunpack.c.l.s4 1966171168
      %v4191 = vunpack.c.0.s8 %v4190
      %v4192 = vlaneseq
      %v4193 = vshrl.u32 %v4192, 7
      %v4194 = vsub.s32 %v4191, %v4193
      %v4195 = vrot.slane %v4179, %v4194
      %v4197 = vunpack.c.l.s4 1966171168
      %v4198 = vunpack.c.0.s8 %v4197
      %v4199 = vlaneseq
      %v4200 = vshrl.u32 %v4199, 7
      %v4201 = vsub.s32 %v4198, %v4200
      %v4202 = vrot.slane %v4180, %v4201
      %v4204 = vunpack.c.l.s4 1966171168
      %v4205 = vunpack.c.0.s8 %v4204
      %v4206 = vlaneseq
      %v4207 = vshrl.u32 %v4206, 7
      %v4208 = vsub.s32 %v4205, %v4207
      %v4209 = vrot.slane %v4181, %v4208
      %v4210 = vcombine.high %v4188, %v4188
      %v4211 = vcombine.high %v4195, %v4195
      %v4212 = vcombine.high %v4202, %v4202
      %v4213 = vcombine.high %v4105, %v4105
      %v4215 = vunpack.c.l.s4 1966171168
      %v4216 = vunpack.c.0.s8 %v4215
      %v4217 = vlaneseq
      %v4218 = vshrl.u32 %v4217, 7
      %v4219 = vsub.s32 %v4216, %v4218
      %v4220 = vrot.slane %v4105, %v4219
      %v4222 = vunpack.c.l.s4 1966171168
      %v4223 = vunpack.c.0.s8 %v4222
      %v4224 = vlaneseq
      %v4225 = vshrl.u32 %v4224, 7
      %v4226 = vsub.s32 %v4223, %v4225
      %v4227 = vrot.slane %v4213, %v4226
      %v4228 = vcombine.high %v4220, %v4220
      %v4229 = vcombine.high %v4227, %v4227
      %v4231 = vunpack.c.l.s4 1966171168
      %v4232 = vunpack.c.0.s8 %v4231
      %v4233 = vlaneseq
      %v4234 = vshrl.u32 %v4233, 7
      %v4235 = vsub.s32 %v4232, %v4234
      %v4236 = vrot.slane %v4220, %v4235
      %v4238 = vunpack.c.l.s4 1966171168
      %v4239 = vunpack.c.0.s8 %v4238
      %v4240 = vlaneseq
      %v4241 = vshrl.u32 %v4240, 7
      %v4242 = vsub.s32 %v4239, %v4241
      %v4243 = vrot.slane %v4227, %v4242
      %v4245 = vunpack.c.l.s4 1966171168
      %v4246 = vunpack.c.0.s8 %v4245
      %v4247 = vlaneseq
      %v4248 = vshrl.u32 %v4247, 7
      %v4249 = vsub.s32 %v4246, %v4248
      %v4250 = vrot.slane %v4228, %v4249
      %v4252 = vunpack.c.l.s4 1966171168
      %v4253 = vunpack.c.0.s8 %v4252
      %v4254 = vlaneseq
      %v4255 = vshrl.u32 %v4254, 7
      %v4256 = vsub.s32 %v4253, %v4255
      %v4257 = vrot.slane %v4229, %v4256
      %v4258 = vcombine.high %v4236, %v4236
      %v4259 = vcombine.high %v4243, %v4243
      %v4260 = vcombine.high %v4250, %v4250
      %v4261 = vcombine.high %v4106, %v4106
      %v4263 = vunpack.c.l.s4 1966171168
      %v4264 = vunpack.c.0.s8 %v4263
      %v4265 = vlaneseq
      %v4266 = vshrl.u32 %v4265, 7
      %v4267 = vsub.s32 %v4264, %v4266
      %v4268 = vrot.slane %v4106, %v4267
      %v4270 = vunpack.c.l.s4 1966171168
      %v4271 = vunpack.c.0.s8 %v4270
      %v4272 = vlaneseq
      %v4273 = vshrl.u32 %v4272, 7
      %v4274 = vsub.s32 %v4271, %v4273
      %v4275 = vrot.slane %v4261, %v4274
      %v4276 = vcombine.high %v4268, %v4268
      %v4277 = vcombine.high %v4275, %v4275
      %v4279 = vunpack.c.l.s4 1966171168
      %v4280 = vunpack.c.0.s8 %v4279
      %v4281 = vlaneseq
      %v4282 = vshrl.u32 %v4281, 7
      %v4283 = vsub.s32 %v4280, %v4282
      %v4284 = vrot.slane %v4268, %v4283
      %v4286 = vunpack.c.l.s4 1966171168
      %v4287 = vunpack.c.0.s8 %v4286
      %v4288 = vlaneseq
      %v4289 = vshrl.u32 %v4288, 7
      %v4290 = vsub.s32 %v4287, %v4289
      %v4291 = vrot.slane %v4275, %v4290
      %v4293 = vunpack.c.l.s4 1966171168
      %v4294 = vunpack.c.0.s8 %v4293
      %v4295 = vlaneseq
      %v4296 = vshrl.u32 %v4295, 7
      %v4297 = vsub.s32 %v4294, %v4296
      %v4298 = vrot.slane %v4276, %v4297
      %v4300 = vunpack.c.l.s4 1966171168
      %v4301 = vunpack.c.0.s8 %v4300
      %v4302 = vlaneseq
      %v4303 = vshrl.u32 %v4302, 7
      %v4304 = vsub.s32 %v4301, %v4303
      %v4305 = vrot.slane %v4277, %v4304
      %v4306 = vcombine.high %v4284, %v4284
      %v4307 = vcombine.high %v4291, %v4291
      %v4308 = vcombine.high %v4298, %v4298
      %v4309 = vcombine.high %v4107, %v4107
      %v4311 = vunpack.c.l.s4 1966171168
      %v4312 = vunpack.c.0.s8 %v4311
      %v4313 = vlaneseq
      %v4314 = vshrl.u32 %v4313, 7
      %v4315 = vsub.s32 %v4312, %v4314
      %v4316 = vrot.slane %v4107, %v4315
      %v4318 = vunpack.c.l.s4 1966171168
      %v4319 = vunpack.c.0.s8 %v4318
      %v4320 = vlaneseq
      %v4321 = vshrl.u32 %v4320, 7
      %v4322 = vsub.s32 %v4319, %v4321
      %v4323 = vrot.slane %v4309, %v4322
      %v4324 = vcombine.high %v4316, %v4316
      %v4325 = vcombine.high %v4323, %v4323
      %v4327 = vunpack.c.l.s4 1966171168
      %v4328 = vunpack.c.0.s8 %v4327
      %v4329 = vlaneseq
      %v4330 = vshrl.u32 %v4329, 7
      %v4331 = vsub.s32 %v4328, %v4330
      %v4332 = vrot.slane %v4316, %v4331
      %v4334 = vunpack.c.l.s4 1966171168
      %v4335 = vunpack.c.0.s8 %v4334
      %v4336 = vlaneseq
      %v4337 = vshrl.u32 %v4336, 7
      %v4338 = vsub.s32 %v4335, %v4337
      %v4339 = vrot.slane %v4323, %v4338
      %v4341 = vunpack.c.l.s4 1966171168
      %v4342 = vunpack.c.0.s8 %v4341
      %v4343 = vlaneseq
      %v4344 = vshrl.u32 %v4343, 7
      %v4345 = vsub.s32 %v4342, %v4344
      %v4346 = vrot.slane %v4324, %v4345
      %v4348 = vunpack.c.l.s4 1966171168
      %v4349 = vunpack.c.0.s8 %v4348
      %v4350 = vlaneseq
      %v4351 = vshrl.u32 %v4350, 7
      %v4352 = vsub.s32 %v4349, %v4351
      %v4353 = vrot.slane %v4325, %v4352
      %v4354 = vcombine.high %v4332, %v4332
      %v4355 = vcombine.high %v4339, %v4339
      %v4356 = vcombine.high %v4346, %v4346
      %v4357 = vcombine.high %v4108, %v4108
      %v4359 = vunpack.c.l.s4 1966171168
      %v4360 = vunpack.c.0.s8 %v4359
      %v4361 = vlaneseq
      %v4362 = vshrl.u32 %v4361, 7
      %v4363 = vsub.s32 %v4360, %v4362
      %v4364 = vrot.slane %v4108, %v4363
      %v4366 = vunpack.c.l.s4 1966171168
      %v4367 = vunpack.c.0.s8 %v4366
      %v4368 = vlaneseq
      %v4369 = vshrl.u32 %v4368, 7
      %v4370 = vsub.s32 %v4367, %v4369
      %v4371 = vrot.slane %v4357, %v4370
      %v4372 = vcombine.high %v4364, %v4364
      %v4373 = vcombine.high %v4371, %v4371
      %v4375 = vunpack.c.l.s4 1966171168
      %v4376 = vunpack.c.0.s8 %v4375
      %v4377 = vlaneseq
      %v4378 = vshrl.u32 %v4377, 7
      %v4379 = vsub.s32 %v4376, %v4378
      %v4380 = vrot.slane %v4364, %v4379
      %v4382 = vunpack.c.l.s4 1966171168
      %v4383 = vunpack.c.0.s8 %v4382
      %v4384 = vlaneseq
      %v4385 = vshrl.u32 %v4384, 7
      %v4386 = vsub.s32 %v4383, %v4385
      %v4387 = vrot.slane %v4371, %v4386
      %v4389 = vunpack.c.l.s4 1966171168
      %v4390 = vunpack.c.0.s8 %v4389
      %v4391 = vlaneseq
      %v4392 = vshrl.u32 %v4391, 7
      %v4393 = vsub.s32 %v4390, %v4392
      %v4394 = vrot.slane %v4372, %v4393
      %v4396 = vunpack.c.l.s4 1966171168
      %v4397 = vunpack.c.0.s8 %v4396
      %v4398 = vlaneseq
      %v4399 = vshrl.u32 %v4398, 7
      %v4400 = vsub.s32 %v4397, %v4399
      %v4401 = vrot.slane %v4373, %v4400
      %v4402 = vcombine.high %v4380, %v4380
      %v4403 = vcombine.high %v4387, %v4387
      %v4404 = vcombine.high %v4394, %v4394
      %v4405 = vcombine.high %v4109, %v4109
      %v4407 = vunpack.c.l.s4 1966171168
      %v4408 = vunpack.c.0.s8 %v4407
      %v4409 = vlaneseq
      %v4410 = vshrl.u32 %v4409, 7
      %v4411 = vsub.s32 %v4408, %v4410
      %v4412 = vrot.slane %v4109, %v4411
      %v4414 = vunpack.c.l.s4 1966171168
      %v4415 = vunpack.c.0.s8 %v4414
      %v4416 = vlaneseq
      %v4417 = vshrl.u32 %v4416, 7
      %v4418 = vsub.s32 %v4415, %v4417
      %v4419 = vrot.slane %v4405, %v4418
      %v4420 = vcombine.high %v4412, %v4412
      %v4421 = vcombine.high %v4419, %v4419
      %v4423 = vunpack.c.l.s4 1966171168
      %v4424 = vunpack.c.0.s8 %v4423
      %v4425 = vlaneseq
      %v4426 = vshrl.u32 %v4425, 7
      %v4427 = vsub.s32 %v4424, %v4426
      %v4428 = vrot.slane %v4412, %v4427
      %v4430 = vunpack.c.l.s4 1966171168
      %v4431 = vunpack.c.0.s8 %v4430
      %v4432 = vlaneseq
      %v4433 = vshrl.u32 %v4432, 7
      %v4434 = vsub.s32 %v4431, %v4433
      %v4435 = vrot.slane %v4419, %v4434
      %v4437 = vunpack.c.l.s4 1966171168
      %v4438 = vunpack.c.0.s8 %v4437
      %v4439 = vlaneseq
      %v4440 = vshrl.u32 %v4439, 7
      %v4441 = vsub.s32 %v4438, %v4440
      %v4442 = vrot.slane %v4420, %v4441
      %v4444 = vunpack.c.l.s4 1966171168
      %v4445 = vunpack.c.0.s8 %v4444
      %v4446 = vlaneseq
      %v4447 = vshrl.u32 %v4446, 7
      %v4448 = vsub.s32 %v4445, %v4447
      %v4449 = vrot.slane %v4421, %v4448
      %v4450 = vcombine.high %v4428, %v4428
      %v4451 = vcombine.high %v4435, %v4435
      %v4452 = vcombine.high %v4442, %v4442
      %s4453 = scalar_lea.vmem %s1, 20
      %v4454 = vld [vmem:[%s4453] sm:$0xf]
      %v4455 = vcombine.low %v4140, %v4154
      %v4456 = vcombine.low %v4162, %v4164
      %v4457 = vcombine.low %v4147, %v4161
      %v4458 = vcombine.low %v4163, %v4188
      %v4460 = vunpack.c.l.s4 1966171168
      %v4461 = vunpack.c.0.s8 %v4460
      %v4462 = vlaneseq
      %v4463 = vshrl.u32 %v4462, 7
      %v4464 = vsub.s32 %v4461, %v4463
      %v4465 = vrot.slane %v4455, %v4464
      %v4467 = vunpack.c.l.s4 1966171168
      %v4468 = vunpack.c.0.s8 %v4467
      %v4469 = vlaneseq
      %v4470 = vshrl.u32 %v4469, 7
      %v4471 = vsub.s32 %v4468, %v4470
      %v4472 = vrot.slane %v4456, %v4471
      %v4474 = vunpack.c.l.s4 1966171168
      %v4475 = vunpack.c.0.s8 %v4474
      %v4476 = vlaneseq
      %v4477 = vshrl.u32 %v4476, 7
      %v4478 = vsub.s32 %v4475, %v4477
      %v4479 = vrot.slane %v4457, %v4478
      %v4481 = vunpack.c.l.s4 1966171168
      %v4482 = vunpack.c.0.s8 %v4481
      %v4483 = vlaneseq
      %v4484 = vshrl.u32 %v4483, 7
      %v4485 = vsub.s32 %v4482, %v4484
      %v4486 = vrot.slane %v4458, %v4485
      %v4487 = vcombine.low %v4465, %v4472
      %v4488 = vcombine.low %v4479, %v4486
      %v4490 = vunpack.c.l.s4 1966171168
      %v4491 = vunpack.c.0.s8 %v4490
      %v4492 = vlaneseq
      %v4493 = vshrl.u32 %v4492, 7
      %v4494 = vsub.s32 %v4491, %v4493
      %v4495 = vrot.slane %v4487, %v4494
      %v4497 = vunpack.c.l.s4 1966171168
      %v4498 = vunpack.c.0.s8 %v4497
      %v4499 = vlaneseq
      %v4500 = vshrl.u32 %v4499, 7
      %v4501 = vsub.s32 %v4498, %v4500
      %v4502 = vrot.slane %v4488, %v4501
      %v4503 = vcombine.low %v4495, %v4502
      %v4504 = vcombine.low %v4202, %v4210
      %v4505 = vcombine.low %v4212, %v4195
      %v4506 = vcombine.low %v4209, %v4211
      %v4507 = vcombine.low %v4236, %v4250
      %v4509 = vunpack.c.l.s4 1966171168
      %v4510 = vunpack.c.0.s8 %v4509
      %v4511 = vlaneseq
      %v4512 = vshrl.u32 %v4511, 7
      %v4513 = vsub.s32 %v4510, %v4512
      %v4514 = vrot.slane %v4504, %v4513
      %v4516 = vunpack.c.l.s4 1966171168
      %v4517 = vunpack.c.0.s8 %v4516
      %v4518 = vlaneseq
      %v4519 = vshrl.u32 %v4518, 7
      %v4520 = vsub.s32 %v4517, %v4519
      %v4521 = vrot.slane %v4505, %v4520
      %v4523 = vunpack.c.l.s4 1966171168
      %v4524 = vunpack.c.0.s8 %v4523
      %v4525 = vlaneseq
      %v4526 = vshrl.u32 %v4525, 7
      %v4527 = vsub.s32 %v4524, %v4526
      %v4528 = vrot.slane %v4506, %v4527
      %v4530 = vunpack.c.l.s4 1966171168
      %v4531 = vunpack.c.0.s8 %v4530
      %v4532 = vlaneseq
      %v4533 = vshrl.u32 %v4532, 7
      %v4534 = vsub.s32 %v4531, %v4533
      %v4535 = vrot.slane %v4507, %v4534
      %v4536 = vcombine.low %v4514, %v4521
      %v4537 = vcombine.low %v4528, %v4535
      %v4539 = vunpack.c.l.s4 1966171168
      %v4540 = vunpack.c.0.s8 %v4539
      %v4541 = vlaneseq
      %v4542 = vshrl.u32 %v4541, 7
      %v4543 = vsub.s32 %v4540, %v4542
      %v4544 = vrot.slane %v4536, %v4543
      %v4546 = vunpack.c.l.s4 1966171168
      %v4547 = vunpack.c.0.s8 %v4546
      %v4548 = vlaneseq
      %v4549 = vshrl.u32 %v4548, 7
      %v4550 = vsub.s32 %v4547, %v4549
      %v4551 = vrot.slane %v4537, %v4550
      %v4552 = vcombine.low %v4544, %v4551
      %v4553 = vcombine.low %v4258, %v4260
      %v4554 = vcombine.low %v4243, %v4257
      %v4555 = vcombine.low %v4259, %v4284
      %v4556 = vcombine.low %v4298, %v4306
      %v4558 = vunpack.c.l.s4 1966171168
      %v4559 = vunpack.c.0.s8 %v4558
      %v4560 = vlaneseq
      %v4561 = vshrl.u32 %v4560, 7
      %v4562 = vsub.s32 %v4559, %v4561
      %v4563 = vrot.slane %v4553, %v4562
      %v4565 = vunpack.c.l.s4 1966171168
      %v4566 = vunpack.c.0.s8 %v4565
      %v4567 = vlaneseq
      %v4568 = vshrl.u32 %v4567, 7
      %v4569 = vsub.s32 %v4566, %v4568
      %v4570 = vrot.slane %v4554, %v4569
      %v4572 = vunpack.c.l.s4 1966171168
      %v4573 = vunpack.c.0.s8 %v4572
      %v4574 = vlaneseq
      %v4575 = vshrl.u32 %v4574, 7
      %v4576 = vsub.s32 %v4573, %v4575
      %v4577 = vrot.slane %v4555, %v4576
      %v4579 = vunpack.c.l.s4 1966171168
      %v4580 = vunpack.c.0.s8 %v4579
      %v4581 = vlaneseq
      %v4582 = vshrl.u32 %v4581, 7
      %v4583 = vsub.s32 %v4580, %v4582
      %v4584 = vrot.slane %v4556, %v4583
      %v4585 = vcombine.low %v4563, %v4570
      %v4586 = vcombine.low %v4577, %v4584
      %v4588 = vunpack.c.l.s4 1966171168
      %v4589 = vunpack.c.0.s8 %v4588
      %v4590 = vlaneseq
      %v4591 = vshrl.u32 %v4590, 7
      %v4592 = vsub.s32 %v4589, %v4591
      %v4593 = vrot.slane %v4585, %v4592
      %v4595 = vunpack.c.l.s4 1966171168
      %v4596 = vunpack.c.0.s8 %v4595
      %v4597 = vlaneseq
      %v4598 = vshrl.u32 %v4597, 7
      %v4599 = vsub.s32 %v4596, %v4598
      %v4600 = vrot.slane %v4586, %v4599
      %v4601 = vcombine.low %v4593, %v4600
      %v4602 = vcombine.low %v4308, %v4291
      %v4603 = vcombine.low %v4305, %v4307
      %v4604 = vcombine.low %v4332, %v4346
      %v4605 = vcombine.low %v4354, %v4356
      %v4607 = vunpack.c.l.s4 1966171168
      %v4608 = vunpack.c.0.s8 %v4607
      %v4609 = vlaneseq
      %v4610 = vshrl.u32 %v4609, 7
      %v4611 = vsub.s32 %v4608, %v4610
      %v4612 = vrot.slane %v4602, %v4611
      %v4614 = vunpack.c.l.s4 1966171168
      %v4615 = vunpack.c.0.s8 %v4614
      %v4616 = vlaneseq
      %v4617 = vshrl.u32 %v4616, 7
      %v4618 = vsub.s32 %v4615, %v4617
      %v4619 = vrot.slane %v4603, %v4618
      %v4621 = vunpack.c.l.s4 1966171168
      %v4622 = vunpack.c.0.s8 %v4621
      %v4623 = vlaneseq
      %v4624 = vshrl.u32 %v4623, 7
      %v4625 = vsub.s32 %v4622, %v4624
      %v4626 = vrot.slane %v4604, %v4625
      %v4628 = vunpack.c.l.s4 1966171168
      %v4629 = vunpack.c.0.s8 %v4628
      %v4630 = vlaneseq
      %v4631 = vshrl.u32 %v4630, 7
      %v4632 = vsub.s32 %v4629, %v4631
      %v4633 = vrot.slane %v4605, %v4632
      %v4634 = vcombine.low %v4612, %v4619
      %v4635 = vcombine.low %v4626, %v4633
      %v4637 = vunpack.c.l.s4 1966171168
      %v4638 = vunpack.c.0.s8 %v4637
      %v4639 = vlaneseq
      %v4640 = vshrl.u32 %v4639, 7
      %v4641 = vsub.s32 %v4638, %v4640
      %v4642 = vrot.slane %v4634, %v4641
      %v4644 = vunpack.c.l.s4 1966171168
      %v4645 = vunpack.c.0.s8 %v4644
      %v4646 = vlaneseq
      %v4647 = vshrl.u32 %v4646, 7
      %v4648 = vsub.s32 %v4645, %v4647
      %v4649 = vrot.slane %v4635, %v4648
      %v4650 = vcombine.low %v4642, %v4649
      %v4651 = vcombine.low %v4339, %v4353
      %v4652 = vcombine.low %v4355, %v4380
      %v4653 = vcombine.low %v4394, %v4402
      %v4654 = vcombine.low %v4404, %v4387
      %v4656 = vunpack.c.l.s4 1966171168
      %v4657 = vunpack.c.0.s8 %v4656
      %v4658 = vlaneseq
      %v4659 = vshrl.u32 %v4658, 7
      %v4660 = vsub.s32 %v4657, %v4659
      %v4661 = vrot.slane %v4651, %v4660
      %v4663 = vunpack.c.l.s4 1966171168
      %v4664 = vunpack.c.0.s8 %v4663
      %v4665 = vlaneseq
      %v4666 = vshrl.u32 %v4665, 7
      %v4667 = vsub.s32 %v4664, %v4666
      %v4668 = vrot.slane %v4652, %v4667
      %v4670 = vunpack.c.l.s4 1966171168
      %v4671 = vunpack.c.0.s8 %v4670
      %v4672 = vlaneseq
      %v4673 = vshrl.u32 %v4672, 7
      %v4674 = vsub.s32 %v4671, %v4673
      %v4675 = vrot.slane %v4653, %v4674
      %v4677 = vunpack.c.l.s4 1966171168
      %v4678 = vunpack.c.0.s8 %v4677
      %v4679 = vlaneseq
      %v4680 = vshrl.u32 %v4679, 7
      %v4681 = vsub.s32 %v4678, %v4680
      %v4682 = vrot.slane %v4654, %v4681
      %v4683 = vcombine.low %v4661, %v4668
      %v4684 = vcombine.low %v4675, %v4682
      %v4686 = vunpack.c.l.s4 1966171168
      %v4687 = vunpack.c.0.s8 %v4686
      %v4688 = vlaneseq
      %v4689 = vshrl.u32 %v4688, 7
      %v4690 = vsub.s32 %v4687, %v4689
      %v4691 = vrot.slane %v4683, %v4690
      %v4693 = vunpack.c.l.s4 1966171168
      %v4694 = vunpack.c.0.s8 %v4693
      %v4695 = vlaneseq
      %v4696 = vshrl.u32 %v4695, 7
      %v4697 = vsub.s32 %v4694, %v4696
      %v4698 = vrot.slane %v4684, %v4697
      %v4699 = vcombine.low %v4691, %v4698
      %v4700 = vcombine.low %v4401, %v4403
      %v4701 = vcombine.low %v4428, %v4442
      %v4702 = vcombine.low %v4450, %v4452
      %v4703 = vcombine.low %v4435, %v4449
      %v4705 = vunpack.c.l.s4 1966171168
      %v4706 = vunpack.c.0.s8 %v4705
      %v4707 = vlaneseq
      %v4708 = vshrl.u32 %v4707, 7
      %v4709 = vsub.s32 %v4706, %v4708
      %v4710 = vrot.slane %v4700, %v4709
      %v4712 = vunpack.c.l.s4 1966171168
      %v4713 = vunpack.c.0.s8 %v4712
      %v4714 = vlaneseq
      %v4715 = vshrl.u32 %v4714, 7
      %v4716 = vsub.s32 %v4713, %v4715
      %v4717 = vrot.slane %v4701, %v4716
      %v4719 = vunpack.c.l.s4 1966171168
      %v4720 = vunpack.c.0.s8 %v4719
      %v4721 = vlaneseq
      %v4722 = vshrl.u32 %v4721, 7
      %v4723 = vsub.s32 %v4720, %v4722
      %v4724 = vrot.slane %v4702, %v4723
      %v4726 = vunpack.c.l.s4 1966171168
      %v4727 = vunpack.c.0.s8 %v4726
      %v4728 = vlaneseq
      %v4729 = vshrl.u32 %v4728, 7
      %v4730 = vsub.s32 %v4727, %v4729
      %v4731 = vrot.slane %v4703, %v4730
      %v4732 = vcombine.low %v4710, %v4717
      %v4733 = vcombine.low %v4724, %v4731
      %v4735 = vunpack.c.l.s4 1966171168
      %v4736 = vunpack.c.0.s8 %v4735
      %v4737 = vlaneseq
      %v4738 = vshrl.u32 %v4737, 7
      %v4739 = vsub.s32 %v4736, %v4738
      %v4740 = vrot.slane %v4732, %v4739
      %v4742 = vunpack.c.l.s4 1966171168
      %v4743 = vunpack.c.0.s8 %v4742
      %v4744 = vlaneseq
      %v4745 = vshrl.u32 %v4744, 7
      %v4746 = vsub.s32 %v4743, %v4745
      %v4747 = vrot.slane %v4733, %v4746
      %v4748 = vcombine.low %v4740, %v4747
      %v4750 = vunpack.c.l.s4 1966171168
      %v4751 = vunpack.c.0.s8 %v4750
      %v4752 = vlaneseq
      %v4753 = vshrl.u32 %v4752, 7
      %v4754 = vsub.s32 %v4751, %v4753
      %v4755 = vrot.slane %v4451, %v4754
      %v4757 = vunpack.c.l.s4 1966171168
      %v4758 = vunpack.c.0.s8 %v4757
      %v4759 = vlaneseq
      %v4760 = vshrl.u32 %v4759, 7
      %v4761 = vsub.s32 %v4758, %v4760
      %v4762 = vrot.slane %v4755, %v4761
      %v4763 = vsel %vm1205, %v4503, 0
      %v4765 = vsel %vm1205, %v4552, 0
      %v4767 = vsel %vm1205, %v4601, 0
      %v4769 = vsel %vm1205, %v4650, 0
      %v4771 = vsel %vm1205, %v4699, 0
      %v4773 = vsel %vm1205, %v4748, 0
      %v4775 = vsel %vm1205, %v4762, 0
      %v4778 = vsel %vm1220, %v4454, 0
      %4780 = vmatprep.subr.mxu0 0.0
      %4781 = vmatpush1.msra.mxu0 %v4778
      %4782 = vmatprep.subr.mxu0 0.0
      %4783 = vmatpush1.msra.mxu0 0.0
      %4784 = vmatprep.subr.mxu0 0.0
      %4785 = vmatpush1.msra.mxu0 0.0
      %4786 = vmatprep.subr.mxu0 0.0
      %4787 = vmatpush1.msra.mxu0 0.0
      %4788 = vmatprep.subr.mxu0 0.0
      %4789 = vmatpush1.msra.mxu0 0.0
      %4790 = vmatprep.subr.mxu0 0.0
      %4791 = vmatpush1.msra.mxu0 0.0
      %4792 = vmatprep.subr.mxu0 0.0
      %4793 = vmatpush1.msra.mxu0 0.0
      %4794 = vmatprep.subr.mxu0 0.0
      %4795 = vmatpush1.msra.mxu0 0.0
      %4796 = vmatprep.subr.mxu0 0.0
      %4797 = vmatpush1.msra.mxu0 0.0
      %4798 = vmatprep.subr.mxu0 0.0
      %4799 = vmatpush1.msra.mxu0 0.0
      %4800 = vmatprep.subr.mxu0 0.0
      %4801 = vmatpush1.msra.mxu0 0.0
      %4802 = vmatprep.subr.mxu0 0.0
      %4803 = vmatpush1.msra.mxu0 0.0
      %4804 = vmatprep.subr.mxu0 0.0
      %4805 = vmatpush1.msra.mxu0 0.0
      %4806 = vmatprep.subr.mxu0 0.0
      %4807 = vmatpush1.msra.mxu0 0.0
      %4808 = vmatprep.subr.mxu0 0.0
      %4809 = vmatpush1.msra.mxu0 0.0
      %4810 = vmatprep.subr.mxu0 0.0
      %4811 = vmatpush1.msra.mxu0 0.0
      %4812 = vmatprep.subr.mxu0 0.0
      %4813 = vmatpush1.msra.mxu0 0.0
      %4814 = vmatprep.subr.mxu0 0.0
      %4815 = vmatpush1.msra.mxu0 0.0
      %4816 = vmatprep.subr.mxu0 0.0
      %4817 = vmatpush1.msra.mxu0 0.0
      %4818 = vmatprep.subr.mxu0 0.0
      %4819 = vmatpush1.msra.mxu0 0.0
      %4820 = vmatprep.subr.mxu0 0.0
      %4821 = vmatpush1.msra.mxu0 0.0
      %4822 = vmatprep.subr.mxu0 0.0
      %4823 = vmatpush1.msra.mxu0 0.0
      %4824 = vmatprep.subr.mxu0 0.0
      %4825 = vmatpush1.msra.mxu0 0.0
      %4826 = vmatprep.subr.mxu0 0.0
      %4827 = vmatpush1.msra.mxu0 0.0
      %4828 = vmatprep.subr.mxu0 0.0
      %4829 = vmatpush1.msra.mxu0 0.0
      %4830 = vmatprep.subr.mxu0 0.0
      %4831 = vmatpush1.msra.mxu0 0.0
      %4832 = vmatprep.subr.mxu0 0.0
      %4833 = vmatpush1.msra.mxu0 0.0
      %4834 = vmatprep.subr.mxu0 0.0
      %4835 = vmatpush1.msra.mxu0 0.0
      %4836 = vmatprep.subr.mxu0 0.0
      %4837 = vmatpush1.msra.mxu0 0.0
      %4838 = vmatprep.subr.mxu0 0.0
      %4839 = vmatpush1.msra.mxu0 0.0
      %4840 = vmatprep.subr.mxu0 0.0
      %4841 = vmatpush1.msra.mxu0 0.0
      %4842 = vmatprep.subr.mxu0 0.0
      %4843 = vmatpush1.msra.mxu0 0.0
      %4844 = vmatprep.mubr.f32.mxu0 0.0
      %4845 = vmatmul.mubr.f32.gmra.mrb[0].mxu0 %v4763
      %v4846 = vpop.f32.mrb[0].mxu0
      %v4847 = vadd.f32 0.0, %v4846
      %v4848 = vpop.f32.mrb[0].mxu0
      %4849 = vmatprep.mubr.f32.mxu0 0.0
      %4850 = vmatmul.mubr.f32.gmra.mrb[0].mxu0 %v4765
      %v4851 = vpop.f32.mrb[0].mxu0
      %v4852 = vadd.f32 0.0, %v4851
      %v4853 = vpop.f32.mrb[0].mxu0
      %4854 = vmatprep.mubr.f32.mxu0 0.0
      %4855 = vmatmul.mubr.f32.gmra.mrb[0].mxu0 %v4767
      %v4856 = vpop.f32.mrb[0].mxu0
      %v4857 = vadd.f32 0.0, %v4856
      %v4858 = vpop.f32.mrb[0].mxu0
      %4859 = vmatprep.mubr.f32.mxu0 0.0
      %4860 = vmatmul.mubr.f32.gmra.mrb[0].mxu0 %v4769
      %v4861 = vpop.f32.mrb[0].mxu0
      %v4862 = vadd.f32 0.0, %v4861
      %v4863 = vpop.f32.mrb[0].mxu0
      %4864 = vmatprep.mubr.f32.mxu0 0.0
      %4865 = vmatmul.mubr.f32.gmra.mrb[0].mxu0 %v4771
      %v4866 = vpop.f32.mrb[0].mxu0
      %v4867 = vadd.f32 0.0, %v4866
      %v4868 = vpop.f32.mrb[0].mxu0
      %4869 = vmatprep.mubr.f32.mxu0 0.0
      %4870 = vmatmul.mubr.f32.gmra.mrb[0].mxu0 %v4773
      %v4871 = vpop.f32.mrb[0].mxu0
      %v4872 = vadd.f32 0.0, %v4871
      %v4873 = vpop.f32.mrb[0].mxu0
      %4874 = vmatprep.mubr.f32.mxu0 0.0
      %4875 = vmatmul.mubr.f32.gmra.mrb[0].mxu0 %v4775
      %v4876 = vpop.f32.mrb[0].mxu0
      %v4877 = vadd.f32 0.0, %v4876
      %v4878 = vpop.f32.mrb[0].mxu0
      %4879 = vdwg.mxu0
      %v4880 = vadd.f32 %v4096, %v4847
      %v4881 = vadd.f32 %v4097, %v4852
      %v4882 = vadd.f32 %v4098, %v4857
      %v4883 = vadd.f32 %v4099, %v4862
      %v4884 = vadd.f32 %v4100, %v4867
      %v4885 = vadd.f32 %v4101, %v4872
      %v4886 = vadd.f32 %v4102, %v4877
      %s4887 = scalar_lea.vmem %s187, 8
      %v4888 = vld [vmem:[%s4887] sm:$0x7f]
      %v4889 = vld [vmem:[%s4887 + $0x8] sm:$0x7f]
      %v4890 = vld [vmem:[%s4887 + $0x10] sm:$0x7f]
      %v4891 = vld [vmem:[%s4887 + $0x18] sm:$0x7f]
      %v4892 = vld [vmem:[%s4887 + $0x20] sm:$0x7f]
      %v4893 = vld [vmem:[%s4887 + $0x28] sm:$0x7f]
      %v4894 = vld [vmem:[%s4887 + $0x30] sm:$0x7f]
      %v4902 = vcombine.high %v4888, %v4888
      %v4904 = vunpack.c.l.s4 1966171168
      %v4905 = vunpack.c.0.s8 %v4904
      %v4906 = vlaneseq
      %v4907 = vshrl.u32 %v4906, 7
      %v4908 = vsub.s32 %v4905, %v4907
      %v4909 = vrot.slane %v4888, %v4908
      %v4911 = vunpack.c.l.s4 1966171168
      %v4912 = vunpack.c.0.s8 %v4911
      %v4913 = vlaneseq
      %v4914 = vshrl.u32 %v4913, 7
      %v4915 = vsub.s32 %v4912, %v4914
      %v4916 = vrot.slane %v4902, %v4915
      %v4917 = vcombine.high %v4909, %v4909
      %v4918 = vcombine.high %v4916, %v4916
      %v4920 = vunpack.c.l.s4 1966171168
      %v4921 = vunpack.c.0.s8 %v4920
      %v4922 = vlaneseq
      %v4923 = vshrl.u32 %v4922, 7
      %v4924 = vsub.s32 %v4921, %v4923
      %v4925 = vrot.slane %v4909, %v4924
      %v4927 = vunpack.c.l.s4 1966171168
      %v4928 = vunpack.c.0.s8 %v4927
      %v4929 = vlaneseq
      %v4930 = vshrl.u32 %v4929, 7
      %v4931 = vsub.s32 %v4928, %v4930
      %v4932 = vrot.slane %v4916, %v4931
      %v4934 = vunpack.c.l.s4 1966171168
      %v4935 = vunpack.c.0.s8 %v4934
      %v4936 = vlaneseq
      %v4937 = vshrl.u32 %v4936, 7
      %v4938 = vsub.s32 %v4935, %v4937
      %v4939 = vrot.slane %v4917, %v4938
      %v4941 = vunpack.c.l.s4 1966171168
      %v4942 = vunpack.c.0.s8 %v4941
      %v4943 = vlaneseq
      %v4944 = vshrl.u32 %v4943, 7
      %v4945 = vsub.s32 %v4942, %v4944
      %v4946 = vrot.slane %v4918, %v4945
      %v4947 = vcombine.high %v4925, %v4925
      %v4948 = vcombine.high %v4932, %v4932
      %v4949 = vcombine.high %v4939, %v4939
      %v4950 = vcombine.high %v4889, %v4889
      %v4952 = vunpack.c.l.s4 1966171168
      %v4953 = vunpack.c.0.s8 %v4952
      %v4954 = vlaneseq
      %v4955 = vshrl.u32 %v4954, 7
      %v4956 = vsub.s32 %v4953, %v4955
      %v4957 = vrot.slane %v4889, %v4956
      %v4959 = vunpack.c.l.s4 1966171168
      %v4960 = vunpack.c.0.s8 %v4959
      %v4961 = vlaneseq
      %v4962 = vshrl.u32 %v4961, 7
      %v4963 = vsub.s32 %v4960, %v4962
      %v4964 = vrot.slane %v4950, %v4963
      %v4965 = vcombine.high %v4957, %v4957
      %v4966 = vcombine.high %v4964, %v4964
      %v4968 = vunpack.c.l.s4 1966171168
      %v4969 = vunpack.c.0.s8 %v4968
      %v4970 = vlaneseq
      %v4971 = vshrl.u32 %v4970, 7
      %v4972 = vsub.s32 %v4969, %v4971
      %v4973 = vrot.slane %v4957, %v4972
      %v4975 = vunpack.c.l.s4 1966171168
      %v4976 = vunpack.c.0.s8 %v4975
      %v4977 = vlaneseq
      %v4978 = vshrl.u32 %v4977, 7
      %v4979 = vsub.s32 %v4976, %v4978
      %v4980 = vrot.slane %v4964, %v4979
      %v4982 = vunpack.c.l.s4 1966171168
      %v4983 = vunpack.c.0.s8 %v4982
      %v4984 = vlaneseq
      %v4985 = vshrl.u32 %v4984, 7
      %v4986 = vsub.s32 %v4983, %v4985
      %v4987 = vrot.slane %v4965, %v4986
      %v4989 = vunpack.c.l.s4 1966171168
      %v4990 = vunpack.c.0.s8 %v4989
      %v4991 = vlaneseq
      %v4992 = vshrl.u32 %v4991, 7
      %v4993 = vsub.s32 %v4990, %v4992
      %v4994 = vrot.slane %v4966, %v4993
      %v4995 = vcombine.high %v4973, %v4973
      %v4996 = vcombine.high %v4980, %v4980
      %v4997 = vcombine.high %v4987, %v4987
      %v4998 = vcombine.high %v4890, %v4890
      %v5000 = vunpack.c.l.s4 1966171168
      %v5001 = vunpack.c.0.s8 %v5000
      %v5002 = vlaneseq
      %v5003 = vshrl.u32 %v5002, 7
      %v5004 = vsub.s32 %v5001, %v5003
      %v5005 = vrot.slane %v4890, %v5004
      %v5007 = vunpack.c.l.s4 1966171168
      %v5008 = vunpack.c.0.s8 %v5007
      %v5009 = vlaneseq
      %v5010 = vshrl.u32 %v5009, 7
      %v5011 = vsub.s32 %v5008, %v5010
      %v5012 = vrot.slane %v4998, %v5011
      %v5013 = vcombine.high %v5005, %v5005
      %v5014 = vcombine.high %v5012, %v5012
      %v5016 = vunpack.c.l.s4 1966171168
      %v5017 = vunpack.c.0.s8 %v5016
      %v5018 = vlaneseq
      %v5019 = vshrl.u32 %v5018, 7
      %v5020 = vsub.s32 %v5017, %v5019
      %v5021 = vrot.slane %v5005, %v5020
      %v5023 = vunpack.c.l.s4 1966171168
      %v5024 = vunpack.c.0.s8 %v5023
      %v5025 = vlaneseq
      %v5026 = vshrl.u32 %v5025, 7
      %v5027 = vsub.s32 %v5024, %v5026
      %v5028 = vrot.slane %v5012, %v5027
      %v5030 = vunpack.c.l.s4 1966171168
      %v5031 = vunpack.c.0.s8 %v5030
      %v5032 = vlaneseq
      %v5033 = vshrl.u32 %v5032, 7
      %v5034 = vsub.s32 %v5031, %v5033
      %v5035 = vrot.slane %v5013, %v5034
      %v5037 = vunpack.c.l.s4 1966171168
      %v5038 = vunpack.c.0.s8 %v5037
      %v5039 = vlaneseq
      %v5040 = vshrl.u32 %v5039, 7
      %v5041 = vsub.s32 %v5038, %v5040
      %v5042 = vrot.slane %v5014, %v5041
      %v5043 = vcombine.high %v5021, %v5021
      %v5044 = vcombine.high %v5028, %v5028
      %v5045 = vcombine.high %v5035, %v5035
      %v5046 = vcombine.high %v4891, %v4891
      %v5048 = vunpack.c.l.s4 1966171168
      %v5049 = vunpack.c.0.s8 %v5048
      %v5050 = vlaneseq
      %v5051 = vshrl.u32 %v5050, 7
      %v5052 = vsub.s32 %v5049, %v5051
      %v5053 = vrot.slane %v4891, %v5052
      %v5055 = vunpack.c.l.s4 1966171168
      %v5056 = vunpack.c.0.s8 %v5055
      %v5057 = vlaneseq
      %v5058 = vshrl.u32 %v5057, 7
      %v5059 = vsub.s32 %v5056, %v5058
      %v5060 = vrot.slane %v5046, %v5059
      %v5061 = vcombine.high %v5053, %v5053
      %v5062 = vcombine.high %v5060, %v5060
      %v5064 = vunpack.c.l.s4 1966171168
      %v5065 = vunpack.c.0.s8 %v5064
      %v5066 = vlaneseq
      %v5067 = vshrl.u32 %v5066, 7
      %v5068 = vsub.s32 %v5065, %v5067
      %v5069 = vrot.slane %v5053, %v5068
      %v5071 = vunpack.c.l.s4 1966171168
      %v5072 = vunpack.c.0.s8 %v5071
      %v5073 = vlaneseq
      %v5074 = vshrl.u32 %v5073, 7
      %v5075 = vsub.s32 %v5072, %v5074
      %v5076 = vrot.slane %v5060, %v5075
      %v5078 = vunpack.c.l.s4 1966171168
      %v5079 = vunpack.c.0.s8 %v5078
      %v5080 = vlaneseq
      %v5081 = vshrl.u32 %v5080, 7
      %v5082 = vsub.s32 %v5079, %v5081
      %v5083 = vrot.slane %v5061, %v5082
      %v5085 = vunpack.c.l.s4 1966171168
      %v5086 = vunpack.c.0.s8 %v5085
      %v5087 = vlaneseq
      %v5088 = vshrl.u32 %v5087, 7
      %v5089 = vsub.s32 %v5086, %v5088
      %v5090 = vrot.slane %v5062, %v5089
      %v5091 = vcombine.high %v5069, %v5069
      %v5092 = vcombine.high %v5076, %v5076
      %v5093 = vcombine.high %v5083, %v5083
      %v5094 = vcombine.high %v4892, %v4892
      %v5096 = vunpack.c.l.s4 1966171168
      %v5097 = vunpack.c.0.s8 %v5096
      %v5098 = vlaneseq
      %v5099 = vshrl.u32 %v5098, 7
      %v5100 = vsub.s32 %v5097, %v5099
      %v5101 = vrot.slane %v4892, %v5100
      %v5103 = vunpack.c.l.s4 1966171168
      %v5104 = vunpack.c.0.s8 %v5103
      %v5105 = vlaneseq
      %v5106 = vshrl.u32 %v5105, 7
      %v5107 = vsub.s32 %v5104, %v5106
      %v5108 = vrot.slane %v5094, %v5107
      %v5109 = vcombine.high %v5101, %v5101
      %v5110 = vcombine.high %v5108, %v5108
      %v5112 = vunpack.c.l.s4 1966171168
      %v5113 = vunpack.c.0.s8 %v5112
      %v5114 = vlaneseq
      %v5115 = vshrl.u32 %v5114, 7
      %v5116 = vsub.s32 %v5113, %v5115
      %v5117 = vrot.slane %v5101, %v5116
      %v5119 = vunpack.c.l.s4 1966171168
      %v5120 = vunpack.c.0.s8 %v5119
      %v5121 = vlaneseq
      %v5122 = vshrl.u32 %v5121, 7
      %v5123 = vsub.s32 %v5120, %v5122
      %v5124 = vrot.slane %v5108, %v5123
      %v5126 = vunpack.c.l.s4 1966171168
      %v5127 = vunpack.c.0.s8 %v5126
      %v5128 = vlaneseq
      %v5129 = vshrl.u32 %v5128, 7
      %v5130 = vsub.s32 %v5127, %v5129
      %v5131 = vrot.slane %v5109, %v5130
      %v5133 = vunpack.c.l.s4 1966171168
      %v5134 = vunpack.c.0.s8 %v5133
      %v5135 = vlaneseq
      %v5136 = vshrl.u32 %v5135, 7
      %v5137 = vsub.s32 %v5134, %v5136
      %v5138 = vrot.slane %v5110, %v5137
      %v5139 = vcombine.high %v5117, %v5117
      %v5140 = vcombine.high %v5124, %v5124
      %v5141 = vcombine.high %v5131, %v5131
      %v5142 = vcombine.high %v4893, %v4893
      %v5144 = vunpack.c.l.s4 1966171168
      %v5145 = vunpack.c.0.s8 %v5144
      %v5146 = vlaneseq
      %v5147 = vshrl.u32 %v5146, 7
      %v5148 = vsub.s32 %v5145, %v5147
      %v5149 = vrot.slane %v4893, %v5148
      %v5151 = vunpack.c.l.s4 1966171168
      %v5152 = vunpack.c.0.s8 %v5151
      %v5153 = vlaneseq
      %v5154 = vshrl.u32 %v5153, 7
      %v5155 = vsub.s32 %v5152, %v5154
      %v5156 = vrot.slane %v5142, %v5155
      %v5157 = vcombine.high %v5149, %v5149
      %v5158 = vcombine.high %v5156, %v5156
      %v5160 = vunpack.c.l.s4 1966171168
      %v5161 = vunpack.c.0.s8 %v5160
      %v5162 = vlaneseq
      %v5163 = vshrl.u32 %v5162, 7
      %v5164 = vsub.s32 %v5161, %v5163
      %v5165 = vrot.slane %v5149, %v5164
      %v5167 = vunpack.c.l.s4 1966171168
      %v5168 = vunpack.c.0.s8 %v5167
      %v5169 = vlaneseq
      %v5170 = vshrl.u32 %v5169, 7
      %v5171 = vsub.s32 %v5168, %v5170
      %v5172 = vrot.slane %v5156, %v5171
      %v5174 = vunpack.c.l.s4 1966171168
      %v5175 = vunpack.c.0.s8 %v5174
      %v5176 = vlaneseq
      %v5177 = vshrl.u32 %v5176, 7
      %v5178 = vsub.s32 %v5175, %v5177
      %v5179 = vrot.slane %v5157, %v5178
      %v5181 = vunpack.c.l.s4 1966171168
      %v5182 = vunpack.c.0.s8 %v5181
      %v5183 = vlaneseq
      %v5184 = vshrl.u32 %v5183, 7
      %v5185 = vsub.s32 %v5182, %v5184
      %v5186 = vrot.slane %v5158, %v5185
      %v5187 = vcombine.high %v5165, %v5165
      %v5188 = vcombine.high %v5172, %v5172
      %v5189 = vcombine.high %v5179, %v5179
      %v5190 = vcombine.high %v4894, %v4894
      %v5192 = vunpack.c.l.s4 1966171168
      %v5193 = vunpack.c.0.s8 %v5192
      %v5194 = vlaneseq
      %v5195 = vshrl.u32 %v5194, 7
      %v5196 = vsub.s32 %v5193, %v5195
      %v5197 = vrot.slane %v4894, %v5196
      %v5199 = vunpack.c.l.s4 1966171168
      %v5200 = vunpack.c.0.s8 %v5199
      %v5201 = vlaneseq
      %v5202 = vshrl.u32 %v5201, 7
      %v5203 = vsub.s32 %v5200, %v5202
      %v5204 = vrot.slane %v5190, %v5203
      %v5205 = vcombine.high %v5197, %v5197
      %v5206 = vcombine.high %v5204, %v5204
      %v5208 = vunpack.c.l.s4 1966171168
      %v5209 = vunpack.c.0.s8 %v5208
      %v5210 = vlaneseq
      %v5211 = vshrl.u32 %v5210, 7
      %v5212 = vsub.s32 %v5209, %v5211
      %v5213 = vrot.slane %v5197, %v5212
      %v5215 = vunpack.c.l.s4 1966171168
      %v5216 = vunpack.c.0.s8 %v5215
      %v5217 = vlaneseq
      %v5218 = vshrl.u32 %v5217, 7
      %v5219 = vsub.s32 %v5216, %v5218
      %v5220 = vrot.slane %v5204, %v5219
      %v5222 = vunpack.c.l.s4 1966171168
      %v5223 = vunpack.c.0.s8 %v5222
      %v5224 = vlaneseq
      %v5225 = vshrl.u32 %v5224, 7
      %v5226 = vsub.s32 %v5223, %v5225
      %v5227 = vrot.slane %v5205, %v5226
      %v5229 = vunpack.c.l.s4 1966171168
      %v5230 = vunpack.c.0.s8 %v5229
      %v5231 = vlaneseq
      %v5232 = vshrl.u32 %v5231, 7
      %v5233 = vsub.s32 %v5230, %v5232
      %v5234 = vrot.slane %v5206, %v5233
      %v5235 = vcombine.high %v5213, %v5213
      %v5236 = vcombine.high %v5220, %v5220
      %v5237 = vcombine.high %v5227, %v5227
      %s5238 = scalar_lea.vmem %s1, 24
      %v5239 = vld [vmem:[%s5238] sm:$0xf]
      %v5240 = vcombine.low %v4925, %v4939
      %v5241 = vcombine.low %v4947, %v4949
      %v5242 = vcombine.low %v4932, %v4946
      %v5243 = vcombine.low %v4948, %v4973
      %v5245 = vunpack.c.l.s4 1966171168
      %v5246 = vunpack.c.0.s8 %v5245
      %v5247 = vlaneseq
      %v5248 = vshrl.u32 %v5247, 7
      %v5249 = vsub.s32 %v5246, %v5248
      %v5250 = vrot.slane %v5240, %v5249
      %v5252 = vunpack.c.l.s4 1966171168
      %v5253 = vunpack.c.0.s8 %v5252
      %v5254 = vlaneseq
      %v5255 = vshrl.u32 %v5254, 7
      %v5256 = vsub.s32 %v5253, %v5255
      %v5257 = vrot.slane %v5241, %v5256
      %v5259 = vunpack.c.l.s4 1966171168
      %v5260 = vunpack.c.0.s8 %v5259
      %v5261 = vlaneseq
      %v5262 = vshrl.u32 %v5261, 7
      %v5263 = vsub.s32 %v5260, %v5262
      %v5264 = vrot.slane %v5242, %v5263
      %v5266 = vunpack.c.l.s4 1966171168
      %v5267 = vunpack.c.0.s8 %v5266
      %v5268 = vlaneseq
      %v5269 = vshrl.u32 %v5268, 7
      %v5270 = vsub.s32 %v5267, %v5269
      %v5271 = vrot.slane %v5243, %v5270
      %v5272 = vcombine.low %v5250, %v5257
      %v5273 = vcombine.low %v5264, %v5271
      %v5275 = vunpack.c.l.s4 1966171168
      %v5276 = vunpack.c.0.s8 %v5275
      %v5277 = vlaneseq
      %v5278 = vshrl.u32 %v5277, 7
      %v5279 = vsub.s32 %v5276, %v5278
      %v5280 = vrot.slane %v5272, %v5279
      %v5282 = vunpack.c.l.s4 1966171168
      %v5283 = vunpack.c.0.s8 %v5282
      %v5284 = vlaneseq
      %v5285 = vshrl.u32 %v5284, 7
      %v5286 = vsub.s32 %v5283, %v5285
      %v5287 = vrot.slane %v5273, %v5286
      %v5288 = vcombine.low %v5280, %v5287
      %v5289 = vcombine.low %v4987, %v4995
      %v5290 = vcombine.low %v4997, %v4980
      %v5291 = vcombine.low %v4994, %v4996
      %v5292 = vcombine.low %v5021, %v5035
      %v5294 = vunpack.c.l.s4 1966171168
      %v5295 = vunpack.c.0.s8 %v5294
      %v5296 = vlaneseq
      %v5297 = vshrl.u32 %v5296, 7
      %v5298 = vsub.s32 %v5295, %v5297
      %v5299 = vrot.slane %v5289, %v5298
      %v5301 = vunpack.c.l.s4 1966171168
      %v5302 = vunpack.c.0.s8 %v5301
      %v5303 = vlaneseq
      %v5304 = vshrl.u32 %v5303, 7
      %v5305 = vsub.s32 %v5302, %v5304
      %v5306 = vrot.slane %v5290, %v5305
      %v5308 = vunpack.c.l.s4 1966171168
      %v5309 = vunpack.c.0.s8 %v5308
      %v5310 = vlaneseq
      %v5311 = vshrl.u32 %v5310, 7
      %v5312 = vsub.s32 %v5309, %v5311
      %v5313 = vrot.slane %v5291, %v5312
      %v5315 = vunpack.c.l.s4 1966171168
      %v5316 = vunpack.c.0.s8 %v5315
      %v5317 = vlaneseq
      %v5318 = vshrl.u32 %v5317, 7
      %v5319 = vsub.s32 %v5316, %v5318
      %v5320 = vrot.slane %v5292, %v5319
      %v5321 = vcombine.low %v5299, %v5306
      %v5322 = vcombine.low %v5313, %v5320
      %v5324 = vunpack.c.l.s4 1966171168
      %v5325 = vunpack.c.0.s8 %v5324
      %v5326 = vlaneseq
      %v5327 = vshrl.u32 %v5326, 7
      %v5328 = vsub.s32 %v5325, %v5327
      %v5329 = vrot.slane %v5321, %v5328
      %v5331 = vunpack.c.l.s4 1966171168
      %v5332 = vunpack.c.0.s8 %v5331
      %v5333 = vlaneseq
      %v5334 = vshrl.u32 %v5333, 7
      %v5335 = vsub.s32 %v5332, %v5334
      %v5336 = vrot.slane %v5322, %v5335
      %v5337 = vcombine.low %v5329, %v5336
      %v5338 = vcombine.low %v5043, %v5045
      %v5339 = vcombine.low %v5028, %v5042
      %v5340 = vcombine.low %v5044, %v5069
      %v5341 = vcombine.low %v5083, %v5091
      %v5343 = vunpack.c.l.s4 1966171168
      %v5344 = vunpack.c.0.s8 %v5343
      %v5345 = vlaneseq
      %v5346 = vshrl.u32 %v5345, 7
      %v5347 = vsub.s32 %v5344, %v5346
      %v5348 = vrot.slane %v5338, %v5347
      %v5350 = vunpack.c.l.s4 1966171168
      %v5351 = vunpack.c.0.s8 %v5350
      %v5352 = vlaneseq
      %v5353 = vshrl.u32 %v5352, 7
      %v5354 = vsub.s32 %v5351, %v5353
      %v5355 = vrot.slane %v5339, %v5354
      %v5357 = vunpack.c.l.s4 1966171168
      %v5358 = vunpack.c.0.s8 %v5357
      %v5359 = vlaneseq
      %v5360 = vshrl.u32 %v5359, 7
      %v5361 = vsub.s32 %v5358, %v5360
      %v5362 = vrot.slane %v5340, %v5361
      %v5364 = vunpack.c.l.s4 1966171168
      %v5365 = vunpack.c.0.s8 %v5364
      %v5366 = vlaneseq
      %v5367 = vshrl.u32 %v5366, 7
      %v5368 = vsub.s32 %v5365, %v5367
      %v5369 = vrot.slane %v5341, %v5368
      %v5370 = vcombine.low %v5348, %v5355
      %v5371 = vcombine.low %v5362, %v5369
      %v5373 = vunpack.c.l.s4 1966171168
      %v5374 = vunpack.c.0.s8 %v5373
      %v5375 = vlaneseq
      %v5376 = vshrl.u32 %v5375, 7
      %v5377 = vsub.s32 %v5374, %v5376
      %v5378 = vrot.slane %v5370, %v5377
      %v5380 = vunpack.c.l.s4 1966171168
      %v5381 = vunpack.c.0.s8 %v5380
      %v5382 = vlaneseq
      %v5383 = vshrl.u32 %v5382, 7
      %v5384 = vsub.s32 %v5381, %v5383
      %v5385 = vrot.slane %v5371, %v5384
      %v5386 = vcombine.low %v5378, %v5385
      %v5387 = vcombine.low %v5093, %v5076
      %v5388 = vcombine.low %v5090, %v5092
      %v5389 = vcombine.low %v5117, %v5131
      %v5390 = vcombine.low %v5139, %v5141
      %v5392 = vunpack.c.l.s4 1966171168
      %v5393 = vunpack.c.0.s8 %v5392
      %v5394 = vlaneseq
      %v5395 = vshrl.u32 %v5394, 7
      %v5396 = vsub.s32 %v5393, %v5395
      %v5397 = vrot.slane %v5387, %v5396
      %v5399 = vunpack.c.l.s4 1966171168
      %v5400 = vunpack.c.0.s8 %v5399
      %v5401 = vlaneseq
      %v5402 = vshrl.u32 %v5401, 7
      %v5403 = vsub.s32 %v5400, %v5402
      %v5404 = vrot.slane %v5388, %v5403
      %v5406 = vunpack.c.l.s4 1966171168
      %v5407 = vunpack.c.0.s8 %v5406
      %v5408 = vlaneseq
      %v5409 = vshrl.u32 %v5408, 7
      %v5410 = vsub.s32 %v5407, %v5409
      %v5411 = vrot.slane %v5389, %v5410
      %v5413 = vunpack.c.l.s4 1966171168
      %v5414 = vunpack.c.0.s8 %v5413
      %v5415 = vlaneseq
      %v5416 = vshrl.u32 %v5415, 7
      %v5417 = vsub.s32 %v5414, %v5416
      %v5418 = vrot.slane %v5390, %v5417
      %v5419 = vcombine.low %v5397, %v5404
      %v5420 = vcombine.low %v5411, %v5418
      %v5422 = vunpack.c.l.s4 1966171168
      %v5423 = vunpack.c.0.s8 %v5422
      %v5424 = vlaneseq
      %v5425 = vshrl.u32 %v5424, 7
      %v5426 = vsub.s32 %v5423, %v5425
      %v5427 = vrot.slane %v5419, %v5426
      %v5429 = vunpack.c.l.s4 1966171168
      %v5430 = vunpack.c.0.s8 %v5429
      %v5431 = vlaneseq
      %v5432 = vshrl.u32 %v5431, 7
      %v5433 = vsub.s32 %v5430, %v5432
      %v5434 = vrot.slane %v5420, %v5433
      %v5435 = vcombine.low %v5427, %v5434
      %v5436 = vcombine.low %v5124, %v5138
      %v5437 = vcombine.low %v5140, %v5165
      %v5438 = vcombine.low %v5179, %v5187
      %v5439 = vcombine.low %v5189, %v5172
      %v5441 = vunpack.c.l.s4 1966171168
      %v5442 = vunpack.c.0.s8 %v5441
      %v5443 = vlaneseq
      %v5444 = vshrl.u32 %v5443, 7
      %v5445 = vsub.s32 %v5442, %v5444
      %v5446 = vrot.slane %v5436, %v5445
      %v5448 = vunpack.c.l.s4 1966171168
      %v5449 = vunpack.c.0.s8 %v5448
      %v5450 = vlaneseq
      %v5451 = vshrl.u32 %v5450, 7
      %v5452 = vsub.s32 %v5449, %v5451
      %v5453 = vrot.slane %v5437, %v5452
      %v5455 = vunpack.c.l.s4 1966171168
      %v5456 = vunpack.c.0.s8 %v5455
      %v5457 = vlaneseq
      %v5458 = vshrl.u32 %v5457, 7
      %v5459 = vsub.s32 %v5456, %v5458
      %v5460 = vrot.slane %v5438, %v5459
      %v5462 = vunpack.c.l.s4 1966171168
      %v5463 = vunpack.c.0.s8 %v5462
      %v5464 = vlaneseq
      %v5465 = vshrl.u32 %v5464, 7
      %v5466 = vsub.s32 %v5463, %v5465
      %v5467 = vrot.slane %v5439, %v5466
      %v5468 = vcombine.low %v5446, %v5453
      %v5469 = vcombine.low %v5460, %v5467
      %v5471 = vunpack.c.l.s4 1966171168
      %v5472 = vunpack.c.0.s8 %v5471
      %v5473 = vlaneseq
      %v5474 = vshrl.u32 %v5473, 7
      %v5475 = vsub.s32 %v5472, %v5474
      %v5476 = vrot.slane %v5468, %v5475
      %v5478 = vunpack.c.l.s4 1966171168
      %v5479 = vunpack.c.0.s8 %v5478
      %v5480 = vlaneseq
      %v5481 = vshrl.u32 %v5480, 7
      %v5482 = vsub.s32 %v5479, %v5481
      %v5483 = vrot.slane %v5469, %v5482
      %v5484 = vcombine.low %v5476, %v5483
      %v5485 = vcombine.low %v5186, %v5188
      %v5486 = vcombine.low %v5213, %v5227
      %v5487 = vcombine.low %v5235, %v5237
      %v5488 = vcombine.low %v5220, %v5234
      %v5490 = vunpack.c.l.s4 1966171168
      %v5491 = vunpack.c.0.s8 %v5490
      %v5492 = vlaneseq
      %v5493 = vshrl.u32 %v5492, 7
      %v5494 = vsub.s32 %v5491, %v5493
      %v5495 = vrot.slane %v5485, %v5494
      %v5497 = vunpack.c.l.s4 1966171168
      %v5498 = vunpack.c.0.s8 %v5497
      %v5499 = vlaneseq
      %v5500 = vshrl.u32 %v5499, 7
      %v5501 = vsub.s32 %v5498, %v5500
      %v5502 = vrot.slane %v5486, %v5501
      %v5504 = vunpack.c.l.s4 1966171168
      %v5505 = vunpack.c.0.s8 %v5504
      %v5506 = vlaneseq
      %v5507 = vshrl.u32 %v5506, 7
      %v5508 = vsub.s32 %v5505, %v5507
      %v5509 = vrot.slane %v5487, %v5508
      %v5511 = vunpack.c.l.s4 1966171168
      %v5512 = vunpack.c.0.s8 %v5511
      %v5513 = vlaneseq
      %v5514 = vshrl.u32 %v5513, 7
      %v5515 = vsub.s32 %v5512, %v5514
      %v5516 = vrot.slane %v5488, %v5515
      %v5517 = vcombine.low %v5495, %v5502
      %v5518 = vcombine.low %v5509, %v5516
      %v5520 = vunpack.c.l.s4 1966171168
      %v5521 = vunpack.c.0.s8 %v5520
      %v5522 = vlaneseq
      %v5523 = vshrl.u32 %v5522, 7
      %v5524 = vsub.s32 %v5521, %v5523
      %v5525 = vrot.slane %v5517, %v5524
      %v5527 = vunpack.c.l.s4 1966171168
      %v5528 = vunpack.c.0.s8 %v5527
      %v5529 = vlaneseq
      %v5530 = vshrl.u32 %v5529, 7
      %v5531 = vsub.s32 %v5528, %v5530
      %v5532 = vrot.slane %v5518, %v5531
      %v5533 = vcombine.low %v5525, %v5532
      %v5535 = vunpack.c.l.s4 1966171168
      %v5536 = vunpack.c.0.s8 %v5535
      %v5537 = vlaneseq
      %v5538 = vshrl.u32 %v5537, 7
      %v5539 = vsub.s32 %v5536, %v5538
      %v5540 = vrot.slane %v5236, %v5539
      %v5542 = vunpack.c.l.s4 1966171168
      %v5543 = vunpack.c.0.s8 %v5542
      %v5544 = vlaneseq
      %v5545 = vshrl.u32 %v5544, 7
      %v5546 = vsub.s32 %v5543, %v5545
      %v5547 = vrot.slane %v5540, %v5546
      %v5548 = vsel %vm1205, %v5288, 0
      %v5550 = vsel %vm1205, %v5337, 0
      %v5552 = vsel %vm1205, %v5386, 0
      %v5554 = vsel %vm1205, %v5435, 0
      %v5556 = vsel %vm1205, %v5484, 0
      %v5558 = vsel %vm1205, %v5533, 0
      %v5560 = vsel %vm1205, %v5547, 0
      %v5563 = vsel %vm1220, %v5239, 0
      %5565 = vmatprep.subr.mxu0 0.0
      %5566 = vmatpush1.msra.mxu0 %v5563
      %5567 = vmatprep.subr.mxu0 0.0
      %5568 = vmatpush1.msra.mxu0 0.0
      %5569 = vmatprep.subr.mxu0 0.0
      %5570 = vmatpush1.msra.mxu0 0.0
      %5571 = vmatprep.subr.mxu0 0.0
      %5572 = vmatpush1.msra.mxu0 0.0
      %5573 = vmatprep.subr.mxu0 0.0
      %5574 = vmatpush1.msra.mxu0 0.0
      %5575 = vmatprep.subr.mxu0 0.0
      %5576 = vmatpush1.msra.mxu0 0.0
      %5577 = vmatprep.subr.mxu0 0.0
      %5578 = vmatpush1.msra.mxu0 0.0
      %5579 = vmatprep.subr.mxu0 0.0
      %5580 = vmatpush1.msra.mxu0 0.0
      %5581 = vmatprep.subr.mxu0 0.0
      %5582 = vmatpush1.msra.mxu0 0.0
      %5583 = vmatprep.subr.mxu0 0.0
      %5584 = vmatpush1.msra.mxu0 0.0
      %5585 = vmatprep.subr.mxu0 0.0
      %5586 = vmatpush1.msra.mxu0 0.0
      %5587 = vmatprep.subr.mxu0 0.0
      %5588 = vmatpush1.msra.mxu0 0.0
      %5589 = vmatprep.subr.mxu0 0.0
      %5590 = vmatpush1.msra.mxu0 0.0
      %5591 = vmatprep.subr.mxu0 0.0
      %5592 = vmatpush1.msra.mxu0 0.0
      %5593 = vmatprep.subr.mxu0 0.0
      %5594 = vmatpush1.msra.mxu0 0.0
      %5595 = vmatprep.subr.mxu0 0.0
      %5596 = vmatpush1.msra.mxu0 0.0
      %5597 = vmatprep.subr.mxu0 0.0
      %5598 = vmatpush1.msra.mxu0 0.0
      %5599 = vmatprep.subr.mxu0 0.0
      %5600 = vmatpush1.msra.mxu0 0.0
      %5601 = vmatprep.subr.mxu0 0.0
      %5602 = vmatpush1.msra.mxu0 0.0
      %5603 = vmatprep.subr.mxu0 0.0
      %5604 = vmatpush1.msra.mxu0 0.0
      %5605 = vmatprep.subr.mxu0 0.0
      %5606 = vmatpush1.msra.mxu0 0.0
      %5607 = vmatprep.subr.mxu0 0.0
      %5608 = vmatpush1.msra.mxu0 0.0
      %5609 = vmatprep.subr.mxu0 0.0
      %5610 = vmatpush1.msra.mxu0 0.0
      %5611 = vmatprep.subr.mxu0 0.0
      %5612 = vmatpush1.msra.mxu0 0.0
      %5613 = vmatprep.subr.mxu0 0.0
      %5614 = vmatpush1.msra.mxu0 0.0
      %5615 = vmatprep.subr.mxu0 0.0
      %5616 = vmatpush1.msra.mxu0 0.0
      %5617 = vmatprep.subr.mxu0 0.0
      %5618 = vmatpush1.msra.mxu0 0.0
      %5619 = vmatprep.subr.mxu0 0.0
      %5620 = vmatpush1.msra.mxu0 0.0
      %5621 = vmatprep.subr.mxu0 0.0
      %5622 = vmatpush1.msra.mxu0 0.0
      %5623 = vmatprep.subr.mxu0 0.0
      %5624 = vmatpush1.msra.mxu0 0.0
      %5625 = vmatprep.subr.mxu0 0.0
      %5626 = vmatpush1.msra.mxu0 0.0
      %5627 = vmatprep.subr.mxu0 0.0
      %5628 = vmatpush1.msra.mxu0 0.0
      %5629 = vmatprep.mubr.f32.mxu0 0.0
      %5630 = vmatmul.mubr.f32.gmra.mrb[0].mxu0 %v5548
      %v5631 = vpop.f32.mrb[0].mxu0
      %v5632 = vadd.f32 0.0, %v5631
      %v5633 = vpop.f32.mrb[0].mxu0
      %5634 = vmatprep.mubr.f32.mxu0 0.0
      %5635 = vmatmul.mubr.f32.gmra.mrb[0].mxu0 %v5550
      %v5636 = vpop.f32.mrb[0].mxu0
      %v5637 = vadd.f32 0.0, %v5636
      %v5638 = vpop.f32.mrb[0].mxu0
      %5639 = vmatprep.mubr.f32.mxu0 0.0
      %5640 = vmatmul.mubr.f32.gmra.mrb[0].mxu0 %v5552
      %v5641 = vpop.f32.mrb[0].mxu0
      %v5642 = vadd.f32 0.0, %v5641
      %v5643 = vpop.f32.mrb[0].mxu0
      %5644 = vmatprep.mubr.f32.mxu0 0.0
      %5645 = vmatmul.mubr.f32.gmra.mrb[0].mxu0 %v5554
      %v5646 = vpop.f32.mrb[0].mxu0
      %v5647 = vadd.f32 0.0, %v5646
      %v5648 = vpop.f32.mrb[0].mxu0
      %5649 = vmatprep.mubr.f32.mxu0 0.0
      %5650 = vmatmul.mubr.f32.gmra.mrb[0].mxu0 %v5556
      %v5651 = vpop.f32.mrb[0].mxu0
      %v5652 = vadd.f32 0.0, %v5651
      %v5653 = vpop.f32.mrb[0].mxu0
      %5654 = vmatprep.mubr.f32.mxu0 0.0
      %5655 = vmatmul.mubr.f32.gmra.mrb[0].mxu0 %v5558
      %v5656 = vpop.f32.mrb[0].mxu0
      %v5657 = vadd.f32 0.0, %v5656
      %v5658 = vpop.f32.mrb[0].mxu0
      %5659 = vmatprep.mubr.f32.mxu0 0.0
      %5660 = vmatmul.mubr.f32.gmra.mrb[0].mxu0 %v5560
      %v5661 = vpop.f32.mrb[0].mxu0
      %v5662 = vadd.f32 0.0, %v5661
      %v5663 = vpop.f32.mrb[0].mxu0
      %5664 = vdwg.mxu0
      %v5665 = vadd.f32 %v4880, %v5632
      %v5666 = vadd.f32 %v4881, %v5637
      %v5667 = vadd.f32 %v4882, %v5642
      %v5668 = vadd.f32 %v4883, %v5647
      %v5669 = vadd.f32 %v4884, %v5652
      %v5670 = vadd.f32 %v4885, %v5657
      %v5671 = vadd.f32 %v4886, %v5662
      %s5672 = scalar_lea.vmem %s187, 72
      %v5673 = vld [vmem:[%s5672] sm:$0x7f]
      %v5674 = vld [vmem:[%s5672 + $0x8] sm:$0x7f]
      %v5675 = vld [vmem:[%s5672 + $0x10] sm:$0x7f]
      %v5676 = vld [vmem:[%s5672 + $0x18] sm:$0x7f]
      %v5677 = vld [vmem:[%s5672 + $0x20] sm:$0x7f]
      %v5678 = vld [vmem:[%s5672 + $0x28] sm:$0x7f]
      %v5679 = vld [vmem:[%s5672 + $0x30] sm:$0x7f]
      %v5687 = vcombine.high %v5673, %v5673
      %v5689 = vunpack.c.l.s4 1966171168
      %v5690 = vunpack.c.0.s8 %v5689
      %v5691 = vlaneseq
      %v5692 = vshrl.u32 %v5691, 7
      %v5693 = vsub.s32 %v5690, %v5692
      %v5694 = vrot.slane %v5673, %v5693
      %v5696 = vunpack.c.l.s4 1966171168
      %v5697 = vunpack.c.0.s8 %v5696
      %v5698 = vlaneseq
      %v5699 = vshrl.u32 %v5698, 7
      %v5700 = vsub.s32 %v5697, %v5699
      %v5701 = vrot.slane %v5687, %v5700
      %v5702 = vcombine.high %v5694, %v5694
      %v5703 = vcombine.high %v5701, %v5701
      %v5705 = vunpack.c.l.s4 1966171168
      %v5706 = vunpack.c.0.s8 %v5705
      %v5707 = vlaneseq
      %v5708 = vshrl.u32 %v5707, 7
      %v5709 = vsub.s32 %v5706, %v5708
      %v5710 = vrot.slane %v5694, %v5709
      %v5712 = vunpack.c.l.s4 1966171168
      %v5713 = vunpack.c.0.s8 %v5712
      %v5714 = vlaneseq
      %v5715 = vshrl.u32 %v5714, 7
      %v5716 = vsub.s32 %v5713, %v5715
      %v5717 = vrot.slane %v5701, %v5716
      %v5719 = vunpack.c.l.s4 1966171168
      %v5720 = vunpack.c.0.s8 %v5719
      %v5721 = vlaneseq
      %v5722 = vshrl.u32 %v5721, 7
      %v5723 = vsub.s32 %v5720, %v5722
      %v5724 = vrot.slane %v5702, %v5723
      %v5726 = vunpack.c.l.s4 1966171168
      %v5727 = vunpack.c.0.s8 %v5726
      %v5728 = vlaneseq
      %v5729 = vshrl.u32 %v5728, 7
      %v5730 = vsub.s32 %v5727, %v5729
      %v5731 = vrot.slane %v5703, %v5730
      %v5732 = vcombine.high %v5710, %v5710
      %v5733 = vcombine.high %v5717, %v5717
      %v5734 = vcombine.high %v5724, %v5724
      %v5735 = vcombine.high %v5674, %v5674
      %v5737 = vunpack.c.l.s4 1966171168
      %v5738 = vunpack.c.0.s8 %v5737
      %v5739 = vlaneseq
      %v5740 = vshrl.u32 %v5739, 7
      %v5741 = vsub.s32 %v5738, %v5740
      %v5742 = vrot.slane %v5674, %v5741
      %v5744 = vunpack.c.l.s4 1966171168
      %v5745 = vunpack.c.0.s8 %v5744
      %v5746 = vlaneseq
      %v5747 = vshrl.u32 %v5746, 7
      %v5748 = vsub.s32 %v5745, %v5747
      %v5749 = vrot.slane %v5735, %v5748
      %v5750 = vcombine.high %v5742, %v5742
      %v5751 = vcombine.high %v5749, %v5749
      %v5753 = vunpack.c.l.s4 1966171168
      %v5754 = vunpack.c.0.s8 %v5753
      %v5755 = vlaneseq
      %v5756 = vshrl.u32 %v5755, 7
      %v5757 = vsub.s32 %v5754, %v5756
      %v5758 = vrot.slane %v5742, %v5757
      %v5760 = vunpack.c.l.s4 1966171168
      %v5761 = vunpack.c.0.s8 %v5760
      %v5762 = vlaneseq
      %v5763 = vshrl.u32 %v5762, 7
      %v5764 = vsub.s32 %v5761, %v5763
      %v5765 = vrot.slane %v5749, %v5764
      %v5767 = vunpack.c.l.s4 1966171168
      %v5768 = vunpack.c.0.s8 %v5767
      %v5769 = vlaneseq
      %v5770 = vshrl.u32 %v5769, 7
      %v5771 = vsub.s32 %v5768, %v5770
      %v5772 = vrot.slane %v5750, %v5771
      %v5774 = vunpack.c.l.s4 1966171168
      %v5775 = vunpack.c.0.s8 %v5774
      %v5776 = vlaneseq
      %v5777 = vshrl.u32 %v5776, 7
      %v5778 = vsub.s32 %v5775, %v5777
      %v5779 = vrot.slane %v5751, %v5778
      %v5780 = vcombine.high %v5758, %v5758
      %v5781 = vcombine.high %v5765, %v5765
      %v5782 = vcombine.high %v5772, %v5772
      %v5783 = vcombine.high %v5675, %v5675
      %v5785 = vunpack.c.l.s4 1966171168
      %v5786 = vunpack.c.0.s8 %v5785
      %v5787 = vlaneseq
      %v5788 = vshrl.u32 %v5787, 7
      %v5789 = vsub.s32 %v5786, %v5788
      %v5790 = vrot.slane %v5675, %v5789
      %v5792 = vunpack.c.l.s4 1966171168
      %v5793 = vunpack.c.0.s8 %v5792
      %v5794 = vlaneseq
      %v5795 = vshrl.u32 %v5794, 7
      %v5796 = vsub.s32 %v5793, %v5795
      %v5797 = vrot.slane %v5783, %v5796
      %v5798 = vcombine.high %v5790, %v5790
      %v5799 = vcombine.high %v5797, %v5797
      %v5801 = vunpack.c.l.s4 1966171168
      %v5802 = vunpack.c.0.s8 %v5801
      %v5803 = vlaneseq
      %v5804 = vshrl.u32 %v5803, 7
      %v5805 = vsub.s32 %v5802, %v5804
      %v5806 = vrot.slane %v5790, %v5805
      %v5808 = vunpack.c.l.s4 1966171168
      %v5809 = vunpack.c.0.s8 %v5808
      %v5810 = vlaneseq
      %v5811 = vshrl.u32 %v5810, 7
      %v5812 = vsub.s32 %v5809, %v5811
      %v5813 = vrot.slane %v5797, %v5812
      %v5815 = vunpack.c.l.s4 1966171168
      %v5816 = vunpack.c.0.s8 %v5815
      %v5817 = vlaneseq
      %v5818 = vshrl.u32 %v5817, 7
      %v5819 = vsub.s32 %v5816, %v5818
      %v5820 = vrot.slane %v5798, %v5819
      %v5822 = vunpack.c.l.s4 1966171168
      %v5823 = vunpack.c.0.s8 %v5822
      %v5824 = vlaneseq
      %v5825 = vshrl.u32 %v5824, 7
      %v5826 = vsub.s32 %v5823, %v5825
      %v5827 = vrot.slane %v5799, %v5826
      %v5828 = vcombine.high %v5806, %v5806
      %v5829 = vcombine.high %v5813, %v5813
      %v5830 = vcombine.high %v5820, %v5820
      %v5831 = vcombine.high %v5676, %v5676
      %v5833 = vunpack.c.l.s4 1966171168
      %v5834 = vunpack.c.0.s8 %v5833
      %v5835 = vlaneseq
      %v5836 = vshrl.u32 %v5835, 7
      %v5837 = vsub.s32 %v5834, %v5836
      %v5838 = vrot.slane %v5676, %v5837
      %v5840 = vunpack.c.l.s4 1966171168
      %v5841 = vunpack.c.0.s8 %v5840
      %v5842 = vlaneseq
      %v5843 = vshrl.u32 %v5842, 7
      %v5844 = vsub.s32 %v5841, %v5843
      %v5845 = vrot.slane %v5831, %v5844
      %v5846 = vcombine.high %v5838, %v5838
      %v5847 = vcombine.high %v5845, %v5845
      %v5849 = vunpack.c.l.s4 1966171168
      %v5850 = vunpack.c.0.s8 %v5849
      %v5851 = vlaneseq
      %v5852 = vshrl.u32 %v5851, 7
      %v5853 = vsub.s32 %v5850, %v5852
      %v5854 = vrot.slane %v5838, %v5853
      %v5856 = vunpack.c.l.s4 1966171168
      %v5857 = vunpack.c.0.s8 %v5856
      %v5858 = vlaneseq
      %v5859 = vshrl.u32 %v5858, 7
      %v5860 = vsub.s32 %v5857, %v5859
      %v5861 = vrot.slane %v5845, %v5860
      %v5863 = vunpack.c.l.s4 1966171168
      %v5864 = vunpack.c.0.s8 %v5863
      %v5865 = vlaneseq
      %v5866 = vshrl.u32 %v5865, 7
      %v5867 = vsub.s32 %v5864, %v5866
      %v5868 = vrot.slane %v5846, %v5867
      %v5870 = vunpack.c.l.s4 1966171168
      %v5871 = vunpack.c.0.s8 %v5870
      %v5872 = vlaneseq
      %v5873 = vshrl.u32 %v5872, 7
      %v5874 = vsub.s32 %v5871, %v5873
      %v5875 = vrot.slane %v5847, %v5874
      %v5876 = vcombine.high %v5854, %v5854
      %v5877 = vcombine.high %v5861, %v5861
      %v5878 = vcombine.high %v5868, %v5868
      %v5879 = vcombine.high %v5677, %v5677
      %v5881 = vunpack.c.l.s4 1966171168
      %v5882 = vunpack.c.0.s8 %v5881
      %v5883 = vlaneseq
      %v5884 = vshrl.u32 %v5883, 7
      %v5885 = vsub.s32 %v5882, %v5884
      %v5886 = vrot.slane %v5677, %v5885
      %v5888 = vunpack.c.l.s4 1966171168
      %v5889 = vunpack.c.0.s8 %v5888
      %v5890 = vlaneseq
      %v5891 = vshrl.u32 %v5890, 7
      %v5892 = vsub.s32 %v5889, %v5891
      %v5893 = vrot.slane %v5879, %v5892
      %v5894 = vcombine.high %v5886, %v5886
      %v5895 = vcombine.high %v5893, %v5893
      %v5897 = vunpack.c.l.s4 1966171168
      %v5898 = vunpack.c.0.s8 %v5897
      %v5899 = vlaneseq
      %v5900 = vshrl.u32 %v5899, 7
      %v5901 = vsub.s32 %v5898, %v5900
      %v5902 = vrot.slane %v5886, %v5901
      %v5904 = vunpack.c.l.s4 1966171168
      %v5905 = vunpack.c.0.s8 %v5904
      %v5906 = vlaneseq
      %v5907 = vshrl.u32 %v5906, 7
      %v5908 = vsub.s32 %v5905, %v5907
      %v5909 = vrot.slane %v5893, %v5908
      %v5911 = vunpack.c.l.s4 1966171168
      %v5912 = vunpack.c.0.s8 %v5911
      %v5913 = vlaneseq
      %v5914 = vshrl.u32 %v5913, 7
      %v5915 = vsub.s32 %v5912, %v5914
      %v5916 = vrot.slane %v5894, %v5915
      %v5918 = vunpack.c.l.s4 1966171168
      %v5919 = vunpack.c.0.s8 %v5918
      %v5920 = vlaneseq
      %v5921 = vshrl.u32 %v5920, 7
      %v5922 = vsub.s32 %v5919, %v5921
      %v5923 = vrot.slane %v5895, %v5922
      %v5924 = vcombine.high %v5902, %v5902
      %v5925 = vcombine.high %v5909, %v5909
      %v5926 = vcombine.high %v5916, %v5916
      %v5927 = vcombine.high %v5678, %v5678
      %v5929 = vunpack.c.l.s4 1966171168
      %v5930 = vunpack.c.0.s8 %v5929
      %v5931 = vlaneseq
      %v5932 = vshrl.u32 %v5931, 7
      %v5933 = vsub.s32 %v5930, %v5932
      %v5934 = vrot.slane %v5678, %v5933
      %v5936 = vunpack.c.l.s4 1966171168
      %v5937 = vunpack.c.0.s8 %v5936
      %v5938 = vlaneseq
      %v5939 = vshrl.u32 %v5938, 7
      %v5940 = vsub.s32 %v5937, %v5939
      %v5941 = vrot.slane %v5927, %v5940
      %v5942 = vcombine.high %v5934, %v5934
      %v5943 = vcombine.high %v5941, %v5941
      %v5945 = vunpack.c.l.s4 1966171168
      %v5946 = vunpack.c.0.s8 %v5945
      %v5947 = vlaneseq
      %v5948 = vshrl.u32 %v5947, 7
      %v5949 = vsub.s32 %v5946, %v5948
      %v5950 = vrot.slane %v5934, %v5949
      %v5952 = vunpack.c.l.s4 1966171168
      %v5953 = vunpack.c.0.s8 %v5952
      %v5954 = vlaneseq
      %v5955 = vshrl.u32 %v5954, 7
      %v5956 = vsub.s32 %v5953, %v5955
      %v5957 = vrot.slane %v5941, %v5956
      %v5959 = vunpack.c.l.s4 1966171168
      %v5960 = vunpack.c.0.s8 %v5959
      %v5961 = vlaneseq
      %v5962 = vshrl.u32 %v5961, 7
      %v5963 = vsub.s32 %v5960, %v5962
      %v5964 = vrot.slane %v5942, %v5963
      %v5966 = vunpack.c.l.s4 1966171168
      %v5967 = vunpack.c.0.s8 %v5966
      %v5968 = vlaneseq
      %v5969 = vshrl.u32 %v5968, 7
      %v5970 = vsub.s32 %v5967, %v5969
      %v5971 = vrot.slane %v5943, %v5970
      %v5972 = vcombine.high %v5950, %v5950
      %v5973 = vcombine.high %v5957, %v5957
      %v5974 = vcombine.high %v5964, %v5964
      %v5975 = vcombine.high %v5679, %v5679
      %v5977 = vunpack.c.l.s4 1966171168
      %v5978 = vunpack.c.0.s8 %v5977
      %v5979 = vlaneseq
      %v5980 = vshrl.u32 %v5979, 7
      %v5981 = vsub.s32 %v5978, %v5980
      %v5982 = vrot.slane %v5679, %v5981
      %v5984 = vunpack.c.l.s4 1966171168
      %v5985 = vunpack.c.0.s8 %v5984
      %v5986 = vlaneseq
      %v5987 = vshrl.u32 %v5986, 7
      %v5988 = vsub.s32 %v5985, %v5987
      %v5989 = vrot.slane %v5975, %v5988
      %v5990 = vcombine.high %v5982, %v5982
      %v5991 = vcombine.high %v5989, %v5989
      %v5993 = vunpack.c.l.s4 1966171168
      %v5994 = vunpack.c.0.s8 %v5993
      %v5995 = vlaneseq
      %v5996 = vshrl.u32 %v5995, 7
      %v5997 = vsub.s32 %v5994, %v5996
      %v5998 = vrot.slane %v5982, %v5997
      %v6000 = vunpack.c.l.s4 1966171168
      %v6001 = vunpack.c.0.s8 %v6000
      %v6002 = vlaneseq
      %v6003 = vshrl.u32 %v6002, 7
      %v6004 = vsub.s32 %v6001, %v6003
      %v6005 = vrot.slane %v5989, %v6004
      %v6007 = vunpack.c.l.s4 1966171168
      %v6008 = vunpack.c.0.s8 %v6007
      %v6009 = vlaneseq
      %v6010 = vshrl.u32 %v6009, 7
      %v6011 = vsub.s32 %v6008, %v6010
      %v6012 = vrot.slane %v5990, %v6011
      %v6014 = vunpack.c.l.s4 1966171168
      %v6015 = vunpack.c.0.s8 %v6014
      %v6016 = vlaneseq
      %v6017 = vshrl.u32 %v6016, 7
      %v6018 = vsub.s32 %v6015, %v6017
      %v6019 = vrot.slane %v5991, %v6018
      %v6020 = vcombine.high %v5998, %v5998
      %v6021 = vcombine.high %v6005, %v6005
      %v6022 = vcombine.high %v6012, %v6012
      %s6023 = scalar_lea.vmem %s1, 28
      %v6024 = vld [vmem:[%s6023] sm:$0xf]
      %v6025 = vcombine.low %v5710, %v5724
      %v6026 = vcombine.low %v5732, %v5734
      %v6027 = vcombine.low %v5717, %v5731
      %v6028 = vcombine.low %v5733, %v5758
      %v6030 = vunpack.c.l.s4 1966171168
      %v6031 = vunpack.c.0.s8 %v6030
      %v6032 = vlaneseq
      %v6033 = vshrl.u32 %v6032, 7
      %v6034 = vsub.s32 %v6031, %v6033
      %v6035 = vrot.slane %v6025, %v6034
      %v6037 = vunpack.c.l.s4 1966171168
      %v6038 = vunpack.c.0.s8 %v6037
      %v6039 = vlaneseq
      %v6040 = vshrl.u32 %v6039, 7
      %v6041 = vsub.s32 %v6038, %v6040
      %v6042 = vrot.slane %v6026, %v6041
      %v6044 = vunpack.c.l.s4 1966171168
      %v6045 = vunpack.c.0.s8 %v6044
      %v6046 = vlaneseq
      %v6047 = vshrl.u32 %v6046, 7
      %v6048 = vsub.s32 %v6045, %v6047
      %v6049 = vrot.slane %v6027, %v6048
      %v6051 = vunpack.c.l.s4 1966171168
      %v6052 = vunpack.c.0.s8 %v6051
      %v6053 = vlaneseq
      %v6054 = vshrl.u32 %v6053, 7
      %v6055 = vsub.s32 %v6052, %v6054
      %v6056 = vrot.slane %v6028, %v6055
      %v6057 = vcombine.low %v6035, %v6042
      %v6058 = vcombine.low %v6049, %v6056
      %v6060 = vunpack.c.l.s4 1966171168
      %v6061 = vunpack.c.0.s8 %v6060
      %v6062 = vlaneseq
      %v6063 = vshrl.u32 %v6062, 7
      %v6064 = vsub.s32 %v6061, %v6063
      %v6065 = vrot.slane %v6057, %v6064
      %v6067 = vunpack.c.l.s4 1966171168
      %v6068 = vunpack.c.0.s8 %v6067
      %v6069 = vlaneseq
      %v6070 = vshrl.u32 %v6069, 7
      %v6071 = vsub.s32 %v6068, %v6070
      %v6072 = vrot.slane %v6058, %v6071
      %v6073 = vcombine.low %v6065, %v6072
      %v6074 = vcombine.low %v5772, %v5780
      %v6075 = vcombine.low %v5782, %v5765
      %v6076 = vcombine.low %v5779, %v5781
      %v6077 = vcombine.low %v5806, %v5820
      %v6079 = vunpack.c.l.s4 1966171168
      %v6080 = vunpack.c.0.s8 %v6079
      %v6081 = vlaneseq
      %v6082 = vshrl.u32 %v6081, 7
      %v6083 = vsub.s32 %v6080, %v6082
      %v6084 = vrot.slane %v6074, %v6083
      %v6086 = vunpack.c.l.s4 1966171168
      %v6087 = vunpack.c.0.s8 %v6086
      %v6088 = vlaneseq
      %v6089 = vshrl.u32 %v6088, 7
      %v6090 = vsub.s32 %v6087, %v6089
      %v6091 = vrot.slane %v6075, %v6090
      %v6093 = vunpack.c.l.s4 1966171168
      %v6094 = vunpack.c.0.s8 %v6093
      %v6095 = vlaneseq
      %v6096 = vshrl.u32 %v6095, 7
      %v6097 = vsub.s32 %v6094, %v6096
      %v6098 = vrot.slane %v6076, %v6097
      %v6100 = vunpack.c.l.s4 1966171168
      %v6101 = vunpack.c.0.s8 %v6100
      %v6102 = vlaneseq
      %v6103 = vshrl.u32 %v6102, 7
      %v6104 = vsub.s32 %v6101, %v6103
      %v6105 = vrot.slane %v6077, %v6104
      %v6106 = vcombine.low %v6084, %v6091
      %v6107 = vcombine.low %v6098, %v6105
      %v6109 = vunpack.c.l.s4 1966171168
      %v6110 = vunpack.c.0.s8 %v6109
      %v6111 = vlaneseq
      %v6112 = vshrl.u32 %v6111, 7
      %v6113 = vsub.s32 %v6110, %v6112
      %v6114 = vrot.slane %v6106, %v6113
      %v6116 = vunpack.c.l.s4 1966171168
      %v6117 = vunpack.c.0.s8 %v6116
      %v6118 = vlaneseq
      %v6119 = vshrl.u32 %v6118, 7
      %v6120 = vsub.s32 %v6117, %v6119
      %v6121 = vrot.slane %v6107, %v6120
      %v6122 = vcombine.low %v6114, %v6121
      %v6123 = vcombine.low %v5828, %v5830
      %v6124 = vcombine.low %v5813, %v5827
      %v6125 = vcombine.low %v5829, %v5854
      %v6126 = vcombine.low %v5868, %v5876
      %v6128 = vunpack.c.l.s4 1966171168
      %v6129 = vunpack.c.0.s8 %v6128
      %v6130 = vlaneseq
      %v6131 = vshrl.u32 %v6130, 7
      %v6132 = vsub.s32 %v6129, %v6131
      %v6133 = vrot.slane %v6123, %v6132
      %v6135 = vunpack.c.l.s4 1966171168
      %v6136 = vunpack.c.0.s8 %v6135
      %v6137 = vlaneseq
      %v6138 = vshrl.u32 %v6137, 7
      %v6139 = vsub.s32 %v6136, %v6138
      %v6140 = vrot.slane %v6124, %v6139
      %v6142 = vunpack.c.l.s4 1966171168
      %v6143 = vunpack.c.0.s8 %v6142
      %v6144 = vlaneseq
      %v6145 = vshrl.u32 %v6144, 7
      %v6146 = vsub.s32 %v6143, %v6145
      %v6147 = vrot.slane %v6125, %v6146
      %v6149 = vunpack.c.l.s4 1966171168
      %v6150 = vunpack.c.0.s8 %v6149
      %v6151 = vlaneseq
      %v6152 = vshrl.u32 %v6151, 7
      %v6153 = vsub.s32 %v6150, %v6152
      %v6154 = vrot.slane %v6126, %v6153
      %v6155 = vcombine.low %v6133, %v6140
      %v6156 = vcombine.low %v6147, %v6154
      %v6158 = vunpack.c.l.s4 1966171168
      %v6159 = vunpack.c.0.s8 %v6158
      %v6160 = vlaneseq
      %v6161 = vshrl.u32 %v6160, 7
      %v6162 = vsub.s32 %v6159, %v6161
      %v6163 = vrot.slane %v6155, %v6162
      %v6165 = vunpack.c.l.s4 1966171168
      %v6166 = vunpack.c.0.s8 %v6165
      %v6167 = vlaneseq
      %v6168 = vshrl.u32 %v6167, 7
      %v6169 = vsub.s32 %v6166, %v6168
      %v6170 = vrot.slane %v6156, %v6169
      %v6171 = vcombine.low %v6163, %v6170
      %v6172 = vcombine.low %v5878, %v5861
      %v6173 = vcombine.low %v5875, %v5877
      %v6174 = vcombine.low %v5902, %v5916
      %v6175 = vcombine.low %v5924, %v5926
      %v6177 = vunpack.c.l.s4 1966171168
      %v6178 = vunpack.c.0.s8 %v6177
      %v6179 = vlaneseq
      %v6180 = vshrl.u32 %v6179, 7
      %v6181 = vsub.s32 %v6178, %v6180
      %v6182 = vrot.slane %v6172, %v6181
      %v6184 = vunpack.c.l.s4 1966171168
      %v6185 = vunpack.c.0.s8 %v6184
      %v6186 = vlaneseq
      %v6187 = vshrl.u32 %v6186, 7
      %v6188 = vsub.s32 %v6185, %v6187
      %v6189 = vrot.slane %v6173, %v6188
      %v6191 = vunpack.c.l.s4 1966171168
      %v6192 = vunpack.c.0.s8 %v6191
      %v6193 = vlaneseq
      %v6194 = vshrl.u32 %v6193, 7
      %v6195 = vsub.s32 %v6192, %v6194
      %v6196 = vrot.slane %v6174, %v6195
      %v6198 = vunpack.c.l.s4 1966171168
      %v6199 = vunpack.c.0.s8 %v6198
      %v6200 = vlaneseq
      %v6201 = vshrl.u32 %v6200, 7
      %v6202 = vsub.s32 %v6199, %v6201
      %v6203 = vrot.slane %v6175, %v6202
      %v6204 = vcombine.low %v6182, %v6189
      %v6205 = vcombine.low %v6196, %v6203
      %v6207 = vunpack.c.l.s4 1966171168
      %v6208 = vunpack.c.0.s8 %v6207
      %v6209 = vlaneseq
      %v6210 = vshrl.u32 %v6209, 7
      %v6211 = vsub.s32 %v6208, %v6210
      %v6212 = vrot.slane %v6204, %v6211
      %v6214 = vunpack.c.l.s4 1966171168
      %v6215 = vunpack.c.0.s8 %v6214
      %v6216 = vlaneseq
      %v6217 = vshrl.u32 %v6216, 7
      %v6218 = vsub.s32 %v6215, %v6217
      %v6219 = vrot.slane %v6205, %v6218
      %v6220 = vcombine.low %v6212, %v6219
      %v6221 = vcombine.low %v5909, %v5923
      %v6222 = vcombine.low %v5925, %v5950
      %v6223 = vcombine.low %v5964, %v5972
      %v6224 = vcombine.low %v5974, %v5957
      %v6226 = vunpack.c.l.s4 1966171168
      %v6227 = vunpack.c.0.s8 %v6226
      %v6228 = vlaneseq
      %v6229 = vshrl.u32 %v6228, 7
      %v6230 = vsub.s32 %v6227, %v6229
      %v6231 = vrot.slane %v6221, %v6230
      %v6233 = vunpack.c.l.s4 1966171168
      %v6234 = vunpack.c.0.s8 %v6233
      %v6235 = vlaneseq
      %v6236 = vshrl.u32 %v6235, 7
      %v6237 = vsub.s32 %v6234, %v6236
      %v6238 = vrot.slane %v6222, %v6237
      %v6240 = vunpack.c.l.s4 1966171168
      %v6241 = vunpack.c.0.s8 %v6240
      %v6242 = vlaneseq
      %v6243 = vshrl.u32 %v6242, 7
      %v6244 = vsub.s32 %v6241, %v6243
      %v6245 = vrot.slane %v6223, %v6244
      %v6247 = vunpack.c.l.s4 1966171168
      %v6248 = vunpack.c.0.s8 %v6247
      %v6249 = vlaneseq
      %v6250 = vshrl.u32 %v6249, 7
      %v6251 = vsub.s32 %v6248, %v6250
      %v6252 = vrot.slane %v6224, %v6251
      %v6253 = vcombine.low %v6231, %v6238
      %v6254 = vcombine.low %v6245, %v6252
      %v6256 = vunpack.c.l.s4 1966171168
      %v6257 = vunpack.c.0.s8 %v6256
      %v6258 = vlaneseq
      %v6259 = vshrl.u32 %v6258, 7
      %v6260 = vsub.s32 %v6257, %v6259
      %v6261 = vrot.slane %v6253, %v6260
      %v6263 = vunpack.c.l.s4 1966171168
      %v6264 = vunpack.c.0.s8 %v6263
      %v6265 = vlaneseq
      %v6266 = vshrl.u32 %v6265, 7
      %v6267 = vsub.s32 %v6264, %v6266
      %v6268 = vrot.slane %v6254, %v6267
      %v6269 = vcombine.low %v6261, %v6268
      %v6270 = vcombine.low %v5971, %v5973
      %v6271 = vcombine.low %v5998, %v6012
      %v6272 = vcombine.low %v6020, %v6022
      %v6273 = vcombine.low %v6005, %v6019
      %v6275 = vunpack.c.l.s4 1966171168
      %v6276 = vunpack.c.0.s8 %v6275
      %v6277 = vlaneseq
      %v6278 = vshrl.u32 %v6277, 7
      %v6279 = vsub.s32 %v6276, %v6278
      %v6280 = vrot.slane %v6270, %v6279
      %v6282 = vunpack.c.l.s4 1966171168
      %v6283 = vunpack.c.0.s8 %v6282
      %v6284 = vlaneseq
      %v6285 = vshrl.u32 %v6284, 7
      %v6286 = vsub.s32 %v6283, %v6285
      %v6287 = vrot.slane %v6271, %v6286
      %v6289 = vunpack.c.l.s4 1966171168
      %v6290 = vunpack.c.0.s8 %v6289
      %v6291 = vlaneseq
      %v6292 = vshrl.u32 %v6291, 7
      %v6293 = vsub.s32 %v6290, %v6292
      %v6294 = vrot.slane %v6272, %v6293
      %v6296 = vunpack.c.l.s4 1966171168
      %v6297 = vunpack.c.0.s8 %v6296
      %v6298 = vlaneseq
      %v6299 = vshrl.u32 %v6298, 7
      %v6300 = vsub.s32 %v6297, %v6299
      %v6301 = vrot.slane %v6273, %v6300
      %v6302 = vcombine.low %v6280, %v6287
      %v6303 = vcombine.low %v6294, %v6301
      %v6305 = vunpack.c.l.s4 1966171168
      %v6306 = vunpack.c.0.s8 %v6305
      %v6307 = vlaneseq
      %v6308 = vshrl.u32 %v6307, 7
      %v6309 = vsub.s32 %v6306, %v6308
      %v6310 = vrot.slane %v6302, %v6309
      %v6312 = vunpack.c.l.s4 1966171168
      %v6313 = vunpack.c.0.s8 %v6312
      %v6314 = vlaneseq
      %v6315 = vshrl.u32 %v6314, 7
      %v6316 = vsub.s32 %v6313, %v6315
      %v6317 = vrot.slane %v6303, %v6316
      %v6318 = vcombine.low %v6310, %v6317
      %v6320 = vunpack.c.l.s4 1966171168
      %v6321 = vunpack.c.0.s8 %v6320
      %v6322 = vlaneseq
      %v6323 = vshrl.u32 %v6322, 7
      %v6324 = vsub.s32 %v6321, %v6323
      %v6325 = vrot.slane %v6021, %v6324
      %v6327 = vunpack.c.l.s4 1966171168
      %v6328 = vunpack.c.0.s8 %v6327
      %v6329 = vlaneseq
      %v6330 = vshrl.u32 %v6329, 7
      %v6331 = vsub.s32 %v6328, %v6330
      %v6332 = vrot.slane %v6325, %v6331
      %v6333 = vsel %vm1205, %v6073, 0
      %v6335 = vsel %vm1205, %v6122, 0
      %v6337 = vsel %vm1205, %v6171, 0
      %v6339 = vsel %vm1205, %v6220, 0
      %v6341 = vsel %vm1205, %v6269, 0
      %v6343 = vsel %vm1205, %v6318, 0
      %v6345 = vsel %vm1205, %v6332, 0
      %v6348 = vsel %vm1220, %v6024, 0
      %6350 = vmatprep.subr.mxu0 0.0
      %6351 = vmatpush1.msra.mxu0 %v6348
      %6352 = vmatprep.subr.mxu0 0.0
      %6353 = vmatpush1.msra.mxu0 0.0
      %6354 = vmatprep.subr.mxu0 0.0
      %6355 = vmatpush1.msra.mxu0 0.0
      %6356 = vmatprep.subr.mxu0 0.0
      %6357 = vmatpush1.msra.mxu0 0.0
      %6358 = vmatprep.subr.mxu0 0.0
      %6359 = vmatpush1.msra.mxu0 0.0
      %6360 = vmatprep.subr.mxu0 0.0
      %6361 = vmatpush1.msra.mxu0 0.0
      %6362 = vmatprep.subr.mxu0 0.0
      %6363 = vmatpush1.msra.mxu0 0.0
      %6364 = vmatprep.subr.mxu0 0.0
      %6365 = vmatpush1.msra.mxu0 0.0
      %6366 = vmatprep.subr.mxu0 0.0
      %6367 = vmatpush1.msra.mxu0 0.0
      %6368 = vmatprep.subr.mxu0 0.0
      %6369 = vmatpush1.msra.mxu0 0.0
      %6370 = vmatprep.subr.mxu0 0.0
      %6371 = vmatpush1.msra.mxu0 0.0
      %6372 = vmatprep.subr.mxu0 0.0
      %6373 = vmatpush1.msra.mxu0 0.0
      %6374 = vmatprep.subr.mxu0 0.0
      %6375 = vmatpush1.msra.mxu0 0.0
      %6376 = vmatprep.subr.mxu0 0.0
      %6377 = vmatpush1.msra.mxu0 0.0
      %6378 = vmatprep.subr.mxu0 0.0
      %6379 = vmatpush1.msra.mxu0 0.0
      %6380 = vmatprep.subr.mxu0 0.0
      %6381 = vmatpush1.msra.mxu0 0.0
      %6382 = vmatprep.subr.mxu0 0.0
      %6383 = vmatpush1.msra.mxu0 0.0
      %6384 = vmatprep.subr.mxu0 0.0
      %6385 = vmatpush1.msra.mxu0 0.0
      %6386 = vmatprep.subr.mxu0 0.0
      %6387 = vmatpush1.msra.mxu0 0.0
      %6388 = vmatprep.subr.mxu0 0.0
      %6389 = vmatpush1.msra.mxu0 0.0
      %6390 = vmatprep.subr.mxu0 0.0
      %6391 = vmatpush1.msra.mxu0 0.0
      %6392 = vmatprep.subr.mxu0 0.0
      %6393 = vmatpush1.msra.mxu0 0.0
      %6394 = vmatprep.subr.mxu0 0.0
      %6395 = vmatpush1.msra.mxu0 0.0
      %6396 = vmatprep.subr.mxu0 0.0
      %6397 = vmatpush1.msra.mxu0 0.0
      %6398 = vmatprep.subr.mxu0 0.0
      %6399 = vmatpush1.msra.mxu0 0.0
      %6400 = vmatprep.subr.mxu0 0.0
      %6401 = vmatpush1.msra.mxu0 0.0
      %6402 = vmatprep.subr.mxu0 0.0
      %6403 = vmatpush1.msra.mxu0 0.0
      %6404 = vmatprep.subr.mxu0 0.0
      %6405 = vmatpush1.msra.mxu0 0.0
      %6406 = vmatprep.subr.mxu0 0.0
      %6407 = vmatpush1.msra.mxu0 0.0
      %6408 = vmatprep.subr.mxu0 0.0
      %6409 = vmatpush1.msra.mxu0 0.0
      %6410 = vmatprep.subr.mxu0 0.0
      %6411 = vmatpush1.msra.mxu0 0.0
      %6412 = vmatprep.subr.mxu0 0.0
      %6413 = vmatpush1.msra.mxu0 0.0
      %6414 = vmatprep.mubr.f32.mxu0 0.0
      %6415 = vmatmul.mubr.f32.gmra.mrb[0].mxu0 %v6333
      %v6416 = vpop.f32.mrb[0].mxu0
      %v6417 = vadd.f32 0.0, %v6416
      %v6418 = vpop.f32.mrb[0].mxu0
      %6419 = vmatprep.mubr.f32.mxu0 0.0
      %6420 = vmatmul.mubr.f32.gmra.mrb[0].mxu0 %v6335
      %v6421 = vpop.f32.mrb[0].mxu0
      %v6422 = vadd.f32 0.0, %v6421
      %v6423 = vpop.f32.mrb[0].mxu0
      %6424 = vmatprep.mubr.f32.mxu0 0.0
      %6425 = vmatmul.mubr.f32.gmra.mrb[0].mxu0 %v6337
      %v6426 = vpop.f32.mrb[0].mxu0
      %v6427 = vadd.f32 0.0, %v6426
      %v6428 = vpop.f32.mrb[0].mxu0
      %6429 = vmatprep.mubr.f32.mxu0 0.0
      %6430 = vmatmul.mubr.f32.gmra.mrb[0].mxu0 %v6339
      %v6431 = vpop.f32.mrb[0].mxu0
      %v6432 = vadd.f32 0.0, %v6431
      %v6433 = vpop.f32.mrb[0].mxu0
      %6434 = vmatprep.mubr.f32.mxu0 0.0
      %6435 = vmatmul.mubr.f32.gmra.mrb[0].mxu0 %v6341
      %v6436 = vpop.f32.mrb[0].mxu0
      %v6437 = vadd.f32 0.0, %v6436
      %v6438 = vpop.f32.mrb[0].mxu0
      %6439 = vmatprep.mubr.f32.mxu0 0.0
      %6440 = vmatmul.mubr.f32.gmra.mrb[0].mxu0 %v6343
      %v6441 = vpop.f32.mrb[0].mxu0
      %v6442 = vadd.f32 0.0, %v6441
      %v6443 = vpop.f32.mrb[0].mxu0
      %6444 = vmatprep.mubr.f32.mxu0 0.0
      %6445 = vmatmul.mubr.f32.gmra.mrb[0].mxu0 %v6345
      %v6446 = vpop.f32.mrb[0].mxu0
      %v6447 = vadd.f32 0.0, %v6446
      %v6448 = vpop.f32.mrb[0].mxu0
      %6449 = vdwg.mxu0
      %v6450 = vadd.f32 %v5665, %v6417
      %v6451 = vadd.f32 %v5666, %v6422
      %v6452 = vadd.f32 %v5667, %v6427
      %v6453 = vadd.f32 %v5668, %v6432
      %v6454 = vadd.f32 %v5669, %v6437
      %v6455 = vadd.f32 %v5670, %v6442
      %v6456 = vadd.f32 %v5671, %v6447
      %v6457 = vld [vmem:[%s4887 + $0x1] sm:$0x7f]
      %v6458 = vld [vmem:[%s4887 + $0x9] sm:$0x7f]
      %v6459 = vld [vmem:[%s4887 + $0x11] sm:$0x7f]
      %v6460 = vld [vmem:[%s4887 + $0x19] sm:$0x7f]
      %v6461 = vld [vmem:[%s4887 + $0x21] sm:$0x7f]
      %v6462 = vld [vmem:[%s4887 + $0x29] sm:$0x7f]
      %v6463 = vld [vmem:[%s4887 + $0x31] sm:$0x7f]
      %v6471 = vcombine.high %v6457, %v6457
      %v6473 = vunpack.c.l.s4 1966171168
      %v6474 = vunpack.c.0.s8 %v6473
      %v6475 = vlaneseq
      %v6476 = vshrl.u32 %v6475, 7
      %v6477 = vsub.s32 %v6474, %v6476
      %v6478 = vrot.slane %v6457, %v6477
      %v6480 = vunpack.c.l.s4 1966171168
      %v6481 = vunpack.c.0.s8 %v6480
      %v6482 = vlaneseq
      %v6483 = vshrl.u32 %v6482, 7
      %v6484 = vsub.s32 %v6481, %v6483
      %v6485 = vrot.slane %v6471, %v6484
      %v6486 = vcombine.high %v6478, %v6478
      %v6487 = vcombine.high %v6485, %v6485
      %v6489 = vunpack.c.l.s4 1966171168
      %v6490 = vunpack.c.0.s8 %v6489
      %v6491 = vlaneseq
      %v6492 = vshrl.u32 %v6491, 7
      %v6493 = vsub.s32 %v6490, %v6492
      %v6494 = vrot.slane %v6478, %v6493
      %v6496 = vunpack.c.l.s4 1966171168
      %v6497 = vunpack.c.0.s8 %v6496
      %v6498 = vlaneseq
      %v6499 = vshrl.u32 %v6498, 7
      %v6500 = vsub.s32 %v6497, %v6499
      %v6501 = vrot.slane %v6485, %v6500
      %v6503 = vunpack.c.l.s4 1966171168
      %v6504 = vunpack.c.0.s8 %v6503
      %v6505 = vlaneseq
      %v6506 = vshrl.u32 %v6505, 7
      %v6507 = vsub.s32 %v6504, %v6506
      %v6508 = vrot.slane %v6486, %v6507
      %v6510 = vunpack.c.l.s4 1966171168
      %v6511 = vunpack.c.0.s8 %v6510
      %v6512 = vlaneseq
      %v6513 = vshrl.u32 %v6512, 7
      %v6514 = vsub.s32 %v6511, %v6513
      %v6515 = vrot.slane %v6487, %v6514
      %v6516 = vcombine.high %v6494, %v6494
      %v6517 = vcombine.high %v6501, %v6501
      %v6518 = vcombine.high %v6508, %v6508
      %v6519 = vcombine.high %v6458, %v6458
      %v6521 = vunpack.c.l.s4 1966171168
      %v6522 = vunpack.c.0.s8 %v6521
      %v6523 = vlaneseq
      %v6524 = vshrl.u32 %v6523, 7
      %v6525 = vsub.s32 %v6522, %v6524
      %v6526 = vrot.slane %v6458, %v6525
      %v6528 = vunpack.c.l.s4 1966171168
      %v6529 = vunpack.c.0.s8 %v6528
      %v6530 = vlaneseq
      %v6531 = vshrl.u32 %v6530, 7
      %v6532 = vsub.s32 %v6529, %v6531
      %v6533 = vrot.slane %v6519, %v6532
      %v6534 = vcombine.high %v6526, %v6526
      %v6535 = vcombine.high %v6533, %v6533
      %v6537 = vunpack.c.l.s4 1966171168
      %v6538 = vunpack.c.0.s8 %v6537
      %v6539 = vlaneseq
      %v6540 = vshrl.u32 %v6539, 7
      %v6541 = vsub.s32 %v6538, %v6540
      %v6542 = vrot.slane %v6526, %v6541
      %v6544 = vunpack.c.l.s4 1966171168
      %v6545 = vunpack.c.0.s8 %v6544
      %v6546 = vlaneseq
      %v6547 = vshrl.u32 %v6546, 7
      %v6548 = vsub.s32 %v6545, %v6547
      %v6549 = vrot.slane %v6533, %v6548
      %v6551 = vunpack.c.l.s4 1966171168
      %v6552 = vunpack.c.0.s8 %v6551
      %v6553 = vlaneseq
      %v6554 = vshrl.u32 %v6553, 7
      %v6555 = vsub.s32 %v6552, %v6554
      %v6556 = vrot.slane %v6534, %v6555
      %v6558 = vunpack.c.l.s4 1966171168
      %v6559 = vunpack.c.0.s8 %v6558
      %v6560 = vlaneseq
      %v6561 = vshrl.u32 %v6560, 7
      %v6562 = vsub.s32 %v6559, %v6561
      %v6563 = vrot.slane %v6535, %v6562
      %v6564 = vcombine.high %v6542, %v6542
      %v6565 = vcombine.high %v6549, %v6549
      %v6566 = vcombine.high %v6556, %v6556
      %v6567 = vcombine.high %v6459, %v6459
      %v6569 = vunpack.c.l.s4 1966171168
      %v6570 = vunpack.c.0.s8 %v6569
      %v6571 = vlaneseq
      %v6572 = vshrl.u32 %v6571, 7
      %v6573 = vsub.s32 %v6570, %v6572
      %v6574 = vrot.slane %v6459, %v6573
      %v6576 = vunpack.c.l.s4 1966171168
      %v6577 = vunpack.c.0.s8 %v6576
      %v6578 = vlaneseq
      %v6579 = vshrl.u32 %v6578, 7
      %v6580 = vsub.s32 %v6577, %v6579
      %v6581 = vrot.slane %v6567, %v6580
      %v6582 = vcombine.high %v6574, %v6574
      %v6583 = vcombine.high %v6581, %v6581
      %v6585 = vunpack.c.l.s4 1966171168
      %v6586 = vunpack.c.0.s8 %v6585
      %v6587 = vlaneseq
      %v6588 = vshrl.u32 %v6587, 7
      %v6589 = vsub.s32 %v6586, %v6588
      %v6590 = vrot.slane %v6574, %v6589
      %v6592 = vunpack.c.l.s4 1966171168
      %v6593 = vunpack.c.0.s8 %v6592
      %v6594 = vlaneseq
      %v6595 = vshrl.u32 %v6594, 7
      %v6596 = vsub.s32 %v6593, %v6595
      %v6597 = vrot.slane %v6581, %v6596
      %v6599 = vunpack.c.l.s4 1966171168
      %v6600 = vunpack.c.0.s8 %v6599
      %v6601 = vlaneseq
      %v6602 = vshrl.u32 %v6601, 7
      %v6603 = vsub.s32 %v6600, %v6602
      %v6604 = vrot.slane %v6582, %v6603
      %v6606 = vunpack.c.l.s4 1966171168
      %v6607 = vunpack.c.0.s8 %v6606
      %v6608 = vlaneseq
      %v6609 = vshrl.u32 %v6608, 7
      %v6610 = vsub.s32 %v6607, %v6609
      %v6611 = vrot.slane %v6583, %v6610
      %v6612 = vcombine.high %v6590, %v6590
      %v6613 = vcombine.high %v6597, %v6597
      %v6614 = vcombine.high %v6604, %v6604
      %v6615 = vcombine.high %v6460, %v6460
      %v6617 = vunpack.c.l.s4 1966171168
      %v6618 = vunpack.c.0.s8 %v6617
      %v6619 = vlaneseq
      %v6620 = vshrl.u32 %v6619, 7
      %v6621 = vsub.s32 %v6618, %v6620
      %v6622 = vrot.slane %v6460, %v6621
      %v6624 = vunpack.c.l.s4 1966171168
      %v6625 = vunpack.c.0.s8 %v6624
      %v6626 = vlaneseq
      %v6627 = vshrl.u32 %v6626, 7
      %v6628 = vsub.s32 %v6625, %v6627
      %v6629 = vrot.slane %v6615, %v6628
      %v6630 = vcombine.high %v6622, %v6622
      %v6631 = vcombine.high %v6629, %v6629
      %v6633 = vunpack.c.l.s4 1966171168
      %v6634 = vunpack.c.0.s8 %v6633
      %v6635 = vlaneseq
      %v6636 = vshrl.u32 %v6635, 7
      %v6637 = vsub.s32 %v6634, %v6636
      %v6638 = vrot.slane %v6622, %v6637
      %v6640 = vunpack.c.l.s4 1966171168
      %v6641 = vunpack.c.0.s8 %v6640
      %v6642 = vlaneseq
      %v6643 = vshrl.u32 %v6642, 7
      %v6644 = vsub.s32 %v6641, %v6643
      %v6645 = vrot.slane %v6629, %v6644
      %v6647 = vunpack.c.l.s4 1966171168
      %v6648 = vunpack.c.0.s8 %v6647
      %v6649 = vlaneseq
      %v6650 = vshrl.u32 %v6649, 7
      %v6651 = vsub.s32 %v6648, %v6650
      %v6652 = vrot.slane %v6630, %v6651
      %v6654 = vunpack.c.l.s4 1966171168
      %v6655 = vunpack.c.0.s8 %v6654
      %v6656 = vlaneseq
      %v6657 = vshrl.u32 %v6656, 7
      %v6658 = vsub.s32 %v6655, %v6657
      %v6659 = vrot.slane %v6631, %v6658
      %v6660 = vcombine.high %v6638, %v6638
      %v6661 = vcombine.high %v6645, %v6645
      %v6662 = vcombine.high %v6652, %v6652
      %v6663 = vcombine.high %v6461, %v6461
      %v6665 = vunpack.c.l.s4 1966171168
      %v6666 = vunpack.c.0.s8 %v6665
      %v6667 = vlaneseq
      %v6668 = vshrl.u32 %v6667, 7
      %v6669 = vsub.s32 %v6666, %v6668
      %v6670 = vrot.slane %v6461, %v6669
      %v6672 = vunpack.c.l.s4 1966171168
      %v6673 = vunpack.c.0.s8 %v6672
      %v6674 = vlaneseq
      %v6675 = vshrl.u32 %v6674, 7
      %v6676 = vsub.s32 %v6673, %v6675
      %v6677 = vrot.slane %v6663, %v6676
      %v6678 = vcombine.high %v6670, %v6670
      %v6679 = vcombine.high %v6677, %v6677
      %v6681 = vunpack.c.l.s4 1966171168
      %v6682 = vunpack.c.0.s8 %v6681
      %v6683 = vlaneseq
      %v6684 = vshrl.u32 %v6683, 7
      %v6685 = vsub.s32 %v6682, %v6684
      %v6686 = vrot.slane %v6670, %v6685
      %v6688 = vunpack.c.l.s4 1966171168
      %v6689 = vunpack.c.0.s8 %v6688
      %v6690 = vlaneseq
      %v6691 = vshrl.u32 %v6690, 7
      %v6692 = vsub.s32 %v6689, %v6691
      %v6693 = vrot.slane %v6677, %v6692
      %v6695 = vunpack.c.l.s4 1966171168
      %v6696 = vunpack.c.0.s8 %v6695
      %v6697 = vlaneseq
      %v6698 = vshrl.u32 %v6697, 7
      %v6699 = vsub.s32 %v6696, %v6698
      %v6700 = vrot.slane %v6678, %v6699
      %v6702 = vunpack.c.l.s4 1966171168
      %v6703 = vunpack.c.0.s8 %v6702
      %v6704 = vlaneseq
      %v6705 = vshrl.u32 %v6704, 7
      %v6706 = vsub.s32 %v6703, %v6705
      %v6707 = vrot.slane %v6679, %v6706
      %v6708 = vcombine.high %v6686, %v6686
      %v6709 = vcombine.high %v6693, %v6693
      %v6710 = vcombine.high %v6700, %v6700
      %v6711 = vcombine.high %v6462, %v6462
      %v6713 = vunpack.c.l.s4 1966171168
      %v6714 = vunpack.c.0.s8 %v6713
      %v6715 = vlaneseq
      %v6716 = vshrl.u32 %v6715, 7
      %v6717 = vsub.s32 %v6714, %v6716
      %v6718 = vrot.slane %v6462, %v6717
      %v6720 = vunpack.c.l.s4 1966171168
      %v6721 = vunpack.c.0.s8 %v6720
      %v6722 = vlaneseq
      %v6723 = vshrl.u32 %v6722, 7
      %v6724 = vsub.s32 %v6721, %v6723
      %v6725 = vrot.slane %v6711, %v6724
      %v6726 = vcombine.high %v6718, %v6718
      %v6727 = vcombine.high %v6725, %v6725
      %v6729 = vunpack.c.l.s4 1966171168
      %v6730 = vunpack.c.0.s8 %v6729
      %v6731 = vlaneseq
      %v6732 = vshrl.u32 %v6731, 7
      %v6733 = vsub.s32 %v6730, %v6732
      %v6734 = vrot.slane %v6718, %v6733
      %v6736 = vunpack.c.l.s4 1966171168
      %v6737 = vunpack.c.0.s8 %v6736
      %v6738 = vlaneseq
      %v6739 = vshrl.u32 %v6738, 7
      %v6740 = vsub.s32 %v6737, %v6739
      %v6741 = vrot.slane %v6725, %v6740
      %v6743 = vunpack.c.l.s4 1966171168
      %v6744 = vunpack.c.0.s8 %v6743
      %v6745 = vlaneseq
      %v6746 = vshrl.u32 %v6745, 7
      %v6747 = vsub.s32 %v6744, %v6746
      %v6748 = vrot.slane %v6726, %v6747
      %v6750 = vunpack.c.l.s4 1966171168
      %v6751 = vunpack.c.0.s8 %v6750
      %v6752 = vlaneseq
      %v6753 = vshrl.u32 %v6752, 7
      %v6754 = vsub.s32 %v6751, %v6753
      %v6755 = vrot.slane %v6727, %v6754
      %v6756 = vcombine.high %v6734, %v6734
      %v6757 = vcombine.high %v6741, %v6741
      %v6758 = vcombine.high %v6748, %v6748
      %v6759 = vcombine.high %v6463, %v6463
      %v6761 = vunpack.c.l.s4 1966171168
      %v6762 = vunpack.c.0.s8 %v6761
      %v6763 = vlaneseq
      %v6764 = vshrl.u32 %v6763, 7
      %v6765 = vsub.s32 %v6762, %v6764
      %v6766 = vrot.slane %v6463, %v6765
      %v6768 = vunpack.c.l.s4 1966171168
      %v6769 = vunpack.c.0.s8 %v6768
      %v6770 = vlaneseq
      %v6771 = vshrl.u32 %v6770, 7
      %v6772 = vsub.s32 %v6769, %v6771
      %v6773 = vrot.slane %v6759, %v6772
      %v6774 = vcombine.high %v6766, %v6766
      %v6775 = vcombine.high %v6773, %v6773
      %v6777 = vunpack.c.l.s4 1966171168
      %v6778 = vunpack.c.0.s8 %v6777
      %v6779 = vlaneseq
      %v6780 = vshrl.u32 %v6779, 7
      %v6781 = vsub.s32 %v6778, %v6780
      %v6782 = vrot.slane %v6766, %v6781
      %v6784 = vunpack.c.l.s4 1966171168
      %v6785 = vunpack.c.0.s8 %v6784
      %v6786 = vlaneseq
      %v6787 = vshrl.u32 %v6786, 7
      %v6788 = vsub.s32 %v6785, %v6787
      %v6789 = vrot.slane %v6773, %v6788
      %v6791 = vunpack.c.l.s4 1966171168
      %v6792 = vunpack.c.0.s8 %v6791
      %v6793 = vlaneseq
      %v6794 = vshrl.u32 %v6793, 7
      %v6795 = vsub.s32 %v6792, %v6794
      %v6796 = vrot.slane %v6774, %v6795
      %v6798 = vunpack.c.l.s4 1966171168
      %v6799 = vunpack.c.0.s8 %v6798
      %v6800 = vlaneseq
      %v6801 = vshrl.u32 %v6800, 7
      %v6802 = vsub.s32 %v6799, %v6801
      %v6803 = vrot.slane %v6775, %v6802
      %v6804 = vcombine.high %v6782, %v6782
      %v6805 = vcombine.high %v6789, %v6789
      %v6806 = vcombine.high %v6796, %v6796
      %s6807 = scalar_lea.vmem %s1, 32
      %v6808 = vld [vmem:[%s6807] sm:$0xf]
      %v6809 = vcombine.low %v6494, %v6508
      %v6810 = vcombine.low %v6516, %v6518
      %v6811 = vcombine.low %v6501, %v6515
      %v6812 = vcombine.low %v6517, %v6542
      %v6814 = vunpack.c.l.s4 1966171168
      %v6815 = vunpack.c.0.s8 %v6814
      %v6816 = vlaneseq
      %v6817 = vshrl.u32 %v6816, 7
      %v6818 = vsub.s32 %v6815, %v6817
      %v6819 = vrot.slane %v6809, %v6818
      %v6821 = vunpack.c.l.s4 1966171168
      %v6822 = vunpack.c.0.s8 %v6821
      %v6823 = vlaneseq
      %v6824 = vshrl.u32 %v6823, 7
      %v6825 = vsub.s32 %v6822, %v6824
      %v6826 = vrot.slane %v6810, %v6825
      %v6828 = vunpack.c.l.s4 1966171168
      %v6829 = vunpack.c.0.s8 %v6828
      %v6830 = vlaneseq
      %v6831 = vshrl.u32 %v6830, 7
      %v6832 = vsub.s32 %v6829, %v6831
      %v6833 = vrot.slane %v6811, %v6832
      %v6835 = vunpack.c.l.s4 1966171168
      %v6836 = vunpack.c.0.s8 %v6835
      %v6837 = vlaneseq
      %v6838 = vshrl.u32 %v6837, 7
      %v6839 = vsub.s32 %v6836, %v6838
      %v6840 = vrot.slane %v6812, %v6839
      %v6841 = vcombine.low %v6819, %v6826
      %v6842 = vcombine.low %v6833, %v6840
      %v6844 = vunpack.c.l.s4 1966171168
      %v6845 = vunpack.c.0.s8 %v6844
      %v6846 = vlaneseq
      %v6847 = vshrl.u32 %v6846, 7
      %v6848 = vsub.s32 %v6845, %v6847
      %v6849 = vrot.slane %v6841, %v6848
      %v6851 = vunpack.c.l.s4 1966171168
      %v6852 = vunpack.c.0.s8 %v6851
      %v6853 = vlaneseq
      %v6854 = vshrl.u32 %v6853, 7
      %v6855 = vsub.s32 %v6852, %v6854
      %v6856 = vrot.slane %v6842, %v6855
      %v6857 = vcombine.low %v6849, %v6856
      %v6858 = vcombine.low %v6556, %v6564
      %v6859 = vcombine.low %v6566, %v6549
      %v6860 = vcombine.low %v6563, %v6565
      %v6861 = vcombine.low %v6590, %v6604
      %v6863 = vunpack.c.l.s4 1966171168
      %v6864 = vunpack.c.0.s8 %v6863
      %v6865 = vlaneseq
      %v6866 = vshrl.u32 %v6865, 7
      %v6867 = vsub.s32 %v6864, %v6866
      %v6868 = vrot.slane %v6858, %v6867
      %v6870 = vunpack.c.l.s4 1966171168
      %v6871 = vunpack.c.0.s8 %v6870
      %v6872 = vlaneseq
      %v6873 = vshrl.u32 %v6872, 7
      %v6874 = vsub.s32 %v6871, %v6873
      %v6875 = vrot.slane %v6859, %v6874
      %v6877 = vunpack.c.l.s4 1966171168
      %v6878 = vunpack.c.0.s8 %v6877
      %v6879 = vlaneseq
      %v6880 = vshrl.u32 %v6879, 7
      %v6881 = vsub.s32 %v6878, %v6880
      %v6882 = vrot.slane %v6860, %v6881
      %v6884 = vunpack.c.l.s4 1966171168
      %v6885 = vunpack.c.0.s8 %v6884
      %v6886 = vlaneseq
      %v6887 = vshrl.u32 %v6886, 7
      %v6888 = vsub.s32 %v6885, %v6887
      %v6889 = vrot.slane %v6861, %v6888
      %v6890 = vcombine.low %v6868, %v6875
      %v6891 = vcombine.low %v6882, %v6889
      %v6893 = vunpack.c.l.s4 1966171168
      %v6894 = vunpack.c.0.s8 %v6893
      %v6895 = vlaneseq
      %v6896 = vshrl.u32 %v6895, 7
      %v6897 = vsub.s32 %v6894, %v6896
      %v6898 = vrot.slane %v6890, %v6897
      %v6900 = vunpack.c.l.s4 1966171168
      %v6901 = vunpack.c.0.s8 %v6900
      %v6902 = vlaneseq
      %v6903 = vshrl.u32 %v6902, 7
      %v6904 = vsub.s32 %v6901, %v6903
      %v6905 = vrot.slane %v6891, %v6904
      %v6906 = vcombine.low %v6898, %v6905
      %v6907 = vcombine.low %v6612, %v6614
      %v6908 = vcombine.low %v6597, %v6611
      %v6909 = vcombine.low %v6613, %v6638
      %v6910 = vcombine.low %v6652, %v6660
      %v6912 = vunpack.c.l.s4 1966171168
      %v6913 = vunpack.c.0.s8 %v6912
      %v6914 = vlaneseq
      %v6915 = vshrl.u32 %v6914, 7
      %v6916 = vsub.s32 %v6913, %v6915
      %v6917 = vrot.slane %v6907, %v6916
      %v6919 = vunpack.c.l.s4 1966171168
      %v6920 = vunpack.c.0.s8 %v6919
      %v6921 = vlaneseq
      %v6922 = vshrl.u32 %v6921, 7
      %v6923 = vsub.s32 %v6920, %v6922
      %v6924 = vrot.slane %v6908, %v6923
      %v6926 = vunpack.c.l.s4 1966171168
      %v6927 = vunpack.c.0.s8 %v6926
      %v6928 = vlaneseq
      %v6929 = vshrl.u32 %v6928, 7
      %v6930 = vsub.s32 %v6927, %v6929
      %v6931 = vrot.slane %v6909, %v6930
      %v6933 = vunpack.c.l.s4 1966171168
      %v6934 = vunpack.c.0.s8 %v6933
      %v6935 = vlaneseq
      %v6936 = vshrl.u32 %v6935, 7
      %v6937 = vsub.s32 %v6934, %v6936
      %v6938 = vrot.slane %v6910, %v6937
      %v6939 = vcombine.low %v6917, %v6924
      %v6940 = vcombine.low %v6931, %v6938
      %v6942 = vunpack.c.l.s4 1966171168
      %v6943 = vunpack.c.0.s8 %v6942
      %v6944 = vlaneseq
      %v6945 = vshrl.u32 %v6944, 7
      %v6946 = vsub.s32 %v6943, %v6945
      %v6947 = vrot.slane %v6939, %v6946
      %v6949 = vunpack.c.l.s4 1966171168
      %v6950 = vunpack.c.0.s8 %v6949
      %v6951 = vlaneseq
      %v6952 = vshrl.u32 %v6951, 7
      %v6953 = vsub.s32 %v6950, %v6952
      %v6954 = vrot.slane %v6940, %v6953
      %v6955 = vcombine.low %v6947, %v6954
      %v6956 = vcombine.low %v6662, %v6645
      %v6957 = vcombine.low %v6659, %v6661
      %v6958 = vcombine.low %v6686, %v6700
      %v6959 = vcombine.low %v6708, %v6710
      %v6961 = vunpack.c.l.s4 1966171168
      %v6962 = vunpack.c.0.s8 %v6961
      %v6963 = vlaneseq
      %v6964 = vshrl.u32 %v6963, 7
      %v6965 = vsub.s32 %v6962, %v6964
      %v6966 = vrot.slane %v6956, %v6965
      %v6968 = vunpack.c.l.s4 1966171168
      %v6969 = vunpack.c.0.s8 %v6968
      %v6970 = vlaneseq
      %v6971 = vshrl.u32 %v6970, 7
      %v6972 = vsub.s32 %v6969, %v6971
      %v6973 = vrot.slane %v6957, %v6972
      %v6975 = vunpack.c.l.s4 1966171168
      %v6976 = vunpack.c.0.s8 %v6975
      %v6977 = vlaneseq
      %v6978 = vshrl.u32 %v6977, 7
      %v6979 = vsub.s32 %v6976, %v6978
      %v6980 = vrot.slane %v6958, %v6979
      %v6982 = vunpack.c.l.s4 1966171168
      %v6983 = vunpack.c.0.s8 %v6982
      %v6984 = vlaneseq
      %v6985 = vshrl.u32 %v6984, 7
      %v6986 = vsub.s32 %v6983, %v6985
      %v6987 = vrot.slane %v6959, %v6986
      %v6988 = vcombine.low %v6966, %v6973
      %v6989 = vcombine.low %v6980, %v6987
      %v6991 = vunpack.c.l.s4 1966171168
      %v6992 = vunpack.c.0.s8 %v6991
      %v6993 = vlaneseq
      %v6994 = vshrl.u32 %v6993, 7
      %v6995 = vsub.s32 %v6992, %v6994
      %v6996 = vrot.slane %v6988, %v6995
      %v6998 = vunpack.c.l.s4 1966171168
      %v6999 = vunpack.c.0.s8 %v6998
      %v7000 = vlaneseq
      %v7001 = vshrl.u32 %v7000, 7
      %v7002 = vsub.s32 %v6999, %v7001
      %v7003 = vrot.slane %v6989, %v7002
      %v7004 = vcombine.low %v6996, %v7003
      %v7005 = vcombine.low %v6693, %v6707
      %v7006 = vcombine.low %v6709, %v6734
      %v7007 = vcombine.low %v6748, %v6756
      %v7008 = vcombine.low %v6758, %v6741
      %v7010 = vunpack.c.l.s4 1966171168
      %v7011 = vunpack.c.0.s8 %v7010
      %v7012 = vlaneseq
      %v7013 = vshrl.u32 %v7012, 7
      %v7014 = vsub.s32 %v7011, %v7013
      %v7015 = vrot.slane %v7005, %v7014
      %v7017 = vunpack.c.l.s4 1966171168
      %v7018 = vunpack.c.0.s8 %v7017
      %v7019 = vlaneseq
      %v7020 = vshrl.u32 %v7019, 7
      %v7021 = vsub.s32 %v7018, %v7020
      %v7022 = vrot.slane %v7006, %v7021
      %v7024 = vunpack.c.l.s4 1966171168
      %v7025 = vunpack.c.0.s8 %v7024
      %v7026 = vlaneseq
      %v7027 = vshrl.u32 %v7026, 7
      %v7028 = vsub.s32 %v7025, %v7027
      %v7029 = vrot.slane %v7007, %v7028
      %v7031 = vunpack.c.l.s4 1966171168
      %v7032 = vunpack.c.0.s8 %v7031
      %v7033 = vlaneseq
      %v7034 = vshrl.u32 %v7033, 7
      %v7035 = vsub.s32 %v7032, %v7034
      %v7036 = vrot.slane %v7008, %v7035
      %v7037 = vcombine.low %v7015, %v7022
      %v7038 = vcombine.low %v7029, %v7036
      %v7040 = vunpack.c.l.s4 1966171168
      %v7041 = vunpack.c.0.s8 %v7040
      %v7042 = vlaneseq
      %v7043 = vshrl.u32 %v7042, 7
      %v7044 = vsub.s32 %v7041, %v7043
      %v7045 = vrot.slane %v7037, %v7044
      %v7047 = vunpack.c.l.s4 1966171168
      %v7048 = vunpack.c.0.s8 %v7047
      %v7049 = vlaneseq
      %v7050 = vshrl.u32 %v7049, 7
      %v7051 = vsub.s32 %v7048, %v7050
      %v7052 = vrot.slane %v7038, %v7051
      %v7053 = vcombine.low %v7045, %v7052
      %v7054 = vcombine.low %v6755, %v6757
      %v7055 = vcombine.low %v6782, %v6796
      %v7056 = vcombine.low %v6804, %v6806
      %v7057 = vcombine.low %v6789, %v6803
      %v7059 = vunpack.c.l.s4 1966171168
      %v7060 = vunpack.c.0.s8 %v7059
      %v7061 = vlaneseq
      %v7062 = vshrl.u32 %v7061, 7
      %v7063 = vsub.s32 %v7060, %v7062
      %v7064 = vrot.slane %v7054, %v7063
      %v7066 = vunpack.c.l.s4 1966171168
      %v7067 = vunpack.c.0.s8 %v7066
      %v7068 = vlaneseq
      %v7069 = vshrl.u32 %v7068, 7
      %v7070 = vsub.s32 %v7067, %v7069
      %v7071 = vrot.slane %v7055, %v7070
      %v7073 = vunpack.c.l.s4 1966171168
      %v7074 = vunpack.c.0.s8 %v7073
      %v7075 = vlaneseq
      %v7076 = vshrl.u32 %v7075, 7
      %v7077 = vsub.s32 %v7074, %v7076
      %v7078 = vrot.slane %v7056, %v7077
      %v7080 = vunpack.c.l.s4 1966171168
      %v7081 = vunpack.c.0.s8 %v7080
      %v7082 = vlaneseq
      %v7083 = vshrl.u32 %v7082, 7
      %v7084 = vsub.s32 %v7081, %v7083
      %v7085 = vrot.slane %v7057, %v7084
      %v7086 = vcombine.low %v7064, %v7071
      %v7087 = vcombine.low %v7078, %v7085
      %v7089 = vunpack.c.l.s4 1966171168
      %v7090 = vunpack.c.0.s8 %v7089
      %v7091 = vlaneseq
      %v7092 = vshrl.u32 %v7091, 7
      %v7093 = vsub.s32 %v7090, %v7092
      %v7094 = vrot.slane %v7086, %v7093
      %v7096 = vunpack.c.l.s4 1966171168
      %v7097 = vunpack.c.0.s8 %v7096
      %v7098 = vlaneseq
      %v7099 = vshrl.u32 %v7098, 7
      %v7100 = vsub.s32 %v7097, %v7099
      %v7101 = vrot.slane %v7087, %v7100
      %v7102 = vcombine.low %v7094, %v7101
      %v7104 = vunpack.c.l.s4 1966171168
      %v7105 = vunpack.c.0.s8 %v7104
      %v7106 = vlaneseq
      %v7107 = vshrl.u32 %v7106, 7
      %v7108 = vsub.s32 %v7105, %v7107
      %v7109 = vrot.slane %v6805, %v7108
      %v7111 = vunpack.c.l.s4 1966171168
      %v7112 = vunpack.c.0.s8 %v7111
      %v7113 = vlaneseq
      %v7114 = vshrl.u32 %v7113, 7
      %v7115 = vsub.s32 %v7112, %v7114
      %v7116 = vrot.slane %v7109, %v7115
      %v7117 = vsel %vm1205, %v6857, 0
      %v7119 = vsel %vm1205, %v6906, 0
      %v7121 = vsel %vm1205, %v6955, 0
      %v7123 = vsel %vm1205, %v7004, 0
      %v7125 = vsel %vm1205, %v7053, 0
      %v7127 = vsel %vm1205, %v7102, 0
      %v7129 = vsel %vm1205, %v7116, 0
      %v7132 = vsel %vm1220, %v6808, 0
      %7134 = vmatprep.subr.mxu0 0.0
      %7135 = vmatpush1.msra.mxu0 %v7132
      %7136 = vmatprep.subr.mxu0 0.0
      %7137 = vmatpush1.msra.mxu0 0.0
      %7138 = vmatprep.subr.mxu0 0.0
      %7139 = vmatpush1.msra.mxu0 0.0
      %7140 = vmatprep.subr.mxu0 0.0
      %7141 = vmatpush1.msra.mxu0 0.0
      %7142 = vmatprep.subr.mxu0 0.0
      %7143 = vmatpush1.msra.mxu0 0.0
      %7144 = vmatprep.subr.mxu0 0.0
      %7145 = vmatpush1.msra.mxu0 0.0
      %7146 = vmatprep.subr.mxu0 0.0
      %7147 = vmatpush1.msra.mxu0 0.0
      %7148 = vmatprep.subr.mxu0 0.0
      %7149 = vmatpush1.msra.mxu0 0.0
      %7150 = vmatprep.subr.mxu0 0.0
      %7151 = vmatpush1.msra.mxu0 0.0
      %7152 = vmatprep.subr.mxu0 0.0
      %7153 = vmatpush1.msra.mxu0 0.0
      %7154 = vmatprep.subr.mxu0 0.0
      %7155 = vmatpush1.msra.mxu0 0.0
      %7156 = vmatprep.subr.mxu0 0.0
      %7157 = vmatpush1.msra.mxu0 0.0
      %7158 = vmatprep.subr.mxu0 0.0
      %7159 = vmatpush1.msra.mxu0 0.0
      %7160 = vmatprep.subr.mxu0 0.0
      %7161 = vmatpush1.msra.mxu0 0.0
      %7162 = vmatprep.subr.mxu0 0.0
      %7163 = vmatpush1.msra.mxu0 0.0
      %7164 = vmatprep.subr.mxu0 0.0
      %7165 = vmatpush1.msra.mxu0 0.0
      %7166 = vmatprep.subr.mxu0 0.0
      %7167 = vmatpush1.msra.mxu0 0.0
      %7168 = vmatprep.subr.mxu0 0.0
      %7169 = vmatpush1.msra.mxu0 0.0
      %7170 = vmatprep.subr.mxu0 0.0
      %7171 = vmatpush1.msra.mxu0 0.0
      %7172 = vmatprep.subr.mxu0 0.0
      %7173 = vmatpush1.msra.mxu0 0.0
      %7174 = vmatprep.subr.mxu0 0.0
      %7175 = vmatpush1.msra.mxu0 0.0
      %7176 = vmatprep.subr.mxu0 0.0
      %7177 = vmatpush1.msra.mxu0 0.0
      %7178 = vmatprep.subr.mxu0 0.0
      %7179 = vmatpush1.msra.mxu0 0.0
      %7180 = vmatprep.subr.mxu0 0.0
      %7181 = vmatpush1.msra.mxu0 0.0
      %7182 = vmatprep.subr.mxu0 0.0
      %7183 = vmatpush1.msra.mxu0 0.0
      %7184 = vmatprep.subr.mxu0 0.0
      %7185 = vmatpush1.msra.mxu0 0.0
      %7186 = vmatprep.subr.mxu0 0.0
      %7187 = vmatpush1.msra.mxu0 0.0
      %7188 = vmatprep.subr.mxu0 0.0
      %7189 = vmatpush1.msra.mxu0 0.0
      %7190 = vmatprep.subr.mxu0 0.0
      %7191 = vmatpush1.msra.mxu0 0.0
      %7192 = vmatprep.subr.mxu0 0.0
      %7193 = vmatpush1.msra.mxu0 0.0
      %7194 = vmatprep.subr.mxu0 0.0
      %7195 = vmatpush1.msra.mxu0 0.0
      %7196 = vmatprep.subr.mxu0 0.0
      %7197 = vmatpush1.msra.mxu0 0.0
      %7198 = vmatprep.mubr.f32.mxu0 0.0
      %7199 = vmatmul.mubr.f32.gmra.mrb[0].mxu0 %v7117
      %v7200 = vpop.f32.mrb[0].mxu0
      %v7201 = vadd.f32 0.0, %v7200
      %v7202 = vpop.f32.mrb[0].mxu0
      %7203 = vmatprep.mubr.f32.mxu0 0.0
      %7204 = vmatmul.mubr.f32.gmra.mrb[0].mxu0 %v7119
      %v7205 = vpop.f32.mrb[0].mxu0
      %v7206 = vadd.f32 0.0, %v7205
      %v7207 = vpop.f32.mrb[0].mxu0
      %7208 = vmatprep.mubr.f32.mxu0 0.0
      %7209 = vmatmul.mubr.f32.gmra.mrb[0].mxu0 %v7121
      %v7210 = vpop.f32.mrb[0].mxu0
      %v7211 = vadd.f32 0.0, %v7210
      %v7212 = vpop.f32.mrb[0].mxu0
      %7213 = vmatprep.mubr.f32.mxu0 0.0
      %7214 = vmatmul.mubr.f32.gmra.mrb[0].mxu0 %v7123
      %v7215 = vpop.f32.mrb[0].mxu0
      %v7216 = vadd.f32 0.0, %v7215
      %v7217 = vpop.f32.mrb[0].mxu0
      %7218 = vmatprep.mubr.f32.mxu0 0.0
      %7219 = vmatmul.mubr.f32.gmra.mrb[0].mxu0 %v7125
      %v7220 = vpop.f32.mrb[0].mxu0
      %v7221 = vadd.f32 0.0, %v7220
      %v7222 = vpop.f32.mrb[0].mxu0
      %7223 = vmatprep.mubr.f32.mxu0 0.0
      %7224 = vmatmul.mubr.f32.gmra.mrb[0].mxu0 %v7127
      %v7225 = vpop.f32.mrb[0].mxu0
      %v7226 = vadd.f32 0.0, %v7225
      %v7227 = vpop.f32.mrb[0].mxu0
      %7228 = vmatprep.mubr.f32.mxu0 0.0
      %7229 = vmatmul.mubr.f32.gmra.mrb[0].mxu0 %v7129
      %v7230 = vpop.f32.mrb[0].mxu0
      %v7231 = vadd.f32 0.0, %v7230
      %v7232 = vpop.f32.mrb[0].mxu0
      %7233 = vdwg.mxu0
      %v7234 = vadd.f32 %v6450, %v7201
      %v7235 = vadd.f32 %v6451, %v7206
      %v7236 = vadd.f32 %v6452, %v7211
      %v7237 = vadd.f32 %v6453, %v7216
      %v7238 = vadd.f32 %v6454, %v7221
      %v7239 = vadd.f32 %v6455, %v7226
      %v7240 = vadd.f32 %v6456, %v7231
      %7241 = vst [vmem:[%s192] sm:$0xff] %v7234
      %7242 = vst [vmem:[%s192 + $0x8] sm:$0xff] %v7235
      %7243 = vst [vmem:[%s192 + $0x10] sm:$0xff] %v7236
      %7244 = vst [vmem:[%s192 + $0x18] sm:$0xff] %v7237
      %7245 = vst [vmem:[%s192 + $0x20] sm:$0xff] %v7238
      %7246 = vst [vmem:[%s192 + $0x28] sm:$0xff] %v7239
      %7247 = vst [vmem:[%s192 + $0x30] sm:$0x1] %v7240
      %p7248 = scmp.eq.s32.totalorder %s16, 0
      // Predicated region
      $region29: #{discriminator_block.2} parent=27 // pred_check
        %p7249 = pneg %p7248
      $region30: #{discriminator_block.2} parent=27 // pred_check_branch
        %7251 = sbr.rel (%p7249) target = $region32
      $region31: #{discriminator_block.2} parent=27 // pred_region
        %7252 = vst [vmem:[%s3] sm:$0x1] 0.0
        %7253 = vst [vmem:[%s4] sm:$0x1] 0.0
      $region32: #{discriminator_block.2} parent=27 // pred_fallthru
        _
      %v7254 = vld [vmem:[%s3] sm:$0x1]
      %v7255 = vadd.f32 %v7234, %v7235
      %v7256 = vadd.f32 %v7255, %v7236
      %v7257 = vadd.f32 %v7256, %v7237
      %v7258 = vadd.f32 %v7257, %v7238
      %v7259 = vadd.f32 %v7258, %v7239
      %vm7260 = vcmask 1040384
      %v7261 = vsel %vm7260, %v7240, 0.0
      %v7262 = vadd.f32 %v7259, %v7261
      %v7263 = vrot.slane %v7262, 4
      %v7264 = vadd.f32 %v7262, %v7263
      %v7265 = vrot.slane %v7264, 2
      %v7266 = vadd.f32 %v7264, %v7265
      %v7267 = vrot.slane %v7266, 1
      %v7268 = vadd.f32 %v7266, %v7267
      %v7269 = vadd.f32 %v7254, %v7268
      %7270 = vst [vmem:[%s3] sm:$0x1] %v7269
      %v7271 = vld [vmem:[%s4] sm:$0x1]
      %v7272 = vmul.f32 %v7234, %v7234
      %v7273 = vmul.f32 %v7235, %v7235
      %v7274 = vmul.f32 %v7236, %v7236
      %v7275 = vmul.f32 %v7237, %v7237
      %v7276 = vmul.f32 %v7238, %v7238
      %v7277 = vmul.f32 %v7239, %v7239
      %v7278 = vmul.f32 %v7240, %v7240
      %v7279 = vadd.f32 %v7272, %v7273
      %v7280 = vadd.f32 %v7279, %v7274
      %v7281 = vadd.f32 %v7280, %v7275
      %v7282 = vadd.f32 %v7281, %v7276
      %v7283 = vadd.f32 %v7282, %v7277
      %v7284 = vsel %vm7260, %v7278, 0.0
      %v7285 = vadd.f32 %v7283, %v7284
      %v7286 = vrot.slane %v7285, 4
      %v7287 = vadd.f32 %v7285, %v7286
      %v7288 = vrot.slane %v7287, 2
      %v7289 = vadd.f32 %v7287, %v7288
      %v7290 = vrot.slane %v7289, 1
      %v7291 = vadd.f32 %v7289, %v7290
      %v7292 = vadd.f32 %v7271, %v7291
      %7293 = vst [vmem:[%s4] sm:$0x1] %v7292
      %p7294 = scmp.lt.s32.totalorder %s16, 1
      %s7295 = scalar_select %p7294, %s16, 1
      %s7296 = smul.addr %s7295, 7
      %s7297 = smul.addr %s7296, 8
      %s7298 = scalar_lea.vmem %s2, %s7297
      // Predicated region
      $region33: #{discriminator_block.2} parent=27 // pred_check
        %p7299 = pneg %p81
      $region34: #{discriminator_block.2} parent=27 // pred_check_branch
        %7301 = sbr.rel (%p7299) target = $region36
      $region35: #{discriminator_block.2} parent=27 // pred_region
        _
      $region36: #{discriminator_block.2} parent=27 // pred_fallthru
        _
      // Predicated region
      $region37: #{discriminator_block.2} parent=27 // pred_check
        %p7302 = pneg %p102
      $region38: #{discriminator_block.2} parent=27 // pred_check_branch
        %7304 = sbr.rel (%p7302) target = $region40
      $region39: #{discriminator_block.2} parent=27 // pred_region
        _
      $region40: #{discriminator_block.2} parent=27 // pred_fallthru
        _
      // Predicated region
      $region41: #{discriminator_block.2} parent=27 // pred_check
        %p7305 = pneg %p123
      $region42: #{discriminator_block.2} parent=27 // pred_check_branch
        %7307 = sbr.rel (%p7305) target = $region44
      $region43: #{discriminator_block.2} parent=27 // pred_region
        _
      $region44: #{discriminator_block.2} parent=27 // pred_fallthru
        _
      // Predicated region
      $region45: #{discriminator_block.2} parent=27 // pred_check
        %p7308 = pneg %p102
      $region46: #{discriminator_block.2} parent=27 // pred_check_branch
        %7310 = sbr.rel (%p7308) target = $region48
      $region47: #{discriminator_block.2} parent=27 // pred_region
        _
      $region48: #{discriminator_block.2} parent=27 // pred_fallthru
        _
      // Predicated region
      $region49: #{discriminator_block.2} parent=27 // pred_check
        %p7311 = pneg %p123
      $region50: #{discriminator_block.2} parent=27 // pred_check_branch
        %7313 = sbr.rel (%p7311) target = $region52
      $region51: #{discriminator_block.2} parent=27 // pred_region
        _
      $region52: #{discriminator_block.2} parent=27 // pred_fallthru
        _
    $region28: #{discriminator_block.2} parent=5 // pred_fallthru
      _
    %p7314 = scmp.le.s32.totalorder 2, %s11
    // Predicated region
    $region53: #{discriminator_block.2} parent=5 // pred_check
      %p7315 = pneg %p7314
    $region54: #{discriminator_block.2} parent=5 // pred_check_branch
      %7317 = sbr.rel (%p7315) target = $region56
    $region55: #{discriminator_block.2} parent=5 // pred_region
      %s7318 = ssub.s32 %s11, 2
      // Predicated region
      $region57: #{discriminator_block.2} parent=55 // pred_check
        %p7319 = pneg %p87
      $region58: #{discriminator_block.2} parent=55 // pred_check_branch
        %7321 = sbr.rel (%p7319) target = $region60
      $region59: #{discriminator_block.2} parent=55 // pred_region
        %p7322 = scmp.lt.s32.totalorder %s17, 1
        %s7323 = scalar_select %p7322, %s17, 1
        %s7324 = smul.addr %s7323, 7
        %s7325 = smul.addr %s7324, 8
        %s7326 = scalar_lea.vmem %s2, %s7325
      $region60: #{discriminator_block.2} parent=55 // pred_fallthru
        _
    $region56: #{discriminator_block.2} parent=5 // pred_fallthru
      _
  $region6: #{discriminator_block.2} parent=0 // loop_footer
    %s15 = sadd.s32 1, %s11
  $region7: #{discriminator_block.2} parent=0 // loop_footer_branch
    %10 = sbr.rel target = $region3
  $region8: #{discriminator_block.2} parent=0 // loop_exit
    _

</llo_original>
